<compile_context>
chip_gen: v7x
topology: tpu7x:2x2x1
jax: 0.10.0
libtpu: 0.0.40
codegen_flags: <defaults>
</compile_context>

<pallas_src>
import functools

import jax
import jax.numpy as jnp
import numpy as np
from jax.experimental import pallas as pl
from jax.experimental.pallas import tpu as pltpu

LANES = 128  # TPU lane width; Cout (15/30/45/60) is zero-padded up to this.


def _round_up(x, m):
    return ((x + m - 1) // m) * m


def _choose_tm(m):
    """Pick the M-tile: large tiles (<=512 rows), >=2 grid steps when possible."""
    if m >= 1024:
        return 512
    half = _round_up(max(m // 2, 1), 8)
    return max(8, min(half, 512))


# ----------------------------- Pallas kernels ------------------------------

def _fused_conv_kernel(*refs, apply_relu, apply_res):
    """bf16 matmul (f32 acc) + BN shift + optional ReLU + optional residual add."""
    if apply_res:
        x_ref, w_ref, shift_ref, res_ref, o_ref = refs
    else:
        x_ref, w_ref, shift_ref, o_ref = refs
    acc = jnp.dot(x_ref[...], w_ref[...], preferred_element_type=jnp.float32)
    out = acc + shift_ref[...]
    if apply_relu:
        out = jnp.maximum(out, 0.0)
    if apply_res:
        out = out + res_ref[...]          # PyTorch adds the residual AFTER the ReLU
    o_ref[...] = out.astype(o_ref.dtype)


def _pool_kernel(x_ref, o_ref, *, op, kk, inv_win):
    """Reduce the kk window slices of a (kk, tm, 128) tile (lane-dense)."""
    r = x_ref[0]
    for t in range(1, kk):
        v = x_ref[t]
        r = jnp.maximum(r, v) if op == "max" else r + v
    if op == "avg":
        r = r * inv_win
    o_ref[...] = r.astype(o_ref.dtype)


# ------------------------------ JAX-side glue -------------------------------

def _im2col(x, kh, kw, stride, pad):
    """x: (N,H,W,C) -> patches (N*Ho*Wo, kh*kw*C), element order (i,j,c)."""
    if pad:
        x = jnp.pad(x, ((0, 0), (pad, pad), (pad, pad), (0, 0)))
    N, H, W, C = x.shape
    Ho = (H - kh) // stride + 1
    Wo = (W - kw) // stride + 1
    cols = []
    for i in range(kh):
        for j in range(kw):
            cols.append(x[:, i:i + stride * Ho:stride, j:j + stride * Wo:stride, :])
    patches = jnp.stack(cols, axis=3)                 # (N, Ho, Wo, kh*kw, C)
    return patches.reshape(N * Ho * Wo, kh * kw * C), (N, Ho, Wo)


def conv2d_fused(x, w, scale, shift, *, stride=1, pad=0, relu=False, residual=None):
    """x: (N,H,W,Cin) NHWC;  w: (Cout,Cin,kh,kw) torch layout;  scale/shift: (Cout,)."""
    Cout, Cin, kh, kw = w.shape
    # bf16 im2col patches (dominant HBM traffic) -> half the DMA bytes, MXU-native.
    patches, (N, Ho, Wo) = _im2col(x.astype(jnp.bfloat16), kh, kw, stride, pad)
    M, K = patches.shape
    K_pad = _round_up(K, LANES)
    C_pad = _round_up(Cout, LANES)
    tm = _choose_tm(M)
    M_pad = _round_up(M, tm)

    patches = jnp.pad(patches, ((0, M_pad - M), (0, K_pad - K)))

    # Fold the BN scale into the weights; zero-pad K rows and Cout lanes -> padded
    # output lanes are exactly 0 (shift pad = 0, relu(0)=0, residual pad = 0).
    w_mat = jnp.transpose(w, (2, 3, 1, 0)).reshape(K, Cout).astype(jnp.float32)
    w_mat = w_mat * scale.astype(jnp.float32)[None, :]
    w_mat = jnp.pad(w_mat, ((0, K_pad - K), (0, C_pad - Cout))).astype(jnp.bfloat16)

    shift_p = jnp.pad(shift.astype(jnp.float32), (0, C_pad - Cout)).reshape(1, C_pad)

    args = [patches, w_mat, shift_p]
    in_specs = [
        pl.BlockSpec((tm, K_pad), lambda i: (i, 0)),
        pl.BlockSpec((K_pad, C_pad), lambda i: (0, 0)),
        pl.BlockSpec((1, C_pad), lambda i: (0, 0)),
    ]

    apply_res = residual is not None
    if apply_res:
        res = residual.reshape(M, Cout).astype(jnp.float32)
        res = jnp.pad(res, ((0, M_pad - M), (0, C_pad - Cout)))
        args.append(res)
        in_specs.append(pl.BlockSpec((tm, C_pad), lambda i: (i, 0)))

    out = pl.pallas_call(
        functools.partial(_fused_conv_kernel, apply_relu=relu, apply_res=apply_res),
        out_shape=jax.ShapeDtypeStruct((M_pad, C_pad), jnp.float32),
        grid=(M_pad // tm,),
        in_specs=in_specs,
        out_specs=pl.BlockSpec((tm, C_pad), lambda i: (i, 0)),
        compiler_params=pltpu.CompilerParams(dimension_semantics=("parallel",)),
    )(*args)
    return out[:M, :Cout].reshape(N, Ho, Wo, Cout)


def pool2d(x, k, stride, op):
    """x: (N,H,W,C) NHWC; PyTorch VALID/floor pooling; lane-dense Pallas reduce."""
    N, H, W, C = x.shape
    Ho = (H - k) // stride + 1
    Wo = (W - k) // stride + 1
    M = N * Ho * Wo
    kk = k * k
    C_pad = _round_up(C, LANES)
    tm = _choose_tm(M)
    M_pad = _round_up(M, tm)

    wins = []
    for i in range(k):
        for j in range(k):
            wins.append(
                x[:, i:i + stride * Ho:stride, j:j + stride * Wo:stride, :].reshape(M, C))
    stacked = jnp.stack(wins, axis=0)                         # (kk, M, C) — channels stay minor
    stacked = jnp.pad(stacked, ((0, 0), (0, M_pad - M), (0, C_pad - C)))

    out = pl.pallas_call(
        functools.partial(_pool_kernel, op=op, kk=kk, inv_win=1.0 / kk),
        out_shape=jax.ShapeDtypeStruct((M_pad, C_pad), jnp.float32),
        grid=(M_pad // tm,),
        in_specs=[pl.BlockSpec((kk, tm, C_pad), lambda i: (0, i, 0))],
        out_specs=pl.BlockSpec((tm, C_pad), lambda i: (i, 0)),
        compiler_params=pltpu.CompilerParams(dimension_semantics=("parallel",)),
    )(stacked)
    return out[:M, :C].reshape(N, Ho, Wo, C)


# ------------------------------- parameters ---------------------------------

_LAYER_SPECS = {
    # name: (Cout, Cin, kh, kw, has_bn)
    "l1":   (15, 3, 7, 7, True),
    "l2_1": (15, 15, 3, 3, True),
    "l2_2": (15, 15, 3, 3, True),
    "up3":  (30, 15, 1, 1, False),
    "l3_1": (30, 15, 3, 3, True),
    "l3_2": (30, 30, 3, 3, True),
    "up4":  (45, 30, 1, 1, False),
    "l4_1": (45, 30, 3, 3, True),
    "l4_2": (45, 45, 3, 3, True),
    "up5":  (60, 45, 1, 1, False),
    "l5_1": (60, 45, 3, 3, True),
    "l5_2": (60, 60, 3, 3, True),
}


def init_params(key):
    """Deterministic synthetic weights; eval-mode BatchNorm folded into scale/shift."""
    params = {}
    keys = jax.random.split(key, len(_LAYER_SPECS))
    for lk, (name, (cout, cin, kh, kw, bn)) in zip(keys, _LAYER_SPECS.items()):
        k1, k2, k3, k4, k5, k6 = jax.random.split(lk, 6)
        fan_in = cin * kh * kw
        w = jax.random.normal(k1, (cout, cin, kh, kw), jnp.float32) / jnp.sqrt(float(fan_in))
        b = 0.05 * jax.random.normal(k2, (cout,), jnp.float32)
        if bn:
            gamma = 1.0 + 0.1 * jax.random.normal(k3, (cout,), jnp.float32)
            beta = 0.1 * jax.random.normal(k4, (cout,), jnp.float32)
            mean = 0.1 * jax.random.normal(k5, (cout,), jnp.float32)
            var = 1.0 + 0.1 * jax.random.uniform(k6, (cout,), jnp.float32)
            scale = gamma / jnp.sqrt(var + 1e-5)
            shift = beta + (b - mean) * scale
        else:
            scale = jnp.ones((cout,), jnp.float32)
            shift = b
        params[name] = {"w": w, "scale": scale, "shift": shift}
    return params


# -------------------------------- forward -----------------------------------

def forward(params, x_nchw):
    x = jnp.transpose(x_nchw, (0, 2, 3, 1))  # NCHW -> NHWC

    # granular_layer_1: Conv(3->15, k7, s2) + BN (no ReLU) + MaxPool(k3, s2)
    p = params["l1"]
    x = conv2d_fused(x, p["w"], p["scale"], p["shift"], stride=2, pad=0, relu=False)
    x = pool2d(x, 3, 2, "max")

    # block 2 (residual on its own input)
    skip = x
    p = params["l2_1"]; x = conv2d_fused(x, p["w"], p["scale"], p["shift"], pad=1, relu=True)
    p = params["l2_2"]; x = conv2d_fused(x, p["w"], p["scale"], p["shift"], pad=1, relu=True, residual=skip)
    x = pool2d(x, 2, 2, "max")

    # block 3 (1x1 upsample skip)
    p = params["up3"]; skip = conv2d_fused(x, p["w"], p["scale"], p["shift"])
    p = params["l3_1"]; x = conv2d_fused(x, p["w"], p["scale"], p["shift"], pad=1, relu=True)
    p = params["l3_2"]; x = conv2d_fused(x, p["w"], p["scale"], p["shift"], pad=1, relu=True, residual=skip)
    x = pool2d(x, 2, 2, "max")

    # block 4
    p = params["up4"]; skip = conv2d_fused(x, p["w"], p["scale"], p["shift"])
    p = params["l4_1"]; x = conv2d_fused(x, p["w"], p["scale"], p["shift"], pad=1, relu=True)
    p = params["l4_2"]; x = conv2d_fused(x, p["w"], p["scale"], p["shift"], pad=1, relu=True, residual=skip)
    x = pool2d(x, 2, 2, "max")

    # block 5 + avg pool
    p = params["up5"]; skip = conv2d_fused(x, p["w"], p["scale"], p["shift"])
    p = params["l5_1"]; x = conv2d_fused(x, p["w"], p["scale"], p["shift"], pad=1, relu=True)
    p = params["l5_2"]; x = conv2d_fused(x, p["w"], p["scale"], p["shift"], pad=1, relu=True, residual=skip)
    x = pool2d(x, 2, 2, "avg")

    # nn.Flatten on NCHW => channel-major flatten
    x = jnp.transpose(x, (0, 3, 1, 2))
    return x.reshape(x.shape[0], -1)


# ----------------------- pure-JAX (XLA) reference ----------------------------

def reference_forward(params, x_nchw):
    dn = ("NCHW", "OIHW", "NCHW")
    prec = jax.lax.Precision.HIGHEST

    def conv(x, p, stride=1, pad=0):
        y = jax.lax.conv_general_dilated(
            x, p["w"], (stride, stride), [(pad, pad), (pad, pad)],
            dimension_numbers=dn, precision=prec)
        return y * p["scale"][None, :, None, None] + p["shift"][None, :, None, None]

    def maxpool(x, k, s):
        return jax.lax.reduce_window(x, -jnp.inf, jax.lax.max,
                                     (1, 1, k, k), (1, 1, s, s), "VALID")

    def avgpool(x, k, s):
        return jax.lax.reduce_window(x, 0.0, jax.lax.add,
                                     (1, 1, k, k), (1, 1, s, s), "VALID") / float(k * k)

    relu = lambda v: jnp.maximum(v, 0.0)

    x = maxpool(conv(x_nchw, params["l1"], stride=2), 3, 2)
    skip = x
    x = relu(conv(x, params["l2_1"], pad=1))
    x = relu(conv(x, params["l2_2"], pad=1)) + skip
    x = maxpool(x, 2, 2)
    skip = conv(x, params["up3"])
    x = relu(conv(x, params["l3_1"], pad=1))
    x = relu(conv(x, params["l3_2"], pad=1)) + skip
    x = maxpool(x, 2, 2)
    skip = conv(x, params["up4"])
    x = relu(conv(x, params["l4_1"], pad=1))
    x = relu(conv(x, params["l4_2"], pad=1)) + skip
    x = maxpool(x, 2, 2)
    skip = conv(x, params["up5"])
    x = relu(conv(x, params["l5_1"], pad=1))
    x = relu(conv(x, params["l5_2"], pad=1)) + skip
    x = avgpool(x, 2, 2)
    return x.reshape(x.shape[0], -1)


# ---------------------------------- main -------------------------------------

if __name__ == "__main__":
    key = jax.random.PRNGKey(0)
    pkey, xkey = jax.random.split(key)
    params = init_params(pkey)

    # Small input consistent with the module (NCHW, 3 channels). 72x72 is the
    # smallest comfortable size that survives the conv7/s2 + 4 pooling stages.
    x = jax.random.normal(xkey, (2, 3, 72, 72), jnp.float32)

    out = jax.jit(forward)(params, x)
    out = jax.block_until_ready(out)

    assert out.shape == (2, 60), out.shape
    assert bool(jnp.all(jnp.isfinite(out)))

    # Tolerance covers bf16 MXU operands (f32 accumulation) across 14 stacked convs
    # vs. the all-f32 HIGHEST-precision XLA reference.
    ref = reference_forward(params, x)
    np.testing.assert_allclose(np.asarray(out), np.asarray(ref), rtol=2e-2, atol=2e-2)

    print("KERNEL_OK")
</pallas_src>

<mosaic_0001>
module attributes {stable_mosaic.version = 11 : i64} {
  func.func @_fused_conv_kernel(%arg0: i32, %arg1: memref<512x256xbf16, #tpu.memory_space<vmem>>, %arg2: memref<256x128xbf16, #tpu.memory_space<vmem>>, %arg3: memref<1x128xf32, #tpu.memory_space<vmem>>, %arg4: memref<512x128xf32, #tpu.memory_space<vmem>>) attributes {dimension_semantics = [#tpu.dimension_semantics<parallel>], iteration_bounds = array<i64: 5>, scalar_prefetch = 0 : i64, scratch_operands = 0 : i64, tpu.core_type = #tpu.core_type<tc>, window_params = [{transform_indices = @transform_0, window_bounds = array<i64: 512, 256>}, {pipeline_mode = #tpu.pipeline_mode<synchronous>, transform_indices = @transform_1, window_bounds = array<i64: 256, 128>}, {pipeline_mode = #tpu.pipeline_mode<synchronous>, transform_indices = @transform_2, window_bounds = array<i64: 1, 128>}, {transform_indices = @transform_3, window_bounds = array<i64: 512, 128>}]} {
    %c0 = arith.constant 0 : index
    %c0_0 = arith.constant 0 : index
    %0 = vector.load %arg1[%c0, %c0_0] : memref<512x256xbf16, #tpu.memory_space<vmem>>, vector<512x256xbf16>
    %c0_1 = arith.constant 0 : index
    %c0_2 = arith.constant 0 : index
    %1 = vector.load %arg2[%c0_1, %c0_2] : memref<256x128xbf16, #tpu.memory_space<vmem>>, vector<256x128xbf16>
    %cst = arith.constant dense<0.000000e+00> : vector<512x128xf32>
    %2 = tpu.matmul %0, %1, %cst {dimension_numbers = #tpu.dot_dimension_numbers<[1], [0], [0], [1], [0, 0, 1, 1], [], []>} : vector<512x256xbf16>, vector<256x128xbf16>, vector<512x128xf32> -> vector<512x128xf32>
    %c0_3 = arith.constant 0 : index
    %c0_4 = arith.constant 0 : index
    %3 = vector.load %arg3[%c0_3, %c0_4] : memref<1x128xf32, #tpu.memory_space<vmem>>, vector<1x128xf32>
    %4 = vector.broadcast %3 : vector<1x128xf32> to vector<512x128xf32>
    %5 = arith.addf %2, %4 : vector<512x128xf32>
    %c0_5 = arith.constant 0 : index
    %c0_6 = arith.constant 0 : index
    %6 = vector.load %arg4[%c0_5, %c0_6] : memref<512x128xf32, #tpu.memory_space<vmem>>, vector<512x128xf32>
    tpu.vector_store %arg4[%c0_5, %c0_6], %5 {strides = array<i32>} : memref<512x128xf32, #tpu.memory_space<vmem>>, vector<512x128xf32>,
    return
  }
  func.func @transform_0(%arg0: i32) -> (i32, i32) {
    %c0_i32 = arith.constant 0 : i32
    %c0_i32_0 = arith.constant 0 : i32
    return %arg0, %c0_i32 : i32, i32
  }
  func.func @transform_1(%arg0: i32) -> (i32, i32) {
    %c0_i32 = arith.constant 0 : i32
    %c0_i32_0 = arith.constant 0 : i32
    %c0_i32_1 = arith.constant 0 : i32
    return %c0_i32, %c0_i32_0 : i32, i32
  }
  func.func @transform_2(%arg0: i32) -> (i32, i32) {
    %c0_i32 = arith.constant 0 : i32
    %c0_i32_0 = arith.constant 0 : i32
    %c0_i32_1 = arith.constant 0 : i32
    return %c0_i32, %c0_i32_0 : i32, i32
  }
  func.func @transform_3(%arg0: i32) -> (i32, i32) {
    %c0_i32 = arith.constant 0 : i32
    %c0_i32_0 = arith.constant 0 : i32
    return %arg0, %c0_i32 : i32, i32
  }
}

module attributes {stable_mosaic.version = 11 : i64} {
  func.func @_pool_kernel(%arg0: i32, %arg1: memref<9x256x128xf32, #tpu.memory_space<vmem>>, %arg2: memref<256x128xf32, #tpu.memory_space<vmem>>) attributes {dimension_semantics = [#tpu.dimension_semantics<parallel>], iteration_bounds = array<i64: 2>, scalar_prefetch = 0 : i64, scratch_operands = 0 : i64, tpu.core_type = #tpu.core_type<tc>, window_params = [{transform_indices = @transform_0, window_bounds = array<i64: 9, 256, 128>}, {transform_indices = @transform_1, window_bounds = array<i64: 256, 128>}]} {
    %c0 = arith.constant 0 : index
    %c0_0 = arith.constant 0 : index
    %c0_1 = arith.constant 0 : index
    %0 = vector.load %arg1[%c0, %c0_0, %c0_1] : memref<9x256x128xf32, #tpu.memory_space<vmem>>, vector<1x256x128xf32>
    %1 = vector.shape_cast %0 : vector<1x256x128xf32> to vector<256x128xf32>
    %c1 = arith.constant 1 : index
    %c0_2 = arith.constant 0 : index
    %c0_3 = arith.constant 0 : index
    %2 = vector.load %arg1[%c1, %c0_2, %c0_3] : memref<9x256x128xf32, #tpu.memory_space<vmem>>, vector<1x256x128xf32>
    %3 = vector.shape_cast %2 : vector<1x256x128xf32> to vector<256x128xf32>
    %4 = arith.maximumf %1, %3 : vector<256x128xf32>
    %c2 = arith.constant 2 : index
    %c0_4 = arith.constant 0 : index
    %c0_5 = arith.constant 0 : index
    %5 = vector.load %arg1[%c2, %c0_4, %c0_5] : memref<9x256x128xf32, #tpu.memory_space<vmem>>, vector<1x256x128xf32>
    %6 = vector.shape_cast %5 : vector<1x256x128xf32> to vector<256x128xf32>
    %7 = arith.maximumf %4, %6 : vector<256x128xf32>
    %c3 = arith.constant 3 : index
    %c0_6 = arith.constant 0 : index
    %c0_7 = arith.constant 0 : index
    %8 = vector.load %arg1[%c3, %c0_6, %c0_7] : memref<9x256x128xf32, #tpu.memory_space<vmem>>, vector<1x256x128xf32>
    %9 = vector.shape_cast %8 : vector<1x256x128xf32> to vector<256x128xf32>
    %10 = arith.maximumf %7, %9 : vector<256x128xf32>
    %c4 = arith.constant 4 : index
    %c0_8 = arith.constant 0 : index
    %c0_9 = arith.constant 0 : index
    %11 = vector.load %arg1[%c4, %c0_8, %c0_9] : memref<9x256x128xf32, #tpu.memory_space<vmem>>, vector<1x256x128xf32>
    %12 = vector.shape_cast %11 : vector<1x256x128xf32> to vector<256x128xf32>
    %13 = arith.maximumf %10, %12 : vector<256x128xf32>
    %c5 = arith.constant 5 : index
    %c0_10 = arith.constant 0 : index
    %c0_11 = arith.constant 0 : index
    %14 = vector.load %arg1[%c5, %c0_10, %c0_11] : memref<9x256x128xf32, #tpu.memory_space<vmem>>, vector<1x256x128xf32>
    %15 = vector.shape_cast %14 : vector<1x256x128xf32> to vector<256x128xf32>
    %16 = arith.maximumf %13, %15 : vector<256x128xf32>
    %c6 = arith.constant 6 : index
    %c0_12 = arith.constant 0 : index
    %c0_13 = arith.constant 0 : index
    %17 = vector.load %arg1[%c6, %c0_12, %c0_13] : memref<9x256x128xf32, #tpu.memory_space<vmem>>, vector<1x256x128xf32>
    %18 = vector.shape_cast %17 : vector<1x256x128xf32> to vector<256x128xf32>
    %19 = arith.maximumf %16, %18 : vector<256x128xf32>
    %c7 = arith.constant 7 : index
    %c0_14 = arith.constant 0 : index
    %c0_15 = arith.constant 0 : index
    %20 = vector.load %arg1[%c7, %c0_14, %c0_15] : memref<9x256x128xf32, #tpu.memory_space<vmem>>, vector<1x256x128xf32>
    %21 = vector.shape_cast %20 : vector<1x256x128xf32> to vector<256x128xf32>
    %22 = arith.maximumf %19, %21 : vector<256x128xf32>
    %c8 = arith.constant 8 : index
    %c0_16 = arith.constant 0 : index
    %c0_17 = arith.constant 0 : index
    %23 = vector.load %arg1[%c8, %c0_16, %c0_17] : memref<9x256x128xf32, #tpu.memory_space<vmem>>, vector<1x256x128xf32>
    %24 = vector.shape_cast %23 : vector<1x256x128xf32> to vector<256x128xf32>
    %25 = arith.maximumf %22, %24 : vector<256x128xf32>
    %c0_18 = arith.constant 0 : index
    %c0_19 = arith.constant 0 : index
    %26 = vector.load %arg2[%c0_18, %c0_19] : memref<256x128xf32, #tpu.memory_space<vmem>>, vector<256x128xf32>
    tpu.vector_store %arg2[%c0_18, %c0_19], %25 {strides = array<i32>} : memref<256x128xf32, #tpu.memory_space<vmem>>, vector<256x128xf32>,
    return
  }
  func.func @transform_0(%arg0: i32) -> (i32, i32, i32) {
    %c0_i32 = arith.constant 0 : i32
    %c0_i32_0 = arith.constant 0 : i32
    %c0_i32_1 = arith.constant 0 : i32
    return %c0_i32, %arg0, %c0_i32_0 : i32, i32, i32
  }
  func.func @transform_1(%arg0: i32) -> (i32, i32) {
    %c0_i32 = arith.constant 0 : i32
    %c0_i32_0 = arith.constant 0 : i32
    return %arg0, %c0_i32 : i32, i32
  }
}

module attributes {stable_mosaic.version = 11 : i64} {
  func.func @_fused_conv_kernel(%arg0: i32, %arg1: memref<256x256xbf16, #tpu.memory_space<vmem>>, %arg2: memref<256x128xbf16, #tpu.memory_space<vmem>>, %arg3: memref<1x128xf32, #tpu.memory_space<vmem>>, %arg4: memref<256x128xf32, #tpu.memory_space<vmem>>) attributes {dimension_semantics = [#tpu.dimension_semantics<parallel>], iteration_bounds = array<i64: 2>, scalar_prefetch = 0 : i64, scratch_operands = 0 : i64, tpu.core_type = #tpu.core_type<tc>, window_params = [{transform_indices = @transform_0, window_bounds = array<i64: 256, 256>}, {pipeline_mode = #tpu.pipeline_mode<synchronous>, transform_indices = @transform_1, window_bounds = array<i64: 256, 128>}, {pipeline_mode = #tpu.pipeline_mode<synchronous>, transform_indices = @transform_2, window_bounds = array<i64: 1, 128>}, {transform_indices = @transform_3, window_bounds = array<i64: 256, 128>}]} {
    %c0 = arith.constant 0 : index
    %c0_0 = arith.constant 0 : index
    %0 = vector.load %arg1[%c0, %c0_0] : memref<256x256xbf16, #tpu.memory_space<vmem>>, vector<256x256xbf16>
    %c0_1 = arith.constant 0 : index
    %c0_2 = arith.constant 0 : index
    %1 = vector.load %arg2[%c0_1, %c0_2] : memref<256x128xbf16, #tpu.memory_space<vmem>>, vector<256x128xbf16>
    %cst = arith.constant dense<0.000000e+00> : vector<256x128xf32>
    %2 = tpu.matmul %0, %1, %cst {dimension_numbers = #tpu.dot_dimension_numbers<[1], [0], [0], [1], [0, 0, 1, 1], [], []>} : vector<256x256xbf16>, vector<256x128xbf16>, vector<256x128xf32> -> vector<256x128xf32>
    %c0_3 = arith.constant 0 : index
    %c0_4 = arith.constant 0 : index
    %3 = vector.load %arg3[%c0_3, %c0_4] : memref<1x128xf32, #tpu.memory_space<vmem>>, vector<1x128xf32>
    %4 = vector.broadcast %3 : vector<1x128xf32> to vector<256x128xf32>
    %5 = arith.addf %2, %4 : vector<256x128xf32>
    %cst_5 = arith.constant 0.000000e+00 : f32
    %6 = vector.broadcast %cst_5 : f32 to vector<256x128xf32>
    %7 = arith.maximumf %5, %6 : vector<256x128xf32>
    %c0_6 = arith.constant 0 : index
    %c0_7 = arith.constant 0 : index
    %8 = vector.load %arg4[%c0_6, %c0_7] : memref<256x128xf32, #tpu.memory_space<vmem>>, vector<256x128xf32>
    tpu.vector_store %arg4[%c0_6, %c0_7], %7 {strides = array<i32>} : memref<256x128xf32, #tpu.memory_space<vmem>>, vector<256x128xf32>,
    return
  }
  func.func @transform_0(%arg0: i32) -> (i32, i32) {
    %c0_i32 = arith.constant 0 : i32
    %c0_i32_0 = arith.constant 0 : i32
    return %arg0, %c0_i32 : i32, i32
  }
  func.func @transform_1(%arg0: i32) -> (i32, i32) {
    %c0_i32 = arith.constant 0 : i32
    %c0_i32_0 = arith.constant 0 : i32
    %c0_i32_1 = arith.constant 0 : i32
    return %c0_i32, %c0_i32_0 : i32, i32
  }
  func.func @transform_2(%arg0: i32) -> (i32, i32) {
    %c0_i32 = arith.constant 0 : i32
    %c0_i32_0 = arith.constant 0 : i32
    %c0_i32_1 = arith.constant 0 : i32
    return %c0_i32, %c0_i32_0 : i32, i32
  }
  func.func @transform_3(%arg0: i32) -> (i32, i32) {
    %c0_i32 = arith.constant 0 : i32
    %c0_i32_0 = arith.constant 0 : i32
    return %arg0, %c0_i32 : i32, i32
  }
}

module attributes {stable_mosaic.version = 11 : i64} {
  func.func @_fused_conv_kernel(%arg0: i32, %arg1: memref<256x256xbf16, #tpu.memory_space<vmem>>, %arg2: memref<256x128xbf16, #tpu.memory_space<vmem>>, %arg3: memref<1x128xf32, #tpu.memory_space<vmem>>, %arg4: memref<256x128xf32, #tpu.memory_space<vmem>>, %arg5: memref<256x128xf32, #tpu.memory_space<vmem>>) attributes {dimension_semantics = [#tpu.dimension_semantics<parallel>], iteration_bounds = array<i64: 2>, scalar_prefetch = 0 : i64, scratch_operands = 0 : i64, tpu.core_type = #tpu.core_type<tc>, window_params = [{transform_indices = @transform_0, window_bounds = array<i64: 256, 256>}, {pipeline_mode = #tpu.pipeline_mode<synchronous>, transform_indices = @transform_1, window_bounds = array<i64: 256, 128>}, {pipeline_mode = #tpu.pipeline_mode<synchronous>, transform_indices = @transform_2, window_bounds = array<i64: 1, 128>}, {transform_indices = @transform_3, window_bounds = array<i64: 256, 128>}, {transform_indices = @transform_4, window_bounds = array<i64: 256, 128>}]} {
    %c0 = arith.constant 0 : index
    %c0_0 = arith.constant 0 : index
    %0 = vector.load %arg1[%c0, %c0_0] : memref<256x256xbf16, #tpu.memory_space<vmem>>, vector<256x256xbf16>
    %c0_1 = arith.constant 0 : index
    %c0_2 = arith.constant 0 : index
    %1 = vector.load %arg2[%c0_1, %c0_2] : memref<256x128xbf16, #tpu.memory_space<vmem>>, vector<256x128xbf16>
    %cst = arith.constant dense<0.000000e+00> : vector<256x128xf32>
    %2 = tpu.matmul %0, %1, %cst {dimension_numbers = #tpu.dot_dimension_numbers<[1], [0], [0], [1], [0, 0, 1, 1], [], []>} : vector<256x256xbf16>, vector<256x128xbf16>, vector<256x128xf32> -> vector<256x128xf32>
    %c0_3 = arith.constant 0 : index
    %c0_4 = arith.constant 0 : index
    %3 = vector.load %arg3[%c0_3, %c0_4] : memref<1x128xf32, #tpu.memory_space<vmem>>, vector<1x128xf32>
    %4 = vector.broadcast %3 : vector<1x128xf32> to vector<256x128xf32>
    %5 = arith.addf %2, %4 : vector<256x128xf32>
    %cst_5 = arith.constant 0.000000e+00 : f32
    %6 = vector.broadcast %cst_5 : f32 to vector<256x128xf32>
    %7 = arith.maximumf %5, %6 : vector<256x128xf32>
    %c0_6 = arith.constant 0 : index
    %c0_7 = arith.constant 0 : index
    %8 = vector.load %arg4[%c0_6, %c0_7] : memref<256x128xf32, #tpu.memory_space<vmem>>, vector<256x128xf32>
    %9 = arith.addf %7, %8 : vector<256x128xf32>
    %c0_8 = arith.constant 0 : index
    %c0_9 = arith.constant 0 : index
    %10 = vector.load %arg5[%c0_8, %c0_9] : memref<256x128xf32, #tpu.memory_space<vmem>>, vector<256x128xf32>
    tpu.vector_store %arg5[%c0_8, %c0_9], %9 {strides = array<i32>} : memref<256x128xf32, #tpu.memory_space<vmem>>, vector<256x128xf32>,
    return
  }
  func.func @transform_0(%arg0: i32) -> (i32, i32) {
    %c0_i32 = arith.constant 0 : i32
    %c0_i32_0 = arith.constant 0 : i32
    return %arg0, %c0_i32 : i32, i32
  }
  func.func @transform_1(%arg0: i32) -> (i32, i32) {
    %c0_i32 = arith.constant 0 : i32
    %c0_i32_0 = arith.constant 0 : i32
    %c0_i32_1 = arith.constant 0 : i32
    return %c0_i32, %c0_i32_0 : i32, i32
  }
  func.func @transform_2(%arg0: i32) -> (i32, i32) {
    %c0_i32 = arith.constant 0 : i32
    %c0_i32_0 = arith.constant 0 : i32
    %c0_i32_1 = arith.constant 0 : i32
    return %c0_i32, %c0_i32_0 : i32, i32
  }
  func.func @transform_3(%arg0: i32) -> (i32, i32) {
    %c0_i32 = arith.constant 0 : i32
    %c0_i32_0 = arith.constant 0 : i32
    return %arg0, %c0_i32 : i32, i32
  }
  func.func @transform_4(%arg0: i32) -> (i32, i32) {
    %c0_i32 = arith.constant 0 : i32
    %c0_i32_0 = arith.constant 0 : i32
    return %arg0, %c0_i32 : i32, i32
  }
}

module attributes {stable_mosaic.version = 11 : i64} {
  func.func @_pool_kernel(%arg0: i32, %arg1: memref<4x64x128xf32, #tpu.memory_space<vmem>>, %arg2: memref<64x128xf32, #tpu.memory_space<vmem>>) attributes {dimension_semantics = [#tpu.dimension_semantics<parallel>], iteration_bounds = array<i64: 2>, scalar_prefetch = 0 : i64, scratch_operands = 0 : i64, tpu.core_type = #tpu.core_type<tc>, window_params = [{transform_indices = @transform_0, window_bounds = array<i64: 4, 64, 128>}, {transform_indices = @transform_1, window_bounds = array<i64: 64, 128>}]} {
    %c0 = arith.constant 0 : index
    %c0_0 = arith.constant 0 : index
    %c0_1 = arith.constant 0 : index
    %0 = vector.load %arg1[%c0, %c0_0, %c0_1] : memref<4x64x128xf32, #tpu.memory_space<vmem>>, vector<1x64x128xf32>
    %1 = vector.shape_cast %0 : vector<1x64x128xf32> to vector<64x128xf32>
    %c1 = arith.constant 1 : index
    %c0_2 = arith.constant 0 : index
    %c0_3 = arith.constant 0 : index
    %2 = vector.load %arg1[%c1, %c0_2, %c0_3] : memref<4x64x128xf32, #tpu.memory_space<vmem>>, vector<1x64x128xf32>
    %3 = vector.shape_cast %2 : vector<1x64x128xf32> to vector<64x128xf32>
    %4 = arith.maximumf %1, %3 : vector<64x128xf32>
    %c2 = arith.constant 2 : index
    %c0_4 = arith.constant 0 : index
    %c0_5 = arith.constant 0 : index
    %5 = vector.load %arg1[%c2, %c0_4, %c0_5] : memref<4x64x128xf32, #tpu.memory_space<vmem>>, vector<1x64x128xf32>
    %6 = vector.shape_cast %5 : vector<1x64x128xf32> to vector<64x128xf32>
    %7 = arith.maximumf %4, %6 : vector<64x128xf32>
    %c3 = arith.constant 3 : index
    %c0_6 = arith.constant 0 : index
    %c0_7 = arith.constant 0 : index
    %8 = vector.load %arg1[%c3, %c0_6, %c0_7] : memref<4x64x128xf32, #tpu.memory_space<vmem>>, vector<1x64x128xf32>
    %9 = vector.shape_cast %8 : vector<1x64x128xf32> to vector<64x128xf32>
    %10 = arith.maximumf %7, %9 : vector<64x128xf32>
    %c0_8 = arith.constant 0 : index
    %c0_9 = arith.constant 0 : index
    %11 = vector.load %arg2[%c0_8, %c0_9] : memref<64x128xf32, #tpu.memory_space<vmem>>, vector<64x128xf32>
    tpu.vector_store %arg2[%c0_8, %c0_9], %10 {strides = array<i32>} : memref<64x128xf32, #tpu.memory_space<vmem>>, vector<64x128xf32>,
    return
  }
  func.func @transform_0(%arg0: i32) -> (i32, i32, i32) {
    %c0_i32 = arith.constant 0 : i32
    %c0_i32_0 = arith.constant 0 : i32
    %c0_i32_1 = arith.constant 0 : i32
    return %c0_i32, %arg0, %c0_i32_0 : i32, i32, i32
  }
  func.func @transform_1(%arg0: i32) -> (i32, i32) {
    %c0_i32 = arith.constant 0 : i32
    %c0_i32_0 = arith.constant 0 : i32
    return %arg0, %c0_i32 : i32, i32
  }
}

module attributes {stable_mosaic.version = 11 : i64} {
  func.func @_fused_conv_kernel(%arg0: i32, %arg1: memref<64x256xbf16, #tpu.memory_space<vmem>>, %arg2: memref<256x128xbf16, #tpu.memory_space<vmem>>, %arg3: memref<1x128xf32, #tpu.memory_space<vmem>>, %arg4: memref<64x128xf32, #tpu.memory_space<vmem>>) attributes {dimension_semantics = [#tpu.dimension_semantics<parallel>], iteration_bounds = array<i64: 2>, scalar_prefetch = 0 : i64, scratch_operands = 0 : i64, tpu.core_type = #tpu.core_type<tc>, window_params = [{transform_indices = @transform_0, window_bounds = array<i64: 64, 256>}, {pipeline_mode = #tpu.pipeline_mode<synchronous>, transform_indices = @transform_1, window_bounds = array<i64: 256, 128>}, {pipeline_mode = #tpu.pipeline_mode<synchronous>, transform_indices = @transform_2, window_bounds = array<i64: 1, 128>}, {transform_indices = @transform_3, window_bounds = array<i64: 64, 128>}]} {
    %c0 = arith.constant 0 : index
    %c0_0 = arith.constant 0 : index
    %0 = vector.load %arg1[%c0, %c0_0] : memref<64x256xbf16, #tpu.memory_space<vmem>>, vector<64x256xbf16>
    %c0_1 = arith.constant 0 : index
    %c0_2 = arith.constant 0 : index
    %1 = vector.load %arg2[%c0_1, %c0_2] : memref<256x128xbf16, #tpu.memory_space<vmem>>, vector<256x128xbf16>
    %cst = arith.constant dense<0.000000e+00> : vector<64x128xf32>
    %2 = tpu.matmul %0, %1, %cst {dimension_numbers = #tpu.dot_dimension_numbers<[1], [0], [0], [1], [0, 0, 1, 1], [], []>} : vector<64x256xbf16>, vector<256x128xbf16>, vector<64x128xf32> -> vector<64x128xf32>
    %c0_3 = arith.constant 0 : index
    %c0_4 = arith.constant 0 : index
    %3 = vector.load %arg3[%c0_3, %c0_4] : memref<1x128xf32, #tpu.memory_space<vmem>>, vector<1x128xf32>
    %4 = vector.broadcast %3 : vector<1x128xf32> to vector<64x128xf32>
    %5 = arith.addf %2, %4 : vector<64x128xf32>
    %cst_5 = arith.constant 0.000000e+00 : f32
    %6 = vector.broadcast %cst_5 : f32 to vector<64x128xf32>
    %7 = arith.maximumf %5, %6 : vector<64x128xf32>
    %c0_6 = arith.constant 0 : index
    %c0_7 = arith.constant 0 : index
    %8 = vector.load %arg4[%c0_6, %c0_7] : memref<64x128xf32, #tpu.memory_space<vmem>>, vector<64x128xf32>
    tpu.vector_store %arg4[%c0_6, %c0_7], %7 {strides = array<i32>} : memref<64x128xf32, #tpu.memory_space<vmem>>, vector<64x128xf32>,
    return
  }
  func.func @transform_0(%arg0: i32) -> (i32, i32) {
    %c0_i32 = arith.constant 0 : i32
    %c0_i32_0 = arith.constant 0 : i32
    return %arg0, %c0_i32 : i32, i32
  }
  func.func @transform_1(%arg0: i32) -> (i32, i32) {
    %c0_i32 = arith.constant 0 : i32
    %c0_i32_0 = arith.constant 0 : i32
    %c0_i32_1 = arith.constant 0 : i32
    return %c0_i32, %c0_i32_0 : i32, i32
  }
  func.func @transform_2(%arg0: i32) -> (i32, i32) {
    %c0_i32 = arith.constant 0 : i32
    %c0_i32_0 = arith.constant 0 : i32
    %c0_i32_1 = arith.constant 0 : i32
    return %c0_i32, %c0_i32_0 : i32, i32
  }
  func.func @transform_3(%arg0: i32) -> (i32, i32) {
    %c0_i32 = arith.constant 0 : i32
    %c0_i32_0 = arith.constant 0 : i32
    return %arg0, %c0_i32 : i32, i32
  }
}

module attributes {stable_mosaic.version = 11 : i64} {
  func.func @_fused_conv_kernel(%arg0: i32, %arg1: memref<64x128xbf16, #tpu.memory_space<vmem>>, %arg2: memref<128x128xbf16, #tpu.memory_space<vmem>>, %arg3: memref<1x128xf32, #tpu.memory_space<vmem>>, %arg4: memref<64x128xf32, #tpu.memory_space<vmem>>) attributes {dimension_semantics = [#tpu.dimension_semantics<parallel>], iteration_bounds = array<i64: 2>, scalar_prefetch = 0 : i64, scratch_operands = 0 : i64, tpu.core_type = #tpu.core_type<tc>, window_params = [{transform_indices = @transform_0, window_bounds = array<i64: 64, 128>}, {pipeline_mode = #tpu.pipeline_mode<synchronous>, transform_indices = @transform_1, window_bounds = array<i64: 128, 128>}, {pipeline_mode = #tpu.pipeline_mode<synchronous>, transform_indices = @transform_2, window_bounds = array<i64: 1, 128>}, {transform_indices = @transform_3, window_bounds = array<i64: 64, 128>}]} {
    %c0 = arith.constant 0 : index
    %c0_0 = arith.constant 0 : index
    %0 = vector.load %arg1[%c0, %c0_0] : memref<64x128xbf16, #tpu.memory_space<vmem>>, vector<64x128xbf16>
    %c0_1 = arith.constant 0 : index
    %c0_2 = arith.constant 0 : index
    %1 = vector.load %arg2[%c0_1, %c0_2] : memref<128x128xbf16, #tpu.memory_space<vmem>>, vector<128x128xbf16>
    %cst = arith.constant dense<0.000000e+00> : vector<64x128xf32>
    %2 = tpu.matmul %0, %1, %cst {dimension_numbers = #tpu.dot_dimension_numbers<[1], [0], [0], [1], [0, 0, 1, 1], [], []>} : vector<64x128xbf16>, vector<128x128xbf16>, vector<64x128xf32> -> vector<64x128xf32>
    %c0_3 = arith.constant 0 : index
    %c0_4 = arith.constant 0 : index
    %3 = vector.load %arg3[%c0_3, %c0_4] : memref<1x128xf32, #tpu.memory_space<vmem>>, vector<1x128xf32>
    %4 = vector.broadcast %3 : vector<1x128xf32> to vector<64x128xf32>
    %5 = arith.addf %2, %4 : vector<64x128xf32>
    %c0_5 = arith.constant 0 : index
    %c0_6 = arith.constant 0 : index
    %6 = vector.load %arg4[%c0_5, %c0_6] : memref<64x128xf32, #tpu.memory_space<vmem>>, vector<64x128xf32>
    tpu.vector_store %arg4[%c0_5, %c0_6], %5 {strides = array<i32>} : memref<64x128xf32, #tpu.memory_space<vmem>>, vector<64x128xf32>,
    return
  }
  func.func @transform_0(%arg0: i32) -> (i32, i32) {
    %c0_i32 = arith.constant 0 : i32
    %c0_i32_0 = arith.constant 0 : i32
    return %arg0, %c0_i32 : i32, i32
  }
  func.func @transform_1(%arg0: i32) -> (i32, i32) {
    %c0_i32 = arith.constant 0 : i32
    %c0_i32_0 = arith.constant 0 : i32
    %c0_i32_1 = arith.constant 0 : i32
    return %c0_i32, %c0_i32_0 : i32, i32
  }
  func.func @transform_2(%arg0: i32) -> (i32, i32) {
    %c0_i32 = arith.constant 0 : i32
    %c0_i32_0 = arith.constant 0 : i32
    %c0_i32_1 = arith.constant 0 : i32
    return %c0_i32, %c0_i32_0 : i32, i32
  }
  func.func @transform_3(%arg0: i32) -> (i32, i32) {
    %c0_i32 = arith.constant 0 : i32
    %c0_i32_0 = arith.constant 0 : i32
    return %arg0, %c0_i32 : i32, i32
  }
}

module attributes {stable_mosaic.version = 11 : i64} {
  func.func @_fused_conv_kernel(%arg0: i32, %arg1: memref<64x384xbf16, #tpu.memory_space<vmem>>, %arg2: memref<384x128xbf16, #tpu.memory_space<vmem>>, %arg3: memref<1x128xf32, #tpu.memory_space<vmem>>, %arg4: memref<64x128xf32, #tpu.memory_space<vmem>>, %arg5: memref<64x128xf32, #tpu.memory_space<vmem>>) attributes {dimension_semantics = [#tpu.dimension_semantics<parallel>], iteration_bounds = array<i64: 2>, scalar_prefetch = 0 : i64, scratch_operands = 0 : i64, tpu.core_type = #tpu.core_type<tc>, window_params = [{transform_indices = @transform_0, window_bounds = array<i64: 64, 384>}, {pipeline_mode = #tpu.pipeline_mode<synchronous>, transform_indices = @transform_1, window_bounds = array<i64: 384, 128>}, {pipeline_mode = #tpu.pipeline_mode<synchronous>, transform_indices = @transform_2, window_bounds = array<i64: 1, 128>}, {transform_indices = @transform_3, window_bounds = array<i64: 64, 128>}, {transform_indices = @transform_4, window_bounds = array<i64: 64, 128>}]} {
    %c0 = arith.constant 0 : index
    %c0_0 = arith.constant 0 : index
    %0 = vector.load %arg1[%c0, %c0_0] : memref<64x384xbf16, #tpu.memory_space<vmem>>, vector<64x384xbf16>
    %c0_1 = arith.constant 0 : index
    %c0_2 = arith.constant 0 : index
    %1 = vector.load %arg2[%c0_1, %c0_2] : memref<384x128xbf16, #tpu.memory_space<vmem>>, vector<384x128xbf16>
    %cst = arith.constant dense<0.000000e+00> : vector<64x128xf32>
    %2 = tpu.matmul %0, %1, %cst {dimension_numbers = #tpu.dot_dimension_numbers<[1], [0], [0], [1], [0, 0, 1, 1], [], []>} : vector<64x384xbf16>, vector<384x128xbf16>, vector<64x128xf32> -> vector<64x128xf32>
    %c0_3 = arith.constant 0 : index
    %c0_4 = arith.constant 0 : index
    %3 = vector.load %arg3[%c0_3, %c0_4] : memref<1x128xf32, #tpu.memory_space<vmem>>, vector<1x128xf32>
    %4 = vector.broadcast %3 : vector<1x128xf32> to vector<64x128xf32>
    %5 = arith.addf %2, %4 : vector<64x128xf32>
    %cst_5 = arith.constant 0.000000e+00 : f32
    %6 = vector.broadcast %cst_5 : f32 to vector<64x128xf32>
    %7 = arith.maximumf %5, %6 : vector<64x128xf32>
    %c0_6 = arith.constant 0 : index
    %c0_7 = arith.constant 0 : index
    %8 = vector.load %arg4[%c0_6, %c0_7] : memref<64x128xf32, #tpu.memory_space<vmem>>, vector<64x128xf32>
    %9 = arith.addf %7, %8 : vector<64x128xf32>
    %c0_8 = arith.constant 0 : index
    %c0_9 = arith.constant 0 : index
    %10 = vector.load %arg5[%c0_8, %c0_9] : memref<64x128xf32, #tpu.memory_space<vmem>>, vector<64x128xf32>
    tpu.vector_store %arg5[%c0_8, %c0_9], %9 {strides = array<i32>} : memref<64x128xf32, #tpu.memory_space<vmem>>, vector<64x128xf32>,
    return
  }
  func.func @transform_0(%arg0: i32) -> (i32, i32) {
    %c0_i32 = arith.constant 0 : i32
    %c0_i32_0 = arith.constant 0 : i32
    return %arg0, %c0_i32 : i32, i32
  }
  func.func @transform_1(%arg0: i32) -> (i32, i32) {
    %c0_i32 = arith.constant 0 : i32
    %c0_i32_0 = arith.constant 0 : i32
    %c0_i32_1 = arith.constant 0 : i32
    return %c0_i32, %c0_i32_0 : i32, i32
  }
  func.func @transform_2(%arg0: i32) -> (i32, i32) {
    %c0_i32 = arith.constant 0 : i32
    %c0_i32_0 = arith.constant 0 : i32
    %c0_i32_1 = arith.constant 0 : i32
    return %c0_i32, %c0_i32_0 : i32, i32
  }
  func.func @transform_3(%arg0: i32) -> (i32, i32) {
    %c0_i32 = arith.constant 0 : i32
    %c0_i32_0 = arith.constant 0 : i32
    return %arg0, %c0_i32 : i32, i32
  }
  func.func @transform_4(%arg0: i32) -> (i32, i32) {
    %c0_i32 = arith.constant 0 : i32
    %c0_i32_0 = arith.constant 0 : i32
    return %arg0, %c0_i32 : i32, i32
  }
}

module attributes {stable_mosaic.version = 11 : i64} {
  func.func @_pool_kernel(%arg0: i32, %arg1: memref<4x16x128xf32, #tpu.memory_space<vmem>>, %arg2: memref<16x128xf32, #tpu.memory_space<vmem>>) attributes {dimension_semantics = [#tpu.dimension_semantics<parallel>], iteration_bounds = array<i64: 2>, scalar_prefetch = 0 : i64, scratch_operands = 0 : i64, tpu.core_type = #tpu.core_type<tc>, window_params = [{transform_indices = @transform_0, window_bounds = array<i64: 4, 16, 128>}, {transform_indices = @transform_1, window_bounds = array<i64: 16, 128>}]} {
    %c0 = arith.constant 0 : index
    %c0_0 = arith.constant 0 : index
    %c0_1 = arith.constant 0 : index
    %0 = vector.load %arg1[%c0, %c0_0, %c0_1] : memref<4x16x128xf32, #tpu.memory_space<vmem>>, vector<1x16x128xf32>
    %1 = vector.shape_cast %0 : vector<1x16x128xf32> to vector<16x128xf32>
    %c1 = arith.constant 1 : index
    %c0_2 = arith.constant 0 : index
    %c0_3 = arith.constant 0 : index
    %2 = vector.load %arg1[%c1, %c0_2, %c0_3] : memref<4x16x128xf32, #tpu.memory_space<vmem>>, vector<1x16x128xf32>
    %3 = vector.shape_cast %2 : vector<1x16x128xf32> to vector<16x128xf32>
    %4 = arith.maximumf %1, %3 : vector<16x128xf32>
    %c2 = arith.constant 2 : index
    %c0_4 = arith.constant 0 : index
    %c0_5 = arith.constant 0 : index
    %5 = vector.load %arg1[%c2, %c0_4, %c0_5] : memref<4x16x128xf32, #tpu.memory_space<vmem>>, vector<1x16x128xf32>
    %6 = vector.shape_cast %5 : vector<1x16x128xf32> to vector<16x128xf32>
    %7 = arith.maximumf %4, %6 : vector<16x128xf32>
    %c3 = arith.constant 3 : index
    %c0_6 = arith.constant 0 : index
    %c0_7 = arith.constant 0 : index
    %8 = vector.load %arg1[%c3, %c0_6, %c0_7] : memref<4x16x128xf32, #tpu.memory_space<vmem>>, vector<1x16x128xf32>
    %9 = vector.shape_cast %8 : vector<1x16x128xf32> to vector<16x128xf32>
    %10 = arith.maximumf %7, %9 : vector<16x128xf32>
    %c0_8 = arith.constant 0 : index
    %c0_9 = arith.constant 0 : index
    %11 = vector.load %arg2[%c0_8, %c0_9] : memref<16x128xf32, #tpu.memory_space<vmem>>, vector<16x128xf32>
    tpu.vector_store %arg2[%c0_8, %c0_9], %10 {strides = array<i32>} : memref<16x128xf32, #tpu.memory_space<vmem>>, vector<16x128xf32>,
    return
  }
  func.func @transform_0(%arg0: i32) -> (i32, i32, i32) {
    %c0_i32 = arith.constant 0 : i32
    %c0_i32_0 = arith.constant 0 : i32
    %c0_i32_1 = arith.constant 0 : i32
    return %c0_i32, %arg0, %c0_i32_0 : i32, i32, i32
  }
  func.func @transform_1(%arg0: i32) -> (i32, i32) {
    %c0_i32 = arith.constant 0 : i32
    %c0_i32_0 = arith.constant 0 : i32
    return %arg0, %c0_i32 : i32, i32
  }
}

module attributes {stable_mosaic.version = 11 : i64} {
  func.func @_fused_conv_kernel(%arg0: i32, %arg1: memref<16x384xbf16, #tpu.memory_space<vmem>>, %arg2: memref<384x128xbf16, #tpu.memory_space<vmem>>, %arg3: memref<1x128xf32, #tpu.memory_space<vmem>>, %arg4: memref<16x128xf32, #tpu.memory_space<vmem>>) attributes {dimension_semantics = [#tpu.dimension_semantics<parallel>], iteration_bounds = array<i64: 2>, scalar_prefetch = 0 : i64, scratch_operands = 0 : i64, tpu.core_type = #tpu.core_type<tc>, window_params = [{transform_indices = @transform_0, window_bounds = array<i64: 16, 384>}, {pipeline_mode = #tpu.pipeline_mode<synchronous>, transform_indices = @transform_1, window_bounds = array<i64: 384, 128>}, {pipeline_mode = #tpu.pipeline_mode<synchronous>, transform_indices = @transform_2, window_bounds = array<i64: 1, 128>}, {transform_indices = @transform_3, window_bounds = array<i64: 16, 128>}]} {
    %c0 = arith.constant 0 : index
    %c0_0 = arith.constant 0 : index
    %0 = vector.load %arg1[%c0, %c0_0] : memref<16x384xbf16, #tpu.memory_space<vmem>>, vector<16x384xbf16>
    %c0_1 = arith.constant 0 : index
    %c0_2 = arith.constant 0 : index
    %1 = vector.load %arg2[%c0_1, %c0_2] : memref<384x128xbf16, #tpu.memory_space<vmem>>, vector<384x128xbf16>
    %cst = arith.constant dense<0.000000e+00> : vector<16x128xf32>
    %2 = tpu.matmul %0, %1, %cst {dimension_numbers = #tpu.dot_dimension_numbers<[1], [0], [0], [1], [0, 0, 1, 1], [], []>} : vector<16x384xbf16>, vector<384x128xbf16>, vector<16x128xf32> -> vector<16x128xf32>
    %c0_3 = arith.constant 0 : index
    %c0_4 = arith.constant 0 : index
    %3 = vector.load %arg3[%c0_3, %c0_4] : memref<1x128xf32, #tpu.memory_space<vmem>>, vector<1x128xf32>
    %4 = vector.broadcast %3 : vector<1x128xf32> to vector<16x128xf32>
    %5 = arith.addf %2, %4 : vector<16x128xf32>
    %cst_5 = arith.constant 0.000000e+00 : f32
    %6 = vector.broadcast %cst_5 : f32 to vector<16x128xf32>
    %7 = arith.maximumf %5, %6 : vector<16x128xf32>
    %c0_6 = arith.constant 0 : index
    %c0_7 = arith.constant 0 : index
    %8 = vector.load %arg4[%c0_6, %c0_7] : memref<16x128xf32, #tpu.memory_space<vmem>>, vector<16x128xf32>
    tpu.vector_store %arg4[%c0_6, %c0_7], %7 {strides = array<i32>} : memref<16x128xf32, #tpu.memory_space<vmem>>, vector<16x128xf32>,
    return
  }
  func.func @transform_0(%arg0: i32) -> (i32, i32) {
    %c0_i32 = arith.constant 0 : i32
    %c0_i32_0 = arith.constant 0 : i32
    return %arg0, %c0_i32 : i32, i32
  }
  func.func @transform_1(%arg0: i32) -> (i32, i32) {
    %c0_i32 = arith.constant 0 : i32
    %c0_i32_0 = arith.constant 0 : i32
    %c0_i32_1 = arith.constant 0 : i32
    return %c0_i32, %c0_i32_0 : i32, i32
  }
  func.func @transform_2(%arg0: i32) -> (i32, i32) {
    %c0_i32 = arith.constant 0 : i32
    %c0_i32_0 = arith.constant 0 : i32
    %c0_i32_1 = arith.constant 0 : i32
    return %c0_i32, %c0_i32_0 : i32, i32
  }
  func.func @transform_3(%arg0: i32) -> (i32, i32) {
    %c0_i32 = arith.constant 0 : i32
    %c0_i32_0 = arith.constant 0 : i32
    return %arg0, %c0_i32 : i32, i32
  }
}

module attributes {stable_mosaic.version = 11 : i64} {
  func.func @_fused_conv_kernel(%arg0: i32, %arg1: memref<16x128xbf16, #tpu.memory_space<vmem>>, %arg2: memref<128x128xbf16, #tpu.memory_space<vmem>>, %arg3: memref<1x128xf32, #tpu.memory_space<vmem>>, %arg4: memref<16x128xf32, #tpu.memory_space<vmem>>) attributes {dimension_semantics = [#tpu.dimension_semantics<parallel>], iteration_bounds = array<i64: 2>, scalar_prefetch = 0 : i64, scratch_operands = 0 : i64, tpu.core_type = #tpu.core_type<tc>, window_params = [{transform_indices = @transform_0, window_bounds = array<i64: 16, 128>}, {pipeline_mode = #tpu.pipeline_mode<synchronous>, transform_indices = @transform_1, window_bounds = array<i64: 128, 128>}, {pipeline_mode = #tpu.pipeline_mode<synchronous>, transform_indices = @transform_2, window_bounds = array<i64: 1, 128>}, {transform_indices = @transform_3, window_bounds = array<i64: 16, 128>}]} {
    %c0 = arith.constant 0 : index
    %c0_0 = arith.constant 0 : index
    %0 = vector.load %arg1[%c0, %c0_0] : memref<16x128xbf16, #tpu.memory_space<vmem>>, vector<16x128xbf16>
    %c0_1 = arith.constant 0 : index
    %c0_2 = arith.constant 0 : index
    %1 = vector.load %arg2[%c0_1, %c0_2] : memref<128x128xbf16, #tpu.memory_space<vmem>>, vector<128x128xbf16>
    %cst = arith.constant dense<0.000000e+00> : vector<16x128xf32>
    %2 = tpu.matmul %0, %1, %cst {dimension_numbers = #tpu.dot_dimension_numbers<[1], [0], [0], [1], [0, 0, 1, 1], [], []>} : vector<16x128xbf16>, vector<128x128xbf16>, vector<16x128xf32> -> vector<16x128xf32>
    %c0_3 = arith.constant 0 : index
    %c0_4 = arith.constant 0 : index
    %3 = vector.load %arg3[%c0_3, %c0_4] : memref<1x128xf32, #tpu.memory_space<vmem>>, vector<1x128xf32>
    %4 = vector.broadcast %3 : vector<1x128xf32> to vector<16x128xf32>
    %5 = arith.addf %2, %4 : vector<16x128xf32>
    %c0_5 = arith.constant 0 : index
    %c0_6 = arith.constant 0 : index
    %6 = vector.load %arg4[%c0_5, %c0_6] : memref<16x128xf32, #tpu.memory_space<vmem>>, vector<16x128xf32>
    tpu.vector_store %arg4[%c0_5, %c0_6], %5 {strides = array<i32>} : memref<16x128xf32, #tpu.memory_space<vmem>>, vector<16x128xf32>,
    return
  }
  func.func @transform_0(%arg0: i32) -> (i32, i32) {
    %c0_i32 = arith.constant 0 : i32
    %c0_i32_0 = arith.constant 0 : i32
    return %arg0, %c0_i32 : i32, i32
  }
  func.func @transform_1(%arg0: i32) -> (i32, i32) {
    %c0_i32 = arith.constant 0 : i32
    %c0_i32_0 = arith.constant 0 : i32
    %c0_i32_1 = arith.constant 0 : i32
    return %c0_i32, %c0_i32_0 : i32, i32
  }
  func.func @transform_2(%arg0: i32) -> (i32, i32) {
    %c0_i32 = arith.constant 0 : i32
    %c0_i32_0 = arith.constant 0 : i32
    %c0_i32_1 = arith.constant 0 : i32
    return %c0_i32, %c0_i32_0 : i32, i32
  }
  func.func @transform_3(%arg0: i32) -> (i32, i32) {
    %c0_i32 = arith.constant 0 : i32
    %c0_i32_0 = arith.constant 0 : i32
    return %arg0, %c0_i32 : i32, i32
  }
}

module attributes {stable_mosaic.version = 11 : i64} {
  func.func @_fused_conv_kernel(%arg0: i32, %arg1: memref<16x512xbf16, #tpu.memory_space<vmem>>, %arg2: memref<512x128xbf16, #tpu.memory_space<vmem>>, %arg3: memref<1x128xf32, #tpu.memory_space<vmem>>, %arg4: memref<16x128xf32, #tpu.memory_space<vmem>>, %arg5: memref<16x128xf32, #tpu.memory_space<vmem>>) attributes {dimension_semantics = [#tpu.dimension_semantics<parallel>], iteration_bounds = array<i64: 2>, scalar_prefetch = 0 : i64, scratch_operands = 0 : i64, tpu.core_type = #tpu.core_type<tc>, window_params = [{transform_indices = @transform_0, window_bounds = array<i64: 16, 512>}, {pipeline_mode = #tpu.pipeline_mode<synchronous>, transform_indices = @transform_1, window_bounds = array<i64: 512, 128>}, {pipeline_mode = #tpu.pipeline_mode<synchronous>, transform_indices = @transform_2, window_bounds = array<i64: 1, 128>}, {transform_indices = @transform_3, window_bounds = array<i64: 16, 128>}, {transform_indices = @transform_4, window_bounds = array<i64: 16, 128>}]} {
    %c0 = arith.constant 0 : index
    %c0_0 = arith.constant 0 : index
    %0 = vector.load %arg1[%c0, %c0_0] : memref<16x512xbf16, #tpu.memory_space<vmem>>, vector<16x512xbf16>
    %c0_1 = arith.constant 0 : index
    %c0_2 = arith.constant 0 : index
    %1 = vector.load %arg2[%c0_1, %c0_2] : memref<512x128xbf16, #tpu.memory_space<vmem>>, vector<512x128xbf16>
    %cst = arith.constant dense<0.000000e+00> : vector<16x128xf32>
    %2 = tpu.matmul %0, %1, %cst {dimension_numbers = #tpu.dot_dimension_numbers<[1], [0], [0], [1], [0, 0, 1, 1], [], []>} : vector<16x512xbf16>, vector<512x128xbf16>, vector<16x128xf32> -> vector<16x128xf32>
    %c0_3 = arith.constant 0 : index
    %c0_4 = arith.constant 0 : index
    %3 = vector.load %arg3[%c0_3, %c0_4] : memref<1x128xf32, #tpu.memory_space<vmem>>, vector<1x128xf32>
    %4 = vector.broadcast %3 : vector<1x128xf32> to vector<16x128xf32>
    %5 = arith.addf %2, %4 : vector<16x128xf32>
    %cst_5 = arith.constant 0.000000e+00 : f32
    %6 = vector.broadcast %cst_5 : f32 to vector<16x128xf32>
    %7 = arith.maximumf %5, %6 : vector<16x128xf32>
    %c0_6 = arith.constant 0 : index
    %c0_7 = arith.constant 0 : index
    %8 = vector.load %arg4[%c0_6, %c0_7] : memref<16x128xf32, #tpu.memory_space<vmem>>, vector<16x128xf32>
    %9 = arith.addf %7, %8 : vector<16x128xf32>
    %c0_8 = arith.constant 0 : index
    %c0_9 = arith.constant 0 : index
    %10 = vector.load %arg5[%c0_8, %c0_9] : memref<16x128xf32, #tpu.memory_space<vmem>>, vector<16x128xf32>
    tpu.vector_store %arg5[%c0_8, %c0_9], %9 {strides = array<i32>} : memref<16x128xf32, #tpu.memory_space<vmem>>, vector<16x128xf32>,
    return
  }
  func.func @transform_0(%arg0: i32) -> (i32, i32) {
    %c0_i32 = arith.constant 0 : i32
    %c0_i32_0 = arith.constant 0 : i32
    return %arg0, %c0_i32 : i32, i32
  }
  func.func @transform_1(%arg0: i32) -> (i32, i32) {
    %c0_i32 = arith.constant 0 : i32
    %c0_i32_0 = arith.constant 0 : i32
    %c0_i32_1 = arith.constant 0 : i32
    return %c0_i32, %c0_i32_0 : i32, i32
  }
  func.func @transform_2(%arg0: i32) -> (i32, i32) {
    %c0_i32 = arith.constant 0 : i32
    %c0_i32_0 = arith.constant 0 : i32
    %c0_i32_1 = arith.constant 0 : i32
    return %c0_i32, %c0_i32_0 : i32, i32
  }
  func.func @transform_3(%arg0: i32) -> (i32, i32) {
    %c0_i32 = arith.constant 0 : i32
    %c0_i32_0 = arith.constant 0 : i32
    return %arg0, %c0_i32 : i32, i32
  }
  func.func @transform_4(%arg0: i32) -> (i32, i32) {
    %c0_i32 = arith.constant 0 : i32
    %c0_i32_0 = arith.constant 0 : i32
    return %arg0, %c0_i32 : i32, i32
  }
}

module attributes {stable_mosaic.version = 11 : i64} {
  func.func @_pool_kernel(%arg0: i32, %arg1: memref<4x8x128xf32, #tpu.memory_space<vmem>>, %arg2: memref<8x128xf32, #tpu.memory_space<vmem>>) attributes {dimension_semantics = [#tpu.dimension_semantics<parallel>], iteration_bounds = array<i64: 1>, scalar_prefetch = 0 : i64, scratch_operands = 0 : i64, tpu.core_type = #tpu.core_type<tc>, window_params = [{transform_indices = @transform_0, window_bounds = array<i64: 4, 8, 128>}, {transform_indices = @transform_1, window_bounds = array<i64: 8, 128>}]} {
    %c0 = arith.constant 0 : index
    %c0_0 = arith.constant 0 : index
    %c0_1 = arith.constant 0 : index
    %0 = vector.load %arg1[%c0, %c0_0, %c0_1] : memref<4x8x128xf32, #tpu.memory_space<vmem>>, vector<1x8x128xf32>
    %1 = vector.shape_cast %0 : vector<1x8x128xf32> to vector<8x128xf32>
    %c1 = arith.constant 1 : index
    %c0_2 = arith.constant 0 : index
    %c0_3 = arith.constant 0 : index
    %2 = vector.load %arg1[%c1, %c0_2, %c0_3] : memref<4x8x128xf32, #tpu.memory_space<vmem>>, vector<1x8x128xf32>
    %3 = vector.shape_cast %2 : vector<1x8x128xf32> to vector<8x128xf32>
    %4 = arith.maximumf %1, %3 : vector<8x128xf32>
    %c2 = arith.constant 2 : index
    %c0_4 = arith.constant 0 : index
    %c0_5 = arith.constant 0 : index
    %5 = vector.load %arg1[%c2, %c0_4, %c0_5] : memref<4x8x128xf32, #tpu.memory_space<vmem>>, vector<1x8x128xf32>
    %6 = vector.shape_cast %5 : vector<1x8x128xf32> to vector<8x128xf32>
    %7 = arith.maximumf %4, %6 : vector<8x128xf32>
    %c3 = arith.constant 3 : index
    %c0_6 = arith.constant 0 : index
    %c0_7 = arith.constant 0 : index
    %8 = vector.load %arg1[%c3, %c0_6, %c0_7] : memref<4x8x128xf32, #tpu.memory_space<vmem>>, vector<1x8x128xf32>
    %9 = vector.shape_cast %8 : vector<1x8x128xf32> to vector<8x128xf32>
    %10 = arith.maximumf %7, %9 : vector<8x128xf32>
    %c0_8 = arith.constant 0 : index
    %c0_9 = arith.constant 0 : index
    %11 = vector.load %arg2[%c0_8, %c0_9] : memref<8x128xf32, #tpu.memory_space<vmem>>, vector<8x128xf32>
    tpu.vector_store %arg2[%c0_8, %c0_9], %10 {strides = array<i32>} : memref<8x128xf32, #tpu.memory_space<vmem>>, vector<8x128xf32>,
    return
  }
  func.func @transform_0(%arg0: i32) -> (i32, i32, i32) {
    %c0_i32 = arith.constant 0 : i32
    %c0_i32_0 = arith.constant 0 : i32
    %c0_i32_1 = arith.constant 0 : i32
    return %c0_i32, %arg0, %c0_i32_0 : i32, i32, i32
  }
  func.func @transform_1(%arg0: i32) -> (i32, i32) {
    %c0_i32 = arith.constant 0 : i32
    %c0_i32_0 = arith.constant 0 : i32
    return %arg0, %c0_i32 : i32, i32
  }
}

module attributes {stable_mosaic.version = 11 : i64} {
  func.func @_fused_conv_kernel(%arg0: i32, %arg1: memref<8x512xbf16, #tpu.memory_space<vmem>>, %arg2: memref<512x128xbf16, #tpu.memory_space<vmem>>, %arg3: memref<1x128xf32, #tpu.memory_space<vmem>>, %arg4: memref<8x128xf32, #tpu.memory_space<vmem>>) attributes {dimension_semantics = [#tpu.dimension_semantics<parallel>], iteration_bounds = array<i64: 1>, scalar_prefetch = 0 : i64, scratch_operands = 0 : i64, tpu.core_type = #tpu.core_type<tc>, window_params = [{transform_indices = @transform_0, window_bounds = array<i64: 8, 512>}, {pipeline_mode = #tpu.pipeline_mode<synchronous>, transform_indices = @transform_1, window_bounds = array<i64: 512, 128>}, {pipeline_mode = #tpu.pipeline_mode<synchronous>, transform_indices = @transform_2, window_bounds = array<i64: 1, 128>}, {transform_indices = @transform_3, window_bounds = array<i64: 8, 128>}]} {
    %c0 = arith.constant 0 : index
    %c0_0 = arith.constant 0 : index
    %0 = vector.load %arg1[%c0, %c0_0] : memref<8x512xbf16, #tpu.memory_space<vmem>>, vector<8x512xbf16>
    %c0_1 = arith.constant 0 : index
    %c0_2 = arith.constant 0 : index
    %1 = vector.load %arg2[%c0_1, %c0_2] : memref<512x128xbf16, #tpu.memory_space<vmem>>, vector<512x128xbf16>
    %cst = arith.constant dense<0.000000e+00> : vector<8x128xf32>
    %2 = tpu.matmul %0, %1, %cst {dimension_numbers = #tpu.dot_dimension_numbers<[1], [0], [0], [1], [0, 0, 1, 1], [], []>} : vector<8x512xbf16>, vector<512x128xbf16>, vector<8x128xf32> -> vector<8x128xf32>
    %c0_3 = arith.constant 0 : index
    %c0_4 = arith.constant 0 : index
    %3 = vector.load %arg3[%c0_3, %c0_4] : memref<1x128xf32, #tpu.memory_space<vmem>>, vector<1x128xf32>
    %4 = vector.broadcast %3 : vector<1x128xf32> to vector<8x128xf32>
    %5 = arith.addf %2, %4 : vector<8x128xf32>
    %cst_5 = arith.constant 0.000000e+00 : f32
    %6 = vector.broadcast %cst_5 : f32 to vector<8x128xf32>
    %7 = arith.maximumf %5, %6 : vector<8x128xf32>
    %c0_6 = arith.constant 0 : index
    %c0_7 = arith.constant 0 : index
    %8 = vector.load %arg4[%c0_6, %c0_7] : memref<8x128xf32, #tpu.memory_space<vmem>>, vector<8x128xf32>
    tpu.vector_store %arg4[%c0_6, %c0_7], %7 {strides = array<i32>} : memref<8x128xf32, #tpu.memory_space<vmem>>, vector<8x128xf32>,
    return
  }
  func.func @transform_0(%arg0: i32) -> (i32, i32) {
    %c0_i32 = arith.constant 0 : i32
    %c0_i32_0 = arith.constant 0 : i32
    return %arg0, %c0_i32 : i32, i32
  }
  func.func @transform_1(%arg0: i32) -> (i32, i32) {
    %c0_i32 = arith.constant 0 : i32
    %c0_i32_0 = arith.constant 0 : i32
    %c0_i32_1 = arith.constant 0 : i32
    return %c0_i32, %c0_i32_0 : i32, i32
  }
  func.func @transform_2(%arg0: i32) -> (i32, i32) {
    %c0_i32 = arith.constant 0 : i32
    %c0_i32_0 = arith.constant 0 : i32
    %c0_i32_1 = arith.constant 0 : i32
    return %c0_i32, %c0_i32_0 : i32, i32
  }
  func.func @transform_3(%arg0: i32) -> (i32, i32) {
    %c0_i32 = arith.constant 0 : i32
    %c0_i32_0 = arith.constant 0 : i32
    return %arg0, %c0_i32 : i32, i32
  }
}

module attributes {stable_mosaic.version = 11 : i64} {
  func.func @_fused_conv_kernel(%arg0: i32, %arg1: memref<8x128xbf16, #tpu.memory_space<vmem>>, %arg2: memref<128x128xbf16, #tpu.memory_space<vmem>>, %arg3: memref<1x128xf32, #tpu.memory_space<vmem>>, %arg4: memref<8x128xf32, #tpu.memory_space<vmem>>) attributes {dimension_semantics = [#tpu.dimension_semantics<parallel>], iteration_bounds = array<i64: 1>, scalar_prefetch = 0 : i64, scratch_operands = 0 : i64, tpu.core_type = #tpu.core_type<tc>, window_params = [{transform_indices = @transform_0, window_bounds = array<i64: 8, 128>}, {pipeline_mode = #tpu.pipeline_mode<synchronous>, transform_indices = @transform_1, window_bounds = array<i64: 128, 128>}, {pipeline_mode = #tpu.pipeline_mode<synchronous>, transform_indices = @transform_2, window_bounds = array<i64: 1, 128>}, {transform_indices = @transform_3, window_bounds = array<i64: 8, 128>}]} {
    %c0 = arith.constant 0 : index
    %c0_0 = arith.constant 0 : index
    %0 = vector.load %arg1[%c0, %c0_0] : memref<8x128xbf16, #tpu.memory_space<vmem>>, vector<8x128xbf16>
    %c0_1 = arith.constant 0 : index
    %c0_2 = arith.constant 0 : index
    %1 = vector.load %arg2[%c0_1, %c0_2] : memref<128x128xbf16, #tpu.memory_space<vmem>>, vector<128x128xbf16>
    %cst = arith.constant dense<0.000000e+00> : vector<8x128xf32>
    %2 = tpu.matmul %0, %1, %cst {dimension_numbers = #tpu.dot_dimension_numbers<[1], [0], [0], [1], [0, 0, 1, 1], [], []>} : vector<8x128xbf16>, vector<128x128xbf16>, vector<8x128xf32> -> vector<8x128xf32>
    %c0_3 = arith.constant 0 : index
    %c0_4 = arith.constant 0 : index
    %3 = vector.load %arg3[%c0_3, %c0_4] : memref<1x128xf32, #tpu.memory_space<vmem>>, vector<1x128xf32>
    %4 = vector.broadcast %3 : vector<1x128xf32> to vector<8x128xf32>
    %5 = arith.addf %2, %4 : vector<8x128xf32>
    %c0_5 = arith.constant 0 : index
    %c0_6 = arith.constant 0 : index
    %6 = vector.load %arg4[%c0_5, %c0_6] : memref<8x128xf32, #tpu.memory_space<vmem>>, vector<8x128xf32>
    tpu.vector_store %arg4[%c0_5, %c0_6], %5 {strides = array<i32>} : memref<8x128xf32, #tpu.memory_space<vmem>>, vector<8x128xf32>,
    return
  }
  func.func @transform_0(%arg0: i32) -> (i32, i32) {
    %c0_i32 = arith.constant 0 : i32
    %c0_i32_0 = arith.constant 0 : i32
    return %arg0, %c0_i32 : i32, i32
  }
  func.func @transform_1(%arg0: i32) -> (i32, i32) {
    %c0_i32 = arith.constant 0 : i32
    %c0_i32_0 = arith.constant 0 : i32
    %c0_i32_1 = arith.constant 0 : i32
    return %c0_i32, %c0_i32_0 : i32, i32
  }
  func.func @transform_2(%arg0: i32) -> (i32, i32) {
    %c0_i32 = arith.constant 0 : i32
    %c0_i32_0 = arith.constant 0 : i32
    %c0_i32_1 = arith.constant 0 : i32
    return %c0_i32, %c0_i32_0 : i32, i32
  }
  func.func @transform_3(%arg0: i32) -> (i32, i32) {
    %c0_i32 = arith.constant 0 : i32
    %c0_i32_0 = arith.constant 0 : i32
    return %arg0, %c0_i32 : i32, i32
  }
}

module attributes {stable_mosaic.version = 11 : i64} {
  func.func @_fused_conv_kernel(%arg0: i32, %arg1: memref<8x640xbf16, #tpu.memory_space<vmem>>, %arg2: memref<640x128xbf16, #tpu.memory_space<vmem>>, %arg3: memref<1x128xf32, #tpu.memory_space<vmem>>, %arg4: memref<8x128xf32, #tpu.memory_space<vmem>>, %arg5: memref<8x128xf32, #tpu.memory_space<vmem>>) attributes {dimension_semantics = [#tpu.dimension_semantics<parallel>], iteration_bounds = array<i64: 1>, scalar_prefetch = 0 : i64, scratch_operands = 0 : i64, tpu.core_type = #tpu.core_type<tc>, window_params = [{transform_indices = @transform_0, window_bounds = array<i64: 8, 640>}, {pipeline_mode = #tpu.pipeline_mode<synchronous>, transform_indices = @transform_1, window_bounds = array<i64: 640, 128>}, {pipeline_mode = #tpu.pipeline_mode<synchronous>, transform_indices = @transform_2, window_bounds = array<i64: 1, 128>}, {transform_indices = @transform_3, window_bounds = array<i64: 8, 128>}, {transform_indices = @transform_4, window_bounds = array<i64: 8, 128>}]} {
    %c0 = arith.constant 0 : index
    %c0_0 = arith.constant 0 : index
    %0 = vector.load %arg1[%c0, %c0_0] : memref<8x640xbf16, #tpu.memory_space<vmem>>, vector<8x640xbf16>
    %c0_1 = arith.constant 0 : index
    %c0_2 = arith.constant 0 : index
    %1 = vector.load %arg2[%c0_1, %c0_2] : memref<640x128xbf16, #tpu.memory_space<vmem>>, vector<640x128xbf16>
    %cst = arith.constant dense<0.000000e+00> : vector<8x128xf32>
    %2 = tpu.matmul %0, %1, %cst {dimension_numbers = #tpu.dot_dimension_numbers<[1], [0], [0], [1], [0, 0, 1, 1], [], []>} : vector<8x640xbf16>, vector<640x128xbf16>, vector<8x128xf32> -> vector<8x128xf32>
    %c0_3 = arith.constant 0 : index
    %c0_4 = arith.constant 0 : index
    %3 = vector.load %arg3[%c0_3, %c0_4] : memref<1x128xf32, #tpu.memory_space<vmem>>, vector<1x128xf32>
    %4 = vector.broadcast %3 : vector<1x128xf32> to vector<8x128xf32>
    %5 = arith.addf %2, %4 : vector<8x128xf32>
    %cst_5 = arith.constant 0.000000e+00 : f32
    %6 = vector.broadcast %cst_5 : f32 to vector<8x128xf32>
    %7 = arith.maximumf %5, %6 : vector<8x128xf32>
    %c0_6 = arith.constant 0 : index
    %c0_7 = arith.constant 0 : index
    %8 = vector.load %arg4[%c0_6, %c0_7] : memref<8x128xf32, #tpu.memory_space<vmem>>, vector<8x128xf32>
    %9 = arith.addf %7, %8 : vector<8x128xf32>
    %c0_8 = arith.constant 0 : index
    %c0_9 = arith.constant 0 : index
    %10 = vector.load %arg5[%c0_8, %c0_9] : memref<8x128xf32, #tpu.memory_space<vmem>>, vector<8x128xf32>
    tpu.vector_store %arg5[%c0_8, %c0_9], %9 {strides = array<i32>} : memref<8x128xf32, #tpu.memory_space<vmem>>, vector<8x128xf32>,
    return
  }
  func.func @transform_0(%arg0: i32) -> (i32, i32) {
    %c0_i32 = arith.constant 0 : i32
    %c0_i32_0 = arith.constant 0 : i32
    return %arg0, %c0_i32 : i32, i32
  }
  func.func @transform_1(%arg0: i32) -> (i32, i32) {
    %c0_i32 = arith.constant 0 : i32
    %c0_i32_0 = arith.constant 0 : i32
    %c0_i32_1 = arith.constant 0 : i32
    return %c0_i32, %c0_i32_0 : i32, i32
  }
  func.func @transform_2(%arg0: i32) -> (i32, i32) {
    %c0_i32 = arith.constant 0 : i32
    %c0_i32_0 = arith.constant 0 : i32
    %c0_i32_1 = arith.constant 0 : i32
    return %c0_i32, %c0_i32_0 : i32, i32
  }
  func.func @transform_3(%arg0: i32) -> (i32, i32) {
    %c0_i32 = arith.constant 0 : i32
    %c0_i32_0 = arith.constant 0 : i32
    return %arg0, %c0_i32 : i32, i32
  }
  func.func @transform_4(%arg0: i32) -> (i32, i32) {
    %c0_i32 = arith.constant 0 : i32
    %c0_i32_0 = arith.constant 0 : i32
    return %arg0, %c0_i32 : i32, i32
  }
}

module attributes {stable_mosaic.version = 11 : i64} {
  func.func @_pool_kernel(%arg0: i32, %arg1: memref<4x8x128xf32, #tpu.memory_space<vmem>>, %arg2: memref<8x128xf32, #tpu.memory_space<vmem>>) attributes {dimension_semantics = [#tpu.dimension_semantics<parallel>], iteration_bounds = array<i64: 1>, scalar_prefetch = 0 : i64, scratch_operands = 0 : i64, tpu.core_type = #tpu.core_type<tc>, window_params = [{transform_indices = @transform_0, window_bounds = array<i64: 4, 8, 128>}, {transform_indices = @transform_1, window_bounds = array<i64: 8, 128>}]} {
    %c0 = arith.constant 0 : index
    %c0_0 = arith.constant 0 : index
    %c0_1 = arith.constant 0 : index
    %0 = vector.load %arg1[%c0, %c0_0, %c0_1] : memref<4x8x128xf32, #tpu.memory_space<vmem>>, vector<1x8x128xf32>
    %1 = vector.shape_cast %0 : vector<1x8x128xf32> to vector<8x128xf32>
    %c1 = arith.constant 1 : index
    %c0_2 = arith.constant 0 : index
    %c0_3 = arith.constant 0 : index
    %2 = vector.load %arg1[%c1, %c0_2, %c0_3] : memref<4x8x128xf32, #tpu.memory_space<vmem>>, vector<1x8x128xf32>
    %3 = vector.shape_cast %2 : vector<1x8x128xf32> to vector<8x128xf32>
    %4 = arith.addf %1, %3 : vector<8x128xf32>
    %c2 = arith.constant 2 : index
    %c0_4 = arith.constant 0 : index
    %c0_5 = arith.constant 0 : index
    %5 = vector.load %arg1[%c2, %c0_4, %c0_5] : memref<4x8x128xf32, #tpu.memory_space<vmem>>, vector<1x8x128xf32>
    %6 = vector.shape_cast %5 : vector<1x8x128xf32> to vector<8x128xf32>
    %7 = arith.addf %4, %6 : vector<8x128xf32>
    %c3 = arith.constant 3 : index
    %c0_6 = arith.constant 0 : index
    %c0_7 = arith.constant 0 : index
    %8 = vector.load %arg1[%c3, %c0_6, %c0_7] : memref<4x8x128xf32, #tpu.memory_space<vmem>>, vector<1x8x128xf32>
    %9 = vector.shape_cast %8 : vector<1x8x128xf32> to vector<8x128xf32>
    %10 = arith.addf %7, %9 : vector<8x128xf32>
    %cst = arith.constant 2.500000e-01 : f32
    %11 = vector.broadcast %cst : f32 to vector<8x128xf32>
    %12 = arith.mulf %10, %11 : vector<8x128xf32>
    %c0_8 = arith.constant 0 : index
    %c0_9 = arith.constant 0 : index
    %13 = vector.load %arg2[%c0_8, %c0_9] : memref<8x128xf32, #tpu.memory_space<vmem>>, vector<8x128xf32>
    tpu.vector_store %arg2[%c0_8, %c0_9], %12 {strides = array<i32>} : memref<8x128xf32, #tpu.memory_space<vmem>>, vector<8x128xf32>,
    return
  }
  func.func @transform_0(%arg0: i32) -> (i32, i32, i32) {
    %c0_i32 = arith.constant 0 : i32
    %c0_i32_0 = arith.constant 0 : i32
    %c0_i32_1 = arith.constant 0 : i32
    return %c0_i32, %arg0, %c0_i32_0 : i32, i32, i32
  }
  func.func @transform_1(%arg0: i32) -> (i32, i32) {
    %c0_i32 = arith.constant 0 : i32
    %c0_i32_0 = arith.constant 0 : i32
    return %arg0, %c0_i32 : i32, i32
  }
}

</mosaic_0001>

<llo_original>
// kernel: forward.17
$region0: #{forward.17}
  #allocation0 [shape = 'u32[]', space=smem, size = 0x4, offset = 0x4, fixed_abs, tag = 'smem constant byte address 0x4 - core index']
  #allocation1 [shape = 'u32[144,128]{1,0:T(1,128)}', space=vmem, size = 0x12000, scoped, tag = 'internal scratch']
  %s0 = inlined_call_operand.vmem [shape: bf16[2560,256], index: 0, kind: input, shape index: {}]
  %s1 = inlined_call_operand.vmem [shape: bf16[256,128], index: 1, kind: input, shape index: {}]
  %s2 = inlined_call_operand.vmem [shape: f32[1,128], index: 2, kind: input, shape index: {}]
  %s3 = inlined_call_operand.vmem [shape: f32[2560,128], index: 3, kind: output, shape index: {}]
  %s4 = sld [smem:[#allocation0]]
  $region45: #{forward.17} parent=0
    _
  %s6 = ssub.s32 1, %s4
  %s7 = scalar_select 0, %s6, %s4
  loop: start=0, step=1, limit=7
  $region2: #{forward.17} parent=0 // loop_pre_header
    _
  $region3: #{forward.17} parent=0 // loop_header
    %s9 = sphi 0, %s13
    %p10 = scmp.ge.s32.totalorder %s9, 7
    %s19 = sphi 0, %s21
    %s22 = sphi 0, %s19
    %s23 = sphi 0, %s22
    %s39 = sphi 0, %s23
    %s43 = sphi 0, %s43
    %s45 = sphi 0, %s43
    %s46 = sphi 0, %s45
    %s60 = sphi 0, %s46
    %s64 = sphi 0, %s64
    %s66 = sphi 0, %s64
    %s67 = sphi 0, %s66
    %s81 = sphi 0, %s67
    %s87 = sphi 0, %s89
    %s90 = sphi 0, %s87
    %s91 = sphi 0, %s90
    %s107 = sphi 0, %s91
  $region4: #{forward.17} parent=0 // loop_header_branch
    %12 = sbr.rel (%p10) target = $region8
  $region5: #{forward.17} parent=0 // loop_body
    %s14 = ssub.s32 %s9, 1
    %s15 = ssub.s32 %s9, 2
    %s16 = sadd.s32 %s9, 1
    %s17 = ssub.s32 %s9, %s16
    %p18 = scmp.eq.s32.totalorder %s17, 0
    %s20 = sadd.s32 %s19, 1
    %s21 = scalar_select %p18, %s19, %s20
    %p24 = pneg %p18
    %p25 = scmp.eq.s32.totalorder %s9, 4
    %p26 = por %p24, %p25
    %p27 = scmp.ne.s32.totalorder %s19, %s22
    %p28 = scmp.eq.s32.totalorder %s9, 0
    %p29 = por %p27, %p28
    %p30 = scmp.ne.s32.totalorder %s19, %s22
    %p31 = scmp.eq.s32.totalorder %s14, 4
    %p32 = por %p30, %p31
    %p33 = scmp.ne.s32.totalorder %s22, %s23
    %p34 = scmp.eq.s32.totalorder %s14, 0
    %p35 = por %p33, %p34
    %p36 = scmp.ne.s32.totalorder %s22, %s23
    %p37 = scmp.eq.s32.totalorder %s15, 4
    %p38 = por %p36, %p37
    %p40 = scmp.ne.s32.totalorder %s23, %s39
    %p41 = scmp.eq.s32.totalorder %s15, 0
    %p42 = por %p40, %p41
    %s44 = sadd.s32 %s43, 1
    %p47 = scmp.eq.s32.totalorder %s9, 4
    %p48 = scmp.ne.s32.totalorder %s43, %s45
    %p49 = scmp.eq.s32.totalorder %s9, 0
    %p50 = por %p48, %p49
    %p51 = scmp.ne.s32.totalorder %s43, %s45
    %p52 = scmp.eq.s32.totalorder %s14, 4
    %p53 = por %p51, %p52
    %p54 = scmp.ne.s32.totalorder %s45, %s46
    %p55 = scmp.eq.s32.totalorder %s14, 0
    %p56 = por %p54, %p55
    %p57 = scmp.ne.s32.totalorder %s45, %s46
    %p58 = scmp.eq.s32.totalorder %s15, 4
    %p59 = por %p57, %p58
    %p61 = scmp.ne.s32.totalorder %s46, %s60
    %p62 = scmp.eq.s32.totalorder %s15, 0
    %p63 = por %p61, %p62
    %s65 = sadd.s32 %s64, 1
    %p68 = scmp.eq.s32.totalorder %s9, 4
    %p69 = scmp.ne.s32.totalorder %s64, %s66
    %p70 = scmp.eq.s32.totalorder %s9, 0
    %p71 = por %p69, %p70
    %p72 = scmp.ne.s32.totalorder %s64, %s66
    %p73 = scmp.eq.s32.totalorder %s14, 4
    %p74 = por %p72, %p73
    %p75 = scmp.ne.s32.totalorder %s66, %s67
    %p76 = scmp.eq.s32.totalorder %s14, 0
    %p77 = por %p75, %p76
    %p78 = scmp.ne.s32.totalorder %s66, %s67
    %p79 = scmp.eq.s32.totalorder %s15, 4
    %p80 = por %p78, %p79
    %p82 = scmp.ne.s32.totalorder %s67, %s81
    %p83 = scmp.eq.s32.totalorder %s15, 0
    %p84 = por %p82, %p83
    %s85 = ssub.s32 %s9, %s16
    %p86 = scmp.eq.s32.totalorder %s85, 0
    %s88 = sadd.s32 %s87, 1
    %s89 = scalar_select %p86, %s87, %s88
    %p92 = pneg %p86
    %p93 = scmp.eq.s32.totalorder %s9, 4
    %p94 = por %p92, %p93
    %p95 = scmp.ne.s32.totalorder %s87, %s90
    %p96 = scmp.eq.s32.totalorder %s9, 0
    %p97 = por %p95, %p96
    %p98 = scmp.ne.s32.totalorder %s87, %s90
    %p99 = scmp.eq.s32.totalorder %s14, 4
    %p100 = por %p98, %p99
    %p101 = scmp.ne.s32.totalorder %s90, %s91
    %p102 = scmp.eq.s32.totalorder %s14, 0
    %p103 = por %p101, %p102
    %p104 = scmp.ne.s32.totalorder %s90, %s91
    %p105 = scmp.eq.s32.totalorder %s15, 4
    %p106 = por %p104, %p105
    %p108 = scmp.ne.s32.totalorder %s91, %s107
    %p109 = scmp.eq.s32.totalorder %s15, 0
    %p110 = por %p108, %p109
    %p111 = scmp.le.s32.totalorder 1, %s9
    %p112 = scmp.lt.s32.totalorder %s9, 6
    %p113 = pnand %p111, %p112
    %p114 = pneg %p113
    // Predicated region
    $region9: #{forward.17} parent=5 // pred_check
      _
    $region10: #{forward.17} parent=5 // pred_check_branch
      %116 = sbr.rel (%p113) target = $region12
    $region11: #{forward.17} parent=5 // pred_region
      %s117 = ssub.s32 %s9, 1
      // Predicated region
      $region13: #{forward.17} parent=11 // pred_check
        %p118 = pneg %p56
      $region14: #{forward.17} parent=11 // pred_check_branch
        %120 = sbr.rel (%p118) target = $region16
      $region15: #{forward.17} parent=11 // pred_region
        _
      $region16: #{forward.17} parent=11 // pred_fallthru
        _
      // Predicated region
      $region17: #{forward.17} parent=11 // pred_check
        %p121 = pneg %p77
      $region18: #{forward.17} parent=11 // pred_check_branch
        %123 = sbr.rel (%p121) target = $region20
      $region19: #{forward.17} parent=11 // pred_region
        _
      $region20: #{forward.17} parent=11 // pred_fallthru
        _
    $region12: #{forward.17} parent=5 // pred_fallthru
      _
    %p124 = scmp.lt.s32.totalorder %s9, 5
    // Predicated region
    $region21: #{forward.17} parent=5 // pred_check
      %p125 = pneg %p124
    $region22: #{forward.17} parent=5 // pred_check_branch
      %127 = sbr.rel (%p125) target = $region24
    $region23: #{forward.17} parent=5 // pred_region
      // Predicated region
      $region25: #{forward.17} parent=23 // pred_check
        %p128 = pneg %p29
      $region26: #{forward.17} parent=23 // pred_check_branch
        %130 = sbr.rel (%p128) target = $region28
      $region27: #{forward.17} parent=23 // pred_region
        %s131 = smul.u32 64, %s9
        %p132 = scmp.lt.s32.totalorder %s131, 319
        %s133 = scalar_select %p132, %s131, 319
        %s134 = smul.addr %s133, 2
        %s135 = smul.addr %s134, 4
        %s136 = scalar_lea.vmem %s0, %s135
        %s137 = smul.u32 64, %s9
      $region28: #{forward.17} parent=23 // pred_fallthru
        _
    $region24: #{forward.17} parent=5 // pred_fallthru
      _
    %p138 = scmp.le.s32.totalorder 1, %s9
    %p139 = scmp.lt.s32.totalorder %s9, 6
    %p140 = pnand %p138, %p139
    %p141 = pneg %p140
    // Predicated region
    $region29: #{forward.17} parent=5 // pred_check
      _
    $region30: #{forward.17} parent=5 // pred_check_branch
      %143 = sbr.rel (%p140) target = $region32
    $region31: #{forward.17} parent=5 // pred_region
      %s144 = ssub.s32 %s9, 1
      %s145 = smul.u32 64, %s14
      %p146 = scmp.lt.s32.totalorder %s145, 319
      %s147 = scalar_select %p146, %s145, 319
      %s148 = smul.addr %s147, 2
      %s149 = smul.addr %s148, 4
      %s150 = scalar_lea.vmem %s0, %s149
      %p151 = pneg %p35
      %p152 = pneg %p32
      %p153 = pneg %p56
      %p154 = pneg %p53
      %p155 = pneg %p77
      %p156 = pneg %p74
      %p157 = pneg %p103
      %p158 = pneg %p100
      %s159 = smul.u32 64, %s14
      %p160 = scmp.lt.s32.totalorder %s159, 319
      %s161 = scalar_select %p160, %s159, 319
      %s162 = smul.addr %s161, 8
      %s163 = scalar_lea.vmem %s3, %s162
      %s164 = smul.u32 64, %s14
      %p165 = scmp.lt.s32.totalorder %s164, 319
      %s166 = scalar_select %p165, %s164, 319
      %s167 = smul.addr %s166, 2
      %s168 = smul.addr %s167, 4
      %s169 = scalar_lea.vmem %s0, %s168
      %s170 = smul.u32 64, %s14
      %s171 = smul.u32 64, %s14
      %p172 = scmp.lt.s32.totalorder %s171, 319
      %s173 = scalar_select %p172, %s171, 319
      %s174 = smul.addr %s173, 8
      %s175 = scalar_lea.vmem %s3, %s174
      %s176 = smul.u32 64, %s14
      %v178 = vld [vmem:[%s169] sm:$0xff]
      %v179 = vld [vmem:[%s169 + $0x8] sm:$0xff]
      %v180 = vld [vmem:[%s169 + $0x10] sm:$0xff]
      %v181 = vld [vmem:[%s169 + $0x18] sm:$0xff]
      %v182 = vld [vmem:[%s169 + $0x20] sm:$0xff]
      %v183 = vld [vmem:[%s169 + $0x28] sm:$0xff]
      %v184 = vld [vmem:[%s169 + $0x30] sm:$0xff]
      %v185 = vld [vmem:[%s169 + $0x38] sm:$0xff]
      %v186 = vld [vmem:[%s169 + $0x40] sm:$0xff]
      %v187 = vld [vmem:[%s169 + $0x48] sm:$0xff]
      %v188 = vld [vmem:[%s169 + $0x50] sm:$0xff]
      %v189 = vld [vmem:[%s169 + $0x58] sm:$0xff]
      %v190 = vld [vmem:[%s169 + $0x60] sm:$0xff]
      %v191 = vld [vmem:[%s169 + $0x68] sm:$0xff]
      %v192 = vld [vmem:[%s169 + $0x70] sm:$0xff]
      %v193 = vld [vmem:[%s169 + $0x78] sm:$0xff]
      %v194 = vld [vmem:[%s169 + $0x80] sm:$0xff]
      %v195 = vld [vmem:[%s169 + $0x88] sm:$0xff]
      %v196 = vld [vmem:[%s169 + $0x90] sm:$0xff]
      %v197 = vld [vmem:[%s169 + $0x98] sm:$0xff]
      %v198 = vld [vmem:[%s169 + $0xa0] sm:$0xff]
      %v199 = vld [vmem:[%s169 + $0xa8] sm:$0xff]
      %v200 = vld [vmem:[%s169 + $0xb0] sm:$0xff]
      %v201 = vld [vmem:[%s169 + $0xb8] sm:$0xff]
      %v202 = vld [vmem:[%s169 + $0xc0] sm:$0xff]
      %v203 = vld [vmem:[%s169 + $0xc8] sm:$0xff]
      %v204 = vld [vmem:[%s169 + $0xd0] sm:$0xff]
      %v205 = vld [vmem:[%s169 + $0xd8] sm:$0xff]
      %v206 = vld [vmem:[%s169 + $0xe0] sm:$0xff]
      %v207 = vld [vmem:[%s169 + $0xe8] sm:$0xff]
      %v208 = vld [vmem:[%s169 + $0xf0] sm:$0xff]
      %v209 = vld [vmem:[%s169 + $0xf8] sm:$0xff]
      %v210 = vld [vmem:[%s169 + $0x100] sm:$0xff]
      %v211 = vld [vmem:[%s169 + $0x108] sm:$0xff]
      %v212 = vld [vmem:[%s169 + $0x110] sm:$0xff]
      %v213 = vld [vmem:[%s169 + $0x118] sm:$0xff]
      %v214 = vld [vmem:[%s169 + $0x120] sm:$0xff]
      %v215 = vld [vmem:[%s169 + $0x128] sm:$0xff]
      %v216 = vld [vmem:[%s169 + $0x130] sm:$0xff]
      %v217 = vld [vmem:[%s169 + $0x138] sm:$0xff]
      %v218 = vld [vmem:[%s169 + $0x140] sm:$0xff]
      %v219 = vld [vmem:[%s169 + $0x148] sm:$0xff]
      %v220 = vld [vmem:[%s169 + $0x150] sm:$0xff]
      %v221 = vld [vmem:[%s169 + $0x158] sm:$0xff]
      %v222 = vld [vmem:[%s169 + $0x160] sm:$0xff]
      %v223 = vld [vmem:[%s169 + $0x168] sm:$0xff]
      %v224 = vld [vmem:[%s169 + $0x170] sm:$0xff]
      %v225 = vld [vmem:[%s169 + $0x178] sm:$0xff]
      %v226 = vld [vmem:[%s169 + $0x180] sm:$0xff]
      %v227 = vld [vmem:[%s169 + $0x188] sm:$0xff]
      %v228 = vld [vmem:[%s169 + $0x190] sm:$0xff]
      %v229 = vld [vmem:[%s169 + $0x198] sm:$0xff]
      %v230 = vld [vmem:[%s169 + $0x1a0] sm:$0xff]
      %v231 = vld [vmem:[%s169 + $0x1a8] sm:$0xff]
      %v232 = vld [vmem:[%s169 + $0x1b0] sm:$0xff]
      %v233 = vld [vmem:[%s169 + $0x1b8] sm:$0xff]
      %v234 = vld [vmem:[%s169 + $0x1c0] sm:$0xff]
      %v235 = vld [vmem:[%s169 + $0x1c8] sm:$0xff]
      %v236 = vld [vmem:[%s169 + $0x1d0] sm:$0xff]
      %v237 = vld [vmem:[%s169 + $0x1d8] sm:$0xff]
      %v238 = vld [vmem:[%s169 + $0x1e0] sm:$0xff]
      %v239 = vld [vmem:[%s169 + $0x1e8] sm:$0xff]
      %v240 = vld [vmem:[%s169 + $0x1f0] sm:$0xff]
      %v241 = vld [vmem:[%s169 + $0x1f8] sm:$0xff]
      %v242 = vld [vmem:[%s1] sm:$0xf]
      %v243 = vld [vmem:[%s1 + $0x4] sm:$0xf]
      %v244 = vld [vmem:[%s1 + $0x8] sm:$0xf]
      %v245 = vld [vmem:[%s1 + $0xc] sm:$0xf]
      %v246 = vld [vmem:[%s1 + $0x10] sm:$0xf]
      %v247 = vld [vmem:[%s1 + $0x14] sm:$0xf]
      %v248 = vld [vmem:[%s1 + $0x18] sm:$0xf]
      %v249 = vld [vmem:[%s1 + $0x1c] sm:$0xf]
      %v250 = vld [vmem:[%s1 + $0x20] sm:$0xf]
      %v251 = vld [vmem:[%s1 + $0x24] sm:$0xf]
      %v252 = vld [vmem:[%s1 + $0x28] sm:$0xf]
      %v253 = vld [vmem:[%s1 + $0x2c] sm:$0xf]
      %v254 = vld [vmem:[%s1 + $0x30] sm:$0xf]
      %v255 = vld [vmem:[%s1 + $0x34] sm:$0xf]
      %v256 = vld [vmem:[%s1 + $0x38] sm:$0xf]
      %v257 = vld [vmem:[%s1 + $0x3c] sm:$0xf]
      %v258 = vld [vmem:[%s1 + $0x40] sm:$0xf]
      %v259 = vld [vmem:[%s1 + $0x44] sm:$0xf]
      %v260 = vld [vmem:[%s1 + $0x48] sm:$0xf]
      %v261 = vld [vmem:[%s1 + $0x4c] sm:$0xf]
      %v262 = vld [vmem:[%s1 + $0x50] sm:$0xf]
      %v263 = vld [vmem:[%s1 + $0x54] sm:$0xf]
      %v264 = vld [vmem:[%s1 + $0x58] sm:$0xf]
      %v265 = vld [vmem:[%s1 + $0x5c] sm:$0xf]
      %v266 = vld [vmem:[%s1 + $0x60] sm:$0xf]
      %v267 = vld [vmem:[%s1 + $0x64] sm:$0xf]
      %v268 = vld [vmem:[%s1 + $0x68] sm:$0xf]
      %v269 = vld [vmem:[%s1 + $0x6c] sm:$0xf]
      %v270 = vld [vmem:[%s1 + $0x70] sm:$0xf]
      %v271 = vld [vmem:[%s1 + $0x74] sm:$0xf]
      %v272 = vld [vmem:[%s1 + $0x78] sm:$0xf]
      %v273 = vld [vmem:[%s1 + $0x7c] sm:$0xf]
      %v274 = vld [vmem:[%s2] sm:$0x1]
      %v276 = vlaneseq
      %v277 = vshrl.u32 %v276, 7
      %v278 = vsub.s32 0, %v277
      %v279 = vrot.slane %v274, %v278
      %v345 = vunpack.c.l.b16 %v178
      %v346 = vunpack.c.h.b16 %v178
      %v347 = vunpack.c.l.b16 %v179
      %v348 = vunpack.c.h.b16 %v179
      %v349 = vunpack.c.l.b16 %v180
      %v350 = vunpack.c.h.b16 %v180
      %v351 = vunpack.c.l.b16 %v181
      %v352 = vunpack.c.h.b16 %v181
      %v353 = vunpack.c.l.b16 %v182
      %v354 = vunpack.c.h.b16 %v182
      %v355 = vunpack.c.l.b16 %v183
      %v356 = vunpack.c.h.b16 %v183
      %v357 = vunpack.c.l.b16 %v184
      %v358 = vunpack.c.h.b16 %v184
      %v359 = vunpack.c.l.b16 %v185
      %v360 = vunpack.c.h.b16 %v185
      %v361 = vunpack.c.l.b16 %v186
      %v362 = vunpack.c.h.b16 %v186
      %v363 = vunpack.c.l.b16 %v187
      %v364 = vunpack.c.h.b16 %v187
      %v365 = vunpack.c.l.b16 %v188
      %v366 = vunpack.c.h.b16 %v188
      %v367 = vunpack.c.l.b16 %v189
      %v368 = vunpack.c.h.b16 %v189
      %v369 = vunpack.c.l.b16 %v190
      %v370 = vunpack.c.h.b16 %v190
      %v371 = vunpack.c.l.b16 %v191
      %v372 = vunpack.c.h.b16 %v191
      %v373 = vunpack.c.l.b16 %v192
      %v374 = vunpack.c.h.b16 %v192
      %v375 = vunpack.c.l.b16 %v193
      %v376 = vunpack.c.h.b16 %v193
      %v377 = vunpack.c.l.b16 %v194
      %v378 = vunpack.c.h.b16 %v194
      %v379 = vunpack.c.l.b16 %v195
      %v380 = vunpack.c.h.b16 %v195
      %v381 = vunpack.c.l.b16 %v196
      %v382 = vunpack.c.h.b16 %v196
      %v383 = vunpack.c.l.b16 %v197
      %v384 = vunpack.c.h.b16 %v197
      %v385 = vunpack.c.l.b16 %v198
      %v386 = vunpack.c.h.b16 %v198
      %v387 = vunpack.c.l.b16 %v199
      %v388 = vunpack.c.h.b16 %v199
      %v389 = vunpack.c.l.b16 %v200
      %v390 = vunpack.c.h.b16 %v200
      %v391 = vunpack.c.l.b16 %v201
      %v392 = vunpack.c.h.b16 %v201
      %v393 = vunpack.c.l.b16 %v202
      %v394 = vunpack.c.h.b16 %v202
      %v395 = vunpack.c.l.b16 %v203
      %v396 = vunpack.c.h.b16 %v203
      %v397 = vunpack.c.l.b16 %v204
      %v398 = vunpack.c.h.b16 %v204
      %v399 = vunpack.c.l.b16 %v205
      %v400 = vunpack.c.h.b16 %v205
      %v401 = vunpack.c.l.b16 %v206
      %v402 = vunpack.c.h.b16 %v206
      %v403 = vunpack.c.l.b16 %v207
      %v404 = vunpack.c.h.b16 %v207
      %v405 = vunpack.c.l.b16 %v208
      %v406 = vunpack.c.h.b16 %v208
      %v407 = vunpack.c.l.b16 %v209
      %v408 = vunpack.c.h.b16 %v209
      %v409 = vunpack.c.l.b16 %v210
      %v410 = vunpack.c.h.b16 %v210
      %v411 = vunpack.c.l.b16 %v211
      %v412 = vunpack.c.h.b16 %v211
      %v413 = vunpack.c.l.b16 %v212
      %v414 = vunpack.c.h.b16 %v212
      %v415 = vunpack.c.l.b16 %v213
      %v416 = vunpack.c.h.b16 %v213
      %v417 = vunpack.c.l.b16 %v214
      %v418 = vunpack.c.h.b16 %v214
      %v419 = vunpack.c.l.b16 %v215
      %v420 = vunpack.c.h.b16 %v215
      %v421 = vunpack.c.l.b16 %v216
      %v422 = vunpack.c.h.b16 %v216
      %v423 = vunpack.c.l.b16 %v217
      %v424 = vunpack.c.h.b16 %v217
      %v425 = vunpack.c.l.b16 %v218
      %v426 = vunpack.c.h.b16 %v218
      %v427 = vunpack.c.l.b16 %v219
      %v428 = vunpack.c.h.b16 %v219
      %v429 = vunpack.c.l.b16 %v220
      %v430 = vunpack.c.h.b16 %v220
      %v431 = vunpack.c.l.b16 %v221
      %v432 = vunpack.c.h.b16 %v221
      %v433 = vunpack.c.l.b16 %v222
      %v434 = vunpack.c.h.b16 %v222
      %v435 = vunpack.c.l.b16 %v223
      %v436 = vunpack.c.h.b16 %v223
      %v437 = vunpack.c.l.b16 %v224
      %v438 = vunpack.c.h.b16 %v224
      %v439 = vunpack.c.l.b16 %v225
      %v440 = vunpack.c.h.b16 %v225
      %v441 = vunpack.c.l.b16 %v226
      %v442 = vunpack.c.h.b16 %v226
      %v443 = vunpack.c.l.b16 %v227
      %v444 = vunpack.c.h.b16 %v227
      %v445 = vunpack.c.l.b16 %v228
      %v446 = vunpack.c.h.b16 %v228
      %v447 = vunpack.c.l.b16 %v229
      %v448 = vunpack.c.h.b16 %v229
      %v449 = vunpack.c.l.b16 %v230
      %v450 = vunpack.c.h.b16 %v230
      %v451 = vunpack.c.l.b16 %v231
      %v452 = vunpack.c.h.b16 %v231
      %v453 = vunpack.c.l.b16 %v232
      %v454 = vunpack.c.h.b16 %v232
      %v455 = vunpack.c.l.b16 %v233
      %v456 = vunpack.c.h.b16 %v233
      %v457 = vunpack.c.l.b16 %v234
      %v458 = vunpack.c.h.b16 %v234
      %v459 = vunpack.c.l.b16 %v235
      %v460 = vunpack.c.h.b16 %v235
      %v461 = vunpack.c.l.b16 %v236
      %v462 = vunpack.c.h.b16 %v236
      %v463 = vunpack.c.l.b16 %v237
      %v464 = vunpack.c.h.b16 %v237
      %v465 = vunpack.c.l.b16 %v238
      %v466 = vunpack.c.h.b16 %v238
      %v467 = vunpack.c.l.b16 %v239
      %v468 = vunpack.c.h.b16 %v239
      %v469 = vunpack.c.l.b16 %v240
      %v470 = vunpack.c.h.b16 %v240
      %v471 = vunpack.c.l.b16 %v241
      %v472 = vunpack.c.h.b16 %v241
      %v473 = vpack.c.b16 %v347, %v345
      %v474 = vpack.c.b16 %v348, %v346
      %v475 = vpack.c.b16 %v351, %v349
      %v476 = vpack.c.b16 %v352, %v350
      %v477 = vpack.c.b16 %v355, %v353
      %v478 = vpack.c.b16 %v356, %v354
      %v479 = vpack.c.b16 %v359, %v357
      %v480 = vpack.c.b16 %v360, %v358
      %v481 = vpack.c.b16 %v363, %v361
      %v482 = vpack.c.b16 %v364, %v362
      %v483 = vpack.c.b16 %v367, %v365
      %v484 = vpack.c.b16 %v368, %v366
      %v485 = vpack.c.b16 %v371, %v369
      %v486 = vpack.c.b16 %v372, %v370
      %v487 = vpack.c.b16 %v375, %v373
      %v488 = vpack.c.b16 %v376, %v374
      %v489 = vpack.c.b16 %v379, %v377
      %v490 = vpack.c.b16 %v380, %v378
      %v491 = vpack.c.b16 %v383, %v381
      %v492 = vpack.c.b16 %v384, %v382
      %v493 = vpack.c.b16 %v387, %v385
      %v494 = vpack.c.b16 %v388, %v386
      %v495 = vpack.c.b16 %v391, %v389
      %v496 = vpack.c.b16 %v392, %v390
      %v497 = vpack.c.b16 %v395, %v393
      %v498 = vpack.c.b16 %v396, %v394
      %v499 = vpack.c.b16 %v399, %v397
      %v500 = vpack.c.b16 %v400, %v398
      %v501 = vpack.c.b16 %v403, %v401
      %v502 = vpack.c.b16 %v404, %v402
      %v503 = vpack.c.b16 %v407, %v405
      %v504 = vpack.c.b16 %v408, %v406
      %v505 = vpack.c.b16 %v411, %v409
      %v506 = vpack.c.b16 %v412, %v410
      %v507 = vpack.c.b16 %v415, %v413
      %v508 = vpack.c.b16 %v416, %v414
      %v509 = vpack.c.b16 %v419, %v417
      %v510 = vpack.c.b16 %v420, %v418
      %v511 = vpack.c.b16 %v423, %v421
      %v512 = vpack.c.b16 %v424, %v422
      %v513 = vpack.c.b16 %v427, %v425
      %v514 = vpack.c.b16 %v428, %v426
      %v515 = vpack.c.b16 %v431, %v429
      %v516 = vpack.c.b16 %v432, %v430
      %v517 = vpack.c.b16 %v435, %v433
      %v518 = vpack.c.b16 %v436, %v434
      %v519 = vpack.c.b16 %v439, %v437
      %v520 = vpack.c.b16 %v440, %v438
      %v521 = vpack.c.b16 %v443, %v441
      %v522 = vpack.c.b16 %v444, %v442
      %v523 = vpack.c.b16 %v447, %v445
      %v524 = vpack.c.b16 %v448, %v446
      %v525 = vpack.c.b16 %v451, %v449
      %v526 = vpack.c.b16 %v452, %v450
      %v527 = vpack.c.b16 %v455, %v453
      %v528 = vpack.c.b16 %v456, %v454
      %v529 = vpack.c.b16 %v459, %v457
      %v530 = vpack.c.b16 %v460, %v458
      %v531 = vpack.c.b16 %v463, %v461
      %v532 = vpack.c.b16 %v464, %v462
      %v533 = vpack.c.b16 %v467, %v465
      %v534 = vpack.c.b16 %v468, %v466
      %v535 = vpack.c.b16 %v471, %v469
      %v536 = vpack.c.b16 %v472, %v470
      %v633 = vunpack.c.l.b16 %v242
      %v634 = vunpack.c.l.b16 %v243
      %v635 = vunpack.c.l.b16 %v244
      %v636 = vunpack.c.l.b16 %v245
      %v637 = vunpack.c.l.b16 %v246
      %v638 = vunpack.c.l.b16 %v247
      %v639 = vunpack.c.l.b16 %v248
      %v640 = vunpack.c.l.b16 %v249
      %v641 = vunpack.c.l.b16 %v250
      %v642 = vunpack.c.l.b16 %v251
      %v643 = vunpack.c.l.b16 %v252
      %v644 = vunpack.c.l.b16 %v253
      %v645 = vunpack.c.l.b16 %v254
      %v646 = vunpack.c.l.b16 %v255
      %v647 = vunpack.c.l.b16 %v256
      %v648 = vunpack.c.l.b16 %v257
      %v649 = vunpack.c.l.b16 %v258
      %v650 = vunpack.c.l.b16 %v259
      %v651 = vunpack.c.l.b16 %v260
      %v652 = vunpack.c.l.b16 %v261
      %v653 = vunpack.c.l.b16 %v262
      %v654 = vunpack.c.l.b16 %v263
      %v655 = vunpack.c.l.b16 %v264
      %v656 = vunpack.c.l.b16 %v265
      %v657 = vunpack.c.l.b16 %v266
      %v658 = vunpack.c.l.b16 %v267
      %v659 = vunpack.c.l.b16 %v268
      %v660 = vunpack.c.l.b16 %v269
      %v661 = vunpack.c.l.b16 %v270
      %v662 = vunpack.c.l.b16 %v271
      %v663 = vunpack.c.l.b16 %v272
      %v664 = vunpack.c.l.b16 %v273
      %v665 = vpack.c.b16 %v634, %v633
      %v666 = vpack.c.b16 %v636, %v635
      %v667 = vpack.c.b16 %v638, %v637
      %v668 = vpack.c.b16 %v640, %v639
      %v669 = vpack.c.b16 %v642, %v641
      %v670 = vpack.c.b16 %v644, %v643
      %v671 = vpack.c.b16 %v646, %v645
      %v672 = vpack.c.b16 %v648, %v647
      %v673 = vpack.c.b16 %v650, %v649
      %v674 = vpack.c.b16 %v652, %v651
      %v675 = vpack.c.b16 %v654, %v653
      %v676 = vpack.c.b16 %v656, %v655
      %v677 = vpack.c.b16 %v658, %v657
      %v678 = vpack.c.b16 %v660, %v659
      %v679 = vpack.c.b16 %v662, %v661
      %v680 = vpack.c.b16 %v664, %v663
      %697 = vmatprep.subr.bf16.mxu0 0
      %698 = vmatpush1.bf16.msra.mxu0 %v665
      %699 = vmatprep.subr.bf16.mxu0 0
      %700 = vmatpush1.bf16.msra.mxu0 %v666
      %701 = vmatprep.subr.bf16.mxu0 0
      %702 = vmatpush1.bf16.msra.mxu0 %v667
      %703 = vmatprep.subr.bf16.mxu0 0
      %704 = vmatpush1.bf16.msra.mxu0 %v668
      %705 = vmatprep.subr.bf16.mxu0 0
      %706 = vmatpush1.bf16.msra.mxu0 %v669
      %707 = vmatprep.subr.bf16.mxu0 0
      %708 = vmatpush1.bf16.msra.mxu0 %v670
      %709 = vmatprep.subr.bf16.mxu0 0
      %710 = vmatpush1.bf16.msra.mxu0 %v671
      %711 = vmatprep.subr.bf16.mxu0 0
      %712 = vmatpush1.bf16.msra.mxu0 %v672
      %713 = vmatprep.subr.bf16.mxu0 0
      %714 = vmatpush1.bf16.msra.mxu0 %v673
      %715 = vmatprep.subr.bf16.mxu0 0
      %716 = vmatpush1.bf16.msra.mxu0 %v674
      %717 = vmatprep.subr.bf16.mxu0 0
      %718 = vmatpush1.bf16.msra.mxu0 %v675
      %719 = vmatprep.subr.bf16.mxu0 0
      %720 = vmatpush1.bf16.msra.mxu0 %v676
      %721 = vmatprep.subr.bf16.mxu0 0
      %722 = vmatpush1.bf16.msra.mxu0 %v677
      %723 = vmatprep.subr.bf16.mxu0 0
      %724 = vmatpush1.bf16.msra.mxu0 %v678
      %725 = vmatprep.subr.bf16.mxu0 0
      %726 = vmatpush1.bf16.msra.mxu0 %v679
      %727 = vmatprep.subr.bf16.mxu0 0
      %728 = vmatpush1.bf16.msra.mxu0 %v680
      %729 = vmatprep.mubr.bf16.mxu0 %v474
      %730 = vmatmul.mubr.bf16.gmra.mrb[0].mxu0 %v473
      %v731 = vpop.f32.mrb[0].mxu0
      %v732 = vadd.f32 %v279, %v731
      %v733 = vpop.f32.mrb[0].mxu0
      %v734 = vpop.f32.mrb[0].mxu0
      %v735 = vadd.f32 %v279, %v734
      %v736 = vpop.f32.mrb[0].mxu0
      %737 = vmatprep.mubr.bf16.mxu0 %v476
      %738 = vmatmul.mubr.bf16.gmra.mrb[0].mxu0 %v475
      %v739 = vpop.f32.mrb[0].mxu0
      %v740 = vadd.f32 %v279, %v739
      %v741 = vpop.f32.mrb[0].mxu0
      %v742 = vpop.f32.mrb[0].mxu0
      %v743 = vadd.f32 %v279, %v742
      %v744 = vpop.f32.mrb[0].mxu0
      %745 = vmatprep.mubr.bf16.mxu0 %v478
      %746 = vmatmul.mubr.bf16.gmra.mrb[0].mxu0 %v477
      %v747 = vpop.f32.mrb[0].mxu0
      %v748 = vadd.f32 %v279, %v747
      %v749 = vpop.f32.mrb[0].mxu0
      %v750 = vpop.f32.mrb[0].mxu0
      %v751 = vadd.f32 %v279, %v750
      %v752 = vpop.f32.mrb[0].mxu0
      %753 = vmatprep.mubr.bf16.mxu0 %v480
      %754 = vmatmul.mubr.bf16.gmra.mrb[0].mxu0 %v479
      %v755 = vpop.f32.mrb[0].mxu0
      %v756 = vadd.f32 %v279, %v755
      %v757 = vpop.f32.mrb[0].mxu0
      %v758 = vpop.f32.mrb[0].mxu0
      %v759 = vadd.f32 %v279, %v758
      %v760 = vpop.f32.mrb[0].mxu0
      %761 = vmatprep.mubr.bf16.mxu0 %v482
      %762 = vmatmul.mubr.bf16.gmra.mrb[0].mxu0 %v481
      %v763 = vpop.f32.mrb[0].mxu0
      %v764 = vadd.f32 %v279, %v763
      %v765 = vpop.f32.mrb[0].mxu0
      %v766 = vpop.f32.mrb[0].mxu0
      %v767 = vadd.f32 %v279, %v766
      %v768 = vpop.f32.mrb[0].mxu0
      %769 = vmatprep.mubr.bf16.mxu0 %v484
      %770 = vmatmul.mubr.bf16.gmra.mrb[0].mxu0 %v483
      %v771 = vpop.f32.mrb[0].mxu0
      %v772 = vadd.f32 %v279, %v771
      %v773 = vpop.f32.mrb[0].mxu0
      %v774 = vpop.f32.mrb[0].mxu0
      %v775 = vadd.f32 %v279, %v774
      %v776 = vpop.f32.mrb[0].mxu0
      %777 = vmatprep.mubr.bf16.mxu0 %v486
      %778 = vmatmul.mubr.bf16.gmra.mrb[0].mxu0 %v485
      %v779 = vpop.f32.mrb[0].mxu0
      %v780 = vadd.f32 %v279, %v779
      %v781 = vpop.f32.mrb[0].mxu0
      %v782 = vpop.f32.mrb[0].mxu0
      %v783 = vadd.f32 %v279, %v782
      %v784 = vpop.f32.mrb[0].mxu0
      %785 = vmatprep.mubr.bf16.mxu0 %v488
      %786 = vmatmul.mubr.bf16.gmra.mrb[0].mxu0 %v487
      %v787 = vpop.f32.mrb[0].mxu0
      %v788 = vadd.f32 %v279, %v787
      %v789 = vpop.f32.mrb[0].mxu0
      %v790 = vpop.f32.mrb[0].mxu0
      %v791 = vadd.f32 %v279, %v790
      %v792 = vpop.f32.mrb[0].mxu0
      %793 = vmatprep.mubr.bf16.mxu0 %v490
      %794 = vmatmul.mubr.bf16.gmra.mrb[0].mxu0 %v489
      %v795 = vpop.f32.mrb[0].mxu0
      %v796 = vadd.f32 %v279, %v795
      %v797 = vpop.f32.mrb[0].mxu0
      %v798 = vpop.f32.mrb[0].mxu0
      %v799 = vadd.f32 %v279, %v798
      %v800 = vpop.f32.mrb[0].mxu0
      %801 = vmatprep.mubr.bf16.mxu0 %v492
      %802 = vmatmul.mubr.bf16.gmra.mrb[0].mxu0 %v491
      %v803 = vpop.f32.mrb[0].mxu0
      %v804 = vadd.f32 %v279, %v803
      %v805 = vpop.f32.mrb[0].mxu0
      %v806 = vpop.f32.mrb[0].mxu0
      %v807 = vadd.f32 %v279, %v806
      %v808 = vpop.f32.mrb[0].mxu0
      %809 = vmatprep.mubr.bf16.mxu0 %v494
      %810 = vmatmul.mubr.bf16.gmra.mrb[0].mxu0 %v493
      %v811 = vpop.f32.mrb[0].mxu0
      %v812 = vadd.f32 %v279, %v811
      %v813 = vpop.f32.mrb[0].mxu0
      %v814 = vpop.f32.mrb[0].mxu0
      %v815 = vadd.f32 %v279, %v814
      %v816 = vpop.f32.mrb[0].mxu0
      %817 = vmatprep.mubr.bf16.mxu0 %v496
      %818 = vmatmul.mubr.bf16.gmra.mrb[0].mxu0 %v495
      %v819 = vpop.f32.mrb[0].mxu0
      %v820 = vadd.f32 %v279, %v819
      %v821 = vpop.f32.mrb[0].mxu0
      %v822 = vpop.f32.mrb[0].mxu0
      %v823 = vadd.f32 %v279, %v822
      %v824 = vpop.f32.mrb[0].mxu0
      %825 = vmatprep.mubr.bf16.mxu0 %v498
      %826 = vmatmul.mubr.bf16.gmra.mrb[0].mxu0 %v497
      %v827 = vpop.f32.mrb[0].mxu0
      %v828 = vadd.f32 %v279, %v827
      %v829 = vpop.f32.mrb[0].mxu0
      %v830 = vpop.f32.mrb[0].mxu0
      %v831 = vadd.f32 %v279, %v830
      %v832 = vpop.f32.mrb[0].mxu0
      %833 = vmatprep.mubr.bf16.mxu0 %v500
      %834 = vmatmul.mubr.bf16.gmra.mrb[0].mxu0 %v499
      %v835 = vpop.f32.mrb[0].mxu0
      %v836 = vadd.f32 %v279, %v835
      %v837 = vpop.f32.mrb[0].mxu0
      %v838 = vpop.f32.mrb[0].mxu0
      %v839 = vadd.f32 %v279, %v838
      %v840 = vpop.f32.mrb[0].mxu0
      %841 = vmatprep.mubr.bf16.mxu0 %v502
      %842 = vmatmul.mubr.bf16.gmra.mrb[0].mxu0 %v501
      %v843 = vpop.f32.mrb[0].mxu0
      %v844 = vadd.f32 %v279, %v843
      %v845 = vpop.f32.mrb[0].mxu0
      %v846 = vpop.f32.mrb[0].mxu0
      %v847 = vadd.f32 %v279, %v846
      %v848 = vpop.f32.mrb[0].mxu0
      %849 = vmatprep.mubr.bf16.mxu0 %v504
      %850 = vmatmul.mubr.bf16.gmra.mrb[0].mxu0 %v503
      %v851 = vpop.f32.mrb[0].mxu0
      %v852 = vadd.f32 %v279, %v851
      %v853 = vpop.f32.mrb[0].mxu0
      %v854 = vpop.f32.mrb[0].mxu0
      %v855 = vadd.f32 %v279, %v854
      %v856 = vpop.f32.mrb[0].mxu0
      %857 = vmatprep.mubr.bf16.mxu0 %v506
      %858 = vmatmul.mubr.bf16.gmra.mrb[0].mxu0 %v505
      %v859 = vpop.f32.mrb[0].mxu0
      %v860 = vadd.f32 %v279, %v859
      %v861 = vpop.f32.mrb[0].mxu0
      %v862 = vpop.f32.mrb[0].mxu0
      %v863 = vadd.f32 %v279, %v862
      %v864 = vpop.f32.mrb[0].mxu0
      %865 = vmatprep.mubr.bf16.mxu0 %v508
      %866 = vmatmul.mubr.bf16.gmra.mrb[0].mxu0 %v507
      %v867 = vpop.f32.mrb[0].mxu0
      %v868 = vadd.f32 %v279, %v867
      %v869 = vpop.f32.mrb[0].mxu0
      %v870 = vpop.f32.mrb[0].mxu0
      %v871 = vadd.f32 %v279, %v870
      %v872 = vpop.f32.mrb[0].mxu0
      %873 = vmatprep.mubr.bf16.mxu0 %v510
      %874 = vmatmul.mubr.bf16.gmra.mrb[0].mxu0 %v509
      %v875 = vpop.f32.mrb[0].mxu0
      %v876 = vadd.f32 %v279, %v875
      %v877 = vpop.f32.mrb[0].mxu0
      %v878 = vpop.f32.mrb[0].mxu0
      %v879 = vadd.f32 %v279, %v878
      %v880 = vpop.f32.mrb[0].mxu0
      %881 = vmatprep.mubr.bf16.mxu0 %v512
      %882 = vmatmul.mubr.bf16.gmra.mrb[0].mxu0 %v511
      %v883 = vpop.f32.mrb[0].mxu0
      %v884 = vadd.f32 %v279, %v883
      %v885 = vpop.f32.mrb[0].mxu0
      %v886 = vpop.f32.mrb[0].mxu0
      %v887 = vadd.f32 %v279, %v886
      %v888 = vpop.f32.mrb[0].mxu0
      %889 = vmatprep.mubr.bf16.mxu0 %v514
      %890 = vmatmul.mubr.bf16.gmra.mrb[0].mxu0 %v513
      %v891 = vpop.f32.mrb[0].mxu0
      %v892 = vadd.f32 %v279, %v891
      %v893 = vpop.f32.mrb[0].mxu0
      %v894 = vpop.f32.mrb[0].mxu0
      %v895 = vadd.f32 %v279, %v894
      %v896 = vpop.f32.mrb[0].mxu0
      %897 = vmatprep.mubr.bf16.mxu0 %v516
      %898 = vmatmul.mubr.bf16.gmra.mrb[0].mxu0 %v515
      %v899 = vpop.f32.mrb[0].mxu0
      %v900 = vadd.f32 %v279, %v899
      %v901 = vpop.f32.mrb[0].mxu0
      %v902 = vpop.f32.mrb[0].mxu0
      %v903 = vadd.f32 %v279, %v902
      %v904 = vpop.f32.mrb[0].mxu0
      %905 = vmatprep.mubr.bf16.mxu0 %v518
      %906 = vmatmul.mubr.bf16.gmra.mrb[0].mxu0 %v517
      %v907 = vpop.f32.mrb[0].mxu0
      %v908 = vadd.f32 %v279, %v907
      %v909 = vpop.f32.mrb[0].mxu0
      %v910 = vpop.f32.mrb[0].mxu0
      %v911 = vadd.f32 %v279, %v910
      %v912 = vpop.f32.mrb[0].mxu0
      %913 = vmatprep.mubr.bf16.mxu0 %v520
      %914 = vmatmul.mubr.bf16.gmra.mrb[0].mxu0 %v519
      %v915 = vpop.f32.mrb[0].mxu0
      %v916 = vadd.f32 %v279, %v915
      %v917 = vpop.f32.mrb[0].mxu0
      %v918 = vpop.f32.mrb[0].mxu0
      %v919 = vadd.f32 %v279, %v918
      %v920 = vpop.f32.mrb[0].mxu0
      %921 = vmatprep.mubr.bf16.mxu0 %v522
      %922 = vmatmul.mubr.bf16.gmra.mrb[0].mxu0 %v521
      %v923 = vpop.f32.mrb[0].mxu0
      %v924 = vadd.f32 %v279, %v923
      %v925 = vpop.f32.mrb[0].mxu0
      %v926 = vpop.f32.mrb[0].mxu0
      %v927 = vadd.f32 %v279, %v926
      %v928 = vpop.f32.mrb[0].mxu0
      %929 = vmatprep.mubr.bf16.mxu0 %v524
      %930 = vmatmul.mubr.bf16.gmra.mrb[0].mxu0 %v523
      %v931 = vpop.f32.mrb[0].mxu0
      %v932 = vadd.f32 %v279, %v931
      %v933 = vpop.f32.mrb[0].mxu0
      %v934 = vpop.f32.mrb[0].mxu0
      %v935 = vadd.f32 %v279, %v934
      %v936 = vpop.f32.mrb[0].mxu0
      %937 = vmatprep.mubr.bf16.mxu0 %v526
      %938 = vmatmul.mubr.bf16.gmra.mrb[0].mxu0 %v525
      %v939 = vpop.f32.mrb[0].mxu0
      %v940 = vadd.f32 %v279, %v939
      %v941 = vpop.f32.mrb[0].mxu0
      %v942 = vpop.f32.mrb[0].mxu0
      %v943 = vadd.f32 %v279, %v942
      %v944 = vpop.f32.mrb[0].mxu0
      %945 = vmatprep.mubr.bf16.mxu0 %v528
      %946 = vmatmul.mubr.bf16.gmra.mrb[0].mxu0 %v527
      %v947 = vpop.f32.mrb[0].mxu0
      %v948 = vadd.f32 %v279, %v947
      %v949 = vpop.f32.mrb[0].mxu0
      %v950 = vpop.f32.mrb[0].mxu0
      %v951 = vadd.f32 %v279, %v950
      %v952 = vpop.f32.mrb[0].mxu0
      %953 = vmatprep.mubr.bf16.mxu0 %v530
      %954 = vmatmul.mubr.bf16.gmra.mrb[0].mxu0 %v529
      %v955 = vpop.f32.mrb[0].mxu0
      %v956 = vadd.f32 %v279, %v955
      %v957 = vpop.f32.mrb[0].mxu0
      %v958 = vpop.f32.mrb[0].mxu0
      %v959 = vadd.f32 %v279, %v958
      %v960 = vpop.f32.mrb[0].mxu0
      %961 = vmatprep.mubr.bf16.mxu0 %v532
      %962 = vmatmul.mubr.bf16.gmra.mrb[0].mxu0 %v531
      %v963 = vpop.f32.mrb[0].mxu0
      %v964 = vadd.f32 %v279, %v963
      %v965 = vpop.f32.mrb[0].mxu0
      %v966 = vpop.f32.mrb[0].mxu0
      %v967 = vadd.f32 %v279, %v966
      %v968 = vpop.f32.mrb[0].mxu0
      %969 = vmatprep.mubr.bf16.mxu0 %v534
      %970 = vmatmul.mubr.bf16.gmra.mrb[0].mxu0 %v533
      %v971 = vpop.f32.mrb[0].mxu0
      %v972 = vadd.f32 %v279, %v971
      %v973 = vpop.f32.mrb[0].mxu0
      %v974 = vpop.f32.mrb[0].mxu0
      %v975 = vadd.f32 %v279, %v974
      %v976 = vpop.f32.mrb[0].mxu0
      %977 = vmatprep.mubr.bf16.mxu0 %v536
      %978 = vmatmul.mubr.bf16.gmra.mrb[0].mxu0 %v535
      %v979 = vpop.f32.mrb[0].mxu0
      %v980 = vadd.f32 %v279, %v979
      %v981 = vpop.f32.mrb[0].mxu0
      %v982 = vpop.f32.mrb[0].mxu0
      %v983 = vadd.f32 %v279, %v982
      %v984 = vpop.f32.mrb[0].mxu0
      %985 = vdwg.mxu0
      %986 = vst [vmem:[%s175] sm:$0xff] %v732
      %987 = vst [vmem:[%s175 + $0x8] sm:$0xff] %v735
      %988 = vst [vmem:[%s175 + $0x10] sm:$0xff] %v740
      %989 = vst [vmem:[%s175 + $0x18] sm:$0xff] %v743
      %990 = vst [vmem:[%s175 + $0x20] sm:$0xff] %v748
      %991 = vst [vmem:[%s175 + $0x28] sm:$0xff] %v751
      %992 = vst [vmem:[%s175 + $0x30] sm:$0xff] %v756
      %993 = vst [vmem:[%s175 + $0x38] sm:$0xff] %v759
      %994 = vst [vmem:[%s175 + $0x40] sm:$0xff] %v764
      %995 = vst [vmem:[%s175 + $0x48] sm:$0xff] %v767
      %996 = vst [vmem:[%s175 + $0x50] sm:$0xff] %v772
      %997 = vst [vmem:[%s175 + $0x58] sm:$0xff] %v775
      %998 = vst [vmem:[%s175 + $0x60] sm:$0xff] %v780
      %999 = vst [vmem:[%s175 + $0x68] sm:$0xff] %v783
      %1000 = vst [vmem:[%s175 + $0x70] sm:$0xff] %v788
      %1001 = vst [vmem:[%s175 + $0x78] sm:$0xff] %v791
      %1002 = vst [vmem:[%s175 + $0x80] sm:$0xff] %v796
      %1003 = vst [vmem:[%s175 + $0x88] sm:$0xff] %v799
      %1004 = vst [vmem:[%s175 + $0x90] sm:$0xff] %v804
      %1005 = vst [vmem:[%s175 + $0x98] sm:$0xff] %v807
      %1006 = vst [vmem:[%s175 + $0xa0] sm:$0xff] %v812
      %1007 = vst [vmem:[%s175 + $0xa8] sm:$0xff] %v815
      %1008 = vst [vmem:[%s175 + $0xb0] sm:$0xff] %v820
      %1009 = vst [vmem:[%s175 + $0xb8] sm:$0xff] %v823
      %1010 = vst [vmem:[%s175 + $0xc0] sm:$0xff] %v828
      %1011 = vst [vmem:[%s175 + $0xc8] sm:$0xff] %v831
      %1012 = vst [vmem:[%s175 + $0xd0] sm:$0xff] %v836
      %1013 = vst [vmem:[%s175 + $0xd8] sm:$0xff] %v839
      %1014 = vst [vmem:[%s175 + $0xe0] sm:$0xff] %v844
      %1015 = vst [vmem:[%s175 + $0xe8] sm:$0xff] %v847
      %1016 = vst [vmem:[%s175 + $0xf0] sm:$0xff] %v852
      %1017 = vst [vmem:[%s175 + $0xf8] sm:$0xff] %v855
      %1018 = vst [vmem:[%s175 + $0x100] sm:$0xff] %v860
      %1019 = vst [vmem:[%s175 + $0x108] sm:$0xff] %v863
      %1020 = vst [vmem:[%s175 + $0x110] sm:$0xff] %v868
      %1021 = vst [vmem:[%s175 + $0x118] sm:$0xff] %v871
      %1022 = vst [vmem:[%s175 + $0x120] sm:$0xff] %v876
      %1023 = vst [vmem:[%s175 + $0x128] sm:$0xff] %v879
      %1024 = vst [vmem:[%s175 + $0x130] sm:$0xff] %v884
      %1025 = vst [vmem:[%s175 + $0x138] sm:$0xff] %v887
      %1026 = vst [vmem:[%s175 + $0x140] sm:$0xff] %v892
      %1027 = vst [vmem:[%s175 + $0x148] sm:$0xff] %v895
      %1028 = vst [vmem:[%s175 + $0x150] sm:$0xff] %v900
      %1029 = vst [vmem:[%s175 + $0x158] sm:$0xff] %v903
      %1030 = vst [vmem:[%s175 + $0x160] sm:$0xff] %v908
      %1031 = vst [vmem:[%s175 + $0x168] sm:$0xff] %v911
      %1032 = vst [vmem:[%s175 + $0x170] sm:$0xff] %v916
      %1033 = vst [vmem:[%s175 + $0x178] sm:$0xff] %v919
      %1034 = vst [vmem:[%s175 + $0x180] sm:$0xff] %v924
      %1035 = vst [vmem:[%s175 + $0x188] sm:$0xff] %v927
      %1036 = vst [vmem:[%s175 + $0x190] sm:$0xff] %v932
      %1037 = vst [vmem:[%s175 + $0x198] sm:$0xff] %v935
      %1038 = vst [vmem:[%s175 + $0x1a0] sm:$0xff] %v940
      %1039 = vst [vmem:[%s175 + $0x1a8] sm:$0xff] %v943
      %1040 = vst [vmem:[%s175 + $0x1b0] sm:$0xff] %v948
      %1041 = vst [vmem:[%s175 + $0x1b8] sm:$0xff] %v951
      %1042 = vst [vmem:[%s175 + $0x1c0] sm:$0xff] %v956
      %1043 = vst [vmem:[%s175 + $0x1c8] sm:$0xff] %v959
      %1044 = vst [vmem:[%s175 + $0x1d0] sm:$0xff] %v964
      %1045 = vst [vmem:[%s175 + $0x1d8] sm:$0xff] %v967
      %1046 = vst [vmem:[%s175 + $0x1e0] sm:$0xff] %v972
      %1047 = vst [vmem:[%s175 + $0x1e8] sm:$0xff] %v975
      %1048 = vst [vmem:[%s175 + $0x1f0] sm:$0xff] %v980
      %1049 = vst [vmem:[%s175 + $0x1f8] sm:$0xff] %v983
      %s1050 = smul.u32 64, %s14
      %p1051 = scmp.lt.s32.totalorder %s1050, 319
      %s1052 = scalar_select %p1051, %s1050, 319
      %s1053 = smul.addr %s1052, 8
      %s1054 = scalar_lea.vmem %s3, %s1053
      // Predicated region
      $region33: #{forward.17} parent=31 // pred_check
        %p1055 = pneg %p100
      $region34: #{forward.17} parent=31 // pred_check_branch
        %1057 = sbr.rel (%p1055) target = $region36
      $region35: #{forward.17} parent=31 // pred_region
        %s1058 = smul.u32 64, %s14
      $region36: #{forward.17} parent=31 // pred_fallthru
        _
    $region32: #{forward.17} parent=5 // pred_fallthru
      _
    %p1059 = scmp.le.s32.totalorder 2, %s9
    // Predicated region
    $region37: #{forward.17} parent=5 // pred_check
      %p1060 = pneg %p1059
    $region38: #{forward.17} parent=5 // pred_check_branch
      %1062 = sbr.rel (%p1060) target = $region40
    $region39: #{forward.17} parent=5 // pred_region
      %s1063 = ssub.s32 %s9, 2
      // Predicated region
      $region41: #{forward.17} parent=39 // pred_check
        %p1064 = pneg %p106
      $region42: #{forward.17} parent=39 // pred_check_branch
        %1066 = sbr.rel (%p1064) target = $region44
      $region43: #{forward.17} parent=39 // pred_region
        %s1067 = smul.u32 64, %s15
        %p1068 = scmp.lt.s32.totalorder %s1067, 319
        %s1069 = scalar_select %p1068, %s1067, 319
        %s1070 = smul.addr %s1069, 8
        %s1071 = scalar_lea.vmem %s3, %s1070
      $region44: #{forward.17} parent=39 // pred_fallthru
        _
    $region40: #{forward.17} parent=5 // pred_fallthru
      _
  $region6: #{forward.17} parent=0 // loop_footer
    %s13 = sadd.s32 1, %s9
  $region7: #{forward.17} parent=0 // loop_footer_branch
    %8 = sbr.rel target = $region3
  $region8: #{forward.17} parent=0 // loop_exit
    _

// kernel: forward.18
$region0: #{forward.18}
  #allocation0 [shape = 'u32[]', space=smem, size = 0x4, offset = 0x4, fixed_abs, tag = 'smem constant byte address 0x4 - core index']
  #allocation1 [shape = 'u32[144,128]{1,0:T(1,128)}', space=vmem, size = 0x12000, scoped, tag = 'internal scratch']
  %s0 = inlined_call_operand.vmem [shape: f32[9,512,128], index: 0, kind: input, shape index: {}]
  %s1 = inlined_call_operand.vmem [shape: f32[512,128], index: 1, kind: output, shape index: {}]
  %s2 = sld [smem:[#allocation0]]
  $region75: #{forward.18} parent=0
    _
  %s4 = ssub.s32 1, %s2
  %s5 = scalar_select 0, %s4, %s2
  $region1: #{forward.18} parent=0
    #allocation2 [shape = 'u8[2359296]{0}', space=vmem, size = 0x240000, scoped, tag = 'input window, operand 0']
    loop: start=0, step=1, limit=4
    $region2: #{forward.18} parent=1 // loop_pre_header
      _
    $region3: #{forward.18} parent=1 // loop_header
      %s7 = sphi 0, %s11
      %p8 = scmp.ge.s32.totalorder %s7, 4
      %s17 = sphi 0, %s19
      %s20 = sphi 0, %s17
      %s21 = sphi 0, %s20
      %s37 = sphi 0, %s21
      %s43 = sphi 0, %s45
      %s46 = sphi 0, %s43
      %s47 = sphi 0, %s46
      %s63 = sphi 0, %s47
    $region4: #{forward.18} parent=1 // loop_header_branch
      %10 = sbr.rel (%p8) target = $region8
    $region5: #{forward.18} parent=1 // loop_body
      %s12 = ssub.s32 %s7, 1
      %s13 = ssub.s32 %s7, 2
      %s14 = sadd.s32 %s7, 1
      %s15 = ssub.s32 %s7, %s14
      %p16 = scmp.eq.s32.totalorder %s15, 0
      %s18 = sadd.s32 %s17, 1
      %s19 = scalar_select %p16, %s17, %s18
      %p22 = pneg %p16
      %p23 = scmp.eq.s32.totalorder %s7, 1
      %p24 = por %p22, %p23
      %p25 = scmp.ne.s32.totalorder %s17, %s20
      %p26 = scmp.eq.s32.totalorder %s7, 0
      %p27 = por %p25, %p26
      %p28 = scmp.ne.s32.totalorder %s17, %s20
      %p29 = scmp.eq.s32.totalorder %s12, 1
      %p30 = por %p28, %p29
      %p31 = scmp.ne.s32.totalorder %s20, %s21
      %p32 = scmp.eq.s32.totalorder %s12, 0
      %p33 = por %p31, %p32
      %p34 = scmp.ne.s32.totalorder %s20, %s21
      %p35 = scmp.eq.s32.totalorder %s13, 1
      %p36 = por %p34, %p35
      %p38 = scmp.ne.s32.totalorder %s21, %s37
      %p39 = scmp.eq.s32.totalorder %s13, 0
      %p40 = por %p38, %p39
      %s41 = ssub.s32 %s7, %s14
      %p42 = scmp.eq.s32.totalorder %s41, 0
      %s44 = sadd.s32 %s43, 1
      %s45 = scalar_select %p42, %s43, %s44
      %p48 = pneg %p42
      %p49 = scmp.eq.s32.totalorder %s7, 1
      %p50 = por %p48, %p49
      %p51 = scmp.ne.s32.totalorder %s43, %s46
      %p52 = scmp.eq.s32.totalorder %s7, 0
      %p53 = por %p51, %p52
      %p54 = scmp.ne.s32.totalorder %s43, %s46
      %p55 = scmp.eq.s32.totalorder %s12, 1
      %p56 = por %p54, %p55
      %p57 = scmp.ne.s32.totalorder %s46, %s47
      %p58 = scmp.eq.s32.totalorder %s12, 0
      %p59 = por %p57, %p58
      %p60 = scmp.ne.s32.totalorder %s46, %s47
      %p61 = scmp.eq.s32.totalorder %s13, 1
      %p62 = por %p60, %p61
      %p64 = scmp.ne.s32.totalorder %s47, %s63
      %p65 = scmp.eq.s32.totalorder %s13, 0
      %p66 = por %p64, %p65
      %p67 = scmp.le.s32.totalorder 1, %s7
      %p68 = scmp.lt.s32.totalorder %s7, 3
      %p69 = pnand %p67, %p68
      %p70 = pneg %p69
      // Predicated region
      $region9: #{forward.18} parent=5 // pred_check
        _
      $region10: #{forward.18} parent=5 // pred_check_branch
        %72 = sbr.rel (%p69) target = $region12
      $region11: #{forward.18} parent=5 // pred_region
        %s73 = ssub.s32 %s7, 1
      $region12: #{forward.18} parent=5 // pred_fallthru
        _
      %p74 = scmp.lt.s32.totalorder %s7, 2
      // Predicated region
      $region13: #{forward.18} parent=5 // pred_check
        %p75 = pneg %p74
      $region14: #{forward.18} parent=5 // pred_check_branch
        %77 = sbr.rel (%p75) target = $region16
      $region15: #{forward.18} parent=5 // pred_region
        // Predicated region
        $region17: #{forward.18} parent=15 // pred_check
          %p78 = pneg %p27
        $region18: #{forward.18} parent=15 // pred_check_branch
          %80 = sbr.rel (%p78) target = $region20
        $region19: #{forward.18} parent=15 // pred_region
          %s81 = sand.u32 %s17, 1
          %s82 = sand.u32 %s17, 1
          %s83 = smul.addr %s82, 2304
          %s84 = scalar_lea.vmem [#allocation2], %s83
          %s85 = smul.u32 32, %s7
          %s86 = smul.addr %s85, 8
          %s87 = scalar_lea.vmem %s0, %s86
          // Predicated region
          $region21: #{forward.18} parent=19 // pred_check
            _
          $region22: #{forward.18} parent=19 // pred_check_branch
            %89 = sbr.rel (0) target = $region24
          $region23: #{forward.18} parent=19 // pred_region
            // Predicated region
            $region25: #{forward.18} parent=23 // pred_check
              _
            $region26: #{forward.18} parent=23 // pred_check_branch
              %91 = sbr.rel (0) target = $region28
            $region27: #{forward.18} parent=23 // pred_region
              // Predicated region
              $region40: #{forward.18} parent=27 // pred_check
                _
              $region41: #{forward.18} parent=27 // pred_check_branch
                %680 = sbr.rel (0) target = $region43
              $region42: #{forward.18} parent=27 // pred_region
                loop: start=0, step=1, limit=1
                $region44: #{forward.18} parent=42 // loop_pre_header
                  _
                $region45: #{forward.18} parent=42 // loop_header
                  %s682 = sphi 0, %s686
                  %p683 = scmp.ge.s32.totalorder %s682, 1
                  %s687 = sphi %s87, %s87
                  %s688 = sphi %s84, %s84
                $region46: #{forward.18} parent=42 // loop_header_branch
                  %685 = sbr.rel (%p683) target = $region50
                $region47: #{forward.18} parent=42 // loop_body
                  %v689 = vld [vmem:[%s687] sm:$0xff]
                  %690 = vst [vmem:[%s688] sm:$0xff] %v689
                  %v691 = vld [vmem:[%s687 + $0x8] sm:$0xff]
                  %692 = vst [vmem:[%s688 + $0x8] sm:$0xff] %v691
                  %v693 = vld [vmem:[%s687 + $0x10] sm:$0xff]
                  %694 = vst [vmem:[%s688 + $0x10] sm:$0xff] %v693
                  %v695 = vld [vmem:[%s687 + $0x18] sm:$0xff]
                  %696 = vst [vmem:[%s688 + $0x18] sm:$0xff] %v695
                  %v697 = vld [vmem:[%s687 + $0x20] sm:$0xff]
                  %698 = vst [vmem:[%s688 + $0x20] sm:$0xff] %v697
                  %v699 = vld [vmem:[%s687 + $0x28] sm:$0xff]
                  %700 = vst [vmem:[%s688 + $0x28] sm:$0xff] %v699
                  %v701 = vld [vmem:[%s687 + $0x30] sm:$0xff]
                  %702 = vst [vmem:[%s688 + $0x30] sm:$0xff] %v701
                  %v703 = vld [vmem:[%s687 + $0x38] sm:$0xff]
                  %704 = vst [vmem:[%s688 + $0x38] sm:$0xff] %v703
                  %v705 = vld [vmem:[%s687 + $0x40] sm:$0xff]
                  %706 = vst [vmem:[%s688 + $0x40] sm:$0xff] %v705
                  %v707 = vld [vmem:[%s687 + $0x48] sm:$0xff]
                  %708 = vst [vmem:[%s688 + $0x48] sm:$0xff] %v707
                  %v709 = vld [vmem:[%s687 + $0x50] sm:$0xff]
                  %710 = vst [vmem:[%s688 + $0x50] sm:$0xff] %v709
                  %v711 = vld [vmem:[%s687 + $0x58] sm:$0xff]
                  %712 = vst [vmem:[%s688 + $0x58] sm:$0xff] %v711
                  %v713 = vld [vmem:[%s687 + $0x60] sm:$0xff]
                  %714 = vst [vmem:[%s688 + $0x60] sm:$0xff] %v713
                  %v715 = vld [vmem:[%s687 + $0x68] sm:$0xff]
                  %716 = vst [vmem:[%s688 + $0x68] sm:$0xff] %v715
                  %v717 = vld [vmem:[%s687 + $0x70] sm:$0xff]
                  %718 = vst [vmem:[%s688 + $0x70] sm:$0xff] %v717
                  %v719 = vld [vmem:[%s687 + $0x78] sm:$0xff]
                  %720 = vst [vmem:[%s688 + $0x78] sm:$0xff] %v719
                  %v721 = vld [vmem:[%s687 + $0x80] sm:$0xff]
                  %722 = vst [vmem:[%s688 + $0x80] sm:$0xff] %v721
                  %v723 = vld [vmem:[%s687 + $0x88] sm:$0xff]
                  %724 = vst [vmem:[%s688 + $0x88] sm:$0xff] %v723
                  %v725 = vld [vmem:[%s687 + $0x90] sm:$0xff]
                  %726 = vst [vmem:[%s688 + $0x90] sm:$0xff] %v725
                  %v727 = vld [vmem:[%s687 + $0x98] sm:$0xff]
                  %728 = vst [vmem:[%s688 + $0x98] sm:$0xff] %v727
                  %v729 = vld [vmem:[%s687 + $0xa0] sm:$0xff]
                  %730 = vst [vmem:[%s688 + $0xa0] sm:$0xff] %v729
                  %v731 = vld [vmem:[%s687 + $0xa8] sm:$0xff]
                  %732 = vst [vmem:[%s688 + $0xa8] sm:$0xff] %v731
                  %v733 = vld [vmem:[%s687 + $0xb0] sm:$0xff]
                  %734 = vst [vmem:[%s688 + $0xb0] sm:$0xff] %v733
                  %v735 = vld [vmem:[%s687 + $0xb8] sm:$0xff]
                  %736 = vst [vmem:[%s688 + $0xb8] sm:$0xff] %v735
                  %v737 = vld [vmem:[%s687 + $0xc0] sm:$0xff]
                  %738 = vst [vmem:[%s688 + $0xc0] sm:$0xff] %v737
                  %v739 = vld [vmem:[%s687 + $0xc8] sm:$0xff]
                  %740 = vst [vmem:[%s688 + $0xc8] sm:$0xff] %v739
                  %v741 = vld [vmem:[%s687 + $0xd0] sm:$0xff]
                  %742 = vst [vmem:[%s688 + $0xd0] sm:$0xff] %v741
                  %v743 = vld [vmem:[%s687 + $0xd8] sm:$0xff]
                  %744 = vst [vmem:[%s688 + $0xd8] sm:$0xff] %v743
                  %v745 = vld [vmem:[%s687 + $0xe0] sm:$0xff]
                  %746 = vst [vmem:[%s688 + $0xe0] sm:$0xff] %v745
                  %v747 = vld [vmem:[%s687 + $0xe8] sm:$0xff]
                  %748 = vst [vmem:[%s688 + $0xe8] sm:$0xff] %v747
                  %v749 = vld [vmem:[%s687 + $0xf0] sm:$0xff]
                  %750 = vst [vmem:[%s688 + $0xf0] sm:$0xff] %v749
                  %v751 = vld [vmem:[%s687 + $0xf8] sm:$0xff]
                  %752 = vst [vmem:[%s688 + $0xf8] sm:$0xff] %v751
                  %v753 = vld [vmem:[%s687 + $0x200] sm:$0xff]
                  %754 = vst [vmem:[%s688 + $0x100] sm:$0xff] %v753
                  %v755 = vld [vmem:[%s687 + $0x208] sm:$0xff]
                  %756 = vst [vmem:[%s688 + $0x108] sm:$0xff] %v755
                  %v757 = vld [vmem:[%s687 + $0x210] sm:$0xff]
                  %758 = vst [vmem:[%s688 + $0x110] sm:$0xff] %v757
                  %v759 = vld [vmem:[%s687 + $0x218] sm:$0xff]
                  %760 = vst [vmem:[%s688 + $0x118] sm:$0xff] %v759
                  %v761 = vld [vmem:[%s687 + $0x220] sm:$0xff]
                  %762 = vst [vmem:[%s688 + $0x120] sm:$0xff] %v761
                  %v763 = vld [vmem:[%s687 + $0x228] sm:$0xff]
                  %764 = vst [vmem:[%s688 + $0x128] sm:$0xff] %v763
                  %v765 = vld [vmem:[%s687 + $0x230] sm:$0xff]
                  %766 = vst [vmem:[%s688 + $0x130] sm:$0xff] %v765
                  %v767 = vld [vmem:[%s687 + $0x238] sm:$0xff]
                  %768 = vst [vmem:[%s688 + $0x138] sm:$0xff] %v767
                  %v769 = vld [vmem:[%s687 + $0x240] sm:$0xff]
                  %770 = vst [vmem:[%s688 + $0x140] sm:$0xff] %v769
                  %v771 = vld [vmem:[%s687 + $0x248] sm:$0xff]
                  %772 = vst [vmem:[%s688 + $0x148] sm:$0xff] %v771
                  %v773 = vld [vmem:[%s687 + $0x250] sm:$0xff]
                  %774 = vst [vmem:[%s688 + $0x150] sm:$0xff] %v773
                  %v775 = vld [vmem:[%s687 + $0x258] sm:$0xff]
                  %776 = vst [vmem:[%s688 + $0x158] sm:$0xff] %v775
                  %v777 = vld [vmem:[%s687 + $0x260] sm:$0xff]
                  %778 = vst [vmem:[%s688 + $0x160] sm:$0xff] %v777
                  %v779 = vld [vmem:[%s687 + $0x268] sm:$0xff]
                  %780 = vst [vmem:[%s688 + $0x168] sm:$0xff] %v779
                  %v781 = vld [vmem:[%s687 + $0x270] sm:$0xff]
                  %782 = vst [vmem:[%s688 + $0x170] sm:$0xff] %v781
                  %v783 = vld [vmem:[%s687 + $0x278] sm:$0xff]
                  %784 = vst [vmem:[%s688 + $0x178] sm:$0xff] %v783
                  %v785 = vld [vmem:[%s687 + $0x280] sm:$0xff]
                  %786 = vst [vmem:[%s688 + $0x180] sm:$0xff] %v785
                  %v787 = vld [vmem:[%s687 + $0x288] sm:$0xff]
                  %788 = vst [vmem:[%s688 + $0x188] sm:$0xff] %v787
                  %v789 = vld [vmem:[%s687 + $0x290] sm:$0xff]
                  %790 = vst [vmem:[%s688 + $0x190] sm:$0xff] %v789
                  %v791 = vld [vmem:[%s687 + $0x298] sm:$0xff]
                  %792 = vst [vmem:[%s688 + $0x198] sm:$0xff] %v791
                  %v793 = vld [vmem:[%s687 + $0x2a0] sm:$0xff]
                  %794 = vst [vmem:[%s688 + $0x1a0] sm:$0xff] %v793
                  %v795 = vld [vmem:[%s687 + $0x2a8] sm:$0xff]
                  %796 = vst [vmem:[%s688 + $0x1a8] sm:$0xff] %v795
                  %v797 = vld [vmem:[%s687 + $0x2b0] sm:$0xff]
                  %798 = vst [vmem:[%s688 + $0x1b0] sm:$0xff] %v797
                  %v799 = vld [vmem:[%s687 + $0x2b8] sm:$0xff]
                  %800 = vst [vmem:[%s688 + $0x1b8] sm:$0xff] %v799
                  %v801 = vld [vmem:[%s687 + $0x2c0] sm:$0xff]
                  %802 = vst [vmem:[%s688 + $0x1c0] sm:$0xff] %v801
                  %v803 = vld [vmem:[%s687 + $0x2c8] sm:$0xff]
                  %804 = vst [vmem:[%s688 + $0x1c8] sm:$0xff] %v803
                  %v805 = vld [vmem:[%s687 + $0x2d0] sm:$0xff]
                  %806 = vst [vmem:[%s688 + $0x1d0] sm:$0xff] %v805
                  %v807 = vld [vmem:[%s687 + $0x2d8] sm:$0xff]
                  %808 = vst [vmem:[%s688 + $0x1d8] sm:$0xff] %v807
                  %v809 = vld [vmem:[%s687 + $0x2e0] sm:$0xff]
                  %810 = vst [vmem:[%s688 + $0x1e0] sm:$0xff] %v809
                  %v811 = vld [vmem:[%s687 + $0x2e8] sm:$0xff]
                  %812 = vst [vmem:[%s688 + $0x1e8] sm:$0xff] %v811
                  %v813 = vld [vmem:[%s687 + $0x2f0] sm:$0xff]
                  %814 = vst [vmem:[%s688 + $0x1f0] sm:$0xff] %v813
                  %v815 = vld [vmem:[%s687 + $0x2f8] sm:$0xff]
                  %816 = vst [vmem:[%s688 + $0x1f8] sm:$0xff] %v815
                  %v817 = vld [vmem:[%s687 + $0x400] sm:$0xff]
                  %818 = vst [vmem:[%s688 + $0x200] sm:$0xff] %v817
                  %v819 = vld [vmem:[%s687 + $0x408] sm:$0xff]
                  %820 = vst [vmem:[%s688 + $0x208] sm:$0xff] %v819
                  %v821 = vld [vmem:[%s687 + $0x410] sm:$0xff]
                  %822 = vst [vmem:[%s688 + $0x210] sm:$0xff] %v821
                  %v823 = vld [vmem:[%s687 + $0x418] sm:$0xff]
                  %824 = vst [vmem:[%s688 + $0x218] sm:$0xff] %v823
                  %v825 = vld [vmem:[%s687 + $0x420] sm:$0xff]
                  %826 = vst [vmem:[%s688 + $0x220] sm:$0xff] %v825
                  %v827 = vld [vmem:[%s687 + $0x428] sm:$0xff]
                  %828 = vst [vmem:[%s688 + $0x228] sm:$0xff] %v827
                  %v829 = vld [vmem:[%s687 + $0x430] sm:$0xff]
                  %830 = vst [vmem:[%s688 + $0x230] sm:$0xff] %v829
                  %v831 = vld [vmem:[%s687 + $0x438] sm:$0xff]
                  %832 = vst [vmem:[%s688 + $0x238] sm:$0xff] %v831
                  %v833 = vld [vmem:[%s687 + $0x440] sm:$0xff]
                  %834 = vst [vmem:[%s688 + $0x240] sm:$0xff] %v833
                  %v835 = vld [vmem:[%s687 + $0x448] sm:$0xff]
                  %836 = vst [vmem:[%s688 + $0x248] sm:$0xff] %v835
                  %v837 = vld [vmem:[%s687 + $0x450] sm:$0xff]
                  %838 = vst [vmem:[%s688 + $0x250] sm:$0xff] %v837
                  %v839 = vld [vmem:[%s687 + $0x458] sm:$0xff]
                  %840 = vst [vmem:[%s688 + $0x258] sm:$0xff] %v839
                  %v841 = vld [vmem:[%s687 + $0x460] sm:$0xff]
                  %842 = vst [vmem:[%s688 + $0x260] sm:$0xff] %v841
                  %v843 = vld [vmem:[%s687 + $0x468] sm:$0xff]
                  %844 = vst [vmem:[%s688 + $0x268] sm:$0xff] %v843
                  %v845 = vld [vmem:[%s687 + $0x470] sm:$0xff]
                  %846 = vst [vmem:[%s688 + $0x270] sm:$0xff] %v845
                  %v847 = vld [vmem:[%s687 + $0x478] sm:$0xff]
                  %848 = vst [vmem:[%s688 + $0x278] sm:$0xff] %v847
                  %v849 = vld [vmem:[%s687 + $0x480] sm:$0xff]
                  %850 = vst [vmem:[%s688 + $0x280] sm:$0xff] %v849
                  %v851 = vld [vmem:[%s687 + $0x488] sm:$0xff]
                  %852 = vst [vmem:[%s688 + $0x288] sm:$0xff] %v851
                  %v853 = vld [vmem:[%s687 + $0x490] sm:$0xff]
                  %854 = vst [vmem:[%s688 + $0x290] sm:$0xff] %v853
                  %v855 = vld [vmem:[%s687 + $0x498] sm:$0xff]
                  %856 = vst [vmem:[%s688 + $0x298] sm:$0xff] %v855
                  %v857 = vld [vmem:[%s687 + $0x4a0] sm:$0xff]
                  %858 = vst [vmem:[%s688 + $0x2a0] sm:$0xff] %v857
                  %v859 = vld [vmem:[%s687 + $0x4a8] sm:$0xff]
                  %860 = vst [vmem:[%s688 + $0x2a8] sm:$0xff] %v859
                  %v861 = vld [vmem:[%s687 + $0x4b0] sm:$0xff]
                  %862 = vst [vmem:[%s688 + $0x2b0] sm:$0xff] %v861
                  %v863 = vld [vmem:[%s687 + $0x4b8] sm:$0xff]
                  %864 = vst [vmem:[%s688 + $0x2b8] sm:$0xff] %v863
                  %v865 = vld [vmem:[%s687 + $0x4c0] sm:$0xff]
                  %866 = vst [vmem:[%s688 + $0x2c0] sm:$0xff] %v865
                  %v867 = vld [vmem:[%s687 + $0x4c8] sm:$0xff]
                  %868 = vst [vmem:[%s688 + $0x2c8] sm:$0xff] %v867
                  %v869 = vld [vmem:[%s687 + $0x4d0] sm:$0xff]
                  %870 = vst [vmem:[%s688 + $0x2d0] sm:$0xff] %v869
                  %v871 = vld [vmem:[%s687 + $0x4d8] sm:$0xff]
                  %872 = vst [vmem:[%s688 + $0x2d8] sm:$0xff] %v871
                  %v873 = vld [vmem:[%s687 + $0x4e0] sm:$0xff]
                  %874 = vst [vmem:[%s688 + $0x2e0] sm:$0xff] %v873
                  %v875 = vld [vmem:[%s687 + $0x4e8] sm:$0xff]
                  %876 = vst [vmem:[%s688 + $0x2e8] sm:$0xff] %v875
                  %v877 = vld [vmem:[%s687 + $0x4f0] sm:$0xff]
                  %878 = vst [vmem:[%s688 + $0x2f0] sm:$0xff] %v877
                  %v879 = vld [vmem:[%s687 + $0x4f8] sm:$0xff]
                  %880 = vst [vmem:[%s688 + $0x2f8] sm:$0xff] %v879
                  %v881 = vld [vmem:[%s687 + $0x600] sm:$0xff]
                  %882 = vst [vmem:[%s688 + $0x300] sm:$0xff] %v881
                  %v883 = vld [vmem:[%s687 + $0x608] sm:$0xff]
                  %884 = vst [vmem:[%s688 + $0x308] sm:$0xff] %v883
                  %v885 = vld [vmem:[%s687 + $0x610] sm:$0xff]
                  %886 = vst [vmem:[%s688 + $0x310] sm:$0xff] %v885
                  %v887 = vld [vmem:[%s687 + $0x618] sm:$0xff]
                  %888 = vst [vmem:[%s688 + $0x318] sm:$0xff] %v887
                  %v889 = vld [vmem:[%s687 + $0x620] sm:$0xff]
                  %890 = vst [vmem:[%s688 + $0x320] sm:$0xff] %v889
                  %v891 = vld [vmem:[%s687 + $0x628] sm:$0xff]
                  %892 = vst [vmem:[%s688 + $0x328] sm:$0xff] %v891
                  %v893 = vld [vmem:[%s687 + $0x630] sm:$0xff]
                  %894 = vst [vmem:[%s688 + $0x330] sm:$0xff] %v893
                  %v895 = vld [vmem:[%s687 + $0x638] sm:$0xff]
                  %896 = vst [vmem:[%s688 + $0x338] sm:$0xff] %v895
                  %v897 = vld [vmem:[%s687 + $0x640] sm:$0xff]
                  %898 = vst [vmem:[%s688 + $0x340] sm:$0xff] %v897
                  %v899 = vld [vmem:[%s687 + $0x648] sm:$0xff]
                  %900 = vst [vmem:[%s688 + $0x348] sm:$0xff] %v899
                  %v901 = vld [vmem:[%s687 + $0x650] sm:$0xff]
                  %902 = vst [vmem:[%s688 + $0x350] sm:$0xff] %v901
                  %v903 = vld [vmem:[%s687 + $0x658] sm:$0xff]
                  %904 = vst [vmem:[%s688 + $0x358] sm:$0xff] %v903
                  %v905 = vld [vmem:[%s687 + $0x660] sm:$0xff]
                  %906 = vst [vmem:[%s688 + $0x360] sm:$0xff] %v905
                  %v907 = vld [vmem:[%s687 + $0x668] sm:$0xff]
                  %908 = vst [vmem:[%s688 + $0x368] sm:$0xff] %v907
                  %v909 = vld [vmem:[%s687 + $0x670] sm:$0xff]
                  %910 = vst [vmem:[%s688 + $0x370] sm:$0xff] %v909
                  %v911 = vld [vmem:[%s687 + $0x678] sm:$0xff]
                  %912 = vst [vmem:[%s688 + $0x378] sm:$0xff] %v911
                  %v913 = vld [vmem:[%s687 + $0x680] sm:$0xff]
                  %914 = vst [vmem:[%s688 + $0x380] sm:$0xff] %v913
                  %v915 = vld [vmem:[%s687 + $0x688] sm:$0xff]
                  %916 = vst [vmem:[%s688 + $0x388] sm:$0xff] %v915
                  %v917 = vld [vmem:[%s687 + $0x690] sm:$0xff]
                  %918 = vst [vmem:[%s688 + $0x390] sm:$0xff] %v917
                  %v919 = vld [vmem:[%s687 + $0x698] sm:$0xff]
                  %920 = vst [vmem:[%s688 + $0x398] sm:$0xff] %v919
                  %v921 = vld [vmem:[%s687 + $0x6a0] sm:$0xff]
                  %922 = vst [vmem:[%s688 + $0x3a0] sm:$0xff] %v921
                  %v923 = vld [vmem:[%s687 + $0x6a8] sm:$0xff]
                  %924 = vst [vmem:[%s688 + $0x3a8] sm:$0xff] %v923
                  %v925 = vld [vmem:[%s687 + $0x6b0] sm:$0xff]
                  %926 = vst [vmem:[%s688 + $0x3b0] sm:$0xff] %v925
                  %v927 = vld [vmem:[%s687 + $0x6b8] sm:$0xff]
                  %928 = vst [vmem:[%s688 + $0x3b8] sm:$0xff] %v927
                  %v929 = vld [vmem:[%s687 + $0x6c0] sm:$0xff]
                  %930 = vst [vmem:[%s688 + $0x3c0] sm:$0xff] %v929
                  %v931 = vld [vmem:[%s687 + $0x6c8] sm:$0xff]
                  %932 = vst [vmem:[%s688 + $0x3c8] sm:$0xff] %v931
                  %v933 = vld [vmem:[%s687 + $0x6d0] sm:$0xff]
                  %934 = vst [vmem:[%s688 + $0x3d0] sm:$0xff] %v933
                  %v935 = vld [vmem:[%s687 + $0x6d8] sm:$0xff]
                  %936 = vst [vmem:[%s688 + $0x3d8] sm:$0xff] %v935
                  %v937 = vld [vmem:[%s687 + $0x6e0] sm:$0xff]
                  %938 = vst [vmem:[%s688 + $0x3e0] sm:$0xff] %v937
                  %v939 = vld [vmem:[%s687 + $0x6e8] sm:$0xff]
                  %940 = vst [vmem:[%s688 + $0x3e8] sm:$0xff] %v939
                  %v941 = vld [vmem:[%s687 + $0x6f0] sm:$0xff]
                  %942 = vst [vmem:[%s688 + $0x3f0] sm:$0xff] %v941
                  %v943 = vld [vmem:[%s687 + $0x6f8] sm:$0xff]
                  %944 = vst [vmem:[%s688 + $0x3f8] sm:$0xff] %v943
                  %v945 = vld [vmem:[%s687 + $0x800] sm:$0xff]
                  %946 = vst [vmem:[%s688 + $0x400] sm:$0xff] %v945
                  %v947 = vld [vmem:[%s687 + $0x808] sm:$0xff]
                  %948 = vst [vmem:[%s688 + $0x408] sm:$0xff] %v947
                  %v949 = vld [vmem:[%s687 + $0x810] sm:$0xff]
                  %950 = vst [vmem:[%s688 + $0x410] sm:$0xff] %v949
                  %v951 = vld [vmem:[%s687 + $0x818] sm:$0xff]
                  %952 = vst [vmem:[%s688 + $0x418] sm:$0xff] %v951
                  %v953 = vld [vmem:[%s687 + $0x820] sm:$0xff]
                  %954 = vst [vmem:[%s688 + $0x420] sm:$0xff] %v953
                  %v955 = vld [vmem:[%s687 + $0x828] sm:$0xff]
                  %956 = vst [vmem:[%s688 + $0x428] sm:$0xff] %v955
                  %v957 = vld [vmem:[%s687 + $0x830] sm:$0xff]
                  %958 = vst [vmem:[%s688 + $0x430] sm:$0xff] %v957
                  %v959 = vld [vmem:[%s687 + $0x838] sm:$0xff]
                  %960 = vst [vmem:[%s688 + $0x438] sm:$0xff] %v959
                  %v961 = vld [vmem:[%s687 + $0x840] sm:$0xff]
                  %962 = vst [vmem:[%s688 + $0x440] sm:$0xff] %v961
                  %v963 = vld [vmem:[%s687 + $0x848] sm:$0xff]
                  %964 = vst [vmem:[%s688 + $0x448] sm:$0xff] %v963
                  %v965 = vld [vmem:[%s687 + $0x850] sm:$0xff]
                  %966 = vst [vmem:[%s688 + $0x450] sm:$0xff] %v965
                  %v967 = vld [vmem:[%s687 + $0x858] sm:$0xff]
                  %968 = vst [vmem:[%s688 + $0x458] sm:$0xff] %v967
                  %v969 = vld [vmem:[%s687 + $0x860] sm:$0xff]
                  %970 = vst [vmem:[%s688 + $0x460] sm:$0xff] %v969
                  %v971 = vld [vmem:[%s687 + $0x868] sm:$0xff]
                  %972 = vst [vmem:[%s688 + $0x468] sm:$0xff] %v971
                  %v973 = vld [vmem:[%s687 + $0x870] sm:$0xff]
                  %974 = vst [vmem:[%s688 + $0x470] sm:$0xff] %v973
                  %v975 = vld [vmem:[%s687 + $0x878] sm:$0xff]
                  %976 = vst [vmem:[%s688 + $0x478] sm:$0xff] %v975
                  %v977 = vld [vmem:[%s687 + $0x880] sm:$0xff]
                  %978 = vst [vmem:[%s688 + $0x480] sm:$0xff] %v977
                  %v979 = vld [vmem:[%s687 + $0x888] sm:$0xff]
                  %980 = vst [vmem:[%s688 + $0x488] sm:$0xff] %v979
                  %v981 = vld [vmem:[%s687 + $0x890] sm:$0xff]
                  %982 = vst [vmem:[%s688 + $0x490] sm:$0xff] %v981
                  %v983 = vld [vmem:[%s687 + $0x898] sm:$0xff]
                  %984 = vst [vmem:[%s688 + $0x498] sm:$0xff] %v983
                  %v985 = vld [vmem:[%s687 + $0x8a0] sm:$0xff]
                  %986 = vst [vmem:[%s688 + $0x4a0] sm:$0xff] %v985
                  %v987 = vld [vmem:[%s687 + $0x8a8] sm:$0xff]
                  %988 = vst [vmem:[%s688 + $0x4a8] sm:$0xff] %v987
                  %v989 = vld [vmem:[%s687 + $0x8b0] sm:$0xff]
                  %990 = vst [vmem:[%s688 + $0x4b0] sm:$0xff] %v989
                  %v991 = vld [vmem:[%s687 + $0x8b8] sm:$0xff]
                  %992 = vst [vmem:[%s688 + $0x4b8] sm:$0xff] %v991
                  %v993 = vld [vmem:[%s687 + $0x8c0] sm:$0xff]
                  %994 = vst [vmem:[%s688 + $0x4c0] sm:$0xff] %v993
                  %v995 = vld [vmem:[%s687 + $0x8c8] sm:$0xff]
                  %996 = vst [vmem:[%s688 + $0x4c8] sm:$0xff] %v995
                  %v997 = vld [vmem:[%s687 + $0x8d0] sm:$0xff]
                  %998 = vst [vmem:[%s688 + $0x4d0] sm:$0xff] %v997
                  %v999 = vld [vmem:[%s687 + $0x8d8] sm:$0xff]
                  %1000 = vst [vmem:[%s688 + $0x4d8] sm:$0xff] %v999
                  %v1001 = vld [vmem:[%s687 + $0x8e0] sm:$0xff]
                  %1002 = vst [vmem:[%s688 + $0x4e0] sm:$0xff] %v1001
                  %v1003 = vld [vmem:[%s687 + $0x8e8] sm:$0xff]
                  %1004 = vst [vmem:[%s688 + $0x4e8] sm:$0xff] %v1003
                  %v1005 = vld [vmem:[%s687 + $0x8f0] sm:$0xff]
                  %1006 = vst [vmem:[%s688 + $0x4f0] sm:$0xff] %v1005
                  %v1007 = vld [vmem:[%s687 + $0x8f8] sm:$0xff]
                  %1008 = vst [vmem:[%s688 + $0x4f8] sm:$0xff] %v1007
                  %v1009 = vld [vmem:[%s687 + $0xa00] sm:$0xff]
                  %1010 = vst [vmem:[%s688 + $0x500] sm:$0xff] %v1009
                  %v1011 = vld [vmem:[%s687 + $0xa08] sm:$0xff]
                  %1012 = vst [vmem:[%s688 + $0x508] sm:$0xff] %v1011
                  %v1013 = vld [vmem:[%s687 + $0xa10] sm:$0xff]
                  %1014 = vst [vmem:[%s688 + $0x510] sm:$0xff] %v1013
                  %v1015 = vld [vmem:[%s687 + $0xa18] sm:$0xff]
                  %1016 = vst [vmem:[%s688 + $0x518] sm:$0xff] %v1015
                  %v1017 = vld [vmem:[%s687 + $0xa20] sm:$0xff]
                  %1018 = vst [vmem:[%s688 + $0x520] sm:$0xff] %v1017
                  %v1019 = vld [vmem:[%s687 + $0xa28] sm:$0xff]
                  %1020 = vst [vmem:[%s688 + $0x528] sm:$0xff] %v1019
                  %v1021 = vld [vmem:[%s687 + $0xa30] sm:$0xff]
                  %1022 = vst [vmem:[%s688 + $0x530] sm:$0xff] %v1021
                  %v1023 = vld [vmem:[%s687 + $0xa38] sm:$0xff]
                  %1024 = vst [vmem:[%s688 + $0x538] sm:$0xff] %v1023
                  %v1025 = vld [vmem:[%s687 + $0xa40] sm:$0xff]
                  %1026 = vst [vmem:[%s688 + $0x540] sm:$0xff] %v1025
                  %v1027 = vld [vmem:[%s687 + $0xa48] sm:$0xff]
                  %1028 = vst [vmem:[%s688 + $0x548] sm:$0xff] %v1027
                  %v1029 = vld [vmem:[%s687 + $0xa50] sm:$0xff]
                  %1030 = vst [vmem:[%s688 + $0x550] sm:$0xff] %v1029
                  %v1031 = vld [vmem:[%s687 + $0xa58] sm:$0xff]
                  %1032 = vst [vmem:[%s688 + $0x558] sm:$0xff] %v1031
                  %v1033 = vld [vmem:[%s687 + $0xa60] sm:$0xff]
                  %1034 = vst [vmem:[%s688 + $0x560] sm:$0xff] %v1033
                  %v1035 = vld [vmem:[%s687 + $0xa68] sm:$0xff]
                  %1036 = vst [vmem:[%s688 + $0x568] sm:$0xff] %v1035
                  %v1037 = vld [vmem:[%s687 + $0xa70] sm:$0xff]
                  %1038 = vst [vmem:[%s688 + $0x570] sm:$0xff] %v1037
                  %v1039 = vld [vmem:[%s687 + $0xa78] sm:$0xff]
                  %1040 = vst [vmem:[%s688 + $0x578] sm:$0xff] %v1039
                  %v1041 = vld [vmem:[%s687 + $0xa80] sm:$0xff]
                  %1042 = vst [vmem:[%s688 + $0x580] sm:$0xff] %v1041
                  %v1043 = vld [vmem:[%s687 + $0xa88] sm:$0xff]
                  %1044 = vst [vmem:[%s688 + $0x588] sm:$0xff] %v1043
                  %v1045 = vld [vmem:[%s687 + $0xa90] sm:$0xff]
                  %1046 = vst [vmem:[%s688 + $0x590] sm:$0xff] %v1045
                  %v1047 = vld [vmem:[%s687 + $0xa98] sm:$0xff]
                  %1048 = vst [vmem:[%s688 + $0x598] sm:$0xff] %v1047
                  %v1049 = vld [vmem:[%s687 + $0xaa0] sm:$0xff]
                  %1050 = vst [vmem:[%s688 + $0x5a0] sm:$0xff] %v1049
                  %v1051 = vld [vmem:[%s687 + $0xaa8] sm:$0xff]
                  %1052 = vst [vmem:[%s688 + $0x5a8] sm:$0xff] %v1051
                  %v1053 = vld [vmem:[%s687 + $0xab0] sm:$0xff]
                  %1054 = vst [vmem:[%s688 + $0x5b0] sm:$0xff] %v1053
                  %v1055 = vld [vmem:[%s687 + $0xab8] sm:$0xff]
                  %1056 = vst [vmem:[%s688 + $0x5b8] sm:$0xff] %v1055
                  %v1057 = vld [vmem:[%s687 + $0xac0] sm:$0xff]
                  %1058 = vst [vmem:[%s688 + $0x5c0] sm:$0xff] %v1057
                  %v1059 = vld [vmem:[%s687 + $0xac8] sm:$0xff]
                  %1060 = vst [vmem:[%s688 + $0x5c8] sm:$0xff] %v1059
                  %v1061 = vld [vmem:[%s687 + $0xad0] sm:$0xff]
                  %1062 = vst [vmem:[%s688 + $0x5d0] sm:$0xff] %v1061
                  %v1063 = vld [vmem:[%s687 + $0xad8] sm:$0xff]
                  %1064 = vst [vmem:[%s688 + $0x5d8] sm:$0xff] %v1063
                  %v1065 = vld [vmem:[%s687 + $0xae0] sm:$0xff]
                  %1066 = vst [vmem:[%s688 + $0x5e0] sm:$0xff] %v1065
                  %v1067 = vld [vmem:[%s687 + $0xae8] sm:$0xff]
                  %1068 = vst [vmem:[%s688 + $0x5e8] sm:$0xff] %v1067
                  %v1069 = vld [vmem:[%s687 + $0xaf0] sm:$0xff]
                  %1070 = vst [vmem:[%s688 + $0x5f0] sm:$0xff] %v1069
                  %v1071 = vld [vmem:[%s687 + $0xaf8] sm:$0xff]
                  %1072 = vst [vmem:[%s688 + $0x5f8] sm:$0xff] %v1071
                  %v1073 = vld [vmem:[%s687 + $0xc00] sm:$0xff]
                  %1074 = vst [vmem:[%s688 + $0x600] sm:$0xff] %v1073
                  %v1075 = vld [vmem:[%s687 + $0xc08] sm:$0xff]
                  %1076 = vst [vmem:[%s688 + $0x608] sm:$0xff] %v1075
                  %v1077 = vld [vmem:[%s687 + $0xc10] sm:$0xff]
                  %1078 = vst [vmem:[%s688 + $0x610] sm:$0xff] %v1077
                  %v1079 = vld [vmem:[%s687 + $0xc18] sm:$0xff]
                  %1080 = vst [vmem:[%s688 + $0x618] sm:$0xff] %v1079
                  %v1081 = vld [vmem:[%s687 + $0xc20] sm:$0xff]
                  %1082 = vst [vmem:[%s688 + $0x620] sm:$0xff] %v1081
                  %v1083 = vld [vmem:[%s687 + $0xc28] sm:$0xff]
                  %1084 = vst [vmem:[%s688 + $0x628] sm:$0xff] %v1083
                  %v1085 = vld [vmem:[%s687 + $0xc30] sm:$0xff]
                  %1086 = vst [vmem:[%s688 + $0x630] sm:$0xff] %v1085
                  %v1087 = vld [vmem:[%s687 + $0xc38] sm:$0xff]
                  %1088 = vst [vmem:[%s688 + $0x638] sm:$0xff] %v1087
                  %v1089 = vld [vmem:[%s687 + $0xc40] sm:$0xff]
                  %1090 = vst [vmem:[%s688 + $0x640] sm:$0xff] %v1089
                  %v1091 = vld [vmem:[%s687 + $0xc48] sm:$0xff]
                  %1092 = vst [vmem:[%s688 + $0x648] sm:$0xff] %v1091
                  %v1093 = vld [vmem:[%s687 + $0xc50] sm:$0xff]
                  %1094 = vst [vmem:[%s688 + $0x650] sm:$0xff] %v1093
                  %v1095 = vld [vmem:[%s687 + $0xc58] sm:$0xff]
                  %1096 = vst [vmem:[%s688 + $0x658] sm:$0xff] %v1095
                  %v1097 = vld [vmem:[%s687 + $0xc60] sm:$0xff]
                  %1098 = vst [vmem:[%s688 + $0x660] sm:$0xff] %v1097
                  %v1099 = vld [vmem:[%s687 + $0xc68] sm:$0xff]
                  %1100 = vst [vmem:[%s688 + $0x668] sm:$0xff] %v1099
                  %v1101 = vld [vmem:[%s687 + $0xc70] sm:$0xff]
                  %1102 = vst [vmem:[%s688 + $0x670] sm:$0xff] %v1101
                  %v1103 = vld [vmem:[%s687 + $0xc78] sm:$0xff]
                  %1104 = vst [vmem:[%s688 + $0x678] sm:$0xff] %v1103
                  %v1105 = vld [vmem:[%s687 + $0xc80] sm:$0xff]
                  %1106 = vst [vmem:[%s688 + $0x680] sm:$0xff] %v1105
                  %v1107 = vld [vmem:[%s687 + $0xc88] sm:$0xff]
                  %1108 = vst [vmem:[%s688 + $0x688] sm:$0xff] %v1107
                  %v1109 = vld [vmem:[%s687 + $0xc90] sm:$0xff]
                  %1110 = vst [vmem:[%s688 + $0x690] sm:$0xff] %v1109
                  %v1111 = vld [vmem:[%s687 + $0xc98] sm:$0xff]
                  %1112 = vst [vmem:[%s688 + $0x698] sm:$0xff] %v1111
                  %v1113 = vld [vmem:[%s687 + $0xca0] sm:$0xff]
                  %1114 = vst [vmem:[%s688 + $0x6a0] sm:$0xff] %v1113
                  %v1115 = vld [vmem:[%s687 + $0xca8] sm:$0xff]
                  %1116 = vst [vmem:[%s688 + $0x6a8] sm:$0xff] %v1115
                  %v1117 = vld [vmem:[%s687 + $0xcb0] sm:$0xff]
                  %1118 = vst [vmem:[%s688 + $0x6b0] sm:$0xff] %v1117
                  %v1119 = vld [vmem:[%s687 + $0xcb8] sm:$0xff]
                  %1120 = vst [vmem:[%s688 + $0x6b8] sm:$0xff] %v1119
                  %v1121 = vld [vmem:[%s687 + $0xcc0] sm:$0xff]
                  %1122 = vst [vmem:[%s688 + $0x6c0] sm:$0xff] %v1121
                  %v1123 = vld [vmem:[%s687 + $0xcc8] sm:$0xff]
                  %1124 = vst [vmem:[%s688 + $0x6c8] sm:$0xff] %v1123
                  %v1125 = vld [vmem:[%s687 + $0xcd0] sm:$0xff]
                  %1126 = vst [vmem:[%s688 + $0x6d0] sm:$0xff] %v1125
                  %v1127 = vld [vmem:[%s687 + $0xcd8] sm:$0xff]
                  %1128 = vst [vmem:[%s688 + $0x6d8] sm:$0xff] %v1127
                  %v1129 = vld [vmem:[%s687 + $0xce0] sm:$0xff]
                  %1130 = vst [vmem:[%s688 + $0x6e0] sm:$0xff] %v1129
                  %v1131 = vld [vmem:[%s687 + $0xce8] sm:$0xff]
                  %1132 = vst [vmem:[%s688 + $0x6e8] sm:$0xff] %v1131
                  %v1133 = vld [vmem:[%s687 + $0xcf0] sm:$0xff]
                  %1134 = vst [vmem:[%s688 + $0x6f0] sm:$0xff] %v1133
                  %v1135 = vld [vmem:[%s687 + $0xcf8] sm:$0xff]
                  %1136 = vst [vmem:[%s688 + $0x6f8] sm:$0xff] %v1135
                  %v1137 = vld [vmem:[%s687 + $0xe00] sm:$0xff]
                  %1138 = vst [vmem:[%s688 + $0x700] sm:$0xff] %v1137
                  %v1139 = vld [vmem:[%s687 + $0xe08] sm:$0xff]
                  %1140 = vst [vmem:[%s688 + $0x708] sm:$0xff] %v1139
                  %v1141 = vld [vmem:[%s687 + $0xe10] sm:$0xff]
                  %1142 = vst [vmem:[%s688 + $0x710] sm:$0xff] %v1141
                  %v1143 = vld [vmem:[%s687 + $0xe18] sm:$0xff]
                  %1144 = vst [vmem:[%s688 + $0x718] sm:$0xff] %v1143
                  %v1145 = vld [vmem:[%s687 + $0xe20] sm:$0xff]
                  %1146 = vst [vmem:[%s688 + $0x720] sm:$0xff] %v1145
                  %v1147 = vld [vmem:[%s687 + $0xe28] sm:$0xff]
                  %1148 = vst [vmem:[%s688 + $0x728] sm:$0xff] %v1147
                  %v1149 = vld [vmem:[%s687 + $0xe30] sm:$0xff]
                  %1150 = vst [vmem:[%s688 + $0x730] sm:$0xff] %v1149
                  %v1151 = vld [vmem:[%s687 + $0xe38] sm:$0xff]
                  %1152 = vst [vmem:[%s688 + $0x738] sm:$0xff] %v1151
                  %v1153 = vld [vmem:[%s687 + $0xe40] sm:$0xff]
                  %1154 = vst [vmem:[%s688 + $0x740] sm:$0xff] %v1153
                  %v1155 = vld [vmem:[%s687 + $0xe48] sm:$0xff]
                  %1156 = vst [vmem:[%s688 + $0x748] sm:$0xff] %v1155
                  %v1157 = vld [vmem:[%s687 + $0xe50] sm:$0xff]
                  %1158 = vst [vmem:[%s688 + $0x750] sm:$0xff] %v1157
                  %v1159 = vld [vmem:[%s687 + $0xe58] sm:$0xff]
                  %1160 = vst [vmem:[%s688 + $0x758] sm:$0xff] %v1159
                  %v1161 = vld [vmem:[%s687 + $0xe60] sm:$0xff]
                  %1162 = vst [vmem:[%s688 + $0x760] sm:$0xff] %v1161
                  %v1163 = vld [vmem:[%s687 + $0xe68] sm:$0xff]
                  %1164 = vst [vmem:[%s688 + $0x768] sm:$0xff] %v1163
                  %v1165 = vld [vmem:[%s687 + $0xe70] sm:$0xff]
                  %1166 = vst [vmem:[%s688 + $0x770] sm:$0xff] %v1165
                  %v1167 = vld [vmem:[%s687 + $0xe78] sm:$0xff]
                  %1168 = vst [vmem:[%s688 + $0x778] sm:$0xff] %v1167
                  %v1169 = vld [vmem:[%s687 + $0xe80] sm:$0xff]
                  %1170 = vst [vmem:[%s688 + $0x780] sm:$0xff] %v1169
                  %v1171 = vld [vmem:[%s687 + $0xe88] sm:$0xff]
                  %1172 = vst [vmem:[%s688 + $0x788] sm:$0xff] %v1171
                  %v1173 = vld [vmem:[%s687 + $0xe90] sm:$0xff]
                  %1174 = vst [vmem:[%s688 + $0x790] sm:$0xff] %v1173
                  %v1175 = vld [vmem:[%s687 + $0xe98] sm:$0xff]
                  %1176 = vst [vmem:[%s688 + $0x798] sm:$0xff] %v1175
                  %v1177 = vld [vmem:[%s687 + $0xea0] sm:$0xff]
                  %1178 = vst [vmem:[%s688 + $0x7a0] sm:$0xff] %v1177
                  %v1179 = vld [vmem:[%s687 + $0xea8] sm:$0xff]
                  %1180 = vst [vmem:[%s688 + $0x7a8] sm:$0xff] %v1179
                  %v1181 = vld [vmem:[%s687 + $0xeb0] sm:$0xff]
                  %1182 = vst [vmem:[%s688 + $0x7b0] sm:$0xff] %v1181
                  %v1183 = vld [vmem:[%s687 + $0xeb8] sm:$0xff]
                  %1184 = vst [vmem:[%s688 + $0x7b8] sm:$0xff] %v1183
                  %v1185 = vld [vmem:[%s687 + $0xec0] sm:$0xff]
                  %1186 = vst [vmem:[%s688 + $0x7c0] sm:$0xff] %v1185
                  %v1187 = vld [vmem:[%s687 + $0xec8] sm:$0xff]
                  %1188 = vst [vmem:[%s688 + $0x7c8] sm:$0xff] %v1187
                  %v1189 = vld [vmem:[%s687 + $0xed0] sm:$0xff]
                  %1190 = vst [vmem:[%s688 + $0x7d0] sm:$0xff] %v1189
                  %v1191 = vld [vmem:[%s687 + $0xed8] sm:$0xff]
                  %1192 = vst [vmem:[%s688 + $0x7d8] sm:$0xff] %v1191
                  %v1193 = vld [vmem:[%s687 + $0xee0] sm:$0xff]
                  %1194 = vst [vmem:[%s688 + $0x7e0] sm:$0xff] %v1193
                  %v1195 = vld [vmem:[%s687 + $0xee8] sm:$0xff]
                  %1196 = vst [vmem:[%s688 + $0x7e8] sm:$0xff] %v1195
                  %v1197 = vld [vmem:[%s687 + $0xef0] sm:$0xff]
                  %1198 = vst [vmem:[%s688 + $0x7f0] sm:$0xff] %v1197
                  %v1199 = vld [vmem:[%s687 + $0xef8] sm:$0xff]
                  %1200 = vst [vmem:[%s688 + $0x7f8] sm:$0xff] %v1199
                  %v1201 = vld [vmem:[%s687 + $0x1000] sm:$0xff]
                  %1202 = vst [vmem:[%s688 + $0x800] sm:$0xff] %v1201
                  %v1203 = vld [vmem:[%s687 + $0x1008] sm:$0xff]
                  %1204 = vst [vmem:[%s688 + $0x808] sm:$0xff] %v1203
                  %v1205 = vld [vmem:[%s687 + $0x1010] sm:$0xff]
                  %1206 = vst [vmem:[%s688 + $0x810] sm:$0xff] %v1205
                  %v1207 = vld [vmem:[%s687 + $0x1018] sm:$0xff]
                  %1208 = vst [vmem:[%s688 + $0x818] sm:$0xff] %v1207
                  %v1209 = vld [vmem:[%s687 + $0x1020] sm:$0xff]
                  %1210 = vst [vmem:[%s688 + $0x820] sm:$0xff] %v1209
                  %v1211 = vld [vmem:[%s687 + $0x1028] sm:$0xff]
                  %1212 = vst [vmem:[%s688 + $0x828] sm:$0xff] %v1211
                  %v1213 = vld [vmem:[%s687 + $0x1030] sm:$0xff]
                  %1214 = vst [vmem:[%s688 + $0x830] sm:$0xff] %v1213
                  %v1215 = vld [vmem:[%s687 + $0x1038] sm:$0xff]
                  %1216 = vst [vmem:[%s688 + $0x838] sm:$0xff] %v1215
                  %v1217 = vld [vmem:[%s687 + $0x1040] sm:$0xff]
                  %1218 = vst [vmem:[%s688 + $0x840] sm:$0xff] %v1217
                  %v1219 = vld [vmem:[%s687 + $0x1048] sm:$0xff]
                  %1220 = vst [vmem:[%s688 + $0x848] sm:$0xff] %v1219
                  %v1221 = vld [vmem:[%s687 + $0x1050] sm:$0xff]
                  %1222 = vst [vmem:[%s688 + $0x850] sm:$0xff] %v1221
                  %v1223 = vld [vmem:[%s687 + $0x1058] sm:$0xff]
                  %1224 = vst [vmem:[%s688 + $0x858] sm:$0xff] %v1223
                  %v1225 = vld [vmem:[%s687 + $0x1060] sm:$0xff]
                  %1226 = vst [vmem:[%s688 + $0x860] sm:$0xff] %v1225
                  %v1227 = vld [vmem:[%s687 + $0x1068] sm:$0xff]
                  %1228 = vst [vmem:[%s688 + $0x868] sm:$0xff] %v1227
                  %v1229 = vld [vmem:[%s687 + $0x1070] sm:$0xff]
                  %1230 = vst [vmem:[%s688 + $0x870] sm:$0xff] %v1229
                  %v1231 = vld [vmem:[%s687 + $0x1078] sm:$0xff]
                  %1232 = vst [vmem:[%s688 + $0x878] sm:$0xff] %v1231
                  %v1233 = vld [vmem:[%s687 + $0x1080] sm:$0xff]
                  %1234 = vst [vmem:[%s688 + $0x880] sm:$0xff] %v1233
                  %v1235 = vld [vmem:[%s687 + $0x1088] sm:$0xff]
                  %1236 = vst [vmem:[%s688 + $0x888] sm:$0xff] %v1235
                  %v1237 = vld [vmem:[%s687 + $0x1090] sm:$0xff]
                  %1238 = vst [vmem:[%s688 + $0x890] sm:$0xff] %v1237
                  %v1239 = vld [vmem:[%s687 + $0x1098] sm:$0xff]
                  %1240 = vst [vmem:[%s688 + $0x898] sm:$0xff] %v1239
                  %v1241 = vld [vmem:[%s687 + $0x10a0] sm:$0xff]
                  %1242 = vst [vmem:[%s688 + $0x8a0] sm:$0xff] %v1241
                  %v1243 = vld [vmem:[%s687 + $0x10a8] sm:$0xff]
                  %1244 = vst [vmem:[%s688 + $0x8a8] sm:$0xff] %v1243
                  %v1245 = vld [vmem:[%s687 + $0x10b0] sm:$0xff]
                  %1246 = vst [vmem:[%s688 + $0x8b0] sm:$0xff] %v1245
                  %v1247 = vld [vmem:[%s687 + $0x10b8] sm:$0xff]
                  %1248 = vst [vmem:[%s688 + $0x8b8] sm:$0xff] %v1247
                  %v1249 = vld [vmem:[%s687 + $0x10c0] sm:$0xff]
                  %1250 = vst [vmem:[%s688 + $0x8c0] sm:$0xff] %v1249
                  %v1251 = vld [vmem:[%s687 + $0x10c8] sm:$0xff]
                  %1252 = vst [vmem:[%s688 + $0x8c8] sm:$0xff] %v1251
                  %v1253 = vld [vmem:[%s687 + $0x10d0] sm:$0xff]
                  %1254 = vst [vmem:[%s688 + $0x8d0] sm:$0xff] %v1253
                  %v1255 = vld [vmem:[%s687 + $0x10d8] sm:$0xff]
                  %1256 = vst [vmem:[%s688 + $0x8d8] sm:$0xff] %v1255
                  %v1257 = vld [vmem:[%s687 + $0x10e0] sm:$0xff]
                  %1258 = vst [vmem:[%s688 + $0x8e0] sm:$0xff] %v1257
                  %v1259 = vld [vmem:[%s687 + $0x10e8] sm:$0xff]
                  %1260 = vst [vmem:[%s688 + $0x8e8] sm:$0xff] %v1259
                  %v1261 = vld [vmem:[%s687 + $0x10f0] sm:$0xff]
                  %1262 = vst [vmem:[%s688 + $0x8f0] sm:$0xff] %v1261
                  %v1263 = vld [vmem:[%s687 + $0x10f8] sm:$0xff]
                  %1264 = vst [vmem:[%s688 + $0x8f8] sm:$0xff] %v1263
                $region48: #{forward.18} parent=42 // loop_footer
                  %s686 = sadd.s32 1, %s682
                $region49: #{forward.18} parent=42 // loop_footer_branch
                  %681 = sbr.rel target = $region45
                $region50: #{forward.18} parent=42 // loop_exit
                  _
              $region43: #{forward.18} parent=27 // pred_fallthru
                _
              // Predicated region
              $region51: #{forward.18} parent=27 // pred_check
                _
              $region52: #{forward.18} parent=27 // pred_check_branch
                %1266 = sbr.rel target = $region54
              $region53: #{forward.18} parent=27 // pred_region
                _
              $region54: #{forward.18} parent=27 // pred_fallthru
                _
            $region28: #{forward.18} parent=23 // pred_fallthru
              _
            // Predicated region
            $region29: #{forward.18} parent=23 // pred_check
              _
            $region30: #{forward.18} parent=23 // pred_check_branch
              %93 = sbr.rel target = $region32
            $region31: #{forward.18} parent=23 // pred_region
              loop: start=0, step=1, limit=1
              $region33: #{forward.18} parent=31 // loop_pre_header
                _
              $region34: #{forward.18} parent=31 // loop_header
                %s96 = sphi 0, %s100
                %p97 = scmp.ge.s32.totalorder %s96, 1
                %s101 = sphi %s87, %s87
                %s102 = sphi %s84, %s84
              $region35: #{forward.18} parent=31 // loop_header_branch
                %99 = sbr.rel (%p97) target = $region39
              $region36: #{forward.18} parent=31 // loop_body
                %v103 = vld [vmem:[%s101] sm:$0xff]
                %104 = vst [vmem:[%s102] sm:$0xff] %v103
                %v105 = vld [vmem:[%s101 + $0x8] sm:$0xff]
                %106 = vst [vmem:[%s102 + $0x8] sm:$0xff] %v105
                %v107 = vld [vmem:[%s101 + $0x10] sm:$0xff]
                %108 = vst [vmem:[%s102 + $0x10] sm:$0xff] %v107
                %v109 = vld [vmem:[%s101 + $0x18] sm:$0xff]
                %110 = vst [vmem:[%s102 + $0x18] sm:$0xff] %v109
                %v111 = vld [vmem:[%s101 + $0x20] sm:$0xff]
                %112 = vst [vmem:[%s102 + $0x20] sm:$0xff] %v111
                %v113 = vld [vmem:[%s101 + $0x28] sm:$0xff]
                %114 = vst [vmem:[%s102 + $0x28] sm:$0xff] %v113
                %v115 = vld [vmem:[%s101 + $0x30] sm:$0xff]
                %116 = vst [vmem:[%s102 + $0x30] sm:$0xff] %v115
                %v117 = vld [vmem:[%s101 + $0x38] sm:$0xff]
                %118 = vst [vmem:[%s102 + $0x38] sm:$0xff] %v117
                %v119 = vld [vmem:[%s101 + $0x40] sm:$0xff]
                %120 = vst [vmem:[%s102 + $0x40] sm:$0xff] %v119
                %v121 = vld [vmem:[%s101 + $0x48] sm:$0xff]
                %122 = vst [vmem:[%s102 + $0x48] sm:$0xff] %v121
                %v123 = vld [vmem:[%s101 + $0x50] sm:$0xff]
                %124 = vst [vmem:[%s102 + $0x50] sm:$0xff] %v123
                %v125 = vld [vmem:[%s101 + $0x58] sm:$0xff]
                %126 = vst [vmem:[%s102 + $0x58] sm:$0xff] %v125
                %v127 = vld [vmem:[%s101 + $0x60] sm:$0xff]
                %128 = vst [vmem:[%s102 + $0x60] sm:$0xff] %v127
                %v129 = vld [vmem:[%s101 + $0x68] sm:$0xff]
                %130 = vst [vmem:[%s102 + $0x68] sm:$0xff] %v129
                %v131 = vld [vmem:[%s101 + $0x70] sm:$0xff]
                %132 = vst [vmem:[%s102 + $0x70] sm:$0xff] %v131
                %v133 = vld [vmem:[%s101 + $0x78] sm:$0xff]
                %134 = vst [vmem:[%s102 + $0x78] sm:$0xff] %v133
                %v135 = vld [vmem:[%s101 + $0x80] sm:$0xff]
                %136 = vst [vmem:[%s102 + $0x80] sm:$0xff] %v135
                %v137 = vld [vmem:[%s101 + $0x88] sm:$0xff]
                %138 = vst [vmem:[%s102 + $0x88] sm:$0xff] %v137
                %v139 = vld [vmem:[%s101 + $0x90] sm:$0xff]
                %140 = vst [vmem:[%s102 + $0x90] sm:$0xff] %v139
                %v141 = vld [vmem:[%s101 + $0x98] sm:$0xff]
                %142 = vst [vmem:[%s102 + $0x98] sm:$0xff] %v141
                %v143 = vld [vmem:[%s101 + $0xa0] sm:$0xff]
                %144 = vst [vmem:[%s102 + $0xa0] sm:$0xff] %v143
                %v145 = vld [vmem:[%s101 + $0xa8] sm:$0xff]
                %146 = vst [vmem:[%s102 + $0xa8] sm:$0xff] %v145
                %v147 = vld [vmem:[%s101 + $0xb0] sm:$0xff]
                %148 = vst [vmem:[%s102 + $0xb0] sm:$0xff] %v147
                %v149 = vld [vmem:[%s101 + $0xb8] sm:$0xff]
                %150 = vst [vmem:[%s102 + $0xb8] sm:$0xff] %v149
                %v151 = vld [vmem:[%s101 + $0xc0] sm:$0xff]
                %152 = vst [vmem:[%s102 + $0xc0] sm:$0xff] %v151
                %v153 = vld [vmem:[%s101 + $0xc8] sm:$0xff]
                %154 = vst [vmem:[%s102 + $0xc8] sm:$0xff] %v153
                %v155 = vld [vmem:[%s101 + $0xd0] sm:$0xff]
                %156 = vst [vmem:[%s102 + $0xd0] sm:$0xff] %v155
                %v157 = vld [vmem:[%s101 + $0xd8] sm:$0xff]
                %158 = vst [vmem:[%s102 + $0xd8] sm:$0xff] %v157
                %v159 = vld [vmem:[%s101 + $0xe0] sm:$0xff]
                %160 = vst [vmem:[%s102 + $0xe0] sm:$0xff] %v159
                %v161 = vld [vmem:[%s101 + $0xe8] sm:$0xff]
                %162 = vst [vmem:[%s102 + $0xe8] sm:$0xff] %v161
                %v163 = vld [vmem:[%s101 + $0xf0] sm:$0xff]
                %164 = vst [vmem:[%s102 + $0xf0] sm:$0xff] %v163
                %v165 = vld [vmem:[%s101 + $0xf8] sm:$0xff]
                %166 = vst [vmem:[%s102 + $0xf8] sm:$0xff] %v165
                %v167 = vld [vmem:[%s101 + $0x200] sm:$0xff]
                %168 = vst [vmem:[%s102 + $0x100] sm:$0xff] %v167
                %v169 = vld [vmem:[%s101 + $0x208] sm:$0xff]
                %170 = vst [vmem:[%s102 + $0x108] sm:$0xff] %v169
                %v171 = vld [vmem:[%s101 + $0x210] sm:$0xff]
                %172 = vst [vmem:[%s102 + $0x110] sm:$0xff] %v171
                %v173 = vld [vmem:[%s101 + $0x218] sm:$0xff]
                %174 = vst [vmem:[%s102 + $0x118] sm:$0xff] %v173
                %v175 = vld [vmem:[%s101 + $0x220] sm:$0xff]
                %176 = vst [vmem:[%s102 + $0x120] sm:$0xff] %v175
                %v177 = vld [vmem:[%s101 + $0x228] sm:$0xff]
                %178 = vst [vmem:[%s102 + $0x128] sm:$0xff] %v177
                %v179 = vld [vmem:[%s101 + $0x230] sm:$0xff]
                %180 = vst [vmem:[%s102 + $0x130] sm:$0xff] %v179
                %v181 = vld [vmem:[%s101 + $0x238] sm:$0xff]
                %182 = vst [vmem:[%s102 + $0x138] sm:$0xff] %v181
                %v183 = vld [vmem:[%s101 + $0x240] sm:$0xff]
                %184 = vst [vmem:[%s102 + $0x140] sm:$0xff] %v183
                %v185 = vld [vmem:[%s101 + $0x248] sm:$0xff]
                %186 = vst [vmem:[%s102 + $0x148] sm:$0xff] %v185
                %v187 = vld [vmem:[%s101 + $0x250] sm:$0xff]
                %188 = vst [vmem:[%s102 + $0x150] sm:$0xff] %v187
                %v189 = vld [vmem:[%s101 + $0x258] sm:$0xff]
                %190 = vst [vmem:[%s102 + $0x158] sm:$0xff] %v189
                %v191 = vld [vmem:[%s101 + $0x260] sm:$0xff]
                %192 = vst [vmem:[%s102 + $0x160] sm:$0xff] %v191
                %v193 = vld [vmem:[%s101 + $0x268] sm:$0xff]
                %194 = vst [vmem:[%s102 + $0x168] sm:$0xff] %v193
                %v195 = vld [vmem:[%s101 + $0x270] sm:$0xff]
                %196 = vst [vmem:[%s102 + $0x170] sm:$0xff] %v195
                %v197 = vld [vmem:[%s101 + $0x278] sm:$0xff]
                %198 = vst [vmem:[%s102 + $0x178] sm:$0xff] %v197
                %v199 = vld [vmem:[%s101 + $0x280] sm:$0xff]
                %200 = vst [vmem:[%s102 + $0x180] sm:$0xff] %v199
                %v201 = vld [vmem:[%s101 + $0x288] sm:$0xff]
                %202 = vst [vmem:[%s102 + $0x188] sm:$0xff] %v201
                %v203 = vld [vmem:[%s101 + $0x290] sm:$0xff]
                %204 = vst [vmem:[%s102 + $0x190] sm:$0xff] %v203
                %v205 = vld [vmem:[%s101 + $0x298] sm:$0xff]
                %206 = vst [vmem:[%s102 + $0x198] sm:$0xff] %v205
                %v207 = vld [vmem:[%s101 + $0x2a0] sm:$0xff]
                %208 = vst [vmem:[%s102 + $0x1a0] sm:$0xff] %v207
                %v209 = vld [vmem:[%s101 + $0x2a8] sm:$0xff]
                %210 = vst [vmem:[%s102 + $0x1a8] sm:$0xff] %v209
                %v211 = vld [vmem:[%s101 + $0x2b0] sm:$0xff]
                %212 = vst [vmem:[%s102 + $0x1b0] sm:$0xff] %v211
                %v213 = vld [vmem:[%s101 + $0x2b8] sm:$0xff]
                %214 = vst [vmem:[%s102 + $0x1b8] sm:$0xff] %v213
                %v215 = vld [vmem:[%s101 + $0x2c0] sm:$0xff]
                %216 = vst [vmem:[%s102 + $0x1c0] sm:$0xff] %v215
                %v217 = vld [vmem:[%s101 + $0x2c8] sm:$0xff]
                %218 = vst [vmem:[%s102 + $0x1c8] sm:$0xff] %v217
                %v219 = vld [vmem:[%s101 + $0x2d0] sm:$0xff]
                %220 = vst [vmem:[%s102 + $0x1d0] sm:$0xff] %v219
                %v221 = vld [vmem:[%s101 + $0x2d8] sm:$0xff]
                %222 = vst [vmem:[%s102 + $0x1d8] sm:$0xff] %v221
                %v223 = vld [vmem:[%s101 + $0x2e0] sm:$0xff]
                %224 = vst [vmem:[%s102 + $0x1e0] sm:$0xff] %v223
                %v225 = vld [vmem:[%s101 + $0x2e8] sm:$0xff]
                %226 = vst [vmem:[%s102 + $0x1e8] sm:$0xff] %v225
                %v227 = vld [vmem:[%s101 + $0x2f0] sm:$0xff]
                %228 = vst [vmem:[%s102 + $0x1f0] sm:$0xff] %v227
                %v229 = vld [vmem:[%s101 + $0x2f8] sm:$0xff]
                %230 = vst [vmem:[%s102 + $0x1f8] sm:$0xff] %v229
                %v231 = vld [vmem:[%s101 + $0x400] sm:$0xff]
                %232 = vst [vmem:[%s102 + $0x200] sm:$0xff] %v231
                %v233 = vld [vmem:[%s101 + $0x408] sm:$0xff]
                %234 = vst [vmem:[%s102 + $0x208] sm:$0xff] %v233
                %v235 = vld [vmem:[%s101 + $0x410] sm:$0xff]
                %236 = vst [vmem:[%s102 + $0x210] sm:$0xff] %v235
                %v237 = vld [vmem:[%s101 + $0x418] sm:$0xff]
                %238 = vst [vmem:[%s102 + $0x218] sm:$0xff] %v237
                %v239 = vld [vmem:[%s101 + $0x420] sm:$0xff]
                %240 = vst [vmem:[%s102 + $0x220] sm:$0xff] %v239
                %v241 = vld [vmem:[%s101 + $0x428] sm:$0xff]
                %242 = vst [vmem:[%s102 + $0x228] sm:$0xff] %v241
                %v243 = vld [vmem:[%s101 + $0x430] sm:$0xff]
                %244 = vst [vmem:[%s102 + $0x230] sm:$0xff] %v243
                %v245 = vld [vmem:[%s101 + $0x438] sm:$0xff]
                %246 = vst [vmem:[%s102 + $0x238] sm:$0xff] %v245
                %v247 = vld [vmem:[%s101 + $0x440] sm:$0xff]
                %248 = vst [vmem:[%s102 + $0x240] sm:$0xff] %v247
                %v249 = vld [vmem:[%s101 + $0x448] sm:$0xff]
                %250 = vst [vmem:[%s102 + $0x248] sm:$0xff] %v249
                %v251 = vld [vmem:[%s101 + $0x450] sm:$0xff]
                %252 = vst [vmem:[%s102 + $0x250] sm:$0xff] %v251
                %v253 = vld [vmem:[%s101 + $0x458] sm:$0xff]
                %254 = vst [vmem:[%s102 + $0x258] sm:$0xff] %v253
                %v255 = vld [vmem:[%s101 + $0x460] sm:$0xff]
                %256 = vst [vmem:[%s102 + $0x260] sm:$0xff] %v255
                %v257 = vld [vmem:[%s101 + $0x468] sm:$0xff]
                %258 = vst [vmem:[%s102 + $0x268] sm:$0xff] %v257
                %v259 = vld [vmem:[%s101 + $0x470] sm:$0xff]
                %260 = vst [vmem:[%s102 + $0x270] sm:$0xff] %v259
                %v261 = vld [vmem:[%s101 + $0x478] sm:$0xff]
                %262 = vst [vmem:[%s102 + $0x278] sm:$0xff] %v261
                %v263 = vld [vmem:[%s101 + $0x480] sm:$0xff]
                %264 = vst [vmem:[%s102 + $0x280] sm:$0xff] %v263
                %v265 = vld [vmem:[%s101 + $0x488] sm:$0xff]
                %266 = vst [vmem:[%s102 + $0x288] sm:$0xff] %v265
                %v267 = vld [vmem:[%s101 + $0x490] sm:$0xff]
                %268 = vst [vmem:[%s102 + $0x290] sm:$0xff] %v267
                %v269 = vld [vmem:[%s101 + $0x498] sm:$0xff]
                %270 = vst [vmem:[%s102 + $0x298] sm:$0xff] %v269
                %v271 = vld [vmem:[%s101 + $0x4a0] sm:$0xff]
                %272 = vst [vmem:[%s102 + $0x2a0] sm:$0xff] %v271
                %v273 = vld [vmem:[%s101 + $0x4a8] sm:$0xff]
                %274 = vst [vmem:[%s102 + $0x2a8] sm:$0xff] %v273
                %v275 = vld [vmem:[%s101 + $0x4b0] sm:$0xff]
                %276 = vst [vmem:[%s102 + $0x2b0] sm:$0xff] %v275
                %v277 = vld [vmem:[%s101 + $0x4b8] sm:$0xff]
                %278 = vst [vmem:[%s102 + $0x2b8] sm:$0xff] %v277
                %v279 = vld [vmem:[%s101 + $0x4c0] sm:$0xff]
                %280 = vst [vmem:[%s102 + $0x2c0] sm:$0xff] %v279
                %v281 = vld [vmem:[%s101 + $0x4c8] sm:$0xff]
                %282 = vst [vmem:[%s102 + $0x2c8] sm:$0xff] %v281
                %v283 = vld [vmem:[%s101 + $0x4d0] sm:$0xff]
                %284 = vst [vmem:[%s102 + $0x2d0] sm:$0xff] %v283
                %v285 = vld [vmem:[%s101 + $0x4d8] sm:$0xff]
                %286 = vst [vmem:[%s102 + $0x2d8] sm:$0xff] %v285
                %v287 = vld [vmem:[%s101 + $0x4e0] sm:$0xff]
                %288 = vst [vmem:[%s102 + $0x2e0] sm:$0xff] %v287
                %v289 = vld [vmem:[%s101 + $0x4e8] sm:$0xff]
                %290 = vst [vmem:[%s102 + $0x2e8] sm:$0xff] %v289
                %v291 = vld [vmem:[%s101 + $0x4f0] sm:$0xff]
                %292 = vst [vmem:[%s102 + $0x2f0] sm:$0xff] %v291
                %v293 = vld [vmem:[%s101 + $0x4f8] sm:$0xff]
                %294 = vst [vmem:[%s102 + $0x2f8] sm:$0xff] %v293
                %v295 = vld [vmem:[%s101 + $0x600] sm:$0xff]
                %296 = vst [vmem:[%s102 + $0x300] sm:$0xff] %v295
                %v297 = vld [vmem:[%s101 + $0x608] sm:$0xff]
                %298 = vst [vmem:[%s102 + $0x308] sm:$0xff] %v297
                %v299 = vld [vmem:[%s101 + $0x610] sm:$0xff]
                %300 = vst [vmem:[%s102 + $0x310] sm:$0xff] %v299
                %v301 = vld [vmem:[%s101 + $0x618] sm:$0xff]
                %302 = vst [vmem:[%s102 + $0x318] sm:$0xff] %v301
                %v303 = vld [vmem:[%s101 + $0x620] sm:$0xff]
                %304 = vst [vmem:[%s102 + $0x320] sm:$0xff] %v303
                %v305 = vld [vmem:[%s101 + $0x628] sm:$0xff]
                %306 = vst [vmem:[%s102 + $0x328] sm:$0xff] %v305
                %v307 = vld [vmem:[%s101 + $0x630] sm:$0xff]
                %308 = vst [vmem:[%s102 + $0x330] sm:$0xff] %v307
                %v309 = vld [vmem:[%s101 + $0x638] sm:$0xff]
                %310 = vst [vmem:[%s102 + $0x338] sm:$0xff] %v309
                %v311 = vld [vmem:[%s101 + $0x640] sm:$0xff]
                %312 = vst [vmem:[%s102 + $0x340] sm:$0xff] %v311
                %v313 = vld [vmem:[%s101 + $0x648] sm:$0xff]
                %314 = vst [vmem:[%s102 + $0x348] sm:$0xff] %v313
                %v315 = vld [vmem:[%s101 + $0x650] sm:$0xff]
                %316 = vst [vmem:[%s102 + $0x350] sm:$0xff] %v315
                %v317 = vld [vmem:[%s101 + $0x658] sm:$0xff]
                %318 = vst [vmem:[%s102 + $0x358] sm:$0xff] %v317
                %v319 = vld [vmem:[%s101 + $0x660] sm:$0xff]
                %320 = vst [vmem:[%s102 + $0x360] sm:$0xff] %v319
                %v321 = vld [vmem:[%s101 + $0x668] sm:$0xff]
                %322 = vst [vmem:[%s102 + $0x368] sm:$0xff] %v321
                %v323 = vld [vmem:[%s101 + $0x670] sm:$0xff]
                %324 = vst [vmem:[%s102 + $0x370] sm:$0xff] %v323
                %v325 = vld [vmem:[%s101 + $0x678] sm:$0xff]
                %326 = vst [vmem:[%s102 + $0x378] sm:$0xff] %v325
                %v327 = vld [vmem:[%s101 + $0x680] sm:$0xff]
                %328 = vst [vmem:[%s102 + $0x380] sm:$0xff] %v327
                %v329 = vld [vmem:[%s101 + $0x688] sm:$0xff]
                %330 = vst [vmem:[%s102 + $0x388] sm:$0xff] %v329
                %v331 = vld [vmem:[%s101 + $0x690] sm:$0xff]
                %332 = vst [vmem:[%s102 + $0x390] sm:$0xff] %v331
                %v333 = vld [vmem:[%s101 + $0x698] sm:$0xff]
                %334 = vst [vmem:[%s102 + $0x398] sm:$0xff] %v333
                %v335 = vld [vmem:[%s101 + $0x6a0] sm:$0xff]
                %336 = vst [vmem:[%s102 + $0x3a0] sm:$0xff] %v335
                %v337 = vld [vmem:[%s101 + $0x6a8] sm:$0xff]
                %338 = vst [vmem:[%s102 + $0x3a8] sm:$0xff] %v337
                %v339 = vld [vmem:[%s101 + $0x6b0] sm:$0xff]
                %340 = vst [vmem:[%s102 + $0x3b0] sm:$0xff] %v339
                %v341 = vld [vmem:[%s101 + $0x6b8] sm:$0xff]
                %342 = vst [vmem:[%s102 + $0x3b8] sm:$0xff] %v341
                %v343 = vld [vmem:[%s101 + $0x6c0] sm:$0xff]
                %344 = vst [vmem:[%s102 + $0x3c0] sm:$0xff] %v343
                %v345 = vld [vmem:[%s101 + $0x6c8] sm:$0xff]
                %346 = vst [vmem:[%s102 + $0x3c8] sm:$0xff] %v345
                %v347 = vld [vmem:[%s101 + $0x6d0] sm:$0xff]
                %348 = vst [vmem:[%s102 + $0x3d0] sm:$0xff] %v347
                %v349 = vld [vmem:[%s101 + $0x6d8] sm:$0xff]
                %350 = vst [vmem:[%s102 + $0x3d8] sm:$0xff] %v349
                %v351 = vld [vmem:[%s101 + $0x6e0] sm:$0xff]
                %352 = vst [vmem:[%s102 + $0x3e0] sm:$0xff] %v351
                %v353 = vld [vmem:[%s101 + $0x6e8] sm:$0xff]
                %354 = vst [vmem:[%s102 + $0x3e8] sm:$0xff] %v353
                %v355 = vld [vmem:[%s101 + $0x6f0] sm:$0xff]
                %356 = vst [vmem:[%s102 + $0x3f0] sm:$0xff] %v355
                %v357 = vld [vmem:[%s101 + $0x6f8] sm:$0xff]
                %358 = vst [vmem:[%s102 + $0x3f8] sm:$0xff] %v357
                %v359 = vld [vmem:[%s101 + $0x800] sm:$0xff]
                %360 = vst [vmem:[%s102 + $0x400] sm:$0xff] %v359
                %v361 = vld [vmem:[%s101 + $0x808] sm:$0xff]
                %362 = vst [vmem:[%s102 + $0x408] sm:$0xff] %v361
                %v363 = vld [vmem:[%s101 + $0x810] sm:$0xff]
                %364 = vst [vmem:[%s102 + $0x410] sm:$0xff] %v363
                %v365 = vld [vmem:[%s101 + $0x818] sm:$0xff]
                %366 = vst [vmem:[%s102 + $0x418] sm:$0xff] %v365
                %v367 = vld [vmem:[%s101 + $0x820] sm:$0xff]
                %368 = vst [vmem:[%s102 + $0x420] sm:$0xff] %v367
                %v369 = vld [vmem:[%s101 + $0x828] sm:$0xff]
                %370 = vst [vmem:[%s102 + $0x428] sm:$0xff] %v369
                %v371 = vld [vmem:[%s101 + $0x830] sm:$0xff]
                %372 = vst [vmem:[%s102 + $0x430] sm:$0xff] %v371
                %v373 = vld [vmem:[%s101 + $0x838] sm:$0xff]
                %374 = vst [vmem:[%s102 + $0x438] sm:$0xff] %v373
                %v375 = vld [vmem:[%s101 + $0x840] sm:$0xff]
                %376 = vst [vmem:[%s102 + $0x440] sm:$0xff] %v375
                %v377 = vld [vmem:[%s101 + $0x848] sm:$0xff]
                %378 = vst [vmem:[%s102 + $0x448] sm:$0xff] %v377
                %v379 = vld [vmem:[%s101 + $0x850] sm:$0xff]
                %380 = vst [vmem:[%s102 + $0x450] sm:$0xff] %v379
                %v381 = vld [vmem:[%s101 + $0x858] sm:$0xff]
                %382 = vst [vmem:[%s102 + $0x458] sm:$0xff] %v381
                %v383 = vld [vmem:[%s101 + $0x860] sm:$0xff]
                %384 = vst [vmem:[%s102 + $0x460] sm:$0xff] %v383
                %v385 = vld [vmem:[%s101 + $0x868] sm:$0xff]
                %386 = vst [vmem:[%s102 + $0x468] sm:$0xff] %v385
                %v387 = vld [vmem:[%s101 + $0x870] sm:$0xff]
                %388 = vst [vmem:[%s102 + $0x470] sm:$0xff] %v387
                %v389 = vld [vmem:[%s101 + $0x878] sm:$0xff]
                %390 = vst [vmem:[%s102 + $0x478] sm:$0xff] %v389
                %v391 = vld [vmem:[%s101 + $0x880] sm:$0xff]
                %392 = vst [vmem:[%s102 + $0x480] sm:$0xff] %v391
                %v393 = vld [vmem:[%s101 + $0x888] sm:$0xff]
                %394 = vst [vmem:[%s102 + $0x488] sm:$0xff] %v393
                %v395 = vld [vmem:[%s101 + $0x890] sm:$0xff]
                %396 = vst [vmem:[%s102 + $0x490] sm:$0xff] %v395
                %v397 = vld [vmem:[%s101 + $0x898] sm:$0xff]
                %398 = vst [vmem:[%s102 + $0x498] sm:$0xff] %v397
                %v399 = vld [vmem:[%s101 + $0x8a0] sm:$0xff]
                %400 = vst [vmem:[%s102 + $0x4a0] sm:$0xff] %v399
                %v401 = vld [vmem:[%s101 + $0x8a8] sm:$0xff]
                %402 = vst [vmem:[%s102 + $0x4a8] sm:$0xff] %v401
                %v403 = vld [vmem:[%s101 + $0x8b0] sm:$0xff]
                %404 = vst [vmem:[%s102 + $0x4b0] sm:$0xff] %v403
                %v405 = vld [vmem:[%s101 + $0x8b8] sm:$0xff]
                %406 = vst [vmem:[%s102 + $0x4b8] sm:$0xff] %v405
                %v407 = vld [vmem:[%s101 + $0x8c0] sm:$0xff]
                %408 = vst [vmem:[%s102 + $0x4c0] sm:$0xff] %v407
                %v409 = vld [vmem:[%s101 + $0x8c8] sm:$0xff]
                %410 = vst [vmem:[%s102 + $0x4c8] sm:$0xff] %v409
                %v411 = vld [vmem:[%s101 + $0x8d0] sm:$0xff]
                %412 = vst [vmem:[%s102 + $0x4d0] sm:$0xff] %v411
                %v413 = vld [vmem:[%s101 + $0x8d8] sm:$0xff]
                %414 = vst [vmem:[%s102 + $0x4d8] sm:$0xff] %v413
                %v415 = vld [vmem:[%s101 + $0x8e0] sm:$0xff]
                %416 = vst [vmem:[%s102 + $0x4e0] sm:$0xff] %v415
                %v417 = vld [vmem:[%s101 + $0x8e8] sm:$0xff]
                %418 = vst [vmem:[%s102 + $0x4e8] sm:$0xff] %v417
                %v419 = vld [vmem:[%s101 + $0x8f0] sm:$0xff]
                %420 = vst [vmem:[%s102 + $0x4f0] sm:$0xff] %v419
                %v421 = vld [vmem:[%s101 + $0x8f8] sm:$0xff]
                %422 = vst [vmem:[%s102 + $0x4f8] sm:$0xff] %v421
                %v423 = vld [vmem:[%s101 + $0xa00] sm:$0xff]
                %424 = vst [vmem:[%s102 + $0x500] sm:$0xff] %v423
                %v425 = vld [vmem:[%s101 + $0xa08] sm:$0xff]
                %426 = vst [vmem:[%s102 + $0x508] sm:$0xff] %v425
                %v427 = vld [vmem:[%s101 + $0xa10] sm:$0xff]
                %428 = vst [vmem:[%s102 + $0x510] sm:$0xff] %v427
                %v429 = vld [vmem:[%s101 + $0xa18] sm:$0xff]
                %430 = vst [vmem:[%s102 + $0x518] sm:$0xff] %v429
                %v431 = vld [vmem:[%s101 + $0xa20] sm:$0xff]
                %432 = vst [vmem:[%s102 + $0x520] sm:$0xff] %v431
                %v433 = vld [vmem:[%s101 + $0xa28] sm:$0xff]
                %434 = vst [vmem:[%s102 + $0x528] sm:$0xff] %v433
                %v435 = vld [vmem:[%s101 + $0xa30] sm:$0xff]
                %436 = vst [vmem:[%s102 + $0x530] sm:$0xff] %v435
                %v437 = vld [vmem:[%s101 + $0xa38] sm:$0xff]
                %438 = vst [vmem:[%s102 + $0x538] sm:$0xff] %v437
                %v439 = vld [vmem:[%s101 + $0xa40] sm:$0xff]
                %440 = vst [vmem:[%s102 + $0x540] sm:$0xff] %v439
                %v441 = vld [vmem:[%s101 + $0xa48] sm:$0xff]
                %442 = vst [vmem:[%s102 + $0x548] sm:$0xff] %v441
                %v443 = vld [vmem:[%s101 + $0xa50] sm:$0xff]
                %444 = vst [vmem:[%s102 + $0x550] sm:$0xff] %v443
                %v445 = vld [vmem:[%s101 + $0xa58] sm:$0xff]
                %446 = vst [vmem:[%s102 + $0x558] sm:$0xff] %v445
                %v447 = vld [vmem:[%s101 + $0xa60] sm:$0xff]
                %448 = vst [vmem:[%s102 + $0x560] sm:$0xff] %v447
                %v449 = vld [vmem:[%s101 + $0xa68] sm:$0xff]
                %450 = vst [vmem:[%s102 + $0x568] sm:$0xff] %v449
                %v451 = vld [vmem:[%s101 + $0xa70] sm:$0xff]
                %452 = vst [vmem:[%s102 + $0x570] sm:$0xff] %v451
                %v453 = vld [vmem:[%s101 + $0xa78] sm:$0xff]
                %454 = vst [vmem:[%s102 + $0x578] sm:$0xff] %v453
                %v455 = vld [vmem:[%s101 + $0xa80] sm:$0xff]
                %456 = vst [vmem:[%s102 + $0x580] sm:$0xff] %v455
                %v457 = vld [vmem:[%s101 + $0xa88] sm:$0xff]
                %458 = vst [vmem:[%s102 + $0x588] sm:$0xff] %v457
                %v459 = vld [vmem:[%s101 + $0xa90] sm:$0xff]
                %460 = vst [vmem:[%s102 + $0x590] sm:$0xff] %v459
                %v461 = vld [vmem:[%s101 + $0xa98] sm:$0xff]
                %462 = vst [vmem:[%s102 + $0x598] sm:$0xff] %v461
                %v463 = vld [vmem:[%s101 + $0xaa0] sm:$0xff]
                %464 = vst [vmem:[%s102 + $0x5a0] sm:$0xff] %v463
                %v465 = vld [vmem:[%s101 + $0xaa8] sm:$0xff]
                %466 = vst [vmem:[%s102 + $0x5a8] sm:$0xff] %v465
                %v467 = vld [vmem:[%s101 + $0xab0] sm:$0xff]
                %468 = vst [vmem:[%s102 + $0x5b0] sm:$0xff] %v467
                %v469 = vld [vmem:[%s101 + $0xab8] sm:$0xff]
                %470 = vst [vmem:[%s102 + $0x5b8] sm:$0xff] %v469
                %v471 = vld [vmem:[%s101 + $0xac0] sm:$0xff]
                %472 = vst [vmem:[%s102 + $0x5c0] sm:$0xff] %v471
                %v473 = vld [vmem:[%s101 + $0xac8] sm:$0xff]
                %474 = vst [vmem:[%s102 + $0x5c8] sm:$0xff] %v473
                %v475 = vld [vmem:[%s101 + $0xad0] sm:$0xff]
                %476 = vst [vmem:[%s102 + $0x5d0] sm:$0xff] %v475
                %v477 = vld [vmem:[%s101 + $0xad8] sm:$0xff]
                %478 = vst [vmem:[%s102 + $0x5d8] sm:$0xff] %v477
                %v479 = vld [vmem:[%s101 + $0xae0] sm:$0xff]
                %480 = vst [vmem:[%s102 + $0x5e0] sm:$0xff] %v479
                %v481 = vld [vmem:[%s101 + $0xae8] sm:$0xff]
                %482 = vst [vmem:[%s102 + $0x5e8] sm:$0xff] %v481
                %v483 = vld [vmem:[%s101 + $0xaf0] sm:$0xff]
                %484 = vst [vmem:[%s102 + $0x5f0] sm:$0xff] %v483
                %v485 = vld [vmem:[%s101 + $0xaf8] sm:$0xff]
                %486 = vst [vmem:[%s102 + $0x5f8] sm:$0xff] %v485
                %v487 = vld [vmem:[%s101 + $0xc00] sm:$0xff]
                %488 = vst [vmem:[%s102 + $0x600] sm:$0xff] %v487
                %v489 = vld [vmem:[%s101 + $0xc08] sm:$0xff]
                %490 = vst [vmem:[%s102 + $0x608] sm:$0xff] %v489
                %v491 = vld [vmem:[%s101 + $0xc10] sm:$0xff]
                %492 = vst [vmem:[%s102 + $0x610] sm:$0xff] %v491
                %v493 = vld [vmem:[%s101 + $0xc18] sm:$0xff]
                %494 = vst [vmem:[%s102 + $0x618] sm:$0xff] %v493
                %v495 = vld [vmem:[%s101 + $0xc20] sm:$0xff]
                %496 = vst [vmem:[%s102 + $0x620] sm:$0xff] %v495
                %v497 = vld [vmem:[%s101 + $0xc28] sm:$0xff]
                %498 = vst [vmem:[%s102 + $0x628] sm:$0xff] %v497
                %v499 = vld [vmem:[%s101 + $0xc30] sm:$0xff]
                %500 = vst [vmem:[%s102 + $0x630] sm:$0xff] %v499
                %v501 = vld [vmem:[%s101 + $0xc38] sm:$0xff]
                %502 = vst [vmem:[%s102 + $0x638] sm:$0xff] %v501
                %v503 = vld [vmem:[%s101 + $0xc40] sm:$0xff]
                %504 = vst [vmem:[%s102 + $0x640] sm:$0xff] %v503
                %v505 = vld [vmem:[%s101 + $0xc48] sm:$0xff]
                %506 = vst [vmem:[%s102 + $0x648] sm:$0xff] %v505
                %v507 = vld [vmem:[%s101 + $0xc50] sm:$0xff]
                %508 = vst [vmem:[%s102 + $0x650] sm:$0xff] %v507
                %v509 = vld [vmem:[%s101 + $0xc58] sm:$0xff]
                %510 = vst [vmem:[%s102 + $0x658] sm:$0xff] %v509
                %v511 = vld [vmem:[%s101 + $0xc60] sm:$0xff]
                %512 = vst [vmem:[%s102 + $0x660] sm:$0xff] %v511
                %v513 = vld [vmem:[%s101 + $0xc68] sm:$0xff]
                %514 = vst [vmem:[%s102 + $0x668] sm:$0xff] %v513
                %v515 = vld [vmem:[%s101 + $0xc70] sm:$0xff]
                %516 = vst [vmem:[%s102 + $0x670] sm:$0xff] %v515
                %v517 = vld [vmem:[%s101 + $0xc78] sm:$0xff]
                %518 = vst [vmem:[%s102 + $0x678] sm:$0xff] %v517
                %v519 = vld [vmem:[%s101 + $0xc80] sm:$0xff]
                %520 = vst [vmem:[%s102 + $0x680] sm:$0xff] %v519
                %v521 = vld [vmem:[%s101 + $0xc88] sm:$0xff]
                %522 = vst [vmem:[%s102 + $0x688] sm:$0xff] %v521
                %v523 = vld [vmem:[%s101 + $0xc90] sm:$0xff]
                %524 = vst [vmem:[%s102 + $0x690] sm:$0xff] %v523
                %v525 = vld [vmem:[%s101 + $0xc98] sm:$0xff]
                %526 = vst [vmem:[%s102 + $0x698] sm:$0xff] %v525
                %v527 = vld [vmem:[%s101 + $0xca0] sm:$0xff]
                %528 = vst [vmem:[%s102 + $0x6a0] sm:$0xff] %v527
                %v529 = vld [vmem:[%s101 + $0xca8] sm:$0xff]
                %530 = vst [vmem:[%s102 + $0x6a8] sm:$0xff] %v529
                %v531 = vld [vmem:[%s101 + $0xcb0] sm:$0xff]
                %532 = vst [vmem:[%s102 + $0x6b0] sm:$0xff] %v531
                %v533 = vld [vmem:[%s101 + $0xcb8] sm:$0xff]
                %534 = vst [vmem:[%s102 + $0x6b8] sm:$0xff] %v533
                %v535 = vld [vmem:[%s101 + $0xcc0] sm:$0xff]
                %536 = vst [vmem:[%s102 + $0x6c0] sm:$0xff] %v535
                %v537 = vld [vmem:[%s101 + $0xcc8] sm:$0xff]
                %538 = vst [vmem:[%s102 + $0x6c8] sm:$0xff] %v537
                %v539 = vld [vmem:[%s101 + $0xcd0] sm:$0xff]
                %540 = vst [vmem:[%s102 + $0x6d0] sm:$0xff] %v539
                %v541 = vld [vmem:[%s101 + $0xcd8] sm:$0xff]
                %542 = vst [vmem:[%s102 + $0x6d8] sm:$0xff] %v541
                %v543 = vld [vmem:[%s101 + $0xce0] sm:$0xff]
                %544 = vst [vmem:[%s102 + $0x6e0] sm:$0xff] %v543
                %v545 = vld [vmem:[%s101 + $0xce8] sm:$0xff]
                %546 = vst [vmem:[%s102 + $0x6e8] sm:$0xff] %v545
                %v547 = vld [vmem:[%s101 + $0xcf0] sm:$0xff]
                %548 = vst [vmem:[%s102 + $0x6f0] sm:$0xff] %v547
                %v549 = vld [vmem:[%s101 + $0xcf8] sm:$0xff]
                %550 = vst [vmem:[%s102 + $0x6f8] sm:$0xff] %v549
                %v551 = vld [vmem:[%s101 + $0xe00] sm:$0xff]
                %552 = vst [vmem:[%s102 + $0x700] sm:$0xff] %v551
                %v553 = vld [vmem:[%s101 + $0xe08] sm:$0xff]
                %554 = vst [vmem:[%s102 + $0x708] sm:$0xff] %v553
                %v555 = vld [vmem:[%s101 + $0xe10] sm:$0xff]
                %556 = vst [vmem:[%s102 + $0x710] sm:$0xff] %v555
                %v557 = vld [vmem:[%s101 + $0xe18] sm:$0xff]
                %558 = vst [vmem:[%s102 + $0x718] sm:$0xff] %v557
                %v559 = vld [vmem:[%s101 + $0xe20] sm:$0xff]
                %560 = vst [vmem:[%s102 + $0x720] sm:$0xff] %v559
                %v561 = vld [vmem:[%s101 + $0xe28] sm:$0xff]
                %562 = vst [vmem:[%s102 + $0x728] sm:$0xff] %v561
                %v563 = vld [vmem:[%s101 + $0xe30] sm:$0xff]
                %564 = vst [vmem:[%s102 + $0x730] sm:$0xff] %v563
                %v565 = vld [vmem:[%s101 + $0xe38] sm:$0xff]
                %566 = vst [vmem:[%s102 + $0x738] sm:$0xff] %v565
                %v567 = vld [vmem:[%s101 + $0xe40] sm:$0xff]
                %568 = vst [vmem:[%s102 + $0x740] sm:$0xff] %v567
                %v569 = vld [vmem:[%s101 + $0xe48] sm:$0xff]
                %570 = vst [vmem:[%s102 + $0x748] sm:$0xff] %v569
                %v571 = vld [vmem:[%s101 + $0xe50] sm:$0xff]
                %572 = vst [vmem:[%s102 + $0x750] sm:$0xff] %v571
                %v573 = vld [vmem:[%s101 + $0xe58] sm:$0xff]
                %574 = vst [vmem:[%s102 + $0x758] sm:$0xff] %v573
                %v575 = vld [vmem:[%s101 + $0xe60] sm:$0xff]
                %576 = vst [vmem:[%s102 + $0x760] sm:$0xff] %v575
                %v577 = vld [vmem:[%s101 + $0xe68] sm:$0xff]
                %578 = vst [vmem:[%s102 + $0x768] sm:$0xff] %v577
                %v579 = vld [vmem:[%s101 + $0xe70] sm:$0xff]
                %580 = vst [vmem:[%s102 + $0x770] sm:$0xff] %v579
                %v581 = vld [vmem:[%s101 + $0xe78] sm:$0xff]
                %582 = vst [vmem:[%s102 + $0x778] sm:$0xff] %v581
                %v583 = vld [vmem:[%s101 + $0xe80] sm:$0xff]
                %584 = vst [vmem:[%s102 + $0x780] sm:$0xff] %v583
                %v585 = vld [vmem:[%s101 + $0xe88] sm:$0xff]
                %586 = vst [vmem:[%s102 + $0x788] sm:$0xff] %v585
                %v587 = vld [vmem:[%s101 + $0xe90] sm:$0xff]
                %588 = vst [vmem:[%s102 + $0x790] sm:$0xff] %v587
                %v589 = vld [vmem:[%s101 + $0xe98] sm:$0xff]
                %590 = vst [vmem:[%s102 + $0x798] sm:$0xff] %v589
                %v591 = vld [vmem:[%s101 + $0xea0] sm:$0xff]
                %592 = vst [vmem:[%s102 + $0x7a0] sm:$0xff] %v591
                %v593 = vld [vmem:[%s101 + $0xea8] sm:$0xff]
                %594 = vst [vmem:[%s102 + $0x7a8] sm:$0xff] %v593
                %v595 = vld [vmem:[%s101 + $0xeb0] sm:$0xff]
                %596 = vst [vmem:[%s102 + $0x7b0] sm:$0xff] %v595
                %v597 = vld [vmem:[%s101 + $0xeb8] sm:$0xff]
                %598 = vst [vmem:[%s102 + $0x7b8] sm:$0xff] %v597
                %v599 = vld [vmem:[%s101 + $0xec0] sm:$0xff]
                %600 = vst [vmem:[%s102 + $0x7c0] sm:$0xff] %v599
                %v601 = vld [vmem:[%s101 + $0xec8] sm:$0xff]
                %602 = vst [vmem:[%s102 + $0x7c8] sm:$0xff] %v601
                %v603 = vld [vmem:[%s101 + $0xed0] sm:$0xff]
                %604 = vst [vmem:[%s102 + $0x7d0] sm:$0xff] %v603
                %v605 = vld [vmem:[%s101 + $0xed8] sm:$0xff]
                %606 = vst [vmem:[%s102 + $0x7d8] sm:$0xff] %v605
                %v607 = vld [vmem:[%s101 + $0xee0] sm:$0xff]
                %608 = vst [vmem:[%s102 + $0x7e0] sm:$0xff] %v607
                %v609 = vld [vmem:[%s101 + $0xee8] sm:$0xff]
                %610 = vst [vmem:[%s102 + $0x7e8] sm:$0xff] %v609
                %v611 = vld [vmem:[%s101 + $0xef0] sm:$0xff]
                %612 = vst [vmem:[%s102 + $0x7f0] sm:$0xff] %v611
                %v613 = vld [vmem:[%s101 + $0xef8] sm:$0xff]
                %614 = vst [vmem:[%s102 + $0x7f8] sm:$0xff] %v613
                %v615 = vld [vmem:[%s101 + $0x1000] sm:$0xff]
                %616 = vst [vmem:[%s102 + $0x800] sm:$0xff] %v615
                %v617 = vld [vmem:[%s101 + $0x1008] sm:$0xff]
                %618 = vst [vmem:[%s102 + $0x808] sm:$0xff] %v617
                %v619 = vld [vmem:[%s101 + $0x1010] sm:$0xff]
                %620 = vst [vmem:[%s102 + $0x810] sm:$0xff] %v619
                %v621 = vld [vmem:[%s101 + $0x1018] sm:$0xff]
                %622 = vst [vmem:[%s102 + $0x818] sm:$0xff] %v621
                %v623 = vld [vmem:[%s101 + $0x1020] sm:$0xff]
                %624 = vst [vmem:[%s102 + $0x820] sm:$0xff] %v623
                %v625 = vld [vmem:[%s101 + $0x1028] sm:$0xff]
                %626 = vst [vmem:[%s102 + $0x828] sm:$0xff] %v625
                %v627 = vld [vmem:[%s101 + $0x1030] sm:$0xff]
                %628 = vst [vmem:[%s102 + $0x830] sm:$0xff] %v627
                %v629 = vld [vmem:[%s101 + $0x1038] sm:$0xff]
                %630 = vst [vmem:[%s102 + $0x838] sm:$0xff] %v629
                %v631 = vld [vmem:[%s101 + $0x1040] sm:$0xff]
                %632 = vst [vmem:[%s102 + $0x840] sm:$0xff] %v631
                %v633 = vld [vmem:[%s101 + $0x1048] sm:$0xff]
                %634 = vst [vmem:[%s102 + $0x848] sm:$0xff] %v633
                %v635 = vld [vmem:[%s101 + $0x1050] sm:$0xff]
                %636 = vst [vmem:[%s102 + $0x850] sm:$0xff] %v635
                %v637 = vld [vmem:[%s101 + $0x1058] sm:$0xff]
                %638 = vst [vmem:[%s102 + $0x858] sm:$0xff] %v637
                %v639 = vld [vmem:[%s101 + $0x1060] sm:$0xff]
                %640 = vst [vmem:[%s102 + $0x860] sm:$0xff] %v639
                %v641 = vld [vmem:[%s101 + $0x1068] sm:$0xff]
                %642 = vst [vmem:[%s102 + $0x868] sm:$0xff] %v641
                %v643 = vld [vmem:[%s101 + $0x1070] sm:$0xff]
                %644 = vst [vmem:[%s102 + $0x870] sm:$0xff] %v643
                %v645 = vld [vmem:[%s101 + $0x1078] sm:$0xff]
                %646 = vst [vmem:[%s102 + $0x878] sm:$0xff] %v645
                %v647 = vld [vmem:[%s101 + $0x1080] sm:$0xff]
                %648 = vst [vmem:[%s102 + $0x880] sm:$0xff] %v647
                %v649 = vld [vmem:[%s101 + $0x1088] sm:$0xff]
                %650 = vst [vmem:[%s102 + $0x888] sm:$0xff] %v649
                %v651 = vld [vmem:[%s101 + $0x1090] sm:$0xff]
                %652 = vst [vmem:[%s102 + $0x890] sm:$0xff] %v651
                %v653 = vld [vmem:[%s101 + $0x1098] sm:$0xff]
                %654 = vst [vmem:[%s102 + $0x898] sm:$0xff] %v653
                %v655 = vld [vmem:[%s101 + $0x10a0] sm:$0xff]
                %656 = vst [vmem:[%s102 + $0x8a0] sm:$0xff] %v655
                %v657 = vld [vmem:[%s101 + $0x10a8] sm:$0xff]
                %658 = vst [vmem:[%s102 + $0x8a8] sm:$0xff] %v657
                %v659 = vld [vmem:[%s101 + $0x10b0] sm:$0xff]
                %660 = vst [vmem:[%s102 + $0x8b0] sm:$0xff] %v659
                %v661 = vld [vmem:[%s101 + $0x10b8] sm:$0xff]
                %662 = vst [vmem:[%s102 + $0x8b8] sm:$0xff] %v661
                %v663 = vld [vmem:[%s101 + $0x10c0] sm:$0xff]
                %664 = vst [vmem:[%s102 + $0x8c0] sm:$0xff] %v663
                %v665 = vld [vmem:[%s101 + $0x10c8] sm:$0xff]
                %666 = vst [vmem:[%s102 + $0x8c8] sm:$0xff] %v665
                %v667 = vld [vmem:[%s101 + $0x10d0] sm:$0xff]
                %668 = vst [vmem:[%s102 + $0x8d0] sm:$0xff] %v667
                %v669 = vld [vmem:[%s101 + $0x10d8] sm:$0xff]
                %670 = vst [vmem:[%s102 + $0x8d8] sm:$0xff] %v669
                %v671 = vld [vmem:[%s101 + $0x10e0] sm:$0xff]
                %672 = vst [vmem:[%s102 + $0x8e0] sm:$0xff] %v671
                %v673 = vld [vmem:[%s101 + $0x10e8] sm:$0xff]
                %674 = vst [vmem:[%s102 + $0x8e8] sm:$0xff] %v673
                %v675 = vld [vmem:[%s101 + $0x10f0] sm:$0xff]
                %676 = vst [vmem:[%s102 + $0x8f0] sm:$0xff] %v675
                %v677 = vld [vmem:[%s101 + $0x10f8] sm:$0xff]
                %678 = vst [vmem:[%s102 + $0x8f8] sm:$0xff] %v677
              $region37: #{forward.18} parent=31 // loop_footer
                %s100 = sadd.s32 1, %s96
              $region38: #{forward.18} parent=31 // loop_footer_branch
                %95 = sbr.rel target = $region34
              $region39: #{forward.18} parent=31 // loop_exit
                _
            $region32: #{forward.18} parent=23 // pred_fallthru
              _
          $region24: #{forward.18} parent=19 // pred_fallthru
            _
          %1267 = vnop
        $region20: #{forward.18} parent=15 // pred_fallthru
          _
      $region16: #{forward.18} parent=5 // pred_fallthru
        _
      %p1268 = scmp.le.s32.totalorder 1, %s7
      %p1269 = scmp.lt.s32.totalorder %s7, 3
      %p1270 = pnand %p1268, %p1269
      %p1271 = pneg %p1270
      // Predicated region
      $region55: #{forward.18} parent=5 // pred_check
        _
      $region56: #{forward.18} parent=5 // pred_check_branch
        %1273 = sbr.rel (%p1270) target = $region58
      $region57: #{forward.18} parent=5 // pred_region
        %s1274 = ssub.s32 %s7, 1
        %s1275 = sand.u32 %s20, 1
        %s1276 = sand.u32 %s20, 1
        %s1277 = smul.addr %s1276, 2304
        %s1278 = scalar_lea.vmem [#allocation2], %s1277
        // Predicated region
        $region59: #{forward.18} parent=57 // pred_check
          %p1279 = pneg %p33
        $region60: #{forward.18} parent=57 // pred_check_branch
          %1281 = sbr.rel (%p1279) target = $region62
        $region61: #{forward.18} parent=57 // pred_region
          _
        $region62: #{forward.18} parent=57 // pred_fallthru
          _
        %s1282 = sand.u32 %s20, 1
        %s1283 = sand.u32 %s20, 1
        %s1284 = smul.addr %s1283, 2304
        %s1285 = scalar_lea.vmem [#allocation2], %s1284
        %p1286 = pneg %p33
        %p1287 = pneg %p30
        %p1288 = pneg %p59
        %p1289 = pneg %p56
        %s1290 = smul.u32 32, %s12
        %p1291 = scmp.lt.s32.totalorder %s1290, 63
        %s1292 = scalar_select %p1291, %s1290, 63
        %s1293 = smul.addr %s1292, 8
        %s1294 = scalar_lea.vmem %s1, %s1293
        %s1295 = smul.u32 32, %s12
        %s1296 = smul.u32 32, %s12
        %p1297 = scmp.lt.s32.totalorder %s1296, 63
        %s1298 = scalar_select %p1297, %s1296, 63
        %s1299 = smul.addr %s1298, 8
        %s1300 = scalar_lea.vmem %s1, %s1299
        %s1301 = smul.u32 32, %s12
        %v1302 = vld [vmem:[%s1278] sm:$0xff]
        %v1303 = vld [vmem:[%s1278 + $0x8] sm:$0xff]
        %v1304 = vld [vmem:[%s1278 + $0x10] sm:$0xff]
        %v1305 = vld [vmem:[%s1278 + $0x18] sm:$0xff]
        %v1306 = vld [vmem:[%s1278 + $0x20] sm:$0xff]
        %v1307 = vld [vmem:[%s1278 + $0x28] sm:$0xff]
        %v1308 = vld [vmem:[%s1278 + $0x30] sm:$0xff]
        %v1309 = vld [vmem:[%s1278 + $0x38] sm:$0xff]
        %v1310 = vld [vmem:[%s1278 + $0x40] sm:$0xff]
        %v1311 = vld [vmem:[%s1278 + $0x48] sm:$0xff]
        %v1312 = vld [vmem:[%s1278 + $0x50] sm:$0xff]
        %v1313 = vld [vmem:[%s1278 + $0x58] sm:$0xff]
        %v1314 = vld [vmem:[%s1278 + $0x60] sm:$0xff]
        %v1315 = vld [vmem:[%s1278 + $0x68] sm:$0xff]
        %v1316 = vld [vmem:[%s1278 + $0x70] sm:$0xff]
        %v1317 = vld [vmem:[%s1278 + $0x78] sm:$0xff]
        %v1318 = vld [vmem:[%s1278 + $0x80] sm:$0xff]
        %v1319 = vld [vmem:[%s1278 + $0x88] sm:$0xff]
        %v1320 = vld [vmem:[%s1278 + $0x90] sm:$0xff]
        %v1321 = vld [vmem:[%s1278 + $0x98] sm:$0xff]
        %v1322 = vld [vmem:[%s1278 + $0xa0] sm:$0xff]
        %v1323 = vld [vmem:[%s1278 + $0xa8] sm:$0xff]
        %v1324 = vld [vmem:[%s1278 + $0xb0] sm:$0xff]
        %v1325 = vld [vmem:[%s1278 + $0xb8] sm:$0xff]
        %v1326 = vld [vmem:[%s1278 + $0xc0] sm:$0xff]
        %v1327 = vld [vmem:[%s1278 + $0xc8] sm:$0xff]
        %v1328 = vld [vmem:[%s1278 + $0xd0] sm:$0xff]
        %v1329 = vld [vmem:[%s1278 + $0xd8] sm:$0xff]
        %v1330 = vld [vmem:[%s1278 + $0xe0] sm:$0xff]
        %v1331 = vld [vmem:[%s1278 + $0xe8] sm:$0xff]
        %v1332 = vld [vmem:[%s1278 + $0xf0] sm:$0xff]
        %v1333 = vld [vmem:[%s1278 + $0xf8] sm:$0xff]
        %s1334 = scalar_lea.vmem %s1278, 256 [#allocation2]
        %v1335 = vld [vmem:[%s1334] sm:$0xff]
        %v1336 = vld [vmem:[%s1334 + $0x8] sm:$0xff]
        %v1337 = vld [vmem:[%s1334 + $0x10] sm:$0xff]
        %v1338 = vld [vmem:[%s1334 + $0x18] sm:$0xff]
        %v1339 = vld [vmem:[%s1334 + $0x20] sm:$0xff]
        %v1340 = vld [vmem:[%s1334 + $0x28] sm:$0xff]
        %v1341 = vld [vmem:[%s1334 + $0x30] sm:$0xff]
        %v1342 = vld [vmem:[%s1334 + $0x38] sm:$0xff]
        %v1343 = vld [vmem:[%s1334 + $0x40] sm:$0xff]
        %v1344 = vld [vmem:[%s1334 + $0x48] sm:$0xff]
        %v1345 = vld [vmem:[%s1334 + $0x50] sm:$0xff]
        %v1346 = vld [vmem:[%s1334 + $0x58] sm:$0xff]
        %v1347 = vld [vmem:[%s1334 + $0x60] sm:$0xff]
        %v1348 = vld [vmem:[%s1334 + $0x68] sm:$0xff]
        %v1349 = vld [vmem:[%s1334 + $0x70] sm:$0xff]
        %v1350 = vld [vmem:[%s1334 + $0x78] sm:$0xff]
        %v1351 = vld [vmem:[%s1334 + $0x80] sm:$0xff]
        %v1352 = vld [vmem:[%s1334 + $0x88] sm:$0xff]
        %v1353 = vld [vmem:[%s1334 + $0x90] sm:$0xff]
        %v1354 = vld [vmem:[%s1334 + $0x98] sm:$0xff]
        %v1355 = vld [vmem:[%s1334 + $0xa0] sm:$0xff]
        %v1356 = vld [vmem:[%s1334 + $0xa8] sm:$0xff]
        %v1357 = vld [vmem:[%s1334 + $0xb0] sm:$0xff]
        %v1358 = vld [vmem:[%s1334 + $0xb8] sm:$0xff]
        %v1359 = vld [vmem:[%s1334 + $0xc0] sm:$0xff]
        %v1360 = vld [vmem:[%s1334 + $0xc8] sm:$0xff]
        %v1361 = vld [vmem:[%s1334 + $0xd0] sm:$0xff]
        %v1362 = vld [vmem:[%s1334 + $0xd8] sm:$0xff]
        %v1363 = vld [vmem:[%s1334 + $0xe0] sm:$0xff]
        %v1364 = vld [vmem:[%s1334 + $0xe8] sm:$0xff]
        %v1365 = vld [vmem:[%s1334 + $0xf0] sm:$0xff]
        %v1366 = vld [vmem:[%s1334 + $0xf8] sm:$0xff]
        %v1367 = vmax.f32 %v1302, %v1335
        %v1368 = vmax.f32 %v1303, %v1336
        %v1369 = vmax.f32 %v1304, %v1337
        %v1370 = vmax.f32 %v1305, %v1338
        %v1371 = vmax.f32 %v1306, %v1339
        %v1372 = vmax.f32 %v1307, %v1340
        %v1373 = vmax.f32 %v1308, %v1341
        %v1374 = vmax.f32 %v1309, %v1342
        %v1375 = vmax.f32 %v1310, %v1343
        %v1376 = vmax.f32 %v1311, %v1344
        %v1377 = vmax.f32 %v1312, %v1345
        %v1378 = vmax.f32 %v1313, %v1346
        %v1379 = vmax.f32 %v1314, %v1347
        %v1380 = vmax.f32 %v1315, %v1348
        %v1381 = vmax.f32 %v1316, %v1349
        %v1382 = vmax.f32 %v1317, %v1350
        %v1383 = vmax.f32 %v1318, %v1351
        %v1384 = vmax.f32 %v1319, %v1352
        %v1385 = vmax.f32 %v1320, %v1353
        %v1386 = vmax.f32 %v1321, %v1354
        %v1387 = vmax.f32 %v1322, %v1355
        %v1388 = vmax.f32 %v1323, %v1356
        %v1389 = vmax.f32 %v1324, %v1357
        %v1390 = vmax.f32 %v1325, %v1358
        %v1391 = vmax.f32 %v1326, %v1359
        %v1392 = vmax.f32 %v1327, %v1360
        %v1393 = vmax.f32 %v1328, %v1361
        %v1394 = vmax.f32 %v1329, %v1362
        %v1395 = vmax.f32 %v1330, %v1363
        %v1396 = vmax.f32 %v1331, %v1364
        %v1397 = vmax.f32 %v1332, %v1365
        %v1398 = vmax.f32 %v1333, %v1366
        %s1399 = scalar_lea.vmem %s1278, 512 [#allocation2]
        %v1400 = vld [vmem:[%s1399] sm:$0xff]
        %v1401 = vld [vmem:[%s1399 + $0x8] sm:$0xff]
        %v1402 = vld [vmem:[%s1399 + $0x10] sm:$0xff]
        %v1403 = vld [vmem:[%s1399 + $0x18] sm:$0xff]
        %v1404 = vld [vmem:[%s1399 + $0x20] sm:$0xff]
        %v1405 = vld [vmem:[%s1399 + $0x28] sm:$0xff]
        %v1406 = vld [vmem:[%s1399 + $0x30] sm:$0xff]
        %v1407 = vld [vmem:[%s1399 + $0x38] sm:$0xff]
        %v1408 = vld [vmem:[%s1399 + $0x40] sm:$0xff]
        %v1409 = vld [vmem:[%s1399 + $0x48] sm:$0xff]
        %v1410 = vld [vmem:[%s1399 + $0x50] sm:$0xff]
        %v1411 = vld [vmem:[%s1399 + $0x58] sm:$0xff]
        %v1412 = vld [vmem:[%s1399 + $0x60] sm:$0xff]
        %v1413 = vld [vmem:[%s1399 + $0x68] sm:$0xff]
        %v1414 = vld [vmem:[%s1399 + $0x70] sm:$0xff]
        %v1415 = vld [vmem:[%s1399 + $0x78] sm:$0xff]
        %v1416 = vld [vmem:[%s1399 + $0x80] sm:$0xff]
        %v1417 = vld [vmem:[%s1399 + $0x88] sm:$0xff]
        %v1418 = vld [vmem:[%s1399 + $0x90] sm:$0xff]
        %v1419 = vld [vmem:[%s1399 + $0x98] sm:$0xff]
        %v1420 = vld [vmem:[%s1399 + $0xa0] sm:$0xff]
        %v1421 = vld [vmem:[%s1399 + $0xa8] sm:$0xff]
        %v1422 = vld [vmem:[%s1399 + $0xb0] sm:$0xff]
        %v1423 = vld [vmem:[%s1399 + $0xb8] sm:$0xff]
        %v1424 = vld [vmem:[%s1399 + $0xc0] sm:$0xff]
        %v1425 = vld [vmem:[%s1399 + $0xc8] sm:$0xff]
        %v1426 = vld [vmem:[%s1399 + $0xd0] sm:$0xff]
        %v1427 = vld [vmem:[%s1399 + $0xd8] sm:$0xff]
        %v1428 = vld [vmem:[%s1399 + $0xe0] sm:$0xff]
        %v1429 = vld [vmem:[%s1399 + $0xe8] sm:$0xff]
        %v1430 = vld [vmem:[%s1399 + $0xf0] sm:$0xff]
        %v1431 = vld [vmem:[%s1399 + $0xf8] sm:$0xff]
        %v1432 = vmax.f32 %v1367, %v1400
        %v1433 = vmax.f32 %v1368, %v1401
        %v1434 = vmax.f32 %v1369, %v1402
        %v1435 = vmax.f32 %v1370, %v1403
        %v1436 = vmax.f32 %v1371, %v1404
        %v1437 = vmax.f32 %v1372, %v1405
        %v1438 = vmax.f32 %v1373, %v1406
        %v1439 = vmax.f32 %v1374, %v1407
        %v1440 = vmax.f32 %v1375, %v1408
        %v1441 = vmax.f32 %v1376, %v1409
        %v1442 = vmax.f32 %v1377, %v1410
        %v1443 = vmax.f32 %v1378, %v1411
        %v1444 = vmax.f32 %v1379, %v1412
        %v1445 = vmax.f32 %v1380, %v1413
        %v1446 = vmax.f32 %v1381, %v1414
        %v1447 = vmax.f32 %v1382, %v1415
        %v1448 = vmax.f32 %v1383, %v1416
        %v1449 = vmax.f32 %v1384, %v1417
        %v1450 = vmax.f32 %v1385, %v1418
        %v1451 = vmax.f32 %v1386, %v1419
        %v1452 = vmax.f32 %v1387, %v1420
        %v1453 = vmax.f32 %v1388, %v1421
        %v1454 = vmax.f32 %v1389, %v1422
        %v1455 = vmax.f32 %v1390, %v1423
        %v1456 = vmax.f32 %v1391, %v1424
        %v1457 = vmax.f32 %v1392, %v1425
        %v1458 = vmax.f32 %v1393, %v1426
        %v1459 = vmax.f32 %v1394, %v1427
        %v1460 = vmax.f32 %v1395, %v1428
        %v1461 = vmax.f32 %v1396, %v1429
        %v1462 = vmax.f32 %v1397, %v1430
        %v1463 = vmax.f32 %v1398, %v1431
        %s1464 = scalar_lea.vmem %s1278, 768 [#allocation2]
        %v1465 = vld [vmem:[%s1464] sm:$0xff]
        %v1466 = vld [vmem:[%s1464 + $0x8] sm:$0xff]
        %v1467 = vld [vmem:[%s1464 + $0x10] sm:$0xff]
        %v1468 = vld [vmem:[%s1464 + $0x18] sm:$0xff]
        %v1469 = vld [vmem:[%s1464 + $0x20] sm:$0xff]
        %v1470 = vld [vmem:[%s1464 + $0x28] sm:$0xff]
        %v1471 = vld [vmem:[%s1464 + $0x30] sm:$0xff]
        %v1472 = vld [vmem:[%s1464 + $0x38] sm:$0xff]
        %v1473 = vld [vmem:[%s1464 + $0x40] sm:$0xff]
        %v1474 = vld [vmem:[%s1464 + $0x48] sm:$0xff]
        %v1475 = vld [vmem:[%s1464 + $0x50] sm:$0xff]
        %v1476 = vld [vmem:[%s1464 + $0x58] sm:$0xff]
        %v1477 = vld [vmem:[%s1464 + $0x60] sm:$0xff]
        %v1478 = vld [vmem:[%s1464 + $0x68] sm:$0xff]
        %v1479 = vld [vmem:[%s1464 + $0x70] sm:$0xff]
        %v1480 = vld [vmem:[%s1464 + $0x78] sm:$0xff]
        %v1481 = vld [vmem:[%s1464 + $0x80] sm:$0xff]
        %v1482 = vld [vmem:[%s1464 + $0x88] sm:$0xff]
        %v1483 = vld [vmem:[%s1464 + $0x90] sm:$0xff]
        %v1484 = vld [vmem:[%s1464 + $0x98] sm:$0xff]
        %v1485 = vld [vmem:[%s1464 + $0xa0] sm:$0xff]
        %v1486 = vld [vmem:[%s1464 + $0xa8] sm:$0xff]
        %v1487 = vld [vmem:[%s1464 + $0xb0] sm:$0xff]
        %v1488 = vld [vmem:[%s1464 + $0xb8] sm:$0xff]
        %v1489 = vld [vmem:[%s1464 + $0xc0] sm:$0xff]
        %v1490 = vld [vmem:[%s1464 + $0xc8] sm:$0xff]
        %v1491 = vld [vmem:[%s1464 + $0xd0] sm:$0xff]
        %v1492 = vld [vmem:[%s1464 + $0xd8] sm:$0xff]
        %v1493 = vld [vmem:[%s1464 + $0xe0] sm:$0xff]
        %v1494 = vld [vmem:[%s1464 + $0xe8] sm:$0xff]
        %v1495 = vld [vmem:[%s1464 + $0xf0] sm:$0xff]
        %v1496 = vld [vmem:[%s1464 + $0xf8] sm:$0xff]
        %v1497 = vmax.f32 %v1432, %v1465
        %v1498 = vmax.f32 %v1433, %v1466
        %v1499 = vmax.f32 %v1434, %v1467
        %v1500 = vmax.f32 %v1435, %v1468
        %v1501 = vmax.f32 %v1436, %v1469
        %v1502 = vmax.f32 %v1437, %v1470
        %v1503 = vmax.f32 %v1438, %v1471
        %v1504 = vmax.f32 %v1439, %v1472
        %v1505 = vmax.f32 %v1440, %v1473
        %v1506 = vmax.f32 %v1441, %v1474
        %v1507 = vmax.f32 %v1442, %v1475
        %v1508 = vmax.f32 %v1443, %v1476
        %v1509 = vmax.f32 %v1444, %v1477
        %v1510 = vmax.f32 %v1445, %v1478
        %v1511 = vmax.f32 %v1446, %v1479
        %v1512 = vmax.f32 %v1447, %v1480
        %v1513 = vmax.f32 %v1448, %v1481
        %v1514 = vmax.f32 %v1449, %v1482
        %v1515 = vmax.f32 %v1450, %v1483
        %v1516 = vmax.f32 %v1451, %v1484
        %v1517 = vmax.f32 %v1452, %v1485
        %v1518 = vmax.f32 %v1453, %v1486
        %v1519 = vmax.f32 %v1454, %v1487
        %v1520 = vmax.f32 %v1455, %v1488
        %v1521 = vmax.f32 %v1456, %v1489
        %v1522 = vmax.f32 %v1457, %v1490
        %v1523 = vmax.f32 %v1458, %v1491
        %v1524 = vmax.f32 %v1459, %v1492
        %v1525 = vmax.f32 %v1460, %v1493
        %v1526 = vmax.f32 %v1461, %v1494
        %v1527 = vmax.f32 %v1462, %v1495
        %v1528 = vmax.f32 %v1463, %v1496
        %s1529 = scalar_lea.vmem %s1278, 1024 [#allocation2]
        %v1530 = vld [vmem:[%s1529] sm:$0xff]
        %v1531 = vld [vmem:[%s1529 + $0x8] sm:$0xff]
        %v1532 = vld [vmem:[%s1529 + $0x10] sm:$0xff]
        %v1533 = vld [vmem:[%s1529 + $0x18] sm:$0xff]
        %v1534 = vld [vmem:[%s1529 + $0x20] sm:$0xff]
        %v1535 = vld [vmem:[%s1529 + $0x28] sm:$0xff]
        %v1536 = vld [vmem:[%s1529 + $0x30] sm:$0xff]
        %v1537 = vld [vmem:[%s1529 + $0x38] sm:$0xff]
        %v1538 = vld [vmem:[%s1529 + $0x40] sm:$0xff]
        %v1539 = vld [vmem:[%s1529 + $0x48] sm:$0xff]
        %v1540 = vld [vmem:[%s1529 + $0x50] sm:$0xff]
        %v1541 = vld [vmem:[%s1529 + $0x58] sm:$0xff]
        %v1542 = vld [vmem:[%s1529 + $0x60] sm:$0xff]
        %v1543 = vld [vmem:[%s1529 + $0x68] sm:$0xff]
        %v1544 = vld [vmem:[%s1529 + $0x70] sm:$0xff]
        %v1545 = vld [vmem:[%s1529 + $0x78] sm:$0xff]
        %v1546 = vld [vmem:[%s1529 + $0x80] sm:$0xff]
        %v1547 = vld [vmem:[%s1529 + $0x88] sm:$0xff]
        %v1548 = vld [vmem:[%s1529 + $0x90] sm:$0xff]
        %v1549 = vld [vmem:[%s1529 + $0x98] sm:$0xff]
        %v1550 = vld [vmem:[%s1529 + $0xa0] sm:$0xff]
        %v1551 = vld [vmem:[%s1529 + $0xa8] sm:$0xff]
        %v1552 = vld [vmem:[%s1529 + $0xb0] sm:$0xff]
        %v1553 = vld [vmem:[%s1529 + $0xb8] sm:$0xff]
        %v1554 = vld [vmem:[%s1529 + $0xc0] sm:$0xff]
        %v1555 = vld [vmem:[%s1529 + $0xc8] sm:$0xff]
        %v1556 = vld [vmem:[%s1529 + $0xd0] sm:$0xff]
        %v1557 = vld [vmem:[%s1529 + $0xd8] sm:$0xff]
        %v1558 = vld [vmem:[%s1529 + $0xe0] sm:$0xff]
        %v1559 = vld [vmem:[%s1529 + $0xe8] sm:$0xff]
        %v1560 = vld [vmem:[%s1529 + $0xf0] sm:$0xff]
        %v1561 = vld [vmem:[%s1529 + $0xf8] sm:$0xff]
        %v1562 = vmax.f32 %v1497, %v1530
        %v1563 = vmax.f32 %v1498, %v1531
        %v1564 = vmax.f32 %v1499, %v1532
        %v1565 = vmax.f32 %v1500, %v1533
        %v1566 = vmax.f32 %v1501, %v1534
        %v1567 = vmax.f32 %v1502, %v1535
        %v1568 = vmax.f32 %v1503, %v1536
        %v1569 = vmax.f32 %v1504, %v1537
        %v1570 = vmax.f32 %v1505, %v1538
        %v1571 = vmax.f32 %v1506, %v1539
        %v1572 = vmax.f32 %v1507, %v1540
        %v1573 = vmax.f32 %v1508, %v1541
        %v1574 = vmax.f32 %v1509, %v1542
        %v1575 = vmax.f32 %v1510, %v1543
        %v1576 = vmax.f32 %v1511, %v1544
        %v1577 = vmax.f32 %v1512, %v1545
        %v1578 = vmax.f32 %v1513, %v1546
        %v1579 = vmax.f32 %v1514, %v1547
        %v1580 = vmax.f32 %v1515, %v1548
        %v1581 = vmax.f32 %v1516, %v1549
        %v1582 = vmax.f32 %v1517, %v1550
        %v1583 = vmax.f32 %v1518, %v1551
        %v1584 = vmax.f32 %v1519, %v1552
        %v1585 = vmax.f32 %v1520, %v1553
        %v1586 = vmax.f32 %v1521, %v1554
        %v1587 = vmax.f32 %v1522, %v1555
        %v1588 = vmax.f32 %v1523, %v1556
        %v1589 = vmax.f32 %v1524, %v1557
        %v1590 = vmax.f32 %v1525, %v1558
        %v1591 = vmax.f32 %v1526, %v1559
        %v1592 = vmax.f32 %v1527, %v1560
        %v1593 = vmax.f32 %v1528, %v1561
        %s1594 = scalar_lea.vmem %s1278, 1280 [#allocation2]
        %v1595 = vld [vmem:[%s1594] sm:$0xff]
        %v1596 = vld [vmem:[%s1594 + $0x8] sm:$0xff]
        %v1597 = vld [vmem:[%s1594 + $0x10] sm:$0xff]
        %v1598 = vld [vmem:[%s1594 + $0x18] sm:$0xff]
        %v1599 = vld [vmem:[%s1594 + $0x20] sm:$0xff]
        %v1600 = vld [vmem:[%s1594 + $0x28] sm:$0xff]
        %v1601 = vld [vmem:[%s1594 + $0x30] sm:$0xff]
        %v1602 = vld [vmem:[%s1594 + $0x38] sm:$0xff]
        %v1603 = vld [vmem:[%s1594 + $0x40] sm:$0xff]
        %v1604 = vld [vmem:[%s1594 + $0x48] sm:$0xff]
        %v1605 = vld [vmem:[%s1594 + $0x50] sm:$0xff]
        %v1606 = vld [vmem:[%s1594 + $0x58] sm:$0xff]
        %v1607 = vld [vmem:[%s1594 + $0x60] sm:$0xff]
        %v1608 = vld [vmem:[%s1594 + $0x68] sm:$0xff]
        %v1609 = vld [vmem:[%s1594 + $0x70] sm:$0xff]
        %v1610 = vld [vmem:[%s1594 + $0x78] sm:$0xff]
        %v1611 = vld [vmem:[%s1594 + $0x80] sm:$0xff]
        %v1612 = vld [vmem:[%s1594 + $0x88] sm:$0xff]
        %v1613 = vld [vmem:[%s1594 + $0x90] sm:$0xff]
        %v1614 = vld [vmem:[%s1594 + $0x98] sm:$0xff]
        %v1615 = vld [vmem:[%s1594 + $0xa0] sm:$0xff]
        %v1616 = vld [vmem:[%s1594 + $0xa8] sm:$0xff]
        %v1617 = vld [vmem:[%s1594 + $0xb0] sm:$0xff]
        %v1618 = vld [vmem:[%s1594 + $0xb8] sm:$0xff]
        %v1619 = vld [vmem:[%s1594 + $0xc0] sm:$0xff]
        %v1620 = vld [vmem:[%s1594 + $0xc8] sm:$0xff]
        %v1621 = vld [vmem:[%s1594 + $0xd0] sm:$0xff]
        %v1622 = vld [vmem:[%s1594 + $0xd8] sm:$0xff]
        %v1623 = vld [vmem:[%s1594 + $0xe0] sm:$0xff]
        %v1624 = vld [vmem:[%s1594 + $0xe8] sm:$0xff]
        %v1625 = vld [vmem:[%s1594 + $0xf0] sm:$0xff]
        %v1626 = vld [vmem:[%s1594 + $0xf8] sm:$0xff]
        %v1627 = vmax.f32 %v1562, %v1595
        %v1628 = vmax.f32 %v1563, %v1596
        %v1629 = vmax.f32 %v1564, %v1597
        %v1630 = vmax.f32 %v1565, %v1598
        %v1631 = vmax.f32 %v1566, %v1599
        %v1632 = vmax.f32 %v1567, %v1600
        %v1633 = vmax.f32 %v1568, %v1601
        %v1634 = vmax.f32 %v1569, %v1602
        %v1635 = vmax.f32 %v1570, %v1603
        %v1636 = vmax.f32 %v1571, %v1604
        %v1637 = vmax.f32 %v1572, %v1605
        %v1638 = vmax.f32 %v1573, %v1606
        %v1639 = vmax.f32 %v1574, %v1607
        %v1640 = vmax.f32 %v1575, %v1608
        %v1641 = vmax.f32 %v1576, %v1609
        %v1642 = vmax.f32 %v1577, %v1610
        %v1643 = vmax.f32 %v1578, %v1611
        %v1644 = vmax.f32 %v1579, %v1612
        %v1645 = vmax.f32 %v1580, %v1613
        %v1646 = vmax.f32 %v1581, %v1614
        %v1647 = vmax.f32 %v1582, %v1615
        %v1648 = vmax.f32 %v1583, %v1616
        %v1649 = vmax.f32 %v1584, %v1617
        %v1650 = vmax.f32 %v1585, %v1618
        %v1651 = vmax.f32 %v1586, %v1619
        %v1652 = vmax.f32 %v1587, %v1620
        %v1653 = vmax.f32 %v1588, %v1621
        %v1654 = vmax.f32 %v1589, %v1622
        %v1655 = vmax.f32 %v1590, %v1623
        %v1656 = vmax.f32 %v1591, %v1624
        %v1657 = vmax.f32 %v1592, %v1625
        %v1658 = vmax.f32 %v1593, %v1626
        %s1659 = scalar_lea.vmem %s1278, 1536 [#allocation2]
        %v1660 = vld [vmem:[%s1659] sm:$0xff]
        %v1661 = vld [vmem:[%s1659 + $0x8] sm:$0xff]
        %v1662 = vld [vmem:[%s1659 + $0x10] sm:$0xff]
        %v1663 = vld [vmem:[%s1659 + $0x18] sm:$0xff]
        %v1664 = vld [vmem:[%s1659 + $0x20] sm:$0xff]
        %v1665 = vld [vmem:[%s1659 + $0x28] sm:$0xff]
        %v1666 = vld [vmem:[%s1659 + $0x30] sm:$0xff]
        %v1667 = vld [vmem:[%s1659 + $0x38] sm:$0xff]
        %v1668 = vld [vmem:[%s1659 + $0x40] sm:$0xff]
        %v1669 = vld [vmem:[%s1659 + $0x48] sm:$0xff]
        %v1670 = vld [vmem:[%s1659 + $0x50] sm:$0xff]
        %v1671 = vld [vmem:[%s1659 + $0x58] sm:$0xff]
        %v1672 = vld [vmem:[%s1659 + $0x60] sm:$0xff]
        %v1673 = vld [vmem:[%s1659 + $0x68] sm:$0xff]
        %v1674 = vld [vmem:[%s1659 + $0x70] sm:$0xff]
        %v1675 = vld [vmem:[%s1659 + $0x78] sm:$0xff]
        %v1676 = vld [vmem:[%s1659 + $0x80] sm:$0xff]
        %v1677 = vld [vmem:[%s1659 + $0x88] sm:$0xff]
        %v1678 = vld [vmem:[%s1659 + $0x90] sm:$0xff]
        %v1679 = vld [vmem:[%s1659 + $0x98] sm:$0xff]
        %v1680 = vld [vmem:[%s1659 + $0xa0] sm:$0xff]
        %v1681 = vld [vmem:[%s1659 + $0xa8] sm:$0xff]
        %v1682 = vld [vmem:[%s1659 + $0xb0] sm:$0xff]
        %v1683 = vld [vmem:[%s1659 + $0xb8] sm:$0xff]
        %v1684 = vld [vmem:[%s1659 + $0xc0] sm:$0xff]
        %v1685 = vld [vmem:[%s1659 + $0xc8] sm:$0xff]
        %v1686 = vld [vmem:[%s1659 + $0xd0] sm:$0xff]
        %v1687 = vld [vmem:[%s1659 + $0xd8] sm:$0xff]
        %v1688 = vld [vmem:[%s1659 + $0xe0] sm:$0xff]
        %v1689 = vld [vmem:[%s1659 + $0xe8] sm:$0xff]
        %v1690 = vld [vmem:[%s1659 + $0xf0] sm:$0xff]
        %v1691 = vld [vmem:[%s1659 + $0xf8] sm:$0xff]
        %v1692 = vmax.f32 %v1627, %v1660
        %v1693 = vmax.f32 %v1628, %v1661
        %v1694 = vmax.f32 %v1629, %v1662
        %v1695 = vmax.f32 %v1630, %v1663
        %v1696 = vmax.f32 %v1631, %v1664
        %v1697 = vmax.f32 %v1632, %v1665
        %v1698 = vmax.f32 %v1633, %v1666
        %v1699 = vmax.f32 %v1634, %v1667
        %v1700 = vmax.f32 %v1635, %v1668
        %v1701 = vmax.f32 %v1636, %v1669
        %v1702 = vmax.f32 %v1637, %v1670
        %v1703 = vmax.f32 %v1638, %v1671
        %v1704 = vmax.f32 %v1639, %v1672
        %v1705 = vmax.f32 %v1640, %v1673
        %v1706 = vmax.f32 %v1641, %v1674
        %v1707 = vmax.f32 %v1642, %v1675
        %v1708 = vmax.f32 %v1643, %v1676
        %v1709 = vmax.f32 %v1644, %v1677
        %v1710 = vmax.f32 %v1645, %v1678
        %v1711 = vmax.f32 %v1646, %v1679
        %v1712 = vmax.f32 %v1647, %v1680
        %v1713 = vmax.f32 %v1648, %v1681
        %v1714 = vmax.f32 %v1649, %v1682
        %v1715 = vmax.f32 %v1650, %v1683
        %v1716 = vmax.f32 %v1651, %v1684
        %v1717 = vmax.f32 %v1652, %v1685
        %v1718 = vmax.f32 %v1653, %v1686
        %v1719 = vmax.f32 %v1654, %v1687
        %v1720 = vmax.f32 %v1655, %v1688
        %v1721 = vmax.f32 %v1656, %v1689
        %v1722 = vmax.f32 %v1657, %v1690
        %v1723 = vmax.f32 %v1658, %v1691
        %s1724 = scalar_lea.vmem %s1278, 1792 [#allocation2]
        %v1725 = vld [vmem:[%s1724] sm:$0xff]
        %v1726 = vld [vmem:[%s1724 + $0x8] sm:$0xff]
        %v1727 = vld [vmem:[%s1724 + $0x10] sm:$0xff]
        %v1728 = vld [vmem:[%s1724 + $0x18] sm:$0xff]
        %v1729 = vld [vmem:[%s1724 + $0x20] sm:$0xff]
        %v1730 = vld [vmem:[%s1724 + $0x28] sm:$0xff]
        %v1731 = vld [vmem:[%s1724 + $0x30] sm:$0xff]
        %v1732 = vld [vmem:[%s1724 + $0x38] sm:$0xff]
        %v1733 = vld [vmem:[%s1724 + $0x40] sm:$0xff]
        %v1734 = vld [vmem:[%s1724 + $0x48] sm:$0xff]
        %v1735 = vld [vmem:[%s1724 + $0x50] sm:$0xff]
        %v1736 = vld [vmem:[%s1724 + $0x58] sm:$0xff]
        %v1737 = vld [vmem:[%s1724 + $0x60] sm:$0xff]
        %v1738 = vld [vmem:[%s1724 + $0x68] sm:$0xff]
        %v1739 = vld [vmem:[%s1724 + $0x70] sm:$0xff]
        %v1740 = vld [vmem:[%s1724 + $0x78] sm:$0xff]
        %v1741 = vld [vmem:[%s1724 + $0x80] sm:$0xff]
        %v1742 = vld [vmem:[%s1724 + $0x88] sm:$0xff]
        %v1743 = vld [vmem:[%s1724 + $0x90] sm:$0xff]
        %v1744 = vld [vmem:[%s1724 + $0x98] sm:$0xff]
        %v1745 = vld [vmem:[%s1724 + $0xa0] sm:$0xff]
        %v1746 = vld [vmem:[%s1724 + $0xa8] sm:$0xff]
        %v1747 = vld [vmem:[%s1724 + $0xb0] sm:$0xff]
        %v1748 = vld [vmem:[%s1724 + $0xb8] sm:$0xff]
        %v1749 = vld [vmem:[%s1724 + $0xc0] sm:$0xff]
        %v1750 = vld [vmem:[%s1724 + $0xc8] sm:$0xff]
        %v1751 = vld [vmem:[%s1724 + $0xd0] sm:$0xff]
        %v1752 = vld [vmem:[%s1724 + $0xd8] sm:$0xff]
        %v1753 = vld [vmem:[%s1724 + $0xe0] sm:$0xff]
        %v1754 = vld [vmem:[%s1724 + $0xe8] sm:$0xff]
        %v1755 = vld [vmem:[%s1724 + $0xf0] sm:$0xff]
        %v1756 = vld [vmem:[%s1724 + $0xf8] sm:$0xff]
        %v1757 = vmax.f32 %v1692, %v1725
        %v1758 = vmax.f32 %v1693, %v1726
        %v1759 = vmax.f32 %v1694, %v1727
        %v1760 = vmax.f32 %v1695, %v1728
        %v1761 = vmax.f32 %v1696, %v1729
        %v1762 = vmax.f32 %v1697, %v1730
        %v1763 = vmax.f32 %v1698, %v1731
        %v1764 = vmax.f32 %v1699, %v1732
        %v1765 = vmax.f32 %v1700, %v1733
        %v1766 = vmax.f32 %v1701, %v1734
        %v1767 = vmax.f32 %v1702, %v1735
        %v1768 = vmax.f32 %v1703, %v1736
        %v1769 = vmax.f32 %v1704, %v1737
        %v1770 = vmax.f32 %v1705, %v1738
        %v1771 = vmax.f32 %v1706, %v1739
        %v1772 = vmax.f32 %v1707, %v1740
        %v1773 = vmax.f32 %v1708, %v1741
        %v1774 = vmax.f32 %v1709, %v1742
        %v1775 = vmax.f32 %v1710, %v1743
        %v1776 = vmax.f32 %v1711, %v1744
        %v1777 = vmax.f32 %v1712, %v1745
        %v1778 = vmax.f32 %v1713, %v1746
        %v1779 = vmax.f32 %v1714, %v1747
        %v1780 = vmax.f32 %v1715, %v1748
        %v1781 = vmax.f32 %v1716, %v1749
        %v1782 = vmax.f32 %v1717, %v1750
        %v1783 = vmax.f32 %v1718, %v1751
        %v1784 = vmax.f32 %v1719, %v1752
        %v1785 = vmax.f32 %v1720, %v1753
        %v1786 = vmax.f32 %v1721, %v1754
        %v1787 = vmax.f32 %v1722, %v1755
        %v1788 = vmax.f32 %v1723, %v1756
        %s1789 = scalar_lea.vmem %s1278, 2048 [#allocation2]
        %v1790 = vld [vmem:[%s1789] sm:$0xff]
        %v1791 = vld [vmem:[%s1789 + $0x8] sm:$0xff]
        %v1792 = vld [vmem:[%s1789 + $0x10] sm:$0xff]
        %v1793 = vld [vmem:[%s1789 + $0x18] sm:$0xff]
        %v1794 = vld [vmem:[%s1789 + $0x20] sm:$0xff]
        %v1795 = vld [vmem:[%s1789 + $0x28] sm:$0xff]
        %v1796 = vld [vmem:[%s1789 + $0x30] sm:$0xff]
        %v1797 = vld [vmem:[%s1789 + $0x38] sm:$0xff]
        %v1798 = vld [vmem:[%s1789 + $0x40] sm:$0xff]
        %v1799 = vld [vmem:[%s1789 + $0x48] sm:$0xff]
        %v1800 = vld [vmem:[%s1789 + $0x50] sm:$0xff]
        %v1801 = vld [vmem:[%s1789 + $0x58] sm:$0xff]
        %v1802 = vld [vmem:[%s1789 + $0x60] sm:$0xff]
        %v1803 = vld [vmem:[%s1789 + $0x68] sm:$0xff]
        %v1804 = vld [vmem:[%s1789 + $0x70] sm:$0xff]
        %v1805 = vld [vmem:[%s1789 + $0x78] sm:$0xff]
        %v1806 = vld [vmem:[%s1789 + $0x80] sm:$0xff]
        %v1807 = vld [vmem:[%s1789 + $0x88] sm:$0xff]
        %v1808 = vld [vmem:[%s1789 + $0x90] sm:$0xff]
        %v1809 = vld [vmem:[%s1789 + $0x98] sm:$0xff]
        %v1810 = vld [vmem:[%s1789 + $0xa0] sm:$0xff]
        %v1811 = vld [vmem:[%s1789 + $0xa8] sm:$0xff]
        %v1812 = vld [vmem:[%s1789 + $0xb0] sm:$0xff]
        %v1813 = vld [vmem:[%s1789 + $0xb8] sm:$0xff]
        %v1814 = vld [vmem:[%s1789 + $0xc0] sm:$0xff]
        %v1815 = vld [vmem:[%s1789 + $0xc8] sm:$0xff]
        %v1816 = vld [vmem:[%s1789 + $0xd0] sm:$0xff]
        %v1817 = vld [vmem:[%s1789 + $0xd8] sm:$0xff]
        %v1818 = vld [vmem:[%s1789 + $0xe0] sm:$0xff]
        %v1819 = vld [vmem:[%s1789 + $0xe8] sm:$0xff]
        %v1820 = vld [vmem:[%s1789 + $0xf0] sm:$0xff]
        %v1821 = vld [vmem:[%s1789 + $0xf8] sm:$0xff]
        %v1822 = vmax.f32 %v1757, %v1790
        %v1823 = vmax.f32 %v1758, %v1791
        %v1824 = vmax.f32 %v1759, %v1792
        %v1825 = vmax.f32 %v1760, %v1793
        %v1826 = vmax.f32 %v1761, %v1794
        %v1827 = vmax.f32 %v1762, %v1795
        %v1828 = vmax.f32 %v1763, %v1796
        %v1829 = vmax.f32 %v1764, %v1797
        %v1830 = vmax.f32 %v1765, %v1798
        %v1831 = vmax.f32 %v1766, %v1799
        %v1832 = vmax.f32 %v1767, %v1800
        %v1833 = vmax.f32 %v1768, %v1801
        %v1834 = vmax.f32 %v1769, %v1802
        %v1835 = vmax.f32 %v1770, %v1803
        %v1836 = vmax.f32 %v1771, %v1804
        %v1837 = vmax.f32 %v1772, %v1805
        %v1838 = vmax.f32 %v1773, %v1806
        %v1839 = vmax.f32 %v1774, %v1807
        %v1840 = vmax.f32 %v1775, %v1808
        %v1841 = vmax.f32 %v1776, %v1809
        %v1842 = vmax.f32 %v1777, %v1810
        %v1843 = vmax.f32 %v1778, %v1811
        %v1844 = vmax.f32 %v1779, %v1812
        %v1845 = vmax.f32 %v1780, %v1813
        %v1846 = vmax.f32 %v1781, %v1814
        %v1847 = vmax.f32 %v1782, %v1815
        %v1848 = vmax.f32 %v1783, %v1816
        %v1849 = vmax.f32 %v1784, %v1817
        %v1850 = vmax.f32 %v1785, %v1818
        %v1851 = vmax.f32 %v1786, %v1819
        %v1852 = vmax.f32 %v1787, %v1820
        %v1853 = vmax.f32 %v1788, %v1821
        %1854 = vst [vmem:[%s1300] sm:$0xff] %v1822
        %1855 = vst [vmem:[%s1300 + $0x8] sm:$0xff] %v1823
        %1856 = vst [vmem:[%s1300 + $0x10] sm:$0xff] %v1824
        %1857 = vst [vmem:[%s1300 + $0x18] sm:$0xff] %v1825
        %1858 = vst [vmem:[%s1300 + $0x20] sm:$0xff] %v1826
        %1859 = vst [vmem:[%s1300 + $0x28] sm:$0xff] %v1827
        %1860 = vst [vmem:[%s1300 + $0x30] sm:$0xff] %v1828
        %1861 = vst [vmem:[%s1300 + $0x38] sm:$0xff] %v1829
        %1862 = vst [vmem:[%s1300 + $0x40] sm:$0xff] %v1830
        %1863 = vst [vmem:[%s1300 + $0x48] sm:$0xff] %v1831
        %1864 = vst [vmem:[%s1300 + $0x50] sm:$0xff] %v1832
        %1865 = vst [vmem:[%s1300 + $0x58] sm:$0xff] %v1833
        %1866 = vst [vmem:[%s1300 + $0x60] sm:$0xff] %v1834
        %1867 = vst [vmem:[%s1300 + $0x68] sm:$0xff] %v1835
        %1868 = vst [vmem:[%s1300 + $0x70] sm:$0xff] %v1836
        %1869 = vst [vmem:[%s1300 + $0x78] sm:$0xff] %v1837
        %1870 = vst [vmem:[%s1300 + $0x80] sm:$0xff] %v1838
        %1871 = vst [vmem:[%s1300 + $0x88] sm:$0xff] %v1839
        %1872 = vst [vmem:[%s1300 + $0x90] sm:$0xff] %v1840
        %1873 = vst [vmem:[%s1300 + $0x98] sm:$0xff] %v1841
        %1874 = vst [vmem:[%s1300 + $0xa0] sm:$0xff] %v1842
        %1875 = vst [vmem:[%s1300 + $0xa8] sm:$0xff] %v1843
        %1876 = vst [vmem:[%s1300 + $0xb0] sm:$0xff] %v1844
        %1877 = vst [vmem:[%s1300 + $0xb8] sm:$0xff] %v1845
        %1878 = vst [vmem:[%s1300 + $0xc0] sm:$0xff] %v1846
        %1879 = vst [vmem:[%s1300 + $0xc8] sm:$0xff] %v1847
        %1880 = vst [vmem:[%s1300 + $0xd0] sm:$0xff] %v1848
        %1881 = vst [vmem:[%s1300 + $0xd8] sm:$0xff] %v1849
        %1882 = vst [vmem:[%s1300 + $0xe0] sm:$0xff] %v1850
        %1883 = vst [vmem:[%s1300 + $0xe8] sm:$0xff] %v1851
        %1884 = vst [vmem:[%s1300 + $0xf0] sm:$0xff] %v1852
        %1885 = vst [vmem:[%s1300 + $0xf8] sm:$0xff] %v1853
        %s1886 = smul.u32 32, %s12
        %p1887 = scmp.lt.s32.totalorder %s1886, 63
        %s1888 = scalar_select %p1887, %s1886, 63
        %s1889 = smul.addr %s1888, 8
        %s1890 = scalar_lea.vmem %s1, %s1889
        // Predicated region
        $region63: #{forward.18} parent=57 // pred_check
          %p1891 = pneg %p56
        $region64: #{forward.18} parent=57 // pred_check_branch
          %1893 = sbr.rel (%p1891) target = $region66
        $region65: #{forward.18} parent=57 // pred_region
          %s1894 = smul.u32 32, %s12
        $region66: #{forward.18} parent=57 // pred_fallthru
          _
      $region58: #{forward.18} parent=5 // pred_fallthru
        _
      %p1895 = scmp.le.s32.totalorder 2, %s7
      // Predicated region
      $region67: #{forward.18} parent=5 // pred_check
        %p1896 = pneg %p1895
      $region68: #{forward.18} parent=5 // pred_check_branch
        %1898 = sbr.rel (%p1896) target = $region70
      $region69: #{forward.18} parent=5 // pred_region
        %s1899 = ssub.s32 %s7, 2
        // Predicated region
        $region71: #{forward.18} parent=69 // pred_check
          %p1900 = pneg %p62
        $region72: #{forward.18} parent=69 // pred_check_branch
          %1902 = sbr.rel (%p1900) target = $region74
        $region73: #{forward.18} parent=69 // pred_region
          %s1903 = smul.u32 32, %s13
          %p1904 = scmp.lt.s32.totalorder %s1903, 63
          %s1905 = scalar_select %p1904, %s1903, 63
          %s1906 = smul.addr %s1905, 8
          %s1907 = scalar_lea.vmem %s1, %s1906
        $region74: #{forward.18} parent=69 // pred_fallthru
          _
      $region70: #{forward.18} parent=5 // pred_fallthru
        _
    $region6: #{forward.18} parent=1 // loop_footer
      %s11 = sadd.s32 1, %s7
    $region7: #{forward.18} parent=1 // loop_footer_branch
      %6 = sbr.rel target = $region3
    $region8: #{forward.18} parent=1 // loop_exit
      _

// kernel: forward.19
$region0: #{forward.19}
  #allocation0 [shape = 'u32[]', space=smem, size = 0x4, offset = 0x4, fixed_abs, tag = 'smem constant byte address 0x4 - core index']
  #allocation1 [shape = 'u32[144,128]{1,0:T(1,128)}', space=vmem, size = 0x12000, scoped, tag = 'internal scratch']
  %s0 = inlined_call_operand.vmem [shape: bf16[512,256], index: 0, kind: input, shape index: {}]
  %s1 = inlined_call_operand.vmem [shape: bf16[256,128], index: 1, kind: input, shape index: {}]
  %s2 = inlined_call_operand.vmem [shape: f32[1,128], index: 2, kind: input, shape index: {}]
  %s3 = inlined_call_operand.vmem [shape: f32[512,128], index: 3, kind: output, shape index: {}]
  %s4 = sld [smem:[#allocation0]]
  $region45: #{forward.19} parent=0
    _
  %s6 = ssub.s32 1, %s4
  %s7 = scalar_select 0, %s6, %s4
  loop: start=0, step=1, limit=4
  $region2: #{forward.19} parent=0 // loop_pre_header
    _
  $region3: #{forward.19} parent=0 // loop_header
    %s9 = sphi 0, %s13
    %p10 = scmp.ge.s32.totalorder %s9, 4
    %s19 = sphi 0, %s21
    %s22 = sphi 0, %s19
    %s23 = sphi 0, %s22
    %s39 = sphi 0, %s23
    %s43 = sphi 0, %s43
    %s45 = sphi 0, %s43
    %s46 = sphi 0, %s45
    %s60 = sphi 0, %s46
    %s64 = sphi 0, %s64
    %s66 = sphi 0, %s64
    %s67 = sphi 0, %s66
    %s81 = sphi 0, %s67
    %s87 = sphi 0, %s89
    %s90 = sphi 0, %s87
    %s91 = sphi 0, %s90
    %s107 = sphi 0, %s91
  $region4: #{forward.19} parent=0 // loop_header_branch
    %12 = sbr.rel (%p10) target = $region8
  $region5: #{forward.19} parent=0 // loop_body
    %s14 = ssub.s32 %s9, 1
    %s15 = ssub.s32 %s9, 2
    %s16 = sadd.s32 %s9, 1
    %s17 = ssub.s32 %s9, %s16
    %p18 = scmp.eq.s32.totalorder %s17, 0
    %s20 = sadd.s32 %s19, 1
    %s21 = scalar_select %p18, %s19, %s20
    %p24 = pneg %p18
    %p25 = scmp.eq.s32.totalorder %s9, 1
    %p26 = por %p24, %p25
    %p27 = scmp.ne.s32.totalorder %s19, %s22
    %p28 = scmp.eq.s32.totalorder %s9, 0
    %p29 = por %p27, %p28
    %p30 = scmp.ne.s32.totalorder %s19, %s22
    %p31 = scmp.eq.s32.totalorder %s14, 1
    %p32 = por %p30, %p31
    %p33 = scmp.ne.s32.totalorder %s22, %s23
    %p34 = scmp.eq.s32.totalorder %s14, 0
    %p35 = por %p33, %p34
    %p36 = scmp.ne.s32.totalorder %s22, %s23
    %p37 = scmp.eq.s32.totalorder %s15, 1
    %p38 = por %p36, %p37
    %p40 = scmp.ne.s32.totalorder %s23, %s39
    %p41 = scmp.eq.s32.totalorder %s15, 0
    %p42 = por %p40, %p41
    %s44 = sadd.s32 %s43, 1
    %p47 = scmp.eq.s32.totalorder %s9, 1
    %p48 = scmp.ne.s32.totalorder %s43, %s45
    %p49 = scmp.eq.s32.totalorder %s9, 0
    %p50 = por %p48, %p49
    %p51 = scmp.ne.s32.totalorder %s43, %s45
    %p52 = scmp.eq.s32.totalorder %s14, 1
    %p53 = por %p51, %p52
    %p54 = scmp.ne.s32.totalorder %s45, %s46
    %p55 = scmp.eq.s32.totalorder %s14, 0
    %p56 = por %p54, %p55
    %p57 = scmp.ne.s32.totalorder %s45, %s46
    %p58 = scmp.eq.s32.totalorder %s15, 1
    %p59 = por %p57, %p58
    %p61 = scmp.ne.s32.totalorder %s46, %s60
    %p62 = scmp.eq.s32.totalorder %s15, 0
    %p63 = por %p61, %p62
    %s65 = sadd.s32 %s64, 1
    %p68 = scmp.eq.s32.totalorder %s9, 1
    %p69 = scmp.ne.s32.totalorder %s64, %s66
    %p70 = scmp.eq.s32.totalorder %s9, 0
    %p71 = por %p69, %p70
    %p72 = scmp.ne.s32.totalorder %s64, %s66
    %p73 = scmp.eq.s32.totalorder %s14, 1
    %p74 = por %p72, %p73
    %p75 = scmp.ne.s32.totalorder %s66, %s67
    %p76 = scmp.eq.s32.totalorder %s14, 0
    %p77 = por %p75, %p76
    %p78 = scmp.ne.s32.totalorder %s66, %s67
    %p79 = scmp.eq.s32.totalorder %s15, 1
    %p80 = por %p78, %p79
    %p82 = scmp.ne.s32.totalorder %s67, %s81
    %p83 = scmp.eq.s32.totalorder %s15, 0
    %p84 = por %p82, %p83
    %s85 = ssub.s32 %s9, %s16
    %p86 = scmp.eq.s32.totalorder %s85, 0
    %s88 = sadd.s32 %s87, 1
    %s89 = scalar_select %p86, %s87, %s88
    %p92 = pneg %p86
    %p93 = scmp.eq.s32.totalorder %s9, 1
    %p94 = por %p92, %p93
    %p95 = scmp.ne.s32.totalorder %s87, %s90
    %p96 = scmp.eq.s32.totalorder %s9, 0
    %p97 = por %p95, %p96
    %p98 = scmp.ne.s32.totalorder %s87, %s90
    %p99 = scmp.eq.s32.totalorder %s14, 1
    %p100 = por %p98, %p99
    %p101 = scmp.ne.s32.totalorder %s90, %s91
    %p102 = scmp.eq.s32.totalorder %s14, 0
    %p103 = por %p101, %p102
    %p104 = scmp.ne.s32.totalorder %s90, %s91
    %p105 = scmp.eq.s32.totalorder %s15, 1
    %p106 = por %p104, %p105
    %p108 = scmp.ne.s32.totalorder %s91, %s107
    %p109 = scmp.eq.s32.totalorder %s15, 0
    %p110 = por %p108, %p109
    %p111 = scmp.le.s32.totalorder 1, %s9
    %p112 = scmp.lt.s32.totalorder %s9, 3
    %p113 = pnand %p111, %p112
    %p114 = pneg %p113
    // Predicated region
    $region9: #{forward.19} parent=5 // pred_check
      _
    $region10: #{forward.19} parent=5 // pred_check_branch
      %116 = sbr.rel (%p113) target = $region12
    $region11: #{forward.19} parent=5 // pred_region
      %s117 = ssub.s32 %s9, 1
      // Predicated region
      $region13: #{forward.19} parent=11 // pred_check
        %p118 = pneg %p56
      $region14: #{forward.19} parent=11 // pred_check_branch
        %120 = sbr.rel (%p118) target = $region16
      $region15: #{forward.19} parent=11 // pred_region
        _
      $region16: #{forward.19} parent=11 // pred_fallthru
        _
      // Predicated region
      $region17: #{forward.19} parent=11 // pred_check
        %p121 = pneg %p77
      $region18: #{forward.19} parent=11 // pred_check_branch
        %123 = sbr.rel (%p121) target = $region20
      $region19: #{forward.19} parent=11 // pred_region
        _
      $region20: #{forward.19} parent=11 // pred_fallthru
        _
    $region12: #{forward.19} parent=5 // pred_fallthru
      _
    %p124 = scmp.lt.s32.totalorder %s9, 2
    // Predicated region
    $region21: #{forward.19} parent=5 // pred_check
      %p125 = pneg %p124
    $region22: #{forward.19} parent=5 // pred_check_branch
      %127 = sbr.rel (%p125) target = $region24
    $region23: #{forward.19} parent=5 // pred_region
      // Predicated region
      $region25: #{forward.19} parent=23 // pred_check
        %p128 = pneg %p29
      $region26: #{forward.19} parent=23 // pred_check_branch
        %130 = sbr.rel (%p128) target = $region28
      $region27: #{forward.19} parent=23 // pred_region
        %s131 = smul.u32 32, %s9
        %p132 = scmp.lt.s32.totalorder %s131, 63
        %s133 = scalar_select %p132, %s131, 63
        %s134 = smul.addr %s133, 2
        %s135 = smul.addr %s134, 4
        %s136 = scalar_lea.vmem %s0, %s135
        %s137 = smul.u32 32, %s9
      $region28: #{forward.19} parent=23 // pred_fallthru
        _
    $region24: #{forward.19} parent=5 // pred_fallthru
      _
    %p138 = scmp.le.s32.totalorder 1, %s9
    %p139 = scmp.lt.s32.totalorder %s9, 3
    %p140 = pnand %p138, %p139
    %p141 = pneg %p140
    // Predicated region
    $region29: #{forward.19} parent=5 // pred_check
      _
    $region30: #{forward.19} parent=5 // pred_check_branch
      %143 = sbr.rel (%p140) target = $region32
    $region31: #{forward.19} parent=5 // pred_region
      %s144 = ssub.s32 %s9, 1
      %s145 = smul.u32 32, %s14
      %p146 = scmp.lt.s32.totalorder %s145, 63
      %s147 = scalar_select %p146, %s145, 63
      %s148 = smul.addr %s147, 2
      %s149 = smul.addr %s148, 4
      %s150 = scalar_lea.vmem %s0, %s149
      %p151 = pneg %p35
      %p152 = pneg %p32
      %p153 = pneg %p56
      %p154 = pneg %p53
      %p155 = pneg %p77
      %p156 = pneg %p74
      %p157 = pneg %p103
      %p158 = pneg %p100
      %s159 = smul.u32 32, %s14
      %p160 = scmp.lt.s32.totalorder %s159, 63
      %s161 = scalar_select %p160, %s159, 63
      %s162 = smul.addr %s161, 8
      %s163 = scalar_lea.vmem %s3, %s162
      %s164 = smul.u32 32, %s14
      %p165 = scmp.lt.s32.totalorder %s164, 63
      %s166 = scalar_select %p165, %s164, 63
      %s167 = smul.addr %s166, 2
      %s168 = smul.addr %s167, 4
      %s169 = scalar_lea.vmem %s0, %s168
      %s170 = smul.u32 32, %s14
      %s171 = smul.u32 32, %s14
      %p172 = scmp.lt.s32.totalorder %s171, 63
      %s173 = scalar_select %p172, %s171, 63
      %s174 = smul.addr %s173, 8
      %s175 = scalar_lea.vmem %s3, %s174
      %s176 = smul.u32 32, %s14
      %v178 = vld [vmem:[%s169] sm:$0xff]
      %v179 = vld [vmem:[%s169 + $0x8] sm:$0xff]
      %v180 = vld [vmem:[%s169 + $0x10] sm:$0xff]
      %v181 = vld [vmem:[%s169 + $0x18] sm:$0xff]
      %v182 = vld [vmem:[%s169 + $0x20] sm:$0xff]
      %v183 = vld [vmem:[%s169 + $0x28] sm:$0xff]
      %v184 = vld [vmem:[%s169 + $0x30] sm:$0xff]
      %v185 = vld [vmem:[%s169 + $0x38] sm:$0xff]
      %v186 = vld [vmem:[%s169 + $0x40] sm:$0xff]
      %v187 = vld [vmem:[%s169 + $0x48] sm:$0xff]
      %v188 = vld [vmem:[%s169 + $0x50] sm:$0xff]
      %v189 = vld [vmem:[%s169 + $0x58] sm:$0xff]
      %v190 = vld [vmem:[%s169 + $0x60] sm:$0xff]
      %v191 = vld [vmem:[%s169 + $0x68] sm:$0xff]
      %v192 = vld [vmem:[%s169 + $0x70] sm:$0xff]
      %v193 = vld [vmem:[%s169 + $0x78] sm:$0xff]
      %v194 = vld [vmem:[%s169 + $0x80] sm:$0xff]
      %v195 = vld [vmem:[%s169 + $0x88] sm:$0xff]
      %v196 = vld [vmem:[%s169 + $0x90] sm:$0xff]
      %v197 = vld [vmem:[%s169 + $0x98] sm:$0xff]
      %v198 = vld [vmem:[%s169 + $0xa0] sm:$0xff]
      %v199 = vld [vmem:[%s169 + $0xa8] sm:$0xff]
      %v200 = vld [vmem:[%s169 + $0xb0] sm:$0xff]
      %v201 = vld [vmem:[%s169 + $0xb8] sm:$0xff]
      %v202 = vld [vmem:[%s169 + $0xc0] sm:$0xff]
      %v203 = vld [vmem:[%s169 + $0xc8] sm:$0xff]
      %v204 = vld [vmem:[%s169 + $0xd0] sm:$0xff]
      %v205 = vld [vmem:[%s169 + $0xd8] sm:$0xff]
      %v206 = vld [vmem:[%s169 + $0xe0] sm:$0xff]
      %v207 = vld [vmem:[%s169 + $0xe8] sm:$0xff]
      %v208 = vld [vmem:[%s169 + $0xf0] sm:$0xff]
      %v209 = vld [vmem:[%s169 + $0xf8] sm:$0xff]
      %v210 = vld [vmem:[%s1] sm:$0xf]
      %v211 = vld [vmem:[%s1 + $0x4] sm:$0xf]
      %v212 = vld [vmem:[%s1 + $0x8] sm:$0xf]
      %v213 = vld [vmem:[%s1 + $0xc] sm:$0xf]
      %v214 = vld [vmem:[%s1 + $0x10] sm:$0xf]
      %v215 = vld [vmem:[%s1 + $0x14] sm:$0xf]
      %v216 = vld [vmem:[%s1 + $0x18] sm:$0xf]
      %v217 = vld [vmem:[%s1 + $0x1c] sm:$0xf]
      %v218 = vld [vmem:[%s1 + $0x20] sm:$0xf]
      %v219 = vld [vmem:[%s1 + $0x24] sm:$0xf]
      %v220 = vld [vmem:[%s1 + $0x28] sm:$0xf]
      %v221 = vld [vmem:[%s1 + $0x2c] sm:$0xf]
      %v222 = vld [vmem:[%s1 + $0x30] sm:$0xf]
      %v223 = vld [vmem:[%s1 + $0x34] sm:$0xf]
      %v224 = vld [vmem:[%s1 + $0x38] sm:$0xf]
      %v225 = vld [vmem:[%s1 + $0x3c] sm:$0xf]
      %v226 = vld [vmem:[%s1 + $0x40] sm:$0xf]
      %v227 = vld [vmem:[%s1 + $0x44] sm:$0xf]
      %v228 = vld [vmem:[%s1 + $0x48] sm:$0xf]
      %v229 = vld [vmem:[%s1 + $0x4c] sm:$0xf]
      %v230 = vld [vmem:[%s1 + $0x50] sm:$0xf]
      %v231 = vld [vmem:[%s1 + $0x54] sm:$0xf]
      %v232 = vld [vmem:[%s1 + $0x58] sm:$0xf]
      %v233 = vld [vmem:[%s1 + $0x5c] sm:$0xf]
      %v234 = vld [vmem:[%s1 + $0x60] sm:$0xf]
      %v235 = vld [vmem:[%s1 + $0x64] sm:$0xf]
      %v236 = vld [vmem:[%s1 + $0x68] sm:$0xf]
      %v237 = vld [vmem:[%s1 + $0x6c] sm:$0xf]
      %v238 = vld [vmem:[%s1 + $0x70] sm:$0xf]
      %v239 = vld [vmem:[%s1 + $0x74] sm:$0xf]
      %v240 = vld [vmem:[%s1 + $0x78] sm:$0xf]
      %v241 = vld [vmem:[%s1 + $0x7c] sm:$0xf]
      %v242 = vld [vmem:[%s2] sm:$0x1]
      %v244 = vlaneseq
      %v245 = vshrl.u32 %v244, 7
      %v246 = vsub.s32 0, %v245
      %v247 = vrot.slane %v242, %v246
      %v281 = vunpack.c.l.b16 %v178
      %v282 = vunpack.c.h.b16 %v178
      %v283 = vunpack.c.l.b16 %v179
      %v284 = vunpack.c.h.b16 %v179
      %v285 = vunpack.c.l.b16 %v180
      %v286 = vunpack.c.h.b16 %v180
      %v287 = vunpack.c.l.b16 %v181
      %v288 = vunpack.c.h.b16 %v181
      %v289 = vunpack.c.l.b16 %v182
      %v290 = vunpack.c.h.b16 %v182
      %v291 = vunpack.c.l.b16 %v183
      %v292 = vunpack.c.h.b16 %v183
      %v293 = vunpack.c.l.b16 %v184
      %v294 = vunpack.c.h.b16 %v184
      %v295 = vunpack.c.l.b16 %v185
      %v296 = vunpack.c.h.b16 %v185
      %v297 = vunpack.c.l.b16 %v186
      %v298 = vunpack.c.h.b16 %v186
      %v299 = vunpack.c.l.b16 %v187
      %v300 = vunpack.c.h.b16 %v187
      %v301 = vunpack.c.l.b16 %v188
      %v302 = vunpack.c.h.b16 %v188
      %v303 = vunpack.c.l.b16 %v189
      %v304 = vunpack.c.h.b16 %v189
      %v305 = vunpack.c.l.b16 %v190
      %v306 = vunpack.c.h.b16 %v190
      %v307 = vunpack.c.l.b16 %v191
      %v308 = vunpack.c.h.b16 %v191
      %v309 = vunpack.c.l.b16 %v192
      %v310 = vunpack.c.h.b16 %v192
      %v311 = vunpack.c.l.b16 %v193
      %v312 = vunpack.c.h.b16 %v193
      %v313 = vunpack.c.l.b16 %v194
      %v314 = vunpack.c.h.b16 %v194
      %v315 = vunpack.c.l.b16 %v195
      %v316 = vunpack.c.h.b16 %v195
      %v317 = vunpack.c.l.b16 %v196
      %v318 = vunpack.c.h.b16 %v196
      %v319 = vunpack.c.l.b16 %v197
      %v320 = vunpack.c.h.b16 %v197
      %v321 = vunpack.c.l.b16 %v198
      %v322 = vunpack.c.h.b16 %v198
      %v323 = vunpack.c.l.b16 %v199
      %v324 = vunpack.c.h.b16 %v199
      %v325 = vunpack.c.l.b16 %v200
      %v326 = vunpack.c.h.b16 %v200
      %v327 = vunpack.c.l.b16 %v201
      %v328 = vunpack.c.h.b16 %v201
      %v329 = vunpack.c.l.b16 %v202
      %v330 = vunpack.c.h.b16 %v202
      %v331 = vunpack.c.l.b16 %v203
      %v332 = vunpack.c.h.b16 %v203
      %v333 = vunpack.c.l.b16 %v204
      %v334 = vunpack.c.h.b16 %v204
      %v335 = vunpack.c.l.b16 %v205
      %v336 = vunpack.c.h.b16 %v205
      %v337 = vunpack.c.l.b16 %v206
      %v338 = vunpack.c.h.b16 %v206
      %v339 = vunpack.c.l.b16 %v207
      %v340 = vunpack.c.h.b16 %v207
      %v341 = vunpack.c.l.b16 %v208
      %v342 = vunpack.c.h.b16 %v208
      %v343 = vunpack.c.l.b16 %v209
      %v344 = vunpack.c.h.b16 %v209
      %v345 = vpack.c.b16 %v283, %v281
      %v346 = vpack.c.b16 %v284, %v282
      %v347 = vpack.c.b16 %v287, %v285
      %v348 = vpack.c.b16 %v288, %v286
      %v349 = vpack.c.b16 %v291, %v289
      %v350 = vpack.c.b16 %v292, %v290
      %v351 = vpack.c.b16 %v295, %v293
      %v352 = vpack.c.b16 %v296, %v294
      %v353 = vpack.c.b16 %v299, %v297
      %v354 = vpack.c.b16 %v300, %v298
      %v355 = vpack.c.b16 %v303, %v301
      %v356 = vpack.c.b16 %v304, %v302
      %v357 = vpack.c.b16 %v307, %v305
      %v358 = vpack.c.b16 %v308, %v306
      %v359 = vpack.c.b16 %v311, %v309
      %v360 = vpack.c.b16 %v312, %v310
      %v361 = vpack.c.b16 %v315, %v313
      %v362 = vpack.c.b16 %v316, %v314
      %v363 = vpack.c.b16 %v319, %v317
      %v364 = vpack.c.b16 %v320, %v318
      %v365 = vpack.c.b16 %v323, %v321
      %v366 = vpack.c.b16 %v324, %v322
      %v367 = vpack.c.b16 %v327, %v325
      %v368 = vpack.c.b16 %v328, %v326
      %v369 = vpack.c.b16 %v331, %v329
      %v370 = vpack.c.b16 %v332, %v330
      %v371 = vpack.c.b16 %v335, %v333
      %v372 = vpack.c.b16 %v336, %v334
      %v373 = vpack.c.b16 %v339, %v337
      %v374 = vpack.c.b16 %v340, %v338
      %v375 = vpack.c.b16 %v343, %v341
      %v376 = vpack.c.b16 %v344, %v342
      %v441 = vunpack.c.l.b16 %v210
      %v442 = vunpack.c.l.b16 %v211
      %v443 = vunpack.c.l.b16 %v212
      %v444 = vunpack.c.l.b16 %v213
      %v445 = vunpack.c.l.b16 %v214
      %v446 = vunpack.c.l.b16 %v215
      %v447 = vunpack.c.l.b16 %v216
      %v448 = vunpack.c.l.b16 %v217
      %v449 = vunpack.c.l.b16 %v218
      %v450 = vunpack.c.l.b16 %v219
      %v451 = vunpack.c.l.b16 %v220
      %v452 = vunpack.c.l.b16 %v221
      %v453 = vunpack.c.l.b16 %v222
      %v454 = vunpack.c.l.b16 %v223
      %v455 = vunpack.c.l.b16 %v224
      %v456 = vunpack.c.l.b16 %v225
      %v457 = vunpack.c.l.b16 %v226
      %v458 = vunpack.c.l.b16 %v227
      %v459 = vunpack.c.l.b16 %v228
      %v460 = vunpack.c.l.b16 %v229
      %v461 = vunpack.c.l.b16 %v230
      %v462 = vunpack.c.l.b16 %v231
      %v463 = vunpack.c.l.b16 %v232
      %v464 = vunpack.c.l.b16 %v233
      %v465 = vunpack.c.l.b16 %v234
      %v466 = vunpack.c.l.b16 %v235
      %v467 = vunpack.c.l.b16 %v236
      %v468 = vunpack.c.l.b16 %v237
      %v469 = vunpack.c.l.b16 %v238
      %v470 = vunpack.c.l.b16 %v239
      %v471 = vunpack.c.l.b16 %v240
      %v472 = vunpack.c.l.b16 %v241
      %v473 = vpack.c.b16 %v442, %v441
      %v474 = vpack.c.b16 %v444, %v443
      %v475 = vpack.c.b16 %v446, %v445
      %v476 = vpack.c.b16 %v448, %v447
      %v477 = vpack.c.b16 %v450, %v449
      %v478 = vpack.c.b16 %v452, %v451
      %v479 = vpack.c.b16 %v454, %v453
      %v480 = vpack.c.b16 %v456, %v455
      %v481 = vpack.c.b16 %v458, %v457
      %v482 = vpack.c.b16 %v460, %v459
      %v483 = vpack.c.b16 %v462, %v461
      %v484 = vpack.c.b16 %v464, %v463
      %v485 = vpack.c.b16 %v466, %v465
      %v486 = vpack.c.b16 %v468, %v467
      %v487 = vpack.c.b16 %v470, %v469
      %v488 = vpack.c.b16 %v472, %v471
      %505 = vmatprep.subr.bf16.mxu0 0
      %506 = vmatpush1.bf16.msra.mxu0 %v473
      %507 = vmatprep.subr.bf16.mxu0 0
      %508 = vmatpush1.bf16.msra.mxu0 %v474
      %509 = vmatprep.subr.bf16.mxu0 0
      %510 = vmatpush1.bf16.msra.mxu0 %v475
      %511 = vmatprep.subr.bf16.mxu0 0
      %512 = vmatpush1.bf16.msra.mxu0 %v476
      %513 = vmatprep.subr.bf16.mxu0 0
      %514 = vmatpush1.bf16.msra.mxu0 %v477
      %515 = vmatprep.subr.bf16.mxu0 0
      %516 = vmatpush1.bf16.msra.mxu0 %v478
      %517 = vmatprep.subr.bf16.mxu0 0
      %518 = vmatpush1.bf16.msra.mxu0 %v479
      %519 = vmatprep.subr.bf16.mxu0 0
      %520 = vmatpush1.bf16.msra.mxu0 %v480
      %521 = vmatprep.subr.bf16.mxu0 0
      %522 = vmatpush1.bf16.msra.mxu0 %v481
      %523 = vmatprep.subr.bf16.mxu0 0
      %524 = vmatpush1.bf16.msra.mxu0 %v482
      %525 = vmatprep.subr.bf16.mxu0 0
      %526 = vmatpush1.bf16.msra.mxu0 %v483
      %527 = vmatprep.subr.bf16.mxu0 0
      %528 = vmatpush1.bf16.msra.mxu0 %v484
      %529 = vmatprep.subr.bf16.mxu0 0
      %530 = vmatpush1.bf16.msra.mxu0 %v485
      %531 = vmatprep.subr.bf16.mxu0 0
      %532 = vmatpush1.bf16.msra.mxu0 %v486
      %533 = vmatprep.subr.bf16.mxu0 0
      %534 = vmatpush1.bf16.msra.mxu0 %v487
      %535 = vmatprep.subr.bf16.mxu0 0
      %536 = vmatpush1.bf16.msra.mxu0 %v488
      %537 = vmatprep.mubr.bf16.mxu0 %v346
      %538 = vmatmul.mubr.bf16.gmra.mrb[0].mxu0 %v345
      %v539 = vpop.f32.mrb[0].mxu0
      %v540 = vadd.f32 %v247, %v539
      %v541 = vpop.f32.mrb[0].mxu0
      %v542 = vpop.f32.mrb[0].mxu0
      %v543 = vadd.f32 %v247, %v542
      %v544 = vpop.f32.mrb[0].mxu0
      %545 = vmatprep.mubr.bf16.mxu0 %v348
      %546 = vmatmul.mubr.bf16.gmra.mrb[0].mxu0 %v347
      %v547 = vpop.f32.mrb[0].mxu0
      %v548 = vadd.f32 %v247, %v547
      %v549 = vpop.f32.mrb[0].mxu0
      %v550 = vpop.f32.mrb[0].mxu0
      %v551 = vadd.f32 %v247, %v550
      %v552 = vpop.f32.mrb[0].mxu0
      %553 = vmatprep.mubr.bf16.mxu0 %v350
      %554 = vmatmul.mubr.bf16.gmra.mrb[0].mxu0 %v349
      %v555 = vpop.f32.mrb[0].mxu0
      %v556 = vadd.f32 %v247, %v555
      %v557 = vpop.f32.mrb[0].mxu0
      %v558 = vpop.f32.mrb[0].mxu0
      %v559 = vadd.f32 %v247, %v558
      %v560 = vpop.f32.mrb[0].mxu0
      %561 = vmatprep.mubr.bf16.mxu0 %v352
      %562 = vmatmul.mubr.bf16.gmra.mrb[0].mxu0 %v351
      %v563 = vpop.f32.mrb[0].mxu0
      %v564 = vadd.f32 %v247, %v563
      %v565 = vpop.f32.mrb[0].mxu0
      %v566 = vpop.f32.mrb[0].mxu0
      %v567 = vadd.f32 %v247, %v566
      %v568 = vpop.f32.mrb[0].mxu0
      %569 = vmatprep.mubr.bf16.mxu0 %v354
      %570 = vmatmul.mubr.bf16.gmra.mrb[0].mxu0 %v353
      %v571 = vpop.f32.mrb[0].mxu0
      %v572 = vadd.f32 %v247, %v571
      %v573 = vpop.f32.mrb[0].mxu0
      %v574 = vpop.f32.mrb[0].mxu0
      %v575 = vadd.f32 %v247, %v574
      %v576 = vpop.f32.mrb[0].mxu0
      %577 = vmatprep.mubr.bf16.mxu0 %v356
      %578 = vmatmul.mubr.bf16.gmra.mrb[0].mxu0 %v355
      %v579 = vpop.f32.mrb[0].mxu0
      %v580 = vadd.f32 %v247, %v579
      %v581 = vpop.f32.mrb[0].mxu0
      %v582 = vpop.f32.mrb[0].mxu0
      %v583 = vadd.f32 %v247, %v582
      %v584 = vpop.f32.mrb[0].mxu0
      %585 = vmatprep.mubr.bf16.mxu0 %v358
      %586 = vmatmul.mubr.bf16.gmra.mrb[0].mxu0 %v357
      %v587 = vpop.f32.mrb[0].mxu0
      %v588 = vadd.f32 %v247, %v587
      %v589 = vpop.f32.mrb[0].mxu0
      %v590 = vpop.f32.mrb[0].mxu0
      %v591 = vadd.f32 %v247, %v590
      %v592 = vpop.f32.mrb[0].mxu0
      %593 = vmatprep.mubr.bf16.mxu0 %v360
      %594 = vmatmul.mubr.bf16.gmra.mrb[0].mxu0 %v359
      %v595 = vpop.f32.mrb[0].mxu0
      %v596 = vadd.f32 %v247, %v595
      %v597 = vpop.f32.mrb[0].mxu0
      %v598 = vpop.f32.mrb[0].mxu0
      %v599 = vadd.f32 %v247, %v598
      %v600 = vpop.f32.mrb[0].mxu0
      %601 = vmatprep.mubr.bf16.mxu0 %v362
      %602 = vmatmul.mubr.bf16.gmra.mrb[0].mxu0 %v361
      %v603 = vpop.f32.mrb[0].mxu0
      %v604 = vadd.f32 %v247, %v603
      %v605 = vpop.f32.mrb[0].mxu0
      %v606 = vpop.f32.mrb[0].mxu0
      %v607 = vadd.f32 %v247, %v606
      %v608 = vpop.f32.mrb[0].mxu0
      %609 = vmatprep.mubr.bf16.mxu0 %v364
      %610 = vmatmul.mubr.bf16.gmra.mrb[0].mxu0 %v363
      %v611 = vpop.f32.mrb[0].mxu0
      %v612 = vadd.f32 %v247, %v611
      %v613 = vpop.f32.mrb[0].mxu0
      %v614 = vpop.f32.mrb[0].mxu0
      %v615 = vadd.f32 %v247, %v614
      %v616 = vpop.f32.mrb[0].mxu0
      %617 = vmatprep.mubr.bf16.mxu0 %v366
      %618 = vmatmul.mubr.bf16.gmra.mrb[0].mxu0 %v365
      %v619 = vpop.f32.mrb[0].mxu0
      %v620 = vadd.f32 %v247, %v619
      %v621 = vpop.f32.mrb[0].mxu0
      %v622 = vpop.f32.mrb[0].mxu0
      %v623 = vadd.f32 %v247, %v622
      %v624 = vpop.f32.mrb[0].mxu0
      %625 = vmatprep.mubr.bf16.mxu0 %v368
      %626 = vmatmul.mubr.bf16.gmra.mrb[0].mxu0 %v367
      %v627 = vpop.f32.mrb[0].mxu0
      %v628 = vadd.f32 %v247, %v627
      %v629 = vpop.f32.mrb[0].mxu0
      %v630 = vpop.f32.mrb[0].mxu0
      %v631 = vadd.f32 %v247, %v630
      %v632 = vpop.f32.mrb[0].mxu0
      %633 = vmatprep.mubr.bf16.mxu0 %v370
      %634 = vmatmul.mubr.bf16.gmra.mrb[0].mxu0 %v369
      %v635 = vpop.f32.mrb[0].mxu0
      %v636 = vadd.f32 %v247, %v635
      %v637 = vpop.f32.mrb[0].mxu0
      %v638 = vpop.f32.mrb[0].mxu0
      %v639 = vadd.f32 %v247, %v638
      %v640 = vpop.f32.mrb[0].mxu0
      %641 = vmatprep.mubr.bf16.mxu0 %v372
      %642 = vmatmul.mubr.bf16.gmra.mrb[0].mxu0 %v371
      %v643 = vpop.f32.mrb[0].mxu0
      %v644 = vadd.f32 %v247, %v643
      %v645 = vpop.f32.mrb[0].mxu0
      %v646 = vpop.f32.mrb[0].mxu0
      %v647 = vadd.f32 %v247, %v646
      %v648 = vpop.f32.mrb[0].mxu0
      %649 = vmatprep.mubr.bf16.mxu0 %v374
      %650 = vmatmul.mubr.bf16.gmra.mrb[0].mxu0 %v373
      %v651 = vpop.f32.mrb[0].mxu0
      %v652 = vadd.f32 %v247, %v651
      %v653 = vpop.f32.mrb[0].mxu0
      %v654 = vpop.f32.mrb[0].mxu0
      %v655 = vadd.f32 %v247, %v654
      %v656 = vpop.f32.mrb[0].mxu0
      %657 = vmatprep.mubr.bf16.mxu0 %v376
      %658 = vmatmul.mubr.bf16.gmra.mrb[0].mxu0 %v375
      %v659 = vpop.f32.mrb[0].mxu0
      %v660 = vadd.f32 %v247, %v659
      %v661 = vpop.f32.mrb[0].mxu0
      %v662 = vpop.f32.mrb[0].mxu0
      %v663 = vadd.f32 %v247, %v662
      %v664 = vpop.f32.mrb[0].mxu0
      %665 = vdwg.mxu0
      %v666 = vmax.f32 %v540, 0.0
      %v667 = vmax.f32 %v543, 0.0
      %v668 = vmax.f32 %v548, 0.0
      %v669 = vmax.f32 %v551, 0.0
      %v670 = vmax.f32 %v556, 0.0
      %v671 = vmax.f32 %v559, 0.0
      %v672 = vmax.f32 %v564, 0.0
      %v673 = vmax.f32 %v567, 0.0
      %v674 = vmax.f32 %v572, 0.0
      %v675 = vmax.f32 %v575, 0.0
      %v676 = vmax.f32 %v580, 0.0
      %v677 = vmax.f32 %v583, 0.0
      %v678 = vmax.f32 %v588, 0.0
      %v679 = vmax.f32 %v591, 0.0
      %v680 = vmax.f32 %v596, 0.0
      %v681 = vmax.f32 %v599, 0.0
      %v682 = vmax.f32 %v604, 0.0
      %v683 = vmax.f32 %v607, 0.0
      %v684 = vmax.f32 %v612, 0.0
      %v685 = vmax.f32 %v615, 0.0
      %v686 = vmax.f32 %v620, 0.0
      %v687 = vmax.f32 %v623, 0.0
      %v688 = vmax.f32 %v628, 0.0
      %v689 = vmax.f32 %v631, 0.0
      %v690 = vmax.f32 %v636, 0.0
      %v691 = vmax.f32 %v639, 0.0
      %v692 = vmax.f32 %v644, 0.0
      %v693 = vmax.f32 %v647, 0.0
      %v694 = vmax.f32 %v652, 0.0
      %v695 = vmax.f32 %v655, 0.0
      %v696 = vmax.f32 %v660, 0.0
      %v697 = vmax.f32 %v663, 0.0
      %698 = vst [vmem:[%s175] sm:$0xff] %v666
      %699 = vst [vmem:[%s175 + $0x8] sm:$0xff] %v667
      %700 = vst [vmem:[%s175 + $0x10] sm:$0xff] %v668
      %701 = vst [vmem:[%s175 + $0x18] sm:$0xff] %v669
      %702 = vst [vmem:[%s175 + $0x20] sm:$0xff] %v670
      %703 = vst [vmem:[%s175 + $0x28] sm:$0xff] %v671
      %704 = vst [vmem:[%s175 + $0x30] sm:$0xff] %v672
      %705 = vst [vmem:[%s175 + $0x38] sm:$0xff] %v673
      %706 = vst [vmem:[%s175 + $0x40] sm:$0xff] %v674
      %707 = vst [vmem:[%s175 + $0x48] sm:$0xff] %v675
      %708 = vst [vmem:[%s175 + $0x50] sm:$0xff] %v676
      %709 = vst [vmem:[%s175 + $0x58] sm:$0xff] %v677
      %710 = vst [vmem:[%s175 + $0x60] sm:$0xff] %v678
      %711 = vst [vmem:[%s175 + $0x68] sm:$0xff] %v679
      %712 = vst [vmem:[%s175 + $0x70] sm:$0xff] %v680
      %713 = vst [vmem:[%s175 + $0x78] sm:$0xff] %v681
      %714 = vst [vmem:[%s175 + $0x80] sm:$0xff] %v682
      %715 = vst [vmem:[%s175 + $0x88] sm:$0xff] %v683
      %716 = vst [vmem:[%s175 + $0x90] sm:$0xff] %v684
      %717 = vst [vmem:[%s175 + $0x98] sm:$0xff] %v685
      %718 = vst [vmem:[%s175 + $0xa0] sm:$0xff] %v686
      %719 = vst [vmem:[%s175 + $0xa8] sm:$0xff] %v687
      %720 = vst [vmem:[%s175 + $0xb0] sm:$0xff] %v688
      %721 = vst [vmem:[%s175 + $0xb8] sm:$0xff] %v689
      %722 = vst [vmem:[%s175 + $0xc0] sm:$0xff] %v690
      %723 = vst [vmem:[%s175 + $0xc8] sm:$0xff] %v691
      %724 = vst [vmem:[%s175 + $0xd0] sm:$0xff] %v692
      %725 = vst [vmem:[%s175 + $0xd8] sm:$0xff] %v693
      %726 = vst [vmem:[%s175 + $0xe0] sm:$0xff] %v694
      %727 = vst [vmem:[%s175 + $0xe8] sm:$0xff] %v695
      %728 = vst [vmem:[%s175 + $0xf0] sm:$0xff] %v696
      %729 = vst [vmem:[%s175 + $0xf8] sm:$0xff] %v697
      %s730 = smul.u32 32, %s14
      %p731 = scmp.lt.s32.totalorder %s730, 63
      %s732 = scalar_select %p731, %s730, 63
      %s733 = smul.addr %s732, 8
      %s734 = scalar_lea.vmem %s3, %s733
      // Predicated region
      $region33: #{forward.19} parent=31 // pred_check
        %p735 = pneg %p100
      $region34: #{forward.19} parent=31 // pred_check_branch
        %737 = sbr.rel (%p735) target = $region36
      $region35: #{forward.19} parent=31 // pred_region
        %s738 = smul.u32 32, %s14
      $region36: #{forward.19} parent=31 // pred_fallthru
        _
    $region32: #{forward.19} parent=5 // pred_fallthru
      _
    %p739 = scmp.le.s32.totalorder 2, %s9
    // Predicated region
    $region37: #{forward.19} parent=5 // pred_check
      %p740 = pneg %p739
    $region38: #{forward.19} parent=5 // pred_check_branch
      %742 = sbr.rel (%p740) target = $region40
    $region39: #{forward.19} parent=5 // pred_region
      %s743 = ssub.s32 %s9, 2
      // Predicated region
      $region41: #{forward.19} parent=39 // pred_check
        %p744 = pneg %p106
      $region42: #{forward.19} parent=39 // pred_check_branch
        %746 = sbr.rel (%p744) target = $region44
      $region43: #{forward.19} parent=39 // pred_region
        %s747 = smul.u32 32, %s15
        %p748 = scmp.lt.s32.totalorder %s747, 63
        %s749 = scalar_select %p748, %s747, 63
        %s750 = smul.addr %s749, 8
        %s751 = scalar_lea.vmem %s3, %s750
      $region44: #{forward.19} parent=39 // pred_fallthru
        _
    $region40: #{forward.19} parent=5 // pred_fallthru
      _
  $region6: #{forward.19} parent=0 // loop_footer
    %s13 = sadd.s32 1, %s9
  $region7: #{forward.19} parent=0 // loop_footer_branch
    %8 = sbr.rel target = $region3
  $region8: #{forward.19} parent=0 // loop_exit
    _

// kernel: forward.20
$region0: #{forward.20}
  #allocation0 [shape = 'u32[]', space=smem, size = 0x4, offset = 0x4, fixed_abs, tag = 'smem constant byte address 0x4 - core index']
  #allocation1 [shape = 'u32[144,128]{1,0:T(1,128)}', space=vmem, size = 0x12000, scoped, tag = 'internal scratch']
  %s0 = inlined_call_operand.vmem [shape: bf16[512,256], index: 0, kind: input, shape index: {}]
  %s1 = inlined_call_operand.vmem [shape: bf16[256,128], index: 1, kind: input, shape index: {}]
  %s2 = inlined_call_operand.vmem [shape: f32[1,128], index: 2, kind: input, shape index: {}]
  %s3 = inlined_call_operand.vmem [shape: f32[512,128], index: 3, kind: input, shape index: {}]
  %s4 = inlined_call_operand.vmem [shape: f32[512,128], index: 4, kind: output, shape index: {}]
  %s5 = sld [smem:[#allocation0]]
  $region49: #{forward.20} parent=0
    _
  %s7 = ssub.s32 1, %s5
  %s8 = scalar_select 0, %s7, %s5
  loop: start=0, step=1, limit=4
  $region2: #{forward.20} parent=0 // loop_pre_header
    _
  $region3: #{forward.20} parent=0 // loop_header
    %s10 = sphi 0, %s14
    %p11 = scmp.ge.s32.totalorder %s10, 4
    %s20 = sphi 0, %s22
    %s23 = sphi 0, %s20
    %s24 = sphi 0, %s23
    %s40 = sphi 0, %s24
    %s44 = sphi 0, %s44
    %s46 = sphi 0, %s44
    %s47 = sphi 0, %s46
    %s61 = sphi 0, %s47
    %s65 = sphi 0, %s65
    %s67 = sphi 0, %s65
    %s68 = sphi 0, %s67
    %s82 = sphi 0, %s68
    %s88 = sphi 0, %s90
    %s91 = sphi 0, %s88
    %s92 = sphi 0, %s91
    %s108 = sphi 0, %s92
    %s114 = sphi 0, %s116
    %s117 = sphi 0, %s114
    %s118 = sphi 0, %s117
    %s134 = sphi 0, %s118
  $region4: #{forward.20} parent=0 // loop_header_branch
    %13 = sbr.rel (%p11) target = $region8
  $region5: #{forward.20} parent=0 // loop_body
    %s15 = ssub.s32 %s10, 1
    %s16 = ssub.s32 %s10, 2
    %s17 = sadd.s32 %s10, 1
    %s18 = ssub.s32 %s10, %s17
    %p19 = scmp.eq.s32.totalorder %s18, 0
    %s21 = sadd.s32 %s20, 1
    %s22 = scalar_select %p19, %s20, %s21
    %p25 = pneg %p19
    %p26 = scmp.eq.s32.totalorder %s10, 1
    %p27 = por %p25, %p26
    %p28 = scmp.ne.s32.totalorder %s20, %s23
    %p29 = scmp.eq.s32.totalorder %s10, 0
    %p30 = por %p28, %p29
    %p31 = scmp.ne.s32.totalorder %s20, %s23
    %p32 = scmp.eq.s32.totalorder %s15, 1
    %p33 = por %p31, %p32
    %p34 = scmp.ne.s32.totalorder %s23, %s24
    %p35 = scmp.eq.s32.totalorder %s15, 0
    %p36 = por %p34, %p35
    %p37 = scmp.ne.s32.totalorder %s23, %s24
    %p38 = scmp.eq.s32.totalorder %s16, 1
    %p39 = por %p37, %p38
    %p41 = scmp.ne.s32.totalorder %s24, %s40
    %p42 = scmp.eq.s32.totalorder %s16, 0
    %p43 = por %p41, %p42
    %s45 = sadd.s32 %s44, 1
    %p48 = scmp.eq.s32.totalorder %s10, 1
    %p49 = scmp.ne.s32.totalorder %s44, %s46
    %p50 = scmp.eq.s32.totalorder %s10, 0
    %p51 = por %p49, %p50
    %p52 = scmp.ne.s32.totalorder %s44, %s46
    %p53 = scmp.eq.s32.totalorder %s15, 1
    %p54 = por %p52, %p53
    %p55 = scmp.ne.s32.totalorder %s46, %s47
    %p56 = scmp.eq.s32.totalorder %s15, 0
    %p57 = por %p55, %p56
    %p58 = scmp.ne.s32.totalorder %s46, %s47
    %p59 = scmp.eq.s32.totalorder %s16, 1
    %p60 = por %p58, %p59
    %p62 = scmp.ne.s32.totalorder %s47, %s61
    %p63 = scmp.eq.s32.totalorder %s16, 0
    %p64 = por %p62, %p63
    %s66 = sadd.s32 %s65, 1
    %p69 = scmp.eq.s32.totalorder %s10, 1
    %p70 = scmp.ne.s32.totalorder %s65, %s67
    %p71 = scmp.eq.s32.totalorder %s10, 0
    %p72 = por %p70, %p71
    %p73 = scmp.ne.s32.totalorder %s65, %s67
    %p74 = scmp.eq.s32.totalorder %s15, 1
    %p75 = por %p73, %p74
    %p76 = scmp.ne.s32.totalorder %s67, %s68
    %p77 = scmp.eq.s32.totalorder %s15, 0
    %p78 = por %p76, %p77
    %p79 = scmp.ne.s32.totalorder %s67, %s68
    %p80 = scmp.eq.s32.totalorder %s16, 1
    %p81 = por %p79, %p80
    %p83 = scmp.ne.s32.totalorder %s68, %s82
    %p84 = scmp.eq.s32.totalorder %s16, 0
    %p85 = por %p83, %p84
    %s86 = ssub.s32 %s10, %s17
    %p87 = scmp.eq.s32.totalorder %s86, 0
    %s89 = sadd.s32 %s88, 1
    %s90 = scalar_select %p87, %s88, %s89
    %p93 = pneg %p87
    %p94 = scmp.eq.s32.totalorder %s10, 1
    %p95 = por %p93, %p94
    %p96 = scmp.ne.s32.totalorder %s88, %s91
    %p97 = scmp.eq.s32.totalorder %s10, 0
    %p98 = por %p96, %p97
    %p99 = scmp.ne.s32.totalorder %s88, %s91
    %p100 = scmp.eq.s32.totalorder %s15, 1
    %p101 = por %p99, %p100
    %p102 = scmp.ne.s32.totalorder %s91, %s92
    %p103 = scmp.eq.s32.totalorder %s15, 0
    %p104 = por %p102, %p103
    %p105 = scmp.ne.s32.totalorder %s91, %s92
    %p106 = scmp.eq.s32.totalorder %s16, 1
    %p107 = por %p105, %p106
    %p109 = scmp.ne.s32.totalorder %s92, %s108
    %p110 = scmp.eq.s32.totalorder %s16, 0
    %p111 = por %p109, %p110
    %s112 = ssub.s32 %s10, %s17
    %p113 = scmp.eq.s32.totalorder %s112, 0
    %s115 = sadd.s32 %s114, 1
    %s116 = scalar_select %p113, %s114, %s115
    %p119 = pneg %p113
    %p120 = scmp.eq.s32.totalorder %s10, 1
    %p121 = por %p119, %p120
    %p122 = scmp.ne.s32.totalorder %s114, %s117
    %p123 = scmp.eq.s32.totalorder %s10, 0
    %p124 = por %p122, %p123
    %p125 = scmp.ne.s32.totalorder %s114, %s117
    %p126 = scmp.eq.s32.totalorder %s15, 1
    %p127 = por %p125, %p126
    %p128 = scmp.ne.s32.totalorder %s117, %s118
    %p129 = scmp.eq.s32.totalorder %s15, 0
    %p130 = por %p128, %p129
    %p131 = scmp.ne.s32.totalorder %s117, %s118
    %p132 = scmp.eq.s32.totalorder %s16, 1
    %p133 = por %p131, %p132
    %p135 = scmp.ne.s32.totalorder %s118, %s134
    %p136 = scmp.eq.s32.totalorder %s16, 0
    %p137 = por %p135, %p136
    %p138 = scmp.le.s32.totalorder 1, %s10
    %p139 = scmp.lt.s32.totalorder %s10, 3
    %p140 = pnand %p138, %p139
    %p141 = pneg %p140
    // Predicated region
    $region9: #{forward.20} parent=5 // pred_check
      _
    $region10: #{forward.20} parent=5 // pred_check_branch
      %143 = sbr.rel (%p140) target = $region12
    $region11: #{forward.20} parent=5 // pred_region
      %s144 = ssub.s32 %s10, 1
      // Predicated region
      $region13: #{forward.20} parent=11 // pred_check
        %p145 = pneg %p57
      $region14: #{forward.20} parent=11 // pred_check_branch
        %147 = sbr.rel (%p145) target = $region16
      $region15: #{forward.20} parent=11 // pred_region
        _
      $region16: #{forward.20} parent=11 // pred_fallthru
        _
      // Predicated region
      $region17: #{forward.20} parent=11 // pred_check
        %p148 = pneg %p78
      $region18: #{forward.20} parent=11 // pred_check_branch
        %150 = sbr.rel (%p148) target = $region20
      $region19: #{forward.20} parent=11 // pred_region
        _
      $region20: #{forward.20} parent=11 // pred_fallthru
        _
    $region12: #{forward.20} parent=5 // pred_fallthru
      _
    %p151 = scmp.lt.s32.totalorder %s10, 2
    // Predicated region
    $region21: #{forward.20} parent=5 // pred_check
      %p152 = pneg %p151
    $region22: #{forward.20} parent=5 // pred_check_branch
      %154 = sbr.rel (%p152) target = $region24
    $region23: #{forward.20} parent=5 // pred_region
      // Predicated region
      $region25: #{forward.20} parent=23 // pred_check
        %p155 = pneg %p30
      $region26: #{forward.20} parent=23 // pred_check_branch
        %157 = sbr.rel (%p155) target = $region28
      $region27: #{forward.20} parent=23 // pred_region
        %s158 = smul.u32 32, %s10
        %p159 = scmp.lt.s32.totalorder %s158, 63
        %s160 = scalar_select %p159, %s158, 63
        %s161 = smul.addr %s160, 2
        %s162 = smul.addr %s161, 4
        %s163 = scalar_lea.vmem %s0, %s162
        %s164 = smul.u32 32, %s10
      $region28: #{forward.20} parent=23 // pred_fallthru
        _
      // Predicated region
      $region29: #{forward.20} parent=23 // pred_check
        %p165 = pneg %p98
      $region30: #{forward.20} parent=23 // pred_check_branch
        %167 = sbr.rel (%p165) target = $region32
      $region31: #{forward.20} parent=23 // pred_region
        %s168 = smul.u32 32, %s10
        %p169 = scmp.lt.s32.totalorder %s168, 63
        %s170 = scalar_select %p169, %s168, 63
        %s171 = smul.addr %s170, 8
        %s172 = scalar_lea.vmem %s3, %s171
        %s173 = smul.u32 32, %s10
      $region32: #{forward.20} parent=23 // pred_fallthru
        _
    $region24: #{forward.20} parent=5 // pred_fallthru
      _
    %p174 = scmp.le.s32.totalorder 1, %s10
    %p175 = scmp.lt.s32.totalorder %s10, 3
    %p176 = pnand %p174, %p175
    %p177 = pneg %p176
    // Predicated region
    $region33: #{forward.20} parent=5 // pred_check
      _
    $region34: #{forward.20} parent=5 // pred_check_branch
      %179 = sbr.rel (%p176) target = $region36
    $region35: #{forward.20} parent=5 // pred_region
      %s180 = ssub.s32 %s10, 1
      %s181 = smul.u32 32, %s15
      %p182 = scmp.lt.s32.totalorder %s181, 63
      %s183 = scalar_select %p182, %s181, 63
      %s184 = smul.addr %s183, 2
      %s185 = smul.addr %s184, 4
      %s186 = scalar_lea.vmem %s0, %s185
      %p187 = pneg %p36
      %p188 = pneg %p33
      %p189 = pneg %p57
      %p190 = pneg %p54
      %p191 = pneg %p78
      %p192 = pneg %p75
      %s193 = smul.u32 32, %s15
      %p194 = scmp.lt.s32.totalorder %s193, 63
      %s195 = scalar_select %p194, %s193, 63
      %s196 = smul.addr %s195, 8
      %s197 = scalar_lea.vmem %s3, %s196
      %p198 = pneg %p104
      %p199 = pneg %p101
      %p200 = pneg %p130
      %p201 = pneg %p127
      %s202 = smul.u32 32, %s15
      %p203 = scmp.lt.s32.totalorder %s202, 63
      %s204 = scalar_select %p203, %s202, 63
      %s205 = smul.addr %s204, 8
      %s206 = scalar_lea.vmem %s4, %s205
      %s207 = smul.u32 32, %s15
      %p208 = scmp.lt.s32.totalorder %s207, 63
      %s209 = scalar_select %p208, %s207, 63
      %s210 = smul.addr %s209, 2
      %s211 = smul.addr %s210, 4
      %s212 = scalar_lea.vmem %s0, %s211
      %s213 = smul.u32 32, %s15
      %s214 = smul.u32 32, %s15
      %p215 = scmp.lt.s32.totalorder %s214, 63
      %s216 = scalar_select %p215, %s214, 63
      %s217 = smul.addr %s216, 8
      %s218 = scalar_lea.vmem %s3, %s217
      %s219 = smul.u32 32, %s15
      %s220 = smul.u32 32, %s15
      %p221 = scmp.lt.s32.totalorder %s220, 63
      %s222 = scalar_select %p221, %s220, 63
      %s223 = smul.addr %s222, 8
      %s224 = scalar_lea.vmem %s4, %s223
      %s225 = smul.u32 32, %s15
      %v227 = vld [vmem:[%s212] sm:$0xff]
      %v228 = vld [vmem:[%s212 + $0x8] sm:$0xff]
      %v229 = vld [vmem:[%s212 + $0x10] sm:$0xff]
      %v230 = vld [vmem:[%s212 + $0x18] sm:$0xff]
      %v231 = vld [vmem:[%s212 + $0x20] sm:$0xff]
      %v232 = vld [vmem:[%s212 + $0x28] sm:$0xff]
      %v233 = vld [vmem:[%s212 + $0x30] sm:$0xff]
      %v234 = vld [vmem:[%s212 + $0x38] sm:$0xff]
      %v235 = vld [vmem:[%s212 + $0x40] sm:$0xff]
      %v236 = vld [vmem:[%s212 + $0x48] sm:$0xff]
      %v237 = vld [vmem:[%s212 + $0x50] sm:$0xff]
      %v238 = vld [vmem:[%s212 + $0x58] sm:$0xff]
      %v239 = vld [vmem:[%s212 + $0x60] sm:$0xff]
      %v240 = vld [vmem:[%s212 + $0x68] sm:$0xff]
      %v241 = vld [vmem:[%s212 + $0x70] sm:$0xff]
      %v242 = vld [vmem:[%s212 + $0x78] sm:$0xff]
      %v243 = vld [vmem:[%s212 + $0x80] sm:$0xff]
      %v244 = vld [vmem:[%s212 + $0x88] sm:$0xff]
      %v245 = vld [vmem:[%s212 + $0x90] sm:$0xff]
      %v246 = vld [vmem:[%s212 + $0x98] sm:$0xff]
      %v247 = vld [vmem:[%s212 + $0xa0] sm:$0xff]
      %v248 = vld [vmem:[%s212 + $0xa8] sm:$0xff]
      %v249 = vld [vmem:[%s212 + $0xb0] sm:$0xff]
      %v250 = vld [vmem:[%s212 + $0xb8] sm:$0xff]
      %v251 = vld [vmem:[%s212 + $0xc0] sm:$0xff]
      %v252 = vld [vmem:[%s212 + $0xc8] sm:$0xff]
      %v253 = vld [vmem:[%s212 + $0xd0] sm:$0xff]
      %v254 = vld [vmem:[%s212 + $0xd8] sm:$0xff]
      %v255 = vld [vmem:[%s212 + $0xe0] sm:$0xff]
      %v256 = vld [vmem:[%s212 + $0xe8] sm:$0xff]
      %v257 = vld [vmem:[%s212 + $0xf0] sm:$0xff]
      %v258 = vld [vmem:[%s212 + $0xf8] sm:$0xff]
      %v259 = vld [vmem:[%s1] sm:$0xf]
      %v260 = vld [vmem:[%s1 + $0x4] sm:$0xf]
      %v261 = vld [vmem:[%s1 + $0x8] sm:$0xf]
      %v262 = vld [vmem:[%s1 + $0xc] sm:$0xf]
      %v263 = vld [vmem:[%s1 + $0x10] sm:$0xf]
      %v264 = vld [vmem:[%s1 + $0x14] sm:$0xf]
      %v265 = vld [vmem:[%s1 + $0x18] sm:$0xf]
      %v266 = vld [vmem:[%s1 + $0x1c] sm:$0xf]
      %v267 = vld [vmem:[%s1 + $0x20] sm:$0xf]
      %v268 = vld [vmem:[%s1 + $0x24] sm:$0xf]
      %v269 = vld [vmem:[%s1 + $0x28] sm:$0xf]
      %v270 = vld [vmem:[%s1 + $0x2c] sm:$0xf]
      %v271 = vld [vmem:[%s1 + $0x30] sm:$0xf]
      %v272 = vld [vmem:[%s1 + $0x34] sm:$0xf]
      %v273 = vld [vmem:[%s1 + $0x38] sm:$0xf]
      %v274 = vld [vmem:[%s1 + $0x3c] sm:$0xf]
      %v275 = vld [vmem:[%s1 + $0x40] sm:$0xf]
      %v276 = vld [vmem:[%s1 + $0x44] sm:$0xf]
      %v277 = vld [vmem:[%s1 + $0x48] sm:$0xf]
      %v278 = vld [vmem:[%s1 + $0x4c] sm:$0xf]
      %v279 = vld [vmem:[%s1 + $0x50] sm:$0xf]
      %v280 = vld [vmem:[%s1 + $0x54] sm:$0xf]
      %v281 = vld [vmem:[%s1 + $0x58] sm:$0xf]
      %v282 = vld [vmem:[%s1 + $0x5c] sm:$0xf]
      %v283 = vld [vmem:[%s1 + $0x60] sm:$0xf]
      %v284 = vld [vmem:[%s1 + $0x64] sm:$0xf]
      %v285 = vld [vmem:[%s1 + $0x68] sm:$0xf]
      %v286 = vld [vmem:[%s1 + $0x6c] sm:$0xf]
      %v287 = vld [vmem:[%s1 + $0x70] sm:$0xf]
      %v288 = vld [vmem:[%s1 + $0x74] sm:$0xf]
      %v289 = vld [vmem:[%s1 + $0x78] sm:$0xf]
      %v290 = vld [vmem:[%s1 + $0x7c] sm:$0xf]
      %v291 = vld [vmem:[%s2] sm:$0x1]
      %v293 = vlaneseq
      %v294 = vshrl.u32 %v293, 7
      %v295 = vsub.s32 0, %v294
      %v296 = vrot.slane %v291, %v295
      %v330 = vunpack.c.l.b16 %v227
      %v331 = vunpack.c.h.b16 %v227
      %v332 = vunpack.c.l.b16 %v228
      %v333 = vunpack.c.h.b16 %v228
      %v334 = vunpack.c.l.b16 %v229
      %v335 = vunpack.c.h.b16 %v229
      %v336 = vunpack.c.l.b16 %v230
      %v337 = vunpack.c.h.b16 %v230
      %v338 = vunpack.c.l.b16 %v231
      %v339 = vunpack.c.h.b16 %v231
      %v340 = vunpack.c.l.b16 %v232
      %v341 = vunpack.c.h.b16 %v232
      %v342 = vunpack.c.l.b16 %v233
      %v343 = vunpack.c.h.b16 %v233
      %v344 = vunpack.c.l.b16 %v234
      %v345 = vunpack.c.h.b16 %v234
      %v346 = vunpack.c.l.b16 %v235
      %v347 = vunpack.c.h.b16 %v235
      %v348 = vunpack.c.l.b16 %v236
      %v349 = vunpack.c.h.b16 %v236
      %v350 = vunpack.c.l.b16 %v237
      %v351 = vunpack.c.h.b16 %v237
      %v352 = vunpack.c.l.b16 %v238
      %v353 = vunpack.c.h.b16 %v238
      %v354 = vunpack.c.l.b16 %v239
      %v355 = vunpack.c.h.b16 %v239
      %v356 = vunpack.c.l.b16 %v240
      %v357 = vunpack.c.h.b16 %v240
      %v358 = vunpack.c.l.b16 %v241
      %v359 = vunpack.c.h.b16 %v241
      %v360 = vunpack.c.l.b16 %v242
      %v361 = vunpack.c.h.b16 %v242
      %v362 = vunpack.c.l.b16 %v243
      %v363 = vunpack.c.h.b16 %v243
      %v364 = vunpack.c.l.b16 %v244
      %v365 = vunpack.c.h.b16 %v244
      %v366 = vunpack.c.l.b16 %v245
      %v367 = vunpack.c.h.b16 %v245
      %v368 = vunpack.c.l.b16 %v246
      %v369 = vunpack.c.h.b16 %v246
      %v370 = vunpack.c.l.b16 %v247
      %v371 = vunpack.c.h.b16 %v247
      %v372 = vunpack.c.l.b16 %v248
      %v373 = vunpack.c.h.b16 %v248
      %v374 = vunpack.c.l.b16 %v249
      %v375 = vunpack.c.h.b16 %v249
      %v376 = vunpack.c.l.b16 %v250
      %v377 = vunpack.c.h.b16 %v250
      %v378 = vunpack.c.l.b16 %v251
      %v379 = vunpack.c.h.b16 %v251
      %v380 = vunpack.c.l.b16 %v252
      %v381 = vunpack.c.h.b16 %v252
      %v382 = vunpack.c.l.b16 %v253
      %v383 = vunpack.c.h.b16 %v253
      %v384 = vunpack.c.l.b16 %v254
      %v385 = vunpack.c.h.b16 %v254
      %v386 = vunpack.c.l.b16 %v255
      %v387 = vunpack.c.h.b16 %v255
      %v388 = vunpack.c.l.b16 %v256
      %v389 = vunpack.c.h.b16 %v256
      %v390 = vunpack.c.l.b16 %v257
      %v391 = vunpack.c.h.b16 %v257
      %v392 = vunpack.c.l.b16 %v258
      %v393 = vunpack.c.h.b16 %v258
      %v394 = vpack.c.b16 %v332, %v330
      %v395 = vpack.c.b16 %v333, %v331
      %v396 = vpack.c.b16 %v336, %v334
      %v397 = vpack.c.b16 %v337, %v335
      %v398 = vpack.c.b16 %v340, %v338
      %v399 = vpack.c.b16 %v341, %v339
      %v400 = vpack.c.b16 %v344, %v342
      %v401 = vpack.c.b16 %v345, %v343
      %v402 = vpack.c.b16 %v348, %v346
      %v403 = vpack.c.b16 %v349, %v347
      %v404 = vpack.c.b16 %v352, %v350
      %v405 = vpack.c.b16 %v353, %v351
      %v406 = vpack.c.b16 %v356, %v354
      %v407 = vpack.c.b16 %v357, %v355
      %v408 = vpack.c.b16 %v360, %v358
      %v409 = vpack.c.b16 %v361, %v359
      %v410 = vpack.c.b16 %v364, %v362
      %v411 = vpack.c.b16 %v365, %v363
      %v412 = vpack.c.b16 %v368, %v366
      %v413 = vpack.c.b16 %v369, %v367
      %v414 = vpack.c.b16 %v372, %v370
      %v415 = vpack.c.b16 %v373, %v371
      %v416 = vpack.c.b16 %v376, %v374
      %v417 = vpack.c.b16 %v377, %v375
      %v418 = vpack.c.b16 %v380, %v378
      %v419 = vpack.c.b16 %v381, %v379
      %v420 = vpack.c.b16 %v384, %v382
      %v421 = vpack.c.b16 %v385, %v383
      %v422 = vpack.c.b16 %v388, %v386
      %v423 = vpack.c.b16 %v389, %v387
      %v424 = vpack.c.b16 %v392, %v390
      %v425 = vpack.c.b16 %v393, %v391
      %v490 = vunpack.c.l.b16 %v259
      %v491 = vunpack.c.l.b16 %v260
      %v492 = vunpack.c.l.b16 %v261
      %v493 = vunpack.c.l.b16 %v262
      %v494 = vunpack.c.l.b16 %v263
      %v495 = vunpack.c.l.b16 %v264
      %v496 = vunpack.c.l.b16 %v265
      %v497 = vunpack.c.l.b16 %v266
      %v498 = vunpack.c.l.b16 %v267
      %v499 = vunpack.c.l.b16 %v268
      %v500 = vunpack.c.l.b16 %v269
      %v501 = vunpack.c.l.b16 %v270
      %v502 = vunpack.c.l.b16 %v271
      %v503 = vunpack.c.l.b16 %v272
      %v504 = vunpack.c.l.b16 %v273
      %v505 = vunpack.c.l.b16 %v274
      %v506 = vunpack.c.l.b16 %v275
      %v507 = vunpack.c.l.b16 %v276
      %v508 = vunpack.c.l.b16 %v277
      %v509 = vunpack.c.l.b16 %v278
      %v510 = vunpack.c.l.b16 %v279
      %v511 = vunpack.c.l.b16 %v280
      %v512 = vunpack.c.l.b16 %v281
      %v513 = vunpack.c.l.b16 %v282
      %v514 = vunpack.c.l.b16 %v283
      %v515 = vunpack.c.l.b16 %v284
      %v516 = vunpack.c.l.b16 %v285
      %v517 = vunpack.c.l.b16 %v286
      %v518 = vunpack.c.l.b16 %v287
      %v519 = vunpack.c.l.b16 %v288
      %v520 = vunpack.c.l.b16 %v289
      %v521 = vunpack.c.l.b16 %v290
      %v522 = vpack.c.b16 %v491, %v490
      %v523 = vpack.c.b16 %v493, %v492
      %v524 = vpack.c.b16 %v495, %v494
      %v525 = vpack.c.b16 %v497, %v496
      %v526 = vpack.c.b16 %v499, %v498
      %v527 = vpack.c.b16 %v501, %v500
      %v528 = vpack.c.b16 %v503, %v502
      %v529 = vpack.c.b16 %v505, %v504
      %v530 = vpack.c.b16 %v507, %v506
      %v531 = vpack.c.b16 %v509, %v508
      %v532 = vpack.c.b16 %v511, %v510
      %v533 = vpack.c.b16 %v513, %v512
      %v534 = vpack.c.b16 %v515, %v514
      %v535 = vpack.c.b16 %v517, %v516
      %v536 = vpack.c.b16 %v519, %v518
      %v537 = vpack.c.b16 %v521, %v520
      %554 = vmatprep.subr.bf16.mxu0 0
      %555 = vmatpush1.bf16.msra.mxu0 %v522
      %556 = vmatprep.subr.bf16.mxu0 0
      %557 = vmatpush1.bf16.msra.mxu0 %v523
      %558 = vmatprep.subr.bf16.mxu0 0
      %559 = vmatpush1.bf16.msra.mxu0 %v524
      %560 = vmatprep.subr.bf16.mxu0 0
      %561 = vmatpush1.bf16.msra.mxu0 %v525
      %562 = vmatprep.subr.bf16.mxu0 0
      %563 = vmatpush1.bf16.msra.mxu0 %v526
      %564 = vmatprep.subr.bf16.mxu0 0
      %565 = vmatpush1.bf16.msra.mxu0 %v527
      %566 = vmatprep.subr.bf16.mxu0 0
      %567 = vmatpush1.bf16.msra.mxu0 %v528
      %568 = vmatprep.subr.bf16.mxu0 0
      %569 = vmatpush1.bf16.msra.mxu0 %v529
      %570 = vmatprep.subr.bf16.mxu0 0
      %571 = vmatpush1.bf16.msra.mxu0 %v530
      %572 = vmatprep.subr.bf16.mxu0 0
      %573 = vmatpush1.bf16.msra.mxu0 %v531
      %574 = vmatprep.subr.bf16.mxu0 0
      %575 = vmatpush1.bf16.msra.mxu0 %v532
      %576 = vmatprep.subr.bf16.mxu0 0
      %577 = vmatpush1.bf16.msra.mxu0 %v533
      %578 = vmatprep.subr.bf16.mxu0 0
      %579 = vmatpush1.bf16.msra.mxu0 %v534
      %580 = vmatprep.subr.bf16.mxu0 0
      %581 = vmatpush1.bf16.msra.mxu0 %v535
      %582 = vmatprep.subr.bf16.mxu0 0
      %583 = vmatpush1.bf16.msra.mxu0 %v536
      %584 = vmatprep.subr.bf16.mxu0 0
      %585 = vmatpush1.bf16.msra.mxu0 %v537
      %586 = vmatprep.mubr.bf16.mxu0 %v395
      %587 = vmatmul.mubr.bf16.gmra.mrb[0].mxu0 %v394
      %v588 = vpop.f32.mrb[0].mxu0
      %v589 = vadd.f32 %v296, %v588
      %v590 = vpop.f32.mrb[0].mxu0
      %v591 = vpop.f32.mrb[0].mxu0
      %v592 = vadd.f32 %v296, %v591
      %v593 = vpop.f32.mrb[0].mxu0
      %594 = vmatprep.mubr.bf16.mxu0 %v397
      %595 = vmatmul.mubr.bf16.gmra.mrb[0].mxu0 %v396
      %v596 = vpop.f32.mrb[0].mxu0
      %v597 = vadd.f32 %v296, %v596
      %v598 = vpop.f32.mrb[0].mxu0
      %v599 = vpop.f32.mrb[0].mxu0
      %v600 = vadd.f32 %v296, %v599
      %v601 = vpop.f32.mrb[0].mxu0
      %602 = vmatprep.mubr.bf16.mxu0 %v399
      %603 = vmatmul.mubr.bf16.gmra.mrb[0].mxu0 %v398
      %v604 = vpop.f32.mrb[0].mxu0
      %v605 = vadd.f32 %v296, %v604
      %v606 = vpop.f32.mrb[0].mxu0
      %v607 = vpop.f32.mrb[0].mxu0
      %v608 = vadd.f32 %v296, %v607
      %v609 = vpop.f32.mrb[0].mxu0
      %610 = vmatprep.mubr.bf16.mxu0 %v401
      %611 = vmatmul.mubr.bf16.gmra.mrb[0].mxu0 %v400
      %v612 = vpop.f32.mrb[0].mxu0
      %v613 = vadd.f32 %v296, %v612
      %v614 = vpop.f32.mrb[0].mxu0
      %v615 = vpop.f32.mrb[0].mxu0
      %v616 = vadd.f32 %v296, %v615
      %v617 = vpop.f32.mrb[0].mxu0
      %618 = vmatprep.mubr.bf16.mxu0 %v403
      %619 = vmatmul.mubr.bf16.gmra.mrb[0].mxu0 %v402
      %v620 = vpop.f32.mrb[0].mxu0
      %v621 = vadd.f32 %v296, %v620
      %v622 = vpop.f32.mrb[0].mxu0
      %v623 = vpop.f32.mrb[0].mxu0
      %v624 = vadd.f32 %v296, %v623
      %v625 = vpop.f32.mrb[0].mxu0
      %626 = vmatprep.mubr.bf16.mxu0 %v405
      %627 = vmatmul.mubr.bf16.gmra.mrb[0].mxu0 %v404
      %v628 = vpop.f32.mrb[0].mxu0
      %v629 = vadd.f32 %v296, %v628
      %v630 = vpop.f32.mrb[0].mxu0
      %v631 = vpop.f32.mrb[0].mxu0
      %v632 = vadd.f32 %v296, %v631
      %v633 = vpop.f32.mrb[0].mxu0
      %634 = vmatprep.mubr.bf16.mxu0 %v407
      %635 = vmatmul.mubr.bf16.gmra.mrb[0].mxu0 %v406
      %v636 = vpop.f32.mrb[0].mxu0
      %v637 = vadd.f32 %v296, %v636
      %v638 = vpop.f32.mrb[0].mxu0
      %v639 = vpop.f32.mrb[0].mxu0
      %v640 = vadd.f32 %v296, %v639
      %v641 = vpop.f32.mrb[0].mxu0
      %642 = vmatprep.mubr.bf16.mxu0 %v409
      %643 = vmatmul.mubr.bf16.gmra.mrb[0].mxu0 %v408
      %v644 = vpop.f32.mrb[0].mxu0
      %v645 = vadd.f32 %v296, %v644
      %v646 = vpop.f32.mrb[0].mxu0
      %v647 = vpop.f32.mrb[0].mxu0
      %v648 = vadd.f32 %v296, %v647
      %v649 = vpop.f32.mrb[0].mxu0
      %650 = vmatprep.mubr.bf16.mxu0 %v411
      %651 = vmatmul.mubr.bf16.gmra.mrb[0].mxu0 %v410
      %v652 = vpop.f32.mrb[0].mxu0
      %v653 = vadd.f32 %v296, %v652
      %v654 = vpop.f32.mrb[0].mxu0
      %v655 = vpop.f32.mrb[0].mxu0
      %v656 = vadd.f32 %v296, %v655
      %v657 = vpop.f32.mrb[0].mxu0
      %658 = vmatprep.mubr.bf16.mxu0 %v413
      %659 = vmatmul.mubr.bf16.gmra.mrb[0].mxu0 %v412
      %v660 = vpop.f32.mrb[0].mxu0
      %v661 = vadd.f32 %v296, %v660
      %v662 = vpop.f32.mrb[0].mxu0
      %v663 = vpop.f32.mrb[0].mxu0
      %v664 = vadd.f32 %v296, %v663
      %v665 = vpop.f32.mrb[0].mxu0
      %666 = vmatprep.mubr.bf16.mxu0 %v415
      %667 = vmatmul.mubr.bf16.gmra.mrb[0].mxu0 %v414
      %v668 = vpop.f32.mrb[0].mxu0
      %v669 = vadd.f32 %v296, %v668
      %v670 = vpop.f32.mrb[0].mxu0
      %v671 = vpop.f32.mrb[0].mxu0
      %v672 = vadd.f32 %v296, %v671
      %v673 = vpop.f32.mrb[0].mxu0
      %674 = vmatprep.mubr.bf16.mxu0 %v417
      %675 = vmatmul.mubr.bf16.gmra.mrb[0].mxu0 %v416
      %v676 = vpop.f32.mrb[0].mxu0
      %v677 = vadd.f32 %v296, %v676
      %v678 = vpop.f32.mrb[0].mxu0
      %v679 = vpop.f32.mrb[0].mxu0
      %v680 = vadd.f32 %v296, %v679
      %v681 = vpop.f32.mrb[0].mxu0
      %682 = vmatprep.mubr.bf16.mxu0 %v419
      %683 = vmatmul.mubr.bf16.gmra.mrb[0].mxu0 %v418
      %v684 = vpop.f32.mrb[0].mxu0
      %v685 = vadd.f32 %v296, %v684
      %v686 = vpop.f32.mrb[0].mxu0
      %v687 = vpop.f32.mrb[0].mxu0
      %v688 = vadd.f32 %v296, %v687
      %v689 = vpop.f32.mrb[0].mxu0
      %690 = vmatprep.mubr.bf16.mxu0 %v421
      %691 = vmatmul.mubr.bf16.gmra.mrb[0].mxu0 %v420
      %v692 = vpop.f32.mrb[0].mxu0
      %v693 = vadd.f32 %v296, %v692
      %v694 = vpop.f32.mrb[0].mxu0
      %v695 = vpop.f32.mrb[0].mxu0
      %v696 = vadd.f32 %v296, %v695
      %v697 = vpop.f32.mrb[0].mxu0
      %698 = vmatprep.mubr.bf16.mxu0 %v423
      %699 = vmatmul.mubr.bf16.gmra.mrb[0].mxu0 %v422
      %v700 = vpop.f32.mrb[0].mxu0
      %v701 = vadd.f32 %v296, %v700
      %v702 = vpop.f32.mrb[0].mxu0
      %v703 = vpop.f32.mrb[0].mxu0
      %v704 = vadd.f32 %v296, %v703
      %v705 = vpop.f32.mrb[0].mxu0
      %706 = vmatprep.mubr.bf16.mxu0 %v425
      %707 = vmatmul.mubr.bf16.gmra.mrb[0].mxu0 %v424
      %v708 = vpop.f32.mrb[0].mxu0
      %v709 = vadd.f32 %v296, %v708
      %v710 = vpop.f32.mrb[0].mxu0
      %v711 = vpop.f32.mrb[0].mxu0
      %v712 = vadd.f32 %v296, %v711
      %v713 = vpop.f32.mrb[0].mxu0
      %714 = vdwg.mxu0
      %v715 = vmax.f32 %v589, 0.0
      %v716 = vmax.f32 %v592, 0.0
      %v717 = vmax.f32 %v597, 0.0
      %v718 = vmax.f32 %v600, 0.0
      %v719 = vmax.f32 %v605, 0.0
      %v720 = vmax.f32 %v608, 0.0
      %v721 = vmax.f32 %v613, 0.0
      %v722 = vmax.f32 %v616, 0.0
      %v723 = vmax.f32 %v621, 0.0
      %v724 = vmax.f32 %v624, 0.0
      %v725 = vmax.f32 %v629, 0.0
      %v726 = vmax.f32 %v632, 0.0
      %v727 = vmax.f32 %v637, 0.0
      %v728 = vmax.f32 %v640, 0.0
      %v729 = vmax.f32 %v645, 0.0
      %v730 = vmax.f32 %v648, 0.0
      %v731 = vmax.f32 %v653, 0.0
      %v732 = vmax.f32 %v656, 0.0
      %v733 = vmax.f32 %v661, 0.0
      %v734 = vmax.f32 %v664, 0.0
      %v735 = vmax.f32 %v669, 0.0
      %v736 = vmax.f32 %v672, 0.0
      %v737 = vmax.f32 %v677, 0.0
      %v738 = vmax.f32 %v680, 0.0
      %v739 = vmax.f32 %v685, 0.0
      %v740 = vmax.f32 %v688, 0.0
      %v741 = vmax.f32 %v693, 0.0
      %v742 = vmax.f32 %v696, 0.0
      %v743 = vmax.f32 %v701, 0.0
      %v744 = vmax.f32 %v704, 0.0
      %v745 = vmax.f32 %v709, 0.0
      %v746 = vmax.f32 %v712, 0.0
      %v747 = vld [vmem:[%s218] sm:$0xff]
      %v748 = vld [vmem:[%s218 + $0x8] sm:$0xff]
      %v749 = vld [vmem:[%s218 + $0x10] sm:$0xff]
      %v750 = vld [vmem:[%s218 + $0x18] sm:$0xff]
      %v751 = vld [vmem:[%s218 + $0x20] sm:$0xff]
      %v752 = vld [vmem:[%s218 + $0x28] sm:$0xff]
      %v753 = vld [vmem:[%s218 + $0x30] sm:$0xff]
      %v754 = vld [vmem:[%s218 + $0x38] sm:$0xff]
      %v755 = vld [vmem:[%s218 + $0x40] sm:$0xff]
      %v756 = vld [vmem:[%s218 + $0x48] sm:$0xff]
      %v757 = vld [vmem:[%s218 + $0x50] sm:$0xff]
      %v758 = vld [vmem:[%s218 + $0x58] sm:$0xff]
      %v759 = vld [vmem:[%s218 + $0x60] sm:$0xff]
      %v760 = vld [vmem:[%s218 + $0x68] sm:$0xff]
      %v761 = vld [vmem:[%s218 + $0x70] sm:$0xff]
      %v762 = vld [vmem:[%s218 + $0x78] sm:$0xff]
      %v763 = vld [vmem:[%s218 + $0x80] sm:$0xff]
      %v764 = vld [vmem:[%s218 + $0x88] sm:$0xff]
      %v765 = vld [vmem:[%s218 + $0x90] sm:$0xff]
      %v766 = vld [vmem:[%s218 + $0x98] sm:$0xff]
      %v767 = vld [vmem:[%s218 + $0xa0] sm:$0xff]
      %v768 = vld [vmem:[%s218 + $0xa8] sm:$0xff]
      %v769 = vld [vmem:[%s218 + $0xb0] sm:$0xff]
      %v770 = vld [vmem:[%s218 + $0xb8] sm:$0xff]
      %v771 = vld [vmem:[%s218 + $0xc0] sm:$0xff]
      %v772 = vld [vmem:[%s218 + $0xc8] sm:$0xff]
      %v773 = vld [vmem:[%s218 + $0xd0] sm:$0xff]
      %v774 = vld [vmem:[%s218 + $0xd8] sm:$0xff]
      %v775 = vld [vmem:[%s218 + $0xe0] sm:$0xff]
      %v776 = vld [vmem:[%s218 + $0xe8] sm:$0xff]
      %v777 = vld [vmem:[%s218 + $0xf0] sm:$0xff]
      %v778 = vld [vmem:[%s218 + $0xf8] sm:$0xff]
      %v779 = vadd.f32 %v715, %v747
      %v780 = vadd.f32 %v716, %v748
      %v781 = vadd.f32 %v717, %v749
      %v782 = vadd.f32 %v718, %v750
      %v783 = vadd.f32 %v719, %v751
      %v784 = vadd.f32 %v720, %v752
      %v785 = vadd.f32 %v721, %v753
      %v786 = vadd.f32 %v722, %v754
      %v787 = vadd.f32 %v723, %v755
      %v788 = vadd.f32 %v724, %v756
      %v789 = vadd.f32 %v725, %v757
      %v790 = vadd.f32 %v726, %v758
      %v791 = vadd.f32 %v727, %v759
      %v792 = vadd.f32 %v728, %v760
      %v793 = vadd.f32 %v729, %v761
      %v794 = vadd.f32 %v730, %v762
      %v795 = vadd.f32 %v731, %v763
      %v796 = vadd.f32 %v732, %v764
      %v797 = vadd.f32 %v733, %v765
      %v798 = vadd.f32 %v734, %v766
      %v799 = vadd.f32 %v735, %v767
      %v800 = vadd.f32 %v736, %v768
      %v801 = vadd.f32 %v737, %v769
      %v802 = vadd.f32 %v738, %v770
      %v803 = vadd.f32 %v739, %v771
      %v804 = vadd.f32 %v740, %v772
      %v805 = vadd.f32 %v741, %v773
      %v806 = vadd.f32 %v742, %v774
      %v807 = vadd.f32 %v743, %v775
      %v808 = vadd.f32 %v744, %v776
      %v809 = vadd.f32 %v745, %v777
      %v810 = vadd.f32 %v746, %v778
      %811 = vst [vmem:[%s224] sm:$0xff] %v779
      %812 = vst [vmem:[%s224 + $0x8] sm:$0xff] %v780
      %813 = vst [vmem:[%s224 + $0x10] sm:$0xff] %v781
      %814 = vst [vmem:[%s224 + $0x18] sm:$0xff] %v782
      %815 = vst [vmem:[%s224 + $0x20] sm:$0xff] %v783
      %816 = vst [vmem:[%s224 + $0x28] sm:$0xff] %v784
      %817 = vst [vmem:[%s224 + $0x30] sm:$0xff] %v785
      %818 = vst [vmem:[%s224 + $0x38] sm:$0xff] %v786
      %819 = vst [vmem:[%s224 + $0x40] sm:$0xff] %v787
      %820 = vst [vmem:[%s224 + $0x48] sm:$0xff] %v788
      %821 = vst [vmem:[%s224 + $0x50] sm:$0xff] %v789
      %822 = vst [vmem:[%s224 + $0x58] sm:$0xff] %v790
      %823 = vst [vmem:[%s224 + $0x60] sm:$0xff] %v791
      %824 = vst [vmem:[%s224 + $0x68] sm:$0xff] %v792
      %825 = vst [vmem:[%s224 + $0x70] sm:$0xff] %v793
      %826 = vst [vmem:[%s224 + $0x78] sm:$0xff] %v794
      %827 = vst [vmem:[%s224 + $0x80] sm:$0xff] %v795
      %828 = vst [vmem:[%s224 + $0x88] sm:$0xff] %v796
      %829 = vst [vmem:[%s224 + $0x90] sm:$0xff] %v797
      %830 = vst [vmem:[%s224 + $0x98] sm:$0xff] %v798
      %831 = vst [vmem:[%s224 + $0xa0] sm:$0xff] %v799
      %832 = vst [vmem:[%s224 + $0xa8] sm:$0xff] %v800
      %833 = vst [vmem:[%s224 + $0xb0] sm:$0xff] %v801
      %834 = vst [vmem:[%s224 + $0xb8] sm:$0xff] %v802
      %835 = vst [vmem:[%s224 + $0xc0] sm:$0xff] %v803
      %836 = vst [vmem:[%s224 + $0xc8] sm:$0xff] %v804
      %837 = vst [vmem:[%s224 + $0xd0] sm:$0xff] %v805
      %838 = vst [vmem:[%s224 + $0xd8] sm:$0xff] %v806
      %839 = vst [vmem:[%s224 + $0xe0] sm:$0xff] %v807
      %840 = vst [vmem:[%s224 + $0xe8] sm:$0xff] %v808
      %841 = vst [vmem:[%s224 + $0xf0] sm:$0xff] %v809
      %842 = vst [vmem:[%s224 + $0xf8] sm:$0xff] %v810
      %s843 = smul.u32 32, %s15
      %p844 = scmp.lt.s32.totalorder %s843, 63
      %s845 = scalar_select %p844, %s843, 63
      %s846 = smul.addr %s845, 8
      %s847 = scalar_lea.vmem %s4, %s846
      // Predicated region
      $region37: #{forward.20} parent=35 // pred_check
        %p848 = pneg %p127
      $region38: #{forward.20} parent=35 // pred_check_branch
        %850 = sbr.rel (%p848) target = $region40
      $region39: #{forward.20} parent=35 // pred_region
        %s851 = smul.u32 32, %s15
      $region40: #{forward.20} parent=35 // pred_fallthru
        _
    $region36: #{forward.20} parent=5 // pred_fallthru
      _
    %p852 = scmp.le.s32.totalorder 2, %s10
    // Predicated region
    $region41: #{forward.20} parent=5 // pred_check
      %p853 = pneg %p852
    $region42: #{forward.20} parent=5 // pred_check_branch
      %855 = sbr.rel (%p853) target = $region44
    $region43: #{forward.20} parent=5 // pred_region
      %s856 = ssub.s32 %s10, 2
      // Predicated region
      $region45: #{forward.20} parent=43 // pred_check
        %p857 = pneg %p133
      $region46: #{forward.20} parent=43 // pred_check_branch
        %859 = sbr.rel (%p857) target = $region48
      $region47: #{forward.20} parent=43 // pred_region
        %s860 = smul.u32 32, %s16
        %p861 = scmp.lt.s32.totalorder %s860, 63
        %s862 = scalar_select %p861, %s860, 63
        %s863 = smul.addr %s862, 8
        %s864 = scalar_lea.vmem %s4, %s863
      $region48: #{forward.20} parent=43 // pred_fallthru
        _
    $region44: #{forward.20} parent=5 // pred_fallthru
      _
  $region6: #{forward.20} parent=0 // loop_footer
    %s14 = sadd.s32 1, %s10
  $region7: #{forward.20} parent=0 // loop_footer_branch
    %9 = sbr.rel target = $region3
  $region8: #{forward.20} parent=0 // loop_exit
    _

// kernel: forward.21
$region0: #{forward.21}
  #allocation0 [shape = 'u32[]', space=smem, size = 0x4, offset = 0x4, fixed_abs, tag = 'smem constant byte address 0x4 - core index']
  #allocation1 [shape = 'u32[144,128]{1,0:T(1,128)}', space=vmem, size = 0x12000, scoped, tag = 'internal scratch']
  %s0 = inlined_call_operand.vmem [shape: f32[4,128,128], index: 0, kind: input, shape index: {}]
  %s1 = inlined_call_operand.vmem [shape: f32[128,128], index: 1, kind: output, shape index: {}]
  %s2 = sld [smem:[#allocation0]]
  $region75: #{forward.21} parent=0
    _
  %s4 = ssub.s32 1, %s2
  %s5 = scalar_select 0, %s4, %s2
  $region1: #{forward.21} parent=0
    #allocation2 [shape = 'u8[262144]{0}', space=vmem, size = 0x40000, scoped, tag = 'input window, operand 0']
    loop: start=0, step=1, limit=4
    $region2: #{forward.21} parent=1 // loop_pre_header
      _
    $region3: #{forward.21} parent=1 // loop_header
      %s7 = sphi 0, %s11
      %p8 = scmp.ge.s32.totalorder %s7, 4
      %s17 = sphi 0, %s19
      %s20 = sphi 0, %s17
      %s21 = sphi 0, %s20
      %s37 = sphi 0, %s21
      %s43 = sphi 0, %s45
      %s46 = sphi 0, %s43
      %s47 = sphi 0, %s46
      %s63 = sphi 0, %s47
    $region4: #{forward.21} parent=1 // loop_header_branch
      %10 = sbr.rel (%p8) target = $region8
    $region5: #{forward.21} parent=1 // loop_body
      %s12 = ssub.s32 %s7, 1
      %s13 = ssub.s32 %s7, 2
      %s14 = sadd.s32 %s7, 1
      %s15 = ssub.s32 %s7, %s14
      %p16 = scmp.eq.s32.totalorder %s15, 0
      %s18 = sadd.s32 %s17, 1
      %s19 = scalar_select %p16, %s17, %s18
      %p22 = pneg %p16
      %p23 = scmp.eq.s32.totalorder %s7, 1
      %p24 = por %p22, %p23
      %p25 = scmp.ne.s32.totalorder %s17, %s20
      %p26 = scmp.eq.s32.totalorder %s7, 0
      %p27 = por %p25, %p26
      %p28 = scmp.ne.s32.totalorder %s17, %s20
      %p29 = scmp.eq.s32.totalorder %s12, 1
      %p30 = por %p28, %p29
      %p31 = scmp.ne.s32.totalorder %s20, %s21
      %p32 = scmp.eq.s32.totalorder %s12, 0
      %p33 = por %p31, %p32
      %p34 = scmp.ne.s32.totalorder %s20, %s21
      %p35 = scmp.eq.s32.totalorder %s13, 1
      %p36 = por %p34, %p35
      %p38 = scmp.ne.s32.totalorder %s21, %s37
      %p39 = scmp.eq.s32.totalorder %s13, 0
      %p40 = por %p38, %p39
      %s41 = ssub.s32 %s7, %s14
      %p42 = scmp.eq.s32.totalorder %s41, 0
      %s44 = sadd.s32 %s43, 1
      %s45 = scalar_select %p42, %s43, %s44
      %p48 = pneg %p42
      %p49 = scmp.eq.s32.totalorder %s7, 1
      %p50 = por %p48, %p49
      %p51 = scmp.ne.s32.totalorder %s43, %s46
      %p52 = scmp.eq.s32.totalorder %s7, 0
      %p53 = por %p51, %p52
      %p54 = scmp.ne.s32.totalorder %s43, %s46
      %p55 = scmp.eq.s32.totalorder %s12, 1
      %p56 = por %p54, %p55
      %p57 = scmp.ne.s32.totalorder %s46, %s47
      %p58 = scmp.eq.s32.totalorder %s12, 0
      %p59 = por %p57, %p58
      %p60 = scmp.ne.s32.totalorder %s46, %s47
      %p61 = scmp.eq.s32.totalorder %s13, 1
      %p62 = por %p60, %p61
      %p64 = scmp.ne.s32.totalorder %s47, %s63
      %p65 = scmp.eq.s32.totalorder %s13, 0
      %p66 = por %p64, %p65
      %p67 = scmp.le.s32.totalorder 1, %s7
      %p68 = scmp.lt.s32.totalorder %s7, 3
      %p69 = pnand %p67, %p68
      %p70 = pneg %p69
      // Predicated region
      $region9: #{forward.21} parent=5 // pred_check
        _
      $region10: #{forward.21} parent=5 // pred_check_branch
        %72 = sbr.rel (%p69) target = $region12
      $region11: #{forward.21} parent=5 // pred_region
        %s73 = ssub.s32 %s7, 1
      $region12: #{forward.21} parent=5 // pred_fallthru
        _
      %p74 = scmp.lt.s32.totalorder %s7, 2
      // Predicated region
      $region13: #{forward.21} parent=5 // pred_check
        %p75 = pneg %p74
      $region14: #{forward.21} parent=5 // pred_check_branch
        %77 = sbr.rel (%p75) target = $region16
      $region15: #{forward.21} parent=5 // pred_region
        // Predicated region
        $region17: #{forward.21} parent=15 // pred_check
          %p78 = pneg %p27
        $region18: #{forward.21} parent=15 // pred_check_branch
          %80 = sbr.rel (%p78) target = $region20
        $region19: #{forward.21} parent=15 // pred_region
          %s81 = sand.u32 %s17, 1
          %s82 = sand.u32 %s17, 1
          %s83 = smul.addr %s82, 256
          %s84 = scalar_lea.vmem [#allocation2], %s83
          %s85 = smul.u32 8, %s7
          %s86 = smul.addr %s85, 8
          %s87 = scalar_lea.vmem %s0, %s86
          // Predicated region
          $region21: #{forward.21} parent=19 // pred_check
            _
          $region22: #{forward.21} parent=19 // pred_check_branch
            %89 = sbr.rel (0) target = $region24
          $region23: #{forward.21} parent=19 // pred_region
            // Predicated region
            $region25: #{forward.21} parent=23 // pred_check
              _
            $region26: #{forward.21} parent=23 // pred_check_branch
              %91 = sbr.rel (0) target = $region28
            $region27: #{forward.21} parent=23 // pred_region
              // Predicated region
              $region40: #{forward.21} parent=27 // pred_check
                _
              $region41: #{forward.21} parent=27 // pred_check_branch
                %168 = sbr.rel (0) target = $region43
              $region42: #{forward.21} parent=27 // pred_region
                loop: start=0, step=1, limit=1
                $region44: #{forward.21} parent=42 // loop_pre_header
                  _
                $region45: #{forward.21} parent=42 // loop_header
                  %s170 = sphi 0, %s174
                  %p171 = scmp.ge.s32.totalorder %s170, 1
                  %s175 = sphi %s87, %s87
                  %s176 = sphi %s84, %s84
                $region46: #{forward.21} parent=42 // loop_header_branch
                  %173 = sbr.rel (%p171) target = $region50
                $region47: #{forward.21} parent=42 // loop_body
                  %v177 = vld [vmem:[%s175] sm:$0xff]
                  %178 = vst [vmem:[%s176] sm:$0xff] %v177
                  %v179 = vld [vmem:[%s175 + $0x8] sm:$0xff]
                  %180 = vst [vmem:[%s176 + $0x8] sm:$0xff] %v179
                  %v181 = vld [vmem:[%s175 + $0x10] sm:$0xff]
                  %182 = vst [vmem:[%s176 + $0x10] sm:$0xff] %v181
                  %v183 = vld [vmem:[%s175 + $0x18] sm:$0xff]
                  %184 = vst [vmem:[%s176 + $0x18] sm:$0xff] %v183
                  %v185 = vld [vmem:[%s175 + $0x20] sm:$0xff]
                  %186 = vst [vmem:[%s176 + $0x20] sm:$0xff] %v185
                  %v187 = vld [vmem:[%s175 + $0x28] sm:$0xff]
                  %188 = vst [vmem:[%s176 + $0x28] sm:$0xff] %v187
                  %v189 = vld [vmem:[%s175 + $0x30] sm:$0xff]
                  %190 = vst [vmem:[%s176 + $0x30] sm:$0xff] %v189
                  %v191 = vld [vmem:[%s175 + $0x38] sm:$0xff]
                  %192 = vst [vmem:[%s176 + $0x38] sm:$0xff] %v191
                  %v193 = vld [vmem:[%s175 + $0x80] sm:$0xff]
                  %194 = vst [vmem:[%s176 + $0x40] sm:$0xff] %v193
                  %v195 = vld [vmem:[%s175 + $0x88] sm:$0xff]
                  %196 = vst [vmem:[%s176 + $0x48] sm:$0xff] %v195
                  %v197 = vld [vmem:[%s175 + $0x90] sm:$0xff]
                  %198 = vst [vmem:[%s176 + $0x50] sm:$0xff] %v197
                  %v199 = vld [vmem:[%s175 + $0x98] sm:$0xff]
                  %200 = vst [vmem:[%s176 + $0x58] sm:$0xff] %v199
                  %v201 = vld [vmem:[%s175 + $0xa0] sm:$0xff]
                  %202 = vst [vmem:[%s176 + $0x60] sm:$0xff] %v201
                  %v203 = vld [vmem:[%s175 + $0xa8] sm:$0xff]
                  %204 = vst [vmem:[%s176 + $0x68] sm:$0xff] %v203
                  %v205 = vld [vmem:[%s175 + $0xb0] sm:$0xff]
                  %206 = vst [vmem:[%s176 + $0x70] sm:$0xff] %v205
                  %v207 = vld [vmem:[%s175 + $0xb8] sm:$0xff]
                  %208 = vst [vmem:[%s176 + $0x78] sm:$0xff] %v207
                  %v209 = vld [vmem:[%s175 + $0x100] sm:$0xff]
                  %210 = vst [vmem:[%s176 + $0x80] sm:$0xff] %v209
                  %v211 = vld [vmem:[%s175 + $0x108] sm:$0xff]
                  %212 = vst [vmem:[%s176 + $0x88] sm:$0xff] %v211
                  %v213 = vld [vmem:[%s175 + $0x110] sm:$0xff]
                  %214 = vst [vmem:[%s176 + $0x90] sm:$0xff] %v213
                  %v215 = vld [vmem:[%s175 + $0x118] sm:$0xff]
                  %216 = vst [vmem:[%s176 + $0x98] sm:$0xff] %v215
                  %v217 = vld [vmem:[%s175 + $0x120] sm:$0xff]
                  %218 = vst [vmem:[%s176 + $0xa0] sm:$0xff] %v217
                  %v219 = vld [vmem:[%s175 + $0x128] sm:$0xff]
                  %220 = vst [vmem:[%s176 + $0xa8] sm:$0xff] %v219
                  %v221 = vld [vmem:[%s175 + $0x130] sm:$0xff]
                  %222 = vst [vmem:[%s176 + $0xb0] sm:$0xff] %v221
                  %v223 = vld [vmem:[%s175 + $0x138] sm:$0xff]
                  %224 = vst [vmem:[%s176 + $0xb8] sm:$0xff] %v223
                  %v225 = vld [vmem:[%s175 + $0x180] sm:$0xff]
                  %226 = vst [vmem:[%s176 + $0xc0] sm:$0xff] %v225
                  %v227 = vld [vmem:[%s175 + $0x188] sm:$0xff]
                  %228 = vst [vmem:[%s176 + $0xc8] sm:$0xff] %v227
                  %v229 = vld [vmem:[%s175 + $0x190] sm:$0xff]
                  %230 = vst [vmem:[%s176 + $0xd0] sm:$0xff] %v229
                  %v231 = vld [vmem:[%s175 + $0x198] sm:$0xff]
                  %232 = vst [vmem:[%s176 + $0xd8] sm:$0xff] %v231
                  %v233 = vld [vmem:[%s175 + $0x1a0] sm:$0xff]
                  %234 = vst [vmem:[%s176 + $0xe0] sm:$0xff] %v233
                  %v235 = vld [vmem:[%s175 + $0x1a8] sm:$0xff]
                  %236 = vst [vmem:[%s176 + $0xe8] sm:$0xff] %v235
                  %v237 = vld [vmem:[%s175 + $0x1b0] sm:$0xff]
                  %238 = vst [vmem:[%s176 + $0xf0] sm:$0xff] %v237
                  %v239 = vld [vmem:[%s175 + $0x1b8] sm:$0xff]
                  %240 = vst [vmem:[%s176 + $0xf8] sm:$0xff] %v239
                $region48: #{forward.21} parent=42 // loop_footer
                  %s174 = sadd.s32 1, %s170
                $region49: #{forward.21} parent=42 // loop_footer_branch
                  %169 = sbr.rel target = $region45
                $region50: #{forward.21} parent=42 // loop_exit
                  _
              $region43: #{forward.21} parent=27 // pred_fallthru
                _
              // Predicated region
              $region51: #{forward.21} parent=27 // pred_check
                _
              $region52: #{forward.21} parent=27 // pred_check_branch
                %242 = sbr.rel target = $region54
              $region53: #{forward.21} parent=27 // pred_region
                _
              $region54: #{forward.21} parent=27 // pred_fallthru
                _
            $region28: #{forward.21} parent=23 // pred_fallthru
              _
            // Predicated region
            $region29: #{forward.21} parent=23 // pred_check
              _
            $region30: #{forward.21} parent=23 // pred_check_branch
              %93 = sbr.rel target = $region32
            $region31: #{forward.21} parent=23 // pred_region
              loop: start=0, step=1, limit=1
              $region33: #{forward.21} parent=31 // loop_pre_header
                _
              $region34: #{forward.21} parent=31 // loop_header
                %s96 = sphi 0, %s100
                %p97 = scmp.ge.s32.totalorder %s96, 1
                %s101 = sphi %s87, %s87
                %s102 = sphi %s84, %s84
              $region35: #{forward.21} parent=31 // loop_header_branch
                %99 = sbr.rel (%p97) target = $region39
              $region36: #{forward.21} parent=31 // loop_body
                %v103 = vld [vmem:[%s101] sm:$0xff]
                %104 = vst [vmem:[%s102] sm:$0xff] %v103
                %v105 = vld [vmem:[%s101 + $0x8] sm:$0xff]
                %106 = vst [vmem:[%s102 + $0x8] sm:$0xff] %v105
                %v107 = vld [vmem:[%s101 + $0x10] sm:$0xff]
                %108 = vst [vmem:[%s102 + $0x10] sm:$0xff] %v107
                %v109 = vld [vmem:[%s101 + $0x18] sm:$0xff]
                %110 = vst [vmem:[%s102 + $0x18] sm:$0xff] %v109
                %v111 = vld [vmem:[%s101 + $0x20] sm:$0xff]
                %112 = vst [vmem:[%s102 + $0x20] sm:$0xff] %v111
                %v113 = vld [vmem:[%s101 + $0x28] sm:$0xff]
                %114 = vst [vmem:[%s102 + $0x28] sm:$0xff] %v113
                %v115 = vld [vmem:[%s101 + $0x30] sm:$0xff]
                %116 = vst [vmem:[%s102 + $0x30] sm:$0xff] %v115
                %v117 = vld [vmem:[%s101 + $0x38] sm:$0xff]
                %118 = vst [vmem:[%s102 + $0x38] sm:$0xff] %v117
                %v119 = vld [vmem:[%s101 + $0x80] sm:$0xff]
                %120 = vst [vmem:[%s102 + $0x40] sm:$0xff] %v119
                %v121 = vld [vmem:[%s101 + $0x88] sm:$0xff]
                %122 = vst [vmem:[%s102 + $0x48] sm:$0xff] %v121
                %v123 = vld [vmem:[%s101 + $0x90] sm:$0xff]
                %124 = vst [vmem:[%s102 + $0x50] sm:$0xff] %v123
                %v125 = vld [vmem:[%s101 + $0x98] sm:$0xff]
                %126 = vst [vmem:[%s102 + $0x58] sm:$0xff] %v125
                %v127 = vld [vmem:[%s101 + $0xa0] sm:$0xff]
                %128 = vst [vmem:[%s102 + $0x60] sm:$0xff] %v127
                %v129 = vld [vmem:[%s101 + $0xa8] sm:$0xff]
                %130 = vst [vmem:[%s102 + $0x68] sm:$0xff] %v129
                %v131 = vld [vmem:[%s101 + $0xb0] sm:$0xff]
                %132 = vst [vmem:[%s102 + $0x70] sm:$0xff] %v131
                %v133 = vld [vmem:[%s101 + $0xb8] sm:$0xff]
                %134 = vst [vmem:[%s102 + $0x78] sm:$0xff] %v133
                %v135 = vld [vmem:[%s101 + $0x100] sm:$0xff]
                %136 = vst [vmem:[%s102 + $0x80] sm:$0xff] %v135
                %v137 = vld [vmem:[%s101 + $0x108] sm:$0xff]
                %138 = vst [vmem:[%s102 + $0x88] sm:$0xff] %v137
                %v139 = vld [vmem:[%s101 + $0x110] sm:$0xff]
                %140 = vst [vmem:[%s102 + $0x90] sm:$0xff] %v139
                %v141 = vld [vmem:[%s101 + $0x118] sm:$0xff]
                %142 = vst [vmem:[%s102 + $0x98] sm:$0xff] %v141
                %v143 = vld [vmem:[%s101 + $0x120] sm:$0xff]
                %144 = vst [vmem:[%s102 + $0xa0] sm:$0xff] %v143
                %v145 = vld [vmem:[%s101 + $0x128] sm:$0xff]
                %146 = vst [vmem:[%s102 + $0xa8] sm:$0xff] %v145
                %v147 = vld [vmem:[%s101 + $0x130] sm:$0xff]
                %148 = vst [vmem:[%s102 + $0xb0] sm:$0xff] %v147
                %v149 = vld [vmem:[%s101 + $0x138] sm:$0xff]
                %150 = vst [vmem:[%s102 + $0xb8] sm:$0xff] %v149
                %v151 = vld [vmem:[%s101 + $0x180] sm:$0xff]
                %152 = vst [vmem:[%s102 + $0xc0] sm:$0xff] %v151
                %v153 = vld [vmem:[%s101 + $0x188] sm:$0xff]
                %154 = vst [vmem:[%s102 + $0xc8] sm:$0xff] %v153
                %v155 = vld [vmem:[%s101 + $0x190] sm:$0xff]
                %156 = vst [vmem:[%s102 + $0xd0] sm:$0xff] %v155
                %v157 = vld [vmem:[%s101 + $0x198] sm:$0xff]
                %158 = vst [vmem:[%s102 + $0xd8] sm:$0xff] %v157
                %v159 = vld [vmem:[%s101 + $0x1a0] sm:$0xff]
                %160 = vst [vmem:[%s102 + $0xe0] sm:$0xff] %v159
                %v161 = vld [vmem:[%s101 + $0x1a8] sm:$0xff]
                %162 = vst [vmem:[%s102 + $0xe8] sm:$0xff] %v161
                %v163 = vld [vmem:[%s101 + $0x1b0] sm:$0xff]
                %164 = vst [vmem:[%s102 + $0xf0] sm:$0xff] %v163
                %v165 = vld [vmem:[%s101 + $0x1b8] sm:$0xff]
                %166 = vst [vmem:[%s102 + $0xf8] sm:$0xff] %v165
              $region37: #{forward.21} parent=31 // loop_footer
                %s100 = sadd.s32 1, %s96
              $region38: #{forward.21} parent=31 // loop_footer_branch
                %95 = sbr.rel target = $region34
              $region39: #{forward.21} parent=31 // loop_exit
                _
            $region32: #{forward.21} parent=23 // pred_fallthru
              _
          $region24: #{forward.21} parent=19 // pred_fallthru
            _
          %243 = vnop
        $region20: #{forward.21} parent=15 // pred_fallthru
          _
      $region16: #{forward.21} parent=5 // pred_fallthru
        _
      %p244 = scmp.le.s32.totalorder 1, %s7
      %p245 = scmp.lt.s32.totalorder %s7, 3
      %p246 = pnand %p244, %p245
      %p247 = pneg %p246
      // Predicated region
      $region55: #{forward.21} parent=5 // pred_check
        _
      $region56: #{forward.21} parent=5 // pred_check_branch
        %249 = sbr.rel (%p246) target = $region58
      $region57: #{forward.21} parent=5 // pred_region
        %s250 = ssub.s32 %s7, 1
        %s251 = sand.u32 %s20, 1
        %s252 = sand.u32 %s20, 1
        %s253 = smul.addr %s252, 256
        %s254 = scalar_lea.vmem [#allocation2], %s253
        // Predicated region
        $region59: #{forward.21} parent=57 // pred_check
          %p255 = pneg %p33
        $region60: #{forward.21} parent=57 // pred_check_branch
          %257 = sbr.rel (%p255) target = $region62
        $region61: #{forward.21} parent=57 // pred_region
          _
        $region62: #{forward.21} parent=57 // pred_fallthru
          _
        %s258 = sand.u32 %s20, 1
        %s259 = sand.u32 %s20, 1
        %s260 = smul.addr %s259, 256
        %s261 = scalar_lea.vmem [#allocation2], %s260
        %p262 = pneg %p33
        %p263 = pneg %p30
        %p264 = pneg %p59
        %p265 = pneg %p56
        %s266 = smul.u32 8, %s12
        %p267 = scmp.lt.s32.totalorder %s266, 15
        %s268 = scalar_select %p267, %s266, 15
        %s269 = smul.addr %s268, 8
        %s270 = scalar_lea.vmem %s1, %s269
        %s271 = smul.u32 8, %s12
        %s272 = smul.u32 8, %s12
        %p273 = scmp.lt.s32.totalorder %s272, 15
        %s274 = scalar_select %p273, %s272, 15
        %s275 = smul.addr %s274, 8
        %s276 = scalar_lea.vmem %s1, %s275
        %s277 = smul.u32 8, %s12
        %v278 = vld [vmem:[%s254] sm:$0xff]
        %v279 = vld [vmem:[%s254 + $0x8] sm:$0xff]
        %v280 = vld [vmem:[%s254 + $0x10] sm:$0xff]
        %v281 = vld [vmem:[%s254 + $0x18] sm:$0xff]
        %v282 = vld [vmem:[%s254 + $0x20] sm:$0xff]
        %v283 = vld [vmem:[%s254 + $0x28] sm:$0xff]
        %v284 = vld [vmem:[%s254 + $0x30] sm:$0xff]
        %v285 = vld [vmem:[%s254 + $0x38] sm:$0xff]
        %s286 = scalar_lea.vmem %s254, 64 [#allocation2]
        %v287 = vld [vmem:[%s286] sm:$0xff]
        %v288 = vld [vmem:[%s286 + $0x8] sm:$0xff]
        %v289 = vld [vmem:[%s286 + $0x10] sm:$0xff]
        %v290 = vld [vmem:[%s286 + $0x18] sm:$0xff]
        %v291 = vld [vmem:[%s286 + $0x20] sm:$0xff]
        %v292 = vld [vmem:[%s286 + $0x28] sm:$0xff]
        %v293 = vld [vmem:[%s286 + $0x30] sm:$0xff]
        %v294 = vld [vmem:[%s286 + $0x38] sm:$0xff]
        %v295 = vmax.f32 %v278, %v287
        %v296 = vmax.f32 %v279, %v288
        %v297 = vmax.f32 %v280, %v289
        %v298 = vmax.f32 %v281, %v290
        %v299 = vmax.f32 %v282, %v291
        %v300 = vmax.f32 %v283, %v292
        %v301 = vmax.f32 %v284, %v293
        %v302 = vmax.f32 %v285, %v294
        %s303 = scalar_lea.vmem %s254, 128 [#allocation2]
        %v304 = vld [vmem:[%s303] sm:$0xff]
        %v305 = vld [vmem:[%s303 + $0x8] sm:$0xff]
        %v306 = vld [vmem:[%s303 + $0x10] sm:$0xff]
        %v307 = vld [vmem:[%s303 + $0x18] sm:$0xff]
        %v308 = vld [vmem:[%s303 + $0x20] sm:$0xff]
        %v309 = vld [vmem:[%s303 + $0x28] sm:$0xff]
        %v310 = vld [vmem:[%s303 + $0x30] sm:$0xff]
        %v311 = vld [vmem:[%s303 + $0x38] sm:$0xff]
        %v312 = vmax.f32 %v295, %v304
        %v313 = vmax.f32 %v296, %v305
        %v314 = vmax.f32 %v297, %v306
        %v315 = vmax.f32 %v298, %v307
        %v316 = vmax.f32 %v299, %v308
        %v317 = vmax.f32 %v300, %v309
        %v318 = vmax.f32 %v301, %v310
        %v319 = vmax.f32 %v302, %v311
        %s320 = scalar_lea.vmem %s254, 192 [#allocation2]
        %v321 = vld [vmem:[%s320] sm:$0xff]
        %v322 = vld [vmem:[%s320 + $0x8] sm:$0xff]
        %v323 = vld [vmem:[%s320 + $0x10] sm:$0xff]
        %v324 = vld [vmem:[%s320 + $0x18] sm:$0xff]
        %v325 = vld [vmem:[%s320 + $0x20] sm:$0xff]
        %v326 = vld [vmem:[%s320 + $0x28] sm:$0xff]
        %v327 = vld [vmem:[%s320 + $0x30] sm:$0xff]
        %v328 = vld [vmem:[%s320 + $0x38] sm:$0xff]
        %v329 = vmax.f32 %v312, %v321
        %v330 = vmax.f32 %v313, %v322
        %v331 = vmax.f32 %v314, %v323
        %v332 = vmax.f32 %v315, %v324
        %v333 = vmax.f32 %v316, %v325
        %v334 = vmax.f32 %v317, %v326
        %v335 = vmax.f32 %v318, %v327
        %v336 = vmax.f32 %v319, %v328
        %337 = vst [vmem:[%s276] sm:$0xff] %v329
        %338 = vst [vmem:[%s276 + $0x8] sm:$0xff] %v330
        %339 = vst [vmem:[%s276 + $0x10] sm:$0xff] %v331
        %340 = vst [vmem:[%s276 + $0x18] sm:$0xff] %v332
        %341 = vst [vmem:[%s276 + $0x20] sm:$0xff] %v333
        %342 = vst [vmem:[%s276 + $0x28] sm:$0xff] %v334
        %343 = vst [vmem:[%s276 + $0x30] sm:$0xff] %v335
        %344 = vst [vmem:[%s276 + $0x38] sm:$0xff] %v336
        %s345 = smul.u32 8, %s12
        %p346 = scmp.lt.s32.totalorder %s345, 15
        %s347 = scalar_select %p346, %s345, 15
        %s348 = smul.addr %s347, 8
        %s349 = scalar_lea.vmem %s1, %s348
        // Predicated region
        $region63: #{forward.21} parent=57 // pred_check
          %p350 = pneg %p56
        $region64: #{forward.21} parent=57 // pred_check_branch
          %352 = sbr.rel (%p350) target = $region66
        $region65: #{forward.21} parent=57 // pred_region
          %s353 = smul.u32 8, %s12
        $region66: #{forward.21} parent=57 // pred_fallthru
          _
      $region58: #{forward.21} parent=5 // pred_fallthru
        _
      %p354 = scmp.le.s32.totalorder 2, %s7
      // Predicated region
      $region67: #{forward.21} parent=5 // pred_check
        %p355 = pneg %p354
      $region68: #{forward.21} parent=5 // pred_check_branch
        %357 = sbr.rel (%p355) target = $region70
      $region69: #{forward.21} parent=5 // pred_region
        %s358 = ssub.s32 %s7, 2
        // Predicated region
        $region71: #{forward.21} parent=69 // pred_check
          %p359 = pneg %p62
        $region72: #{forward.21} parent=69 // pred_check_branch
          %361 = sbr.rel (%p359) target = $region74
        $region73: #{forward.21} parent=69 // pred_region
          %s362 = smul.u32 8, %s13
          %p363 = scmp.lt.s32.totalorder %s362, 15
          %s364 = scalar_select %p363, %s362, 15
          %s365 = smul.addr %s364, 8
          %s366 = scalar_lea.vmem %s1, %s365
        $region74: #{forward.21} parent=69 // pred_fallthru
          _
      $region70: #{forward.21} parent=5 // pred_fallthru
        _
    $region6: #{forward.21} parent=1 // loop_footer
      %s11 = sadd.s32 1, %s7
    $region7: #{forward.21} parent=1 // loop_footer_branch
      %6 = sbr.rel target = $region3
    $region8: #{forward.21} parent=1 // loop_exit
      _

// kernel: forward.23
$region0: #{forward.23}
  #allocation0 [shape = 'u32[]', space=smem, size = 0x4, offset = 0x4, fixed_abs, tag = 'smem constant byte address 0x4 - core index']
  #allocation1 [shape = 'u32[144,128]{1,0:T(1,128)}', space=vmem, size = 0x12000, scoped, tag = 'internal scratch']
  %s0 = inlined_call_operand.vmem [shape: bf16[128,256], index: 0, kind: input, shape index: {}]
  %s1 = inlined_call_operand.vmem [shape: bf16[256,128], index: 1, kind: input, shape index: {}]
  %s2 = inlined_call_operand.vmem [shape: f32[1,128], index: 2, kind: input, shape index: {}]
  %s3 = inlined_call_operand.vmem [shape: f32[128,128], index: 3, kind: output, shape index: {}]
  %s4 = sld [smem:[#allocation0]]
  $region45: #{forward.23} parent=0
    _
  %s6 = ssub.s32 1, %s4
  %s7 = scalar_select 0, %s6, %s4
  loop: start=0, step=1, limit=4
  $region2: #{forward.23} parent=0 // loop_pre_header
    _
  $region3: #{forward.23} parent=0 // loop_header
    %s9 = sphi 0, %s13
    %p10 = scmp.ge.s32.totalorder %s9, 4
    %s19 = sphi 0, %s21
    %s22 = sphi 0, %s19
    %s23 = sphi 0, %s22
    %s39 = sphi 0, %s23
    %s43 = sphi 0, %s43
    %s45 = sphi 0, %s43
    %s46 = sphi 0, %s45
    %s60 = sphi 0, %s46
    %s64 = sphi 0, %s64
    %s66 = sphi 0, %s64
    %s67 = sphi 0, %s66
    %s81 = sphi 0, %s67
    %s87 = sphi 0, %s89
    %s90 = sphi 0, %s87
    %s91 = sphi 0, %s90
    %s107 = sphi 0, %s91
  $region4: #{forward.23} parent=0 // loop_header_branch
    %12 = sbr.rel (%p10) target = $region8
  $region5: #{forward.23} parent=0 // loop_body
    %s14 = ssub.s32 %s9, 1
    %s15 = ssub.s32 %s9, 2
    %s16 = sadd.s32 %s9, 1
    %s17 = ssub.s32 %s9, %s16
    %p18 = scmp.eq.s32.totalorder %s17, 0
    %s20 = sadd.s32 %s19, 1
    %s21 = scalar_select %p18, %s19, %s20
    %p24 = pneg %p18
    %p25 = scmp.eq.s32.totalorder %s9, 1
    %p26 = por %p24, %p25
    %p27 = scmp.ne.s32.totalorder %s19, %s22
    %p28 = scmp.eq.s32.totalorder %s9, 0
    %p29 = por %p27, %p28
    %p30 = scmp.ne.s32.totalorder %s19, %s22
    %p31 = scmp.eq.s32.totalorder %s14, 1
    %p32 = por %p30, %p31
    %p33 = scmp.ne.s32.totalorder %s22, %s23
    %p34 = scmp.eq.s32.totalorder %s14, 0
    %p35 = por %p33, %p34
    %p36 = scmp.ne.s32.totalorder %s22, %s23
    %p37 = scmp.eq.s32.totalorder %s15, 1
    %p38 = por %p36, %p37
    %p40 = scmp.ne.s32.totalorder %s23, %s39
    %p41 = scmp.eq.s32.totalorder %s15, 0
    %p42 = por %p40, %p41
    %s44 = sadd.s32 %s43, 1
    %p47 = scmp.eq.s32.totalorder %s9, 1
    %p48 = scmp.ne.s32.totalorder %s43, %s45
    %p49 = scmp.eq.s32.totalorder %s9, 0
    %p50 = por %p48, %p49
    %p51 = scmp.ne.s32.totalorder %s43, %s45
    %p52 = scmp.eq.s32.totalorder %s14, 1
    %p53 = por %p51, %p52
    %p54 = scmp.ne.s32.totalorder %s45, %s46
    %p55 = scmp.eq.s32.totalorder %s14, 0
    %p56 = por %p54, %p55
    %p57 = scmp.ne.s32.totalorder %s45, %s46
    %p58 = scmp.eq.s32.totalorder %s15, 1
    %p59 = por %p57, %p58
    %p61 = scmp.ne.s32.totalorder %s46, %s60
    %p62 = scmp.eq.s32.totalorder %s15, 0
    %p63 = por %p61, %p62
    %s65 = sadd.s32 %s64, 1
    %p68 = scmp.eq.s32.totalorder %s9, 1
    %p69 = scmp.ne.s32.totalorder %s64, %s66
    %p70 = scmp.eq.s32.totalorder %s9, 0
    %p71 = por %p69, %p70
    %p72 = scmp.ne.s32.totalorder %s64, %s66
    %p73 = scmp.eq.s32.totalorder %s14, 1
    %p74 = por %p72, %p73
    %p75 = scmp.ne.s32.totalorder %s66, %s67
    %p76 = scmp.eq.s32.totalorder %s14, 0
    %p77 = por %p75, %p76
    %p78 = scmp.ne.s32.totalorder %s66, %s67
    %p79 = scmp.eq.s32.totalorder %s15, 1
    %p80 = por %p78, %p79
    %p82 = scmp.ne.s32.totalorder %s67, %s81
    %p83 = scmp.eq.s32.totalorder %s15, 0
    %p84 = por %p82, %p83
    %s85 = ssub.s32 %s9, %s16
    %p86 = scmp.eq.s32.totalorder %s85, 0
    %s88 = sadd.s32 %s87, 1
    %s89 = scalar_select %p86, %s87, %s88
    %p92 = pneg %p86
    %p93 = scmp.eq.s32.totalorder %s9, 1
    %p94 = por %p92, %p93
    %p95 = scmp.ne.s32.totalorder %s87, %s90
    %p96 = scmp.eq.s32.totalorder %s9, 0
    %p97 = por %p95, %p96
    %p98 = scmp.ne.s32.totalorder %s87, %s90
    %p99 = scmp.eq.s32.totalorder %s14, 1
    %p100 = por %p98, %p99
    %p101 = scmp.ne.s32.totalorder %s90, %s91
    %p102 = scmp.eq.s32.totalorder %s14, 0
    %p103 = por %p101, %p102
    %p104 = scmp.ne.s32.totalorder %s90, %s91
    %p105 = scmp.eq.s32.totalorder %s15, 1
    %p106 = por %p104, %p105
    %p108 = scmp.ne.s32.totalorder %s91, %s107
    %p109 = scmp.eq.s32.totalorder %s15, 0
    %p110 = por %p108, %p109
    %p111 = scmp.le.s32.totalorder 1, %s9
    %p112 = scmp.lt.s32.totalorder %s9, 3
    %p113 = pnand %p111, %p112
    %p114 = pneg %p113
    // Predicated region
    $region9: #{forward.23} parent=5 // pred_check
      _
    $region10: #{forward.23} parent=5 // pred_check_branch
      %116 = sbr.rel (%p113) target = $region12
    $region11: #{forward.23} parent=5 // pred_region
      %s117 = ssub.s32 %s9, 1
      // Predicated region
      $region13: #{forward.23} parent=11 // pred_check
        %p118 = pneg %p56
      $region14: #{forward.23} parent=11 // pred_check_branch
        %120 = sbr.rel (%p118) target = $region16
      $region15: #{forward.23} parent=11 // pred_region
        _
      $region16: #{forward.23} parent=11 // pred_fallthru
        _
      // Predicated region
      $region17: #{forward.23} parent=11 // pred_check
        %p121 = pneg %p77
      $region18: #{forward.23} parent=11 // pred_check_branch
        %123 = sbr.rel (%p121) target = $region20
      $region19: #{forward.23} parent=11 // pred_region
        _
      $region20: #{forward.23} parent=11 // pred_fallthru
        _
    $region12: #{forward.23} parent=5 // pred_fallthru
      _
    %p124 = scmp.lt.s32.totalorder %s9, 2
    // Predicated region
    $region21: #{forward.23} parent=5 // pred_check
      %p125 = pneg %p124
    $region22: #{forward.23} parent=5 // pred_check_branch
      %127 = sbr.rel (%p125) target = $region24
    $region23: #{forward.23} parent=5 // pred_region
      // Predicated region
      $region25: #{forward.23} parent=23 // pred_check
        %p128 = pneg %p29
      $region26: #{forward.23} parent=23 // pred_check_branch
        %130 = sbr.rel (%p128) target = $region28
      $region27: #{forward.23} parent=23 // pred_region
        %s131 = smul.u32 8, %s9
        %p132 = scmp.lt.s32.totalorder %s131, 15
        %s133 = scalar_select %p132, %s131, 15
        %s134 = smul.addr %s133, 2
        %s135 = smul.addr %s134, 4
        %s136 = scalar_lea.vmem %s0, %s135
        %s137 = smul.u32 8, %s9
      $region28: #{forward.23} parent=23 // pred_fallthru
        _
    $region24: #{forward.23} parent=5 // pred_fallthru
      _
    %p138 = scmp.le.s32.totalorder 1, %s9
    %p139 = scmp.lt.s32.totalorder %s9, 3
    %p140 = pnand %p138, %p139
    %p141 = pneg %p140
    // Predicated region
    $region29: #{forward.23} parent=5 // pred_check
      _
    $region30: #{forward.23} parent=5 // pred_check_branch
      %143 = sbr.rel (%p140) target = $region32
    $region31: #{forward.23} parent=5 // pred_region
      %s144 = ssub.s32 %s9, 1
      %s145 = smul.u32 8, %s14
      %p146 = scmp.lt.s32.totalorder %s145, 15
      %s147 = scalar_select %p146, %s145, 15
      %s148 = smul.addr %s147, 2
      %s149 = smul.addr %s148, 4
      %s150 = scalar_lea.vmem %s0, %s149
      %p151 = pneg %p35
      %p152 = pneg %p32
      %p153 = pneg %p56
      %p154 = pneg %p53
      %p155 = pneg %p77
      %p156 = pneg %p74
      %p157 = pneg %p103
      %p158 = pneg %p100
      %s159 = smul.u32 8, %s14
      %p160 = scmp.lt.s32.totalorder %s159, 15
      %s161 = scalar_select %p160, %s159, 15
      %s162 = smul.addr %s161, 8
      %s163 = scalar_lea.vmem %s3, %s162
      %s164 = smul.u32 8, %s14
      %p165 = scmp.lt.s32.totalorder %s164, 15
      %s166 = scalar_select %p165, %s164, 15
      %s167 = smul.addr %s166, 2
      %s168 = smul.addr %s167, 4
      %s169 = scalar_lea.vmem %s0, %s168
      %s170 = smul.u32 8, %s14
      %s171 = smul.u32 8, %s14
      %p172 = scmp.lt.s32.totalorder %s171, 15
      %s173 = scalar_select %p172, %s171, 15
      %s174 = smul.addr %s173, 8
      %s175 = scalar_lea.vmem %s3, %s174
      %s176 = smul.u32 8, %s14
      %v178 = vld [vmem:[%s169] sm:$0xff]
      %v179 = vld [vmem:[%s169 + $0x8] sm:$0xff]
      %v180 = vld [vmem:[%s169 + $0x10] sm:$0xff]
      %v181 = vld [vmem:[%s169 + $0x18] sm:$0xff]
      %v182 = vld [vmem:[%s169 + $0x20] sm:$0xff]
      %v183 = vld [vmem:[%s169 + $0x28] sm:$0xff]
      %v184 = vld [vmem:[%s169 + $0x30] sm:$0xff]
      %v185 = vld [vmem:[%s169 + $0x38] sm:$0xff]
      %v186 = vld [vmem:[%s1] sm:$0xf]
      %v187 = vld [vmem:[%s1 + $0x4] sm:$0xf]
      %v188 = vld [vmem:[%s1 + $0x8] sm:$0xf]
      %v189 = vld [vmem:[%s1 + $0xc] sm:$0xf]
      %v190 = vld [vmem:[%s1 + $0x10] sm:$0xf]
      %v191 = vld [vmem:[%s1 + $0x14] sm:$0xf]
      %v192 = vld [vmem:[%s1 + $0x18] sm:$0xf]
      %v193 = vld [vmem:[%s1 + $0x1c] sm:$0xf]
      %v194 = vld [vmem:[%s1 + $0x20] sm:$0xf]
      %v195 = vld [vmem:[%s1 + $0x24] sm:$0xf]
      %v196 = vld [vmem:[%s1 + $0x28] sm:$0xf]
      %v197 = vld [vmem:[%s1 + $0x2c] sm:$0xf]
      %v198 = vld [vmem:[%s1 + $0x30] sm:$0xf]
      %v199 = vld [vmem:[%s1 + $0x34] sm:$0xf]
      %v200 = vld [vmem:[%s1 + $0x38] sm:$0xf]
      %v201 = vld [vmem:[%s1 + $0x3c] sm:$0xf]
      %v202 = vld [vmem:[%s1 + $0x40] sm:$0xf]
      %v203 = vld [vmem:[%s1 + $0x44] sm:$0xf]
      %v204 = vld [vmem:[%s1 + $0x48] sm:$0xf]
      %v205 = vld [vmem:[%s1 + $0x4c] sm:$0xf]
      %v206 = vld [vmem:[%s1 + $0x50] sm:$0xf]
      %v207 = vld [vmem:[%s1 + $0x54] sm:$0xf]
      %v208 = vld [vmem:[%s1 + $0x58] sm:$0xf]
      %v209 = vld [vmem:[%s1 + $0x5c] sm:$0xf]
      %v210 = vld [vmem:[%s1 + $0x60] sm:$0xf]
      %v211 = vld [vmem:[%s1 + $0x64] sm:$0xf]
      %v212 = vld [vmem:[%s1 + $0x68] sm:$0xf]
      %v213 = vld [vmem:[%s1 + $0x6c] sm:$0xf]
      %v214 = vld [vmem:[%s1 + $0x70] sm:$0xf]
      %v215 = vld [vmem:[%s1 + $0x74] sm:$0xf]
      %v216 = vld [vmem:[%s1 + $0x78] sm:$0xf]
      %v217 = vld [vmem:[%s1 + $0x7c] sm:$0xf]
      %v218 = vld [vmem:[%s2] sm:$0x1]
      %v220 = vlaneseq
      %v221 = vshrl.u32 %v220, 7
      %v222 = vsub.s32 0, %v221
      %v223 = vrot.slane %v218, %v222
      %v233 = vunpack.c.l.b16 %v178
      %v234 = vunpack.c.h.b16 %v178
      %v235 = vunpack.c.l.b16 %v179
      %v236 = vunpack.c.h.b16 %v179
      %v237 = vunpack.c.l.b16 %v180
      %v238 = vunpack.c.h.b16 %v180
      %v239 = vunpack.c.l.b16 %v181
      %v240 = vunpack.c.h.b16 %v181
      %v241 = vunpack.c.l.b16 %v182
      %v242 = vunpack.c.h.b16 %v182
      %v243 = vunpack.c.l.b16 %v183
      %v244 = vunpack.c.h.b16 %v183
      %v245 = vunpack.c.l.b16 %v184
      %v246 = vunpack.c.h.b16 %v184
      %v247 = vunpack.c.l.b16 %v185
      %v248 = vunpack.c.h.b16 %v185
      %v249 = vpack.c.b16 %v235, %v233
      %v250 = vpack.c.b16 %v236, %v234
      %v251 = vpack.c.b16 %v239, %v237
      %v252 = vpack.c.b16 %v240, %v238
      %v253 = vpack.c.b16 %v243, %v241
      %v254 = vpack.c.b16 %v244, %v242
      %v255 = vpack.c.b16 %v247, %v245
      %v256 = vpack.c.b16 %v248, %v246
      %v297 = vunpack.c.l.b16 %v186
      %v298 = vunpack.c.l.b16 %v187
      %v299 = vunpack.c.l.b16 %v188
      %v300 = vunpack.c.l.b16 %v189
      %v301 = vunpack.c.l.b16 %v190
      %v302 = vunpack.c.l.b16 %v191
      %v303 = vunpack.c.l.b16 %v192
      %v304 = vunpack.c.l.b16 %v193
      %v305 = vunpack.c.l.b16 %v194
      %v306 = vunpack.c.l.b16 %v195
      %v307 = vunpack.c.l.b16 %v196
      %v308 = vunpack.c.l.b16 %v197
      %v309 = vunpack.c.l.b16 %v198
      %v310 = vunpack.c.l.b16 %v199
      %v311 = vunpack.c.l.b16 %v200
      %v312 = vunpack.c.l.b16 %v201
      %v313 = vunpack.c.l.b16 %v202
      %v314 = vunpack.c.l.b16 %v203
      %v315 = vunpack.c.l.b16 %v204
      %v316 = vunpack.c.l.b16 %v205
      %v317 = vunpack.c.l.b16 %v206
      %v318 = vunpack.c.l.b16 %v207
      %v319 = vunpack.c.l.b16 %v208
      %v320 = vunpack.c.l.b16 %v209
      %v321 = vunpack.c.l.b16 %v210
      %v322 = vunpack.c.l.b16 %v211
      %v323 = vunpack.c.l.b16 %v212
      %v324 = vunpack.c.l.b16 %v213
      %v325 = vunpack.c.l.b16 %v214
      %v326 = vunpack.c.l.b16 %v215
      %v327 = vunpack.c.l.b16 %v216
      %v328 = vunpack.c.l.b16 %v217
      %v329 = vpack.c.b16 %v298, %v297
      %v330 = vpack.c.b16 %v300, %v299
      %v331 = vpack.c.b16 %v302, %v301
      %v332 = vpack.c.b16 %v304, %v303
      %v333 = vpack.c.b16 %v306, %v305
      %v334 = vpack.c.b16 %v308, %v307
      %v335 = vpack.c.b16 %v310, %v309
      %v336 = vpack.c.b16 %v312, %v311
      %v337 = vpack.c.b16 %v314, %v313
      %v338 = vpack.c.b16 %v316, %v315
      %v339 = vpack.c.b16 %v318, %v317
      %v340 = vpack.c.b16 %v320, %v319
      %v341 = vpack.c.b16 %v322, %v321
      %v342 = vpack.c.b16 %v324, %v323
      %v343 = vpack.c.b16 %v326, %v325
      %v344 = vpack.c.b16 %v328, %v327
      %361 = vmatprep.subr.bf16.mxu0 0
      %362 = vmatpush1.bf16.msra.mxu0 %v329
      %363 = vmatprep.subr.bf16.mxu0 0
      %364 = vmatpush1.bf16.msra.mxu0 %v330
      %365 = vmatprep.subr.bf16.mxu0 0
      %366 = vmatpush1.bf16.msra.mxu0 %v331
      %367 = vmatprep.subr.bf16.mxu0 0
      %368 = vmatpush1.bf16.msra.mxu0 %v332
      %369 = vmatprep.subr.bf16.mxu0 0
      %370 = vmatpush1.bf16.msra.mxu0 %v333
      %371 = vmatprep.subr.bf16.mxu0 0
      %372 = vmatpush1.bf16.msra.mxu0 %v334
      %373 = vmatprep.subr.bf16.mxu0 0
      %374 = vmatpush1.bf16.msra.mxu0 %v335
      %375 = vmatprep.subr.bf16.mxu0 0
      %376 = vmatpush1.bf16.msra.mxu0 %v336
      %377 = vmatprep.subr.bf16.mxu0 0
      %378 = vmatpush1.bf16.msra.mxu0 %v337
      %379 = vmatprep.subr.bf16.mxu0 0
      %380 = vmatpush1.bf16.msra.mxu0 %v338
      %381 = vmatprep.subr.bf16.mxu0 0
      %382 = vmatpush1.bf16.msra.mxu0 %v339
      %383 = vmatprep.subr.bf16.mxu0 0
      %384 = vmatpush1.bf16.msra.mxu0 %v340
      %385 = vmatprep.subr.bf16.mxu0 0
      %386 = vmatpush1.bf16.msra.mxu0 %v341
      %387 = vmatprep.subr.bf16.mxu0 0
      %388 = vmatpush1.bf16.msra.mxu0 %v342
      %389 = vmatprep.subr.bf16.mxu0 0
      %390 = vmatpush1.bf16.msra.mxu0 %v343
      %391 = vmatprep.subr.bf16.mxu0 0
      %392 = vmatpush1.bf16.msra.mxu0 %v344
      %393 = vmatprep.mubr.bf16.mxu0 %v250
      %394 = vmatmul.mubr.bf16.gmra.mrb[0].mxu0 %v249
      %v395 = vpop.f32.mrb[0].mxu0
      %v396 = vadd.f32 %v223, %v395
      %v397 = vpop.f32.mrb[0].mxu0
      %v398 = vpop.f32.mrb[0].mxu0
      %v399 = vadd.f32 %v223, %v398
      %v400 = vpop.f32.mrb[0].mxu0
      %401 = vmatprep.mubr.bf16.mxu0 %v252
      %402 = vmatmul.mubr.bf16.gmra.mrb[0].mxu0 %v251
      %v403 = vpop.f32.mrb[0].mxu0
      %v404 = vadd.f32 %v223, %v403
      %v405 = vpop.f32.mrb[0].mxu0
      %v406 = vpop.f32.mrb[0].mxu0
      %v407 = vadd.f32 %v223, %v406
      %v408 = vpop.f32.mrb[0].mxu0
      %409 = vmatprep.mubr.bf16.mxu0 %v254
      %410 = vmatmul.mubr.bf16.gmra.mrb[0].mxu0 %v253
      %v411 = vpop.f32.mrb[0].mxu0
      %v412 = vadd.f32 %v223, %v411
      %v413 = vpop.f32.mrb[0].mxu0
      %v414 = vpop.f32.mrb[0].mxu0
      %v415 = vadd.f32 %v223, %v414
      %v416 = vpop.f32.mrb[0].mxu0
      %417 = vmatprep.mubr.bf16.mxu0 %v256
      %418 = vmatmul.mubr.bf16.gmra.mrb[0].mxu0 %v255
      %v419 = vpop.f32.mrb[0].mxu0
      %v420 = vadd.f32 %v223, %v419
      %v421 = vpop.f32.mrb[0].mxu0
      %v422 = vpop.f32.mrb[0].mxu0
      %v423 = vadd.f32 %v223, %v422
      %v424 = vpop.f32.mrb[0].mxu0
      %425 = vdwg.mxu0
      %v426 = vmax.f32 %v396, 0.0
      %v427 = vmax.f32 %v399, 0.0
      %v428 = vmax.f32 %v404, 0.0
      %v429 = vmax.f32 %v407, 0.0
      %v430 = vmax.f32 %v412, 0.0
      %v431 = vmax.f32 %v415, 0.0
      %v432 = vmax.f32 %v420, 0.0
      %v433 = vmax.f32 %v423, 0.0
      %434 = vst [vmem:[%s175] sm:$0xff] %v426
      %435 = vst [vmem:[%s175 + $0x8] sm:$0xff] %v427
      %436 = vst [vmem:[%s175 + $0x10] sm:$0xff] %v428
      %437 = vst [vmem:[%s175 + $0x18] sm:$0xff] %v429
      %438 = vst [vmem:[%s175 + $0x20] sm:$0xff] %v430
      %439 = vst [vmem:[%s175 + $0x28] sm:$0xff] %v431
      %440 = vst [vmem:[%s175 + $0x30] sm:$0xff] %v432
      %441 = vst [vmem:[%s175 + $0x38] sm:$0xff] %v433
      %s442 = smul.u32 8, %s14
      %p443 = scmp.lt.s32.totalorder %s442, 15
      %s444 = scalar_select %p443, %s442, 15
      %s445 = smul.addr %s444, 8
      %s446 = scalar_lea.vmem %s3, %s445
      // Predicated region
      $region33: #{forward.23} parent=31 // pred_check
        %p447 = pneg %p100
      $region34: #{forward.23} parent=31 // pred_check_branch
        %449 = sbr.rel (%p447) target = $region36
      $region35: #{forward.23} parent=31 // pred_region
        %s450 = smul.u32 8, %s14
      $region36: #{forward.23} parent=31 // pred_fallthru
        _
    $region32: #{forward.23} parent=5 // pred_fallthru
      _
    %p451 = scmp.le.s32.totalorder 2, %s9
    // Predicated region
    $region37: #{forward.23} parent=5 // pred_check
      %p452 = pneg %p451
    $region38: #{forward.23} parent=5 // pred_check_branch
      %454 = sbr.rel (%p452) target = $region40
    $region39: #{forward.23} parent=5 // pred_region
      %s455 = ssub.s32 %s9, 2
      // Predicated region
      $region41: #{forward.23} parent=39 // pred_check
        %p456 = pneg %p106
      $region42: #{forward.23} parent=39 // pred_check_branch
        %458 = sbr.rel (%p456) target = $region44
      $region43: #{forward.23} parent=39 // pred_region
        %s459 = smul.u32 8, %s15
        %p460 = scmp.lt.s32.totalorder %s459, 15
        %s461 = scalar_select %p460, %s459, 15
        %s462 = smul.addr %s461, 8
        %s463 = scalar_lea.vmem %s3, %s462
      $region44: #{forward.23} parent=39 // pred_fallthru
        _
    $region40: #{forward.23} parent=5 // pred_fallthru
      _
  $region6: #{forward.23} parent=0 // loop_footer
    %s13 = sadd.s32 1, %s9
  $region7: #{forward.23} parent=0 // loop_footer_branch
    %8 = sbr.rel target = $region3
  $region8: #{forward.23} parent=0 // loop_exit
    _

// kernel: forward.22
$region0: #{forward.22}
  #allocation0 [shape = 'u32[]', space=smem, size = 0x4, offset = 0x4, fixed_abs, tag = 'smem constant byte address 0x4 - core index']
  #allocation1 [shape = 'u32[144,128]{1,0:T(1,128)}', space=vmem, size = 0x12000, scoped, tag = 'internal scratch']
  %s0 = inlined_call_operand.vmem [shape: bf16[128,128], index: 0, kind: input, shape index: {}]
  %s1 = inlined_call_operand.vmem [shape: bf16[128,128], index: 1, kind: input, shape index: {}]
  %s2 = inlined_call_operand.vmem [shape: f32[1,128], index: 2, kind: input, shape index: {}]
  %s3 = inlined_call_operand.vmem [shape: f32[128,128], index: 3, kind: output, shape index: {}]
  %s4 = sld [smem:[#allocation0]]
  $region45: #{forward.22} parent=0
    _
  %s6 = ssub.s32 1, %s4
  %s7 = scalar_select 0, %s6, %s4
  loop: start=0, step=1, limit=4
  $region2: #{forward.22} parent=0 // loop_pre_header
    _
  $region3: #{forward.22} parent=0 // loop_header
    %s9 = sphi 0, %s13
    %p10 = scmp.ge.s32.totalorder %s9, 4
    %s19 = sphi 0, %s21
    %s22 = sphi 0, %s19
    %s23 = sphi 0, %s22
    %s39 = sphi 0, %s23
    %s43 = sphi 0, %s43
    %s45 = sphi 0, %s43
    %s46 = sphi 0, %s45
    %s60 = sphi 0, %s46
    %s64 = sphi 0, %s64
    %s66 = sphi 0, %s64
    %s67 = sphi 0, %s66
    %s81 = sphi 0, %s67
    %s87 = sphi 0, %s89
    %s90 = sphi 0, %s87
    %s91 = sphi 0, %s90
    %s107 = sphi 0, %s91
  $region4: #{forward.22} parent=0 // loop_header_branch
    %12 = sbr.rel (%p10) target = $region8
  $region5: #{forward.22} parent=0 // loop_body
    %s14 = ssub.s32 %s9, 1
    %s15 = ssub.s32 %s9, 2
    %s16 = sadd.s32 %s9, 1
    %s17 = ssub.s32 %s9, %s16
    %p18 = scmp.eq.s32.totalorder %s17, 0
    %s20 = sadd.s32 %s19, 1
    %s21 = scalar_select %p18, %s19, %s20
    %p24 = pneg %p18
    %p25 = scmp.eq.s32.totalorder %s9, 1
    %p26 = por %p24, %p25
    %p27 = scmp.ne.s32.totalorder %s19, %s22
    %p28 = scmp.eq.s32.totalorder %s9, 0
    %p29 = por %p27, %p28
    %p30 = scmp.ne.s32.totalorder %s19, %s22
    %p31 = scmp.eq.s32.totalorder %s14, 1
    %p32 = por %p30, %p31
    %p33 = scmp.ne.s32.totalorder %s22, %s23
    %p34 = scmp.eq.s32.totalorder %s14, 0
    %p35 = por %p33, %p34
    %p36 = scmp.ne.s32.totalorder %s22, %s23
    %p37 = scmp.eq.s32.totalorder %s15, 1
    %p38 = por %p36, %p37
    %p40 = scmp.ne.s32.totalorder %s23, %s39
    %p41 = scmp.eq.s32.totalorder %s15, 0
    %p42 = por %p40, %p41
    %s44 = sadd.s32 %s43, 1
    %p47 = scmp.eq.s32.totalorder %s9, 1
    %p48 = scmp.ne.s32.totalorder %s43, %s45
    %p49 = scmp.eq.s32.totalorder %s9, 0
    %p50 = por %p48, %p49
    %p51 = scmp.ne.s32.totalorder %s43, %s45
    %p52 = scmp.eq.s32.totalorder %s14, 1
    %p53 = por %p51, %p52
    %p54 = scmp.ne.s32.totalorder %s45, %s46
    %p55 = scmp.eq.s32.totalorder %s14, 0
    %p56 = por %p54, %p55
    %p57 = scmp.ne.s32.totalorder %s45, %s46
    %p58 = scmp.eq.s32.totalorder %s15, 1
    %p59 = por %p57, %p58
    %p61 = scmp.ne.s32.totalorder %s46, %s60
    %p62 = scmp.eq.s32.totalorder %s15, 0
    %p63 = por %p61, %p62
    %s65 = sadd.s32 %s64, 1
    %p68 = scmp.eq.s32.totalorder %s9, 1
    %p69 = scmp.ne.s32.totalorder %s64, %s66
    %p70 = scmp.eq.s32.totalorder %s9, 0
    %p71 = por %p69, %p70
    %p72 = scmp.ne.s32.totalorder %s64, %s66
    %p73 = scmp.eq.s32.totalorder %s14, 1
    %p74 = por %p72, %p73
    %p75 = scmp.ne.s32.totalorder %s66, %s67
    %p76 = scmp.eq.s32.totalorder %s14, 0
    %p77 = por %p75, %p76
    %p78 = scmp.ne.s32.totalorder %s66, %s67
    %p79 = scmp.eq.s32.totalorder %s15, 1
    %p80 = por %p78, %p79
    %p82 = scmp.ne.s32.totalorder %s67, %s81
    %p83 = scmp.eq.s32.totalorder %s15, 0
    %p84 = por %p82, %p83
    %s85 = ssub.s32 %s9, %s16
    %p86 = scmp.eq.s32.totalorder %s85, 0
    %s88 = sadd.s32 %s87, 1
    %s89 = scalar_select %p86, %s87, %s88
    %p92 = pneg %p86
    %p93 = scmp.eq.s32.totalorder %s9, 1
    %p94 = por %p92, %p93
    %p95 = scmp.ne.s32.totalorder %s87, %s90
    %p96 = scmp.eq.s32.totalorder %s9, 0
    %p97 = por %p95, %p96
    %p98 = scmp.ne.s32.totalorder %s87, %s90
    %p99 = scmp.eq.s32.totalorder %s14, 1
    %p100 = por %p98, %p99
    %p101 = scmp.ne.s32.totalorder %s90, %s91
    %p102 = scmp.eq.s32.totalorder %s14, 0
    %p103 = por %p101, %p102
    %p104 = scmp.ne.s32.totalorder %s90, %s91
    %p105 = scmp.eq.s32.totalorder %s15, 1
    %p106 = por %p104, %p105
    %p108 = scmp.ne.s32.totalorder %s91, %s107
    %p109 = scmp.eq.s32.totalorder %s15, 0
    %p110 = por %p108, %p109
    %p111 = scmp.le.s32.totalorder 1, %s9
    %p112 = scmp.lt.s32.totalorder %s9, 3
    %p113 = pnand %p111, %p112
    %p114 = pneg %p113
    // Predicated region
    $region9: #{forward.22} parent=5 // pred_check
      _
    $region10: #{forward.22} parent=5 // pred_check_branch
      %116 = sbr.rel (%p113) target = $region12
    $region11: #{forward.22} parent=5 // pred_region
      %s117 = ssub.s32 %s9, 1
      // Predicated region
      $region13: #{forward.22} parent=11 // pred_check
        %p118 = pneg %p56
      $region14: #{forward.22} parent=11 // pred_check_branch
        %120 = sbr.rel (%p118) target = $region16
      $region15: #{forward.22} parent=11 // pred_region
        _
      $region16: #{forward.22} parent=11 // pred_fallthru
        _
      // Predicated region
      $region17: #{forward.22} parent=11 // pred_check
        %p121 = pneg %p77
      $region18: #{forward.22} parent=11 // pred_check_branch
        %123 = sbr.rel (%p121) target = $region20
      $region19: #{forward.22} parent=11 // pred_region
        _
      $region20: #{forward.22} parent=11 // pred_fallthru
        _
    $region12: #{forward.22} parent=5 // pred_fallthru
      _
    %p124 = scmp.lt.s32.totalorder %s9, 2
    // Predicated region
    $region21: #{forward.22} parent=5 // pred_check
      %p125 = pneg %p124
    $region22: #{forward.22} parent=5 // pred_check_branch
      %127 = sbr.rel (%p125) target = $region24
    $region23: #{forward.22} parent=5 // pred_region
      // Predicated region
      $region25: #{forward.22} parent=23 // pred_check
        %p128 = pneg %p29
      $region26: #{forward.22} parent=23 // pred_check_branch
        %130 = sbr.rel (%p128) target = $region28
      $region27: #{forward.22} parent=23 // pred_region
        %s131 = smul.u32 8, %s9
        %p132 = scmp.lt.s32.totalorder %s131, 15
        %s133 = scalar_select %p132, %s131, 15
        %s134 = smul.addr %s133, 4
        %s135 = scalar_lea.vmem %s0, %s134
        %s136 = smul.u32 8, %s9
      $region28: #{forward.22} parent=23 // pred_fallthru
        _
    $region24: #{forward.22} parent=5 // pred_fallthru
      _
    %p137 = scmp.le.s32.totalorder 1, %s9
    %p138 = scmp.lt.s32.totalorder %s9, 3
    %p139 = pnand %p137, %p138
    %p140 = pneg %p139
    // Predicated region
    $region29: #{forward.22} parent=5 // pred_check
      _
    $region30: #{forward.22} parent=5 // pred_check_branch
      %142 = sbr.rel (%p139) target = $region32
    $region31: #{forward.22} parent=5 // pred_region
      %s143 = ssub.s32 %s9, 1
      %s144 = smul.u32 8, %s14
      %p145 = scmp.lt.s32.totalorder %s144, 15
      %s146 = scalar_select %p145, %s144, 15
      %s147 = smul.addr %s146, 4
      %s148 = scalar_lea.vmem %s0, %s147
      %p149 = pneg %p35
      %p150 = pneg %p32
      %p151 = pneg %p56
      %p152 = pneg %p53
      %p153 = pneg %p77
      %p154 = pneg %p74
      %p155 = pneg %p103
      %p156 = pneg %p100
      %s157 = smul.u32 8, %s14
      %p158 = scmp.lt.s32.totalorder %s157, 15
      %s159 = scalar_select %p158, %s157, 15
      %s160 = smul.addr %s159, 8
      %s161 = scalar_lea.vmem %s3, %s160
      %s162 = smul.u32 8, %s14
      %p163 = scmp.lt.s32.totalorder %s162, 15
      %s164 = scalar_select %p163, %s162, 15
      %s165 = smul.addr %s164, 4
      %s166 = scalar_lea.vmem %s0, %s165
      %s167 = smul.u32 8, %s14
      %s168 = smul.u32 8, %s14
      %p169 = scmp.lt.s32.totalorder %s168, 15
      %s170 = scalar_select %p169, %s168, 15
      %s171 = smul.addr %s170, 8
      %s172 = scalar_lea.vmem %s3, %s171
      %s173 = smul.u32 8, %s14
      %v175 = vld [vmem:[%s166] sm:$0xf]
      %v176 = vld [vmem:[%s166 + $0x4] sm:$0xf]
      %v177 = vld [vmem:[%s166 + $0x8] sm:$0xf]
      %v178 = vld [vmem:[%s166 + $0xc] sm:$0xf]
      %v179 = vld [vmem:[%s166 + $0x10] sm:$0xf]
      %v180 = vld [vmem:[%s166 + $0x14] sm:$0xf]
      %v181 = vld [vmem:[%s166 + $0x18] sm:$0xf]
      %v182 = vld [vmem:[%s166 + $0x1c] sm:$0xf]
      %v183 = vld [vmem:[%s1] sm:$0xf]
      %v184 = vld [vmem:[%s1 + $0x4] sm:$0xf]
      %v185 = vld [vmem:[%s1 + $0x8] sm:$0xf]
      %v186 = vld [vmem:[%s1 + $0xc] sm:$0xf]
      %v187 = vld [vmem:[%s1 + $0x10] sm:$0xf]
      %v188 = vld [vmem:[%s1 + $0x14] sm:$0xf]
      %v189 = vld [vmem:[%s1 + $0x18] sm:$0xf]
      %v190 = vld [vmem:[%s1 + $0x1c] sm:$0xf]
      %v191 = vld [vmem:[%s1 + $0x20] sm:$0xf]
      %v192 = vld [vmem:[%s1 + $0x24] sm:$0xf]
      %v193 = vld [vmem:[%s1 + $0x28] sm:$0xf]
      %v194 = vld [vmem:[%s1 + $0x2c] sm:$0xf]
      %v195 = vld [vmem:[%s1 + $0x30] sm:$0xf]
      %v196 = vld [vmem:[%s1 + $0x34] sm:$0xf]
      %v197 = vld [vmem:[%s1 + $0x38] sm:$0xf]
      %v198 = vld [vmem:[%s1 + $0x3c] sm:$0xf]
      %v199 = vld [vmem:[%s2] sm:$0x1]
      %v201 = vlaneseq
      %v202 = vshrl.u32 %v201, 7
      %v203 = vsub.s32 0, %v202
      %v204 = vrot.slane %v199, %v203
      %v214 = vunpack.c.l.b16 %v175
      %v215 = vunpack.c.l.b16 %v176
      %v216 = vunpack.c.l.b16 %v177
      %v217 = vunpack.c.l.b16 %v178
      %v218 = vunpack.c.l.b16 %v179
      %v219 = vunpack.c.l.b16 %v180
      %v220 = vunpack.c.l.b16 %v181
      %v221 = vunpack.c.l.b16 %v182
      %v222 = vpack.c.b16 %v215, %v214
      %v223 = vpack.c.b16 %v217, %v216
      %v224 = vpack.c.b16 %v219, %v218
      %v225 = vpack.c.b16 %v221, %v220
      %v246 = vunpack.c.l.b16 %v183
      %v247 = vunpack.c.l.b16 %v184
      %v248 = vunpack.c.l.b16 %v185
      %v249 = vunpack.c.l.b16 %v186
      %v250 = vunpack.c.l.b16 %v187
      %v251 = vunpack.c.l.b16 %v188
      %v252 = vunpack.c.l.b16 %v189
      %v253 = vunpack.c.l.b16 %v190
      %v254 = vunpack.c.l.b16 %v191
      %v255 = vunpack.c.l.b16 %v192
      %v256 = vunpack.c.l.b16 %v193
      %v257 = vunpack.c.l.b16 %v194
      %v258 = vunpack.c.l.b16 %v195
      %v259 = vunpack.c.l.b16 %v196
      %v260 = vunpack.c.l.b16 %v197
      %v261 = vunpack.c.l.b16 %v198
      %v262 = vpack.c.b16 %v247, %v246
      %v263 = vpack.c.b16 %v249, %v248
      %v264 = vpack.c.b16 %v251, %v250
      %v265 = vpack.c.b16 %v253, %v252
      %v266 = vpack.c.b16 %v255, %v254
      %v267 = vpack.c.b16 %v257, %v256
      %v268 = vpack.c.b16 %v259, %v258
      %v269 = vpack.c.b16 %v261, %v260
      %278 = vmatprep.subr.bf16.mxu0 0
      %279 = vmatpush1.bf16.msra.mxu0 %v262
      %280 = vmatprep.subr.bf16.mxu0 0
      %281 = vmatpush1.bf16.msra.mxu0 %v263
      %282 = vmatprep.subr.bf16.mxu0 0
      %283 = vmatpush1.bf16.msra.mxu0 %v264
      %284 = vmatprep.subr.bf16.mxu0 0
      %285 = vmatpush1.bf16.msra.mxu0 %v265
      %286 = vmatprep.subr.bf16.mxu0 0
      %287 = vmatpush1.bf16.msra.mxu0 %v266
      %288 = vmatprep.subr.bf16.mxu0 0
      %289 = vmatpush1.bf16.msra.mxu0 %v267
      %290 = vmatprep.subr.bf16.mxu0 0
      %291 = vmatpush1.bf16.msra.mxu0 %v268
      %292 = vmatprep.subr.bf16.mxu0 0
      %293 = vmatpush1.bf16.msra.mxu0 %v269
      %294 = vmatprep.subr.bf16.mxu0 0
      %295 = vmatpush1.bf16.msra.mxu0 0
      %296 = vmatprep.subr.bf16.mxu0 0
      %297 = vmatpush1.bf16.msra.mxu0 0
      %298 = vmatprep.subr.bf16.mxu0 0
      %299 = vmatpush1.bf16.msra.mxu0 0
      %300 = vmatprep.subr.bf16.mxu0 0
      %301 = vmatpush1.bf16.msra.mxu0 0
      %302 = vmatprep.subr.bf16.mxu0 0
      %303 = vmatpush1.bf16.msra.mxu0 0
      %304 = vmatprep.subr.bf16.mxu0 0
      %305 = vmatpush1.bf16.msra.mxu0 0
      %306 = vmatprep.subr.bf16.mxu0 0
      %307 = vmatpush1.bf16.msra.mxu0 0
      %308 = vmatprep.subr.bf16.mxu0 0
      %309 = vmatpush1.bf16.msra.mxu0 0
      %310 = vmatprep.mubr.bf16.mxu0 0
      %311 = vmatmul.mubr.bf16.gmra.mrb[0].mxu0 %v222
      %v312 = vpop.f32.mrb[0].mxu0
      %v313 = vadd.f32 %v204, %v312
      %v314 = vpop.f32.mrb[0].mxu0
      %v315 = vpop.f32.mrb[0].mxu0
      %v316 = vadd.f32 %v204, %v315
      %v317 = vpop.f32.mrb[0].mxu0
      %318 = vmatprep.mubr.bf16.mxu0 0
      %319 = vmatmul.mubr.bf16.gmra.mrb[0].mxu0 %v223
      %v320 = vpop.f32.mrb[0].mxu0
      %v321 = vadd.f32 %v204, %v320
      %v322 = vpop.f32.mrb[0].mxu0
      %v323 = vpop.f32.mrb[0].mxu0
      %v324 = vadd.f32 %v204, %v323
      %v325 = vpop.f32.mrb[0].mxu0
      %326 = vmatprep.mubr.bf16.mxu0 0
      %327 = vmatmul.mubr.bf16.gmra.mrb[0].mxu0 %v224
      %v328 = vpop.f32.mrb[0].mxu0
      %v329 = vadd.f32 %v204, %v328
      %v330 = vpop.f32.mrb[0].mxu0
      %v331 = vpop.f32.mrb[0].mxu0
      %v332 = vadd.f32 %v204, %v331
      %v333 = vpop.f32.mrb[0].mxu0
      %334 = vmatprep.mubr.bf16.mxu0 0
      %335 = vmatmul.mubr.bf16.gmra.mrb[0].mxu0 %v225
      %v336 = vpop.f32.mrb[0].mxu0
      %v337 = vadd.f32 %v204, %v336
      %v338 = vpop.f32.mrb[0].mxu0
      %v339 = vpop.f32.mrb[0].mxu0
      %v340 = vadd.f32 %v204, %v339
      %v341 = vpop.f32.mrb[0].mxu0
      %342 = vdwg.mxu0
      %343 = vst [vmem:[%s172] sm:$0xff] %v313
      %344 = vst [vmem:[%s172 + $0x8] sm:$0xff] %v316
      %345 = vst [vmem:[%s172 + $0x10] sm:$0xff] %v321
      %346 = vst [vmem:[%s172 + $0x18] sm:$0xff] %v324
      %347 = vst [vmem:[%s172 + $0x20] sm:$0xff] %v329
      %348 = vst [vmem:[%s172 + $0x28] sm:$0xff] %v332
      %349 = vst [vmem:[%s172 + $0x30] sm:$0xff] %v337
      %350 = vst [vmem:[%s172 + $0x38] sm:$0xff] %v340
      %s351 = smul.u32 8, %s14
      %p352 = scmp.lt.s32.totalorder %s351, 15
      %s353 = scalar_select %p352, %s351, 15
      %s354 = smul.addr %s353, 8
      %s355 = scalar_lea.vmem %s3, %s354
      // Predicated region
      $region33: #{forward.22} parent=31 // pred_check
        %p356 = pneg %p100
      $region34: #{forward.22} parent=31 // pred_check_branch
        %358 = sbr.rel (%p356) target = $region36
      $region35: #{forward.22} parent=31 // pred_region
        %s359 = smul.u32 8, %s14
      $region36: #{forward.22} parent=31 // pred_fallthru
        _
    $region32: #{forward.22} parent=5 // pred_fallthru
      _
    %p360 = scmp.le.s32.totalorder 2, %s9
    // Predicated region
    $region37: #{forward.22} parent=5 // pred_check
      %p361 = pneg %p360
    $region38: #{forward.22} parent=5 // pred_check_branch
      %363 = sbr.rel (%p361) target = $region40
    $region39: #{forward.22} parent=5 // pred_region
      %s364 = ssub.s32 %s9, 2
      // Predicated region
      $region41: #{forward.22} parent=39 // pred_check
        %p365 = pneg %p106
      $region42: #{forward.22} parent=39 // pred_check_branch
        %367 = sbr.rel (%p365) target = $region44
      $region43: #{forward.22} parent=39 // pred_region
        %s368 = smul.u32 8, %s15
        %p369 = scmp.lt.s32.totalorder %s368, 15
        %s370 = scalar_select %p369, %s368, 15
        %s371 = smul.addr %s370, 8
        %s372 = scalar_lea.vmem %s3, %s371
      $region44: #{forward.22} parent=39 // pred_fallthru
        _
    $region40: #{forward.22} parent=5 // pred_fallthru
      _
  $region6: #{forward.22} parent=0 // loop_footer
    %s13 = sadd.s32 1, %s9
  $region7: #{forward.22} parent=0 // loop_footer_branch
    %8 = sbr.rel target = $region3
  $region8: #{forward.22} parent=0 // loop_exit
    _

// kernel: forward.24
$region0: #{forward.24}
  #allocation0 [shape = 'u32[]', space=smem, size = 0x4, offset = 0x4, fixed_abs, tag = 'smem constant byte address 0x4 - core index']
  #allocation1 [shape = 'u32[144,128]{1,0:T(1,128)}', space=vmem, size = 0x12000, scoped, tag = 'internal scratch']
  %s0 = inlined_call_operand.vmem [shape: bf16[128,384], index: 0, kind: input, shape index: {}]
  %s1 = inlined_call_operand.vmem [shape: bf16[384,128], index: 1, kind: input, shape index: {}]
  %s2 = inlined_call_operand.vmem [shape: f32[1,128], index: 2, kind: input, shape index: {}]
  %s3 = inlined_call_operand.vmem [shape: f32[128,128], index: 3, kind: input, shape index: {}]
  %s4 = inlined_call_operand.vmem [shape: f32[128,128], index: 4, kind: output, shape index: {}]
  %s5 = sld [smem:[#allocation0]]
  $region49: #{forward.24} parent=0
    _
  %s7 = ssub.s32 1, %s5
  %s8 = scalar_select 0, %s7, %s5
  loop: start=0, step=1, limit=4
  $region2: #{forward.24} parent=0 // loop_pre_header
    _
  $region3: #{forward.24} parent=0 // loop_header
    %s10 = sphi 0, %s14
    %p11 = scmp.ge.s32.totalorder %s10, 4
    %s20 = sphi 0, %s22
    %s23 = sphi 0, %s20
    %s24 = sphi 0, %s23
    %s40 = sphi 0, %s24
    %s44 = sphi 0, %s44
    %s46 = sphi 0, %s44
    %s47 = sphi 0, %s46
    %s61 = sphi 0, %s47
    %s65 = sphi 0, %s65
    %s67 = sphi 0, %s65
    %s68 = sphi 0, %s67
    %s82 = sphi 0, %s68
    %s88 = sphi 0, %s90
    %s91 = sphi 0, %s88
    %s92 = sphi 0, %s91
    %s108 = sphi 0, %s92
    %s114 = sphi 0, %s116
    %s117 = sphi 0, %s114
    %s118 = sphi 0, %s117
    %s134 = sphi 0, %s118
  $region4: #{forward.24} parent=0 // loop_header_branch
    %13 = sbr.rel (%p11) target = $region8
  $region5: #{forward.24} parent=0 // loop_body
    %s15 = ssub.s32 %s10, 1
    %s16 = ssub.s32 %s10, 2
    %s17 = sadd.s32 %s10, 1
    %s18 = ssub.s32 %s10, %s17
    %p19 = scmp.eq.s32.totalorder %s18, 0
    %s21 = sadd.s32 %s20, 1
    %s22 = scalar_select %p19, %s20, %s21
    %p25 = pneg %p19
    %p26 = scmp.eq.s32.totalorder %s10, 1
    %p27 = por %p25, %p26
    %p28 = scmp.ne.s32.totalorder %s20, %s23
    %p29 = scmp.eq.s32.totalorder %s10, 0
    %p30 = por %p28, %p29
    %p31 = scmp.ne.s32.totalorder %s20, %s23
    %p32 = scmp.eq.s32.totalorder %s15, 1
    %p33 = por %p31, %p32
    %p34 = scmp.ne.s32.totalorder %s23, %s24
    %p35 = scmp.eq.s32.totalorder %s15, 0
    %p36 = por %p34, %p35
    %p37 = scmp.ne.s32.totalorder %s23, %s24
    %p38 = scmp.eq.s32.totalorder %s16, 1
    %p39 = por %p37, %p38
    %p41 = scmp.ne.s32.totalorder %s24, %s40
    %p42 = scmp.eq.s32.totalorder %s16, 0
    %p43 = por %p41, %p42
    %s45 = sadd.s32 %s44, 1
    %p48 = scmp.eq.s32.totalorder %s10, 1
    %p49 = scmp.ne.s32.totalorder %s44, %s46
    %p50 = scmp.eq.s32.totalorder %s10, 0
    %p51 = por %p49, %p50
    %p52 = scmp.ne.s32.totalorder %s44, %s46
    %p53 = scmp.eq.s32.totalorder %s15, 1
    %p54 = por %p52, %p53
    %p55 = scmp.ne.s32.totalorder %s46, %s47
    %p56 = scmp.eq.s32.totalorder %s15, 0
    %p57 = por %p55, %p56
    %p58 = scmp.ne.s32.totalorder %s46, %s47
    %p59 = scmp.eq.s32.totalorder %s16, 1
    %p60 = por %p58, %p59
    %p62 = scmp.ne.s32.totalorder %s47, %s61
    %p63 = scmp.eq.s32.totalorder %s16, 0
    %p64 = por %p62, %p63
    %s66 = sadd.s32 %s65, 1
    %p69 = scmp.eq.s32.totalorder %s10, 1
    %p70 = scmp.ne.s32.totalorder %s65, %s67
    %p71 = scmp.eq.s32.totalorder %s10, 0
    %p72 = por %p70, %p71
    %p73 = scmp.ne.s32.totalorder %s65, %s67
    %p74 = scmp.eq.s32.totalorder %s15, 1
    %p75 = por %p73, %p74
    %p76 = scmp.ne.s32.totalorder %s67, %s68
    %p77 = scmp.eq.s32.totalorder %s15, 0
    %p78 = por %p76, %p77
    %p79 = scmp.ne.s32.totalorder %s67, %s68
    %p80 = scmp.eq.s32.totalorder %s16, 1
    %p81 = por %p79, %p80
    %p83 = scmp.ne.s32.totalorder %s68, %s82
    %p84 = scmp.eq.s32.totalorder %s16, 0
    %p85 = por %p83, %p84
    %s86 = ssub.s32 %s10, %s17
    %p87 = scmp.eq.s32.totalorder %s86, 0
    %s89 = sadd.s32 %s88, 1
    %s90 = scalar_select %p87, %s88, %s89
    %p93 = pneg %p87
    %p94 = scmp.eq.s32.totalorder %s10, 1
    %p95 = por %p93, %p94
    %p96 = scmp.ne.s32.totalorder %s88, %s91
    %p97 = scmp.eq.s32.totalorder %s10, 0
    %p98 = por %p96, %p97
    %p99 = scmp.ne.s32.totalorder %s88, %s91
    %p100 = scmp.eq.s32.totalorder %s15, 1
    %p101 = por %p99, %p100
    %p102 = scmp.ne.s32.totalorder %s91, %s92
    %p103 = scmp.eq.s32.totalorder %s15, 0
    %p104 = por %p102, %p103
    %p105 = scmp.ne.s32.totalorder %s91, %s92
    %p106 = scmp.eq.s32.totalorder %s16, 1
    %p107 = por %p105, %p106
    %p109 = scmp.ne.s32.totalorder %s92, %s108
    %p110 = scmp.eq.s32.totalorder %s16, 0
    %p111 = por %p109, %p110
    %s112 = ssub.s32 %s10, %s17
    %p113 = scmp.eq.s32.totalorder %s112, 0
    %s115 = sadd.s32 %s114, 1
    %s116 = scalar_select %p113, %s114, %s115
    %p119 = pneg %p113
    %p120 = scmp.eq.s32.totalorder %s10, 1
    %p121 = por %p119, %p120
    %p122 = scmp.ne.s32.totalorder %s114, %s117
    %p123 = scmp.eq.s32.totalorder %s10, 0
    %p124 = por %p122, %p123
    %p125 = scmp.ne.s32.totalorder %s114, %s117
    %p126 = scmp.eq.s32.totalorder %s15, 1
    %p127 = por %p125, %p126
    %p128 = scmp.ne.s32.totalorder %s117, %s118
    %p129 = scmp.eq.s32.totalorder %s15, 0
    %p130 = por %p128, %p129
    %p131 = scmp.ne.s32.totalorder %s117, %s118
    %p132 = scmp.eq.s32.totalorder %s16, 1
    %p133 = por %p131, %p132
    %p135 = scmp.ne.s32.totalorder %s118, %s134
    %p136 = scmp.eq.s32.totalorder %s16, 0
    %p137 = por %p135, %p136
    %p138 = scmp.le.s32.totalorder 1, %s10
    %p139 = scmp.lt.s32.totalorder %s10, 3
    %p140 = pnand %p138, %p139
    %p141 = pneg %p140
    // Predicated region
    $region9: #{forward.24} parent=5 // pred_check
      _
    $region10: #{forward.24} parent=5 // pred_check_branch
      %143 = sbr.rel (%p140) target = $region12
    $region11: #{forward.24} parent=5 // pred_region
      %s144 = ssub.s32 %s10, 1
      // Predicated region
      $region13: #{forward.24} parent=11 // pred_check
        %p145 = pneg %p57
      $region14: #{forward.24} parent=11 // pred_check_branch
        %147 = sbr.rel (%p145) target = $region16
      $region15: #{forward.24} parent=11 // pred_region
        _
      $region16: #{forward.24} parent=11 // pred_fallthru
        _
      // Predicated region
      $region17: #{forward.24} parent=11 // pred_check
        %p148 = pneg %p78
      $region18: #{forward.24} parent=11 // pred_check_branch
        %150 = sbr.rel (%p148) target = $region20
      $region19: #{forward.24} parent=11 // pred_region
        _
      $region20: #{forward.24} parent=11 // pred_fallthru
        _
    $region12: #{forward.24} parent=5 // pred_fallthru
      _
    %p151 = scmp.lt.s32.totalorder %s10, 2
    // Predicated region
    $region21: #{forward.24} parent=5 // pred_check
      %p152 = pneg %p151
    $region22: #{forward.24} parent=5 // pred_check_branch
      %154 = sbr.rel (%p152) target = $region24
    $region23: #{forward.24} parent=5 // pred_region
      // Predicated region
      $region25: #{forward.24} parent=23 // pred_check
        %p155 = pneg %p30
      $region26: #{forward.24} parent=23 // pred_check_branch
        %157 = sbr.rel (%p155) target = $region28
      $region27: #{forward.24} parent=23 // pred_region
        %s158 = smul.u32 8, %s10
        %p159 = scmp.lt.s32.totalorder %s158, 15
        %s160 = scalar_select %p159, %s158, 15
        %s161 = smul.addr %s160, 3
        %s162 = smul.addr %s161, 4
        %s163 = scalar_lea.vmem %s0, %s162
        %s164 = smul.u32 8, %s10
      $region28: #{forward.24} parent=23 // pred_fallthru
        _
      // Predicated region
      $region29: #{forward.24} parent=23 // pred_check
        %p165 = pneg %p98
      $region30: #{forward.24} parent=23 // pred_check_branch
        %167 = sbr.rel (%p165) target = $region32
      $region31: #{forward.24} parent=23 // pred_region
        %s168 = smul.u32 8, %s10
        %p169 = scmp.lt.s32.totalorder %s168, 15
        %s170 = scalar_select %p169, %s168, 15
        %s171 = smul.addr %s170, 8
        %s172 = scalar_lea.vmem %s3, %s171
        %s173 = smul.u32 8, %s10
      $region32: #{forward.24} parent=23 // pred_fallthru
        _
    $region24: #{forward.24} parent=5 // pred_fallthru
      _
    %p174 = scmp.le.s32.totalorder 1, %s10
    %p175 = scmp.lt.s32.totalorder %s10, 3
    %p176 = pnand %p174, %p175
    %p177 = pneg %p176
    // Predicated region
    $region33: #{forward.24} parent=5 // pred_check
      _
    $region34: #{forward.24} parent=5 // pred_check_branch
      %179 = sbr.rel (%p176) target = $region36
    $region35: #{forward.24} parent=5 // pred_region
      %s180 = ssub.s32 %s10, 1
      %s181 = smul.u32 8, %s15
      %p182 = scmp.lt.s32.totalorder %s181, 15
      %s183 = scalar_select %p182, %s181, 15
      %s184 = smul.addr %s183, 3
      %s185 = smul.addr %s184, 4
      %s186 = scalar_lea.vmem %s0, %s185
      %p187 = pneg %p36
      %p188 = pneg %p33
      %p189 = pneg %p57
      %p190 = pneg %p54
      %p191 = pneg %p78
      %p192 = pneg %p75
      %s193 = smul.u32 8, %s15
      %p194 = scmp.lt.s32.totalorder %s193, 15
      %s195 = scalar_select %p194, %s193, 15
      %s196 = smul.addr %s195, 8
      %s197 = scalar_lea.vmem %s3, %s196
      %p198 = pneg %p104
      %p199 = pneg %p101
      %p200 = pneg %p130
      %p201 = pneg %p127
      %s202 = smul.u32 8, %s15
      %p203 = scmp.lt.s32.totalorder %s202, 15
      %s204 = scalar_select %p203, %s202, 15
      %s205 = smul.addr %s204, 8
      %s206 = scalar_lea.vmem %s4, %s205
      %s207 = smul.u32 8, %s15
      %p208 = scmp.lt.s32.totalorder %s207, 15
      %s209 = scalar_select %p208, %s207, 15
      %s210 = smul.addr %s209, 3
      %s211 = smul.addr %s210, 4
      %s212 = scalar_lea.vmem %s0, %s211
      %s213 = smul.u32 8, %s15
      %s214 = smul.u32 8, %s15
      %p215 = scmp.lt.s32.totalorder %s214, 15
      %s216 = scalar_select %p215, %s214, 15
      %s217 = smul.addr %s216, 8
      %s218 = scalar_lea.vmem %s3, %s217
      %s219 = smul.u32 8, %s15
      %s220 = smul.u32 8, %s15
      %p221 = scmp.lt.s32.totalorder %s220, 15
      %s222 = scalar_select %p221, %s220, 15
      %s223 = smul.addr %s222, 8
      %s224 = scalar_lea.vmem %s4, %s223
      %s225 = smul.u32 8, %s15
      %v227 = vld [vmem:[%s212] sm:$0xff]
      %v228 = vld [vmem:[%s212 + $0x8] sm:$0xf]
      %v229 = vld [vmem:[%s212 + $0xc] sm:$0xff]
      %v230 = vld [vmem:[%s212 + $0x14] sm:$0xf]
      %v231 = vld [vmem:[%s212 + $0x18] sm:$0xff]
      %v232 = vld [vmem:[%s212 + $0x20] sm:$0xf]
      %v233 = vld [vmem:[%s212 + $0x24] sm:$0xff]
      %v234 = vld [vmem:[%s212 + $0x2c] sm:$0xf]
      %v235 = vld [vmem:[%s212 + $0x30] sm:$0xff]
      %v236 = vld [vmem:[%s212 + $0x38] sm:$0xf]
      %v237 = vld [vmem:[%s212 + $0x3c] sm:$0xff]
      %v238 = vld [vmem:[%s212 + $0x44] sm:$0xf]
      %v239 = vld [vmem:[%s212 + $0x48] sm:$0xff]
      %v240 = vld [vmem:[%s212 + $0x50] sm:$0xf]
      %v241 = vld [vmem:[%s212 + $0x54] sm:$0xff]
      %v242 = vld [vmem:[%s212 + $0x5c] sm:$0xf]
      %v243 = vld [vmem:[%s1] sm:$0xf]
      %v244 = vld [vmem:[%s1 + $0x4] sm:$0xf]
      %v245 = vld [vmem:[%s1 + $0x8] sm:$0xf]
      %v246 = vld [vmem:[%s1 + $0xc] sm:$0xf]
      %v247 = vld [vmem:[%s1 + $0x10] sm:$0xf]
      %v248 = vld [vmem:[%s1 + $0x14] sm:$0xf]
      %v249 = vld [vmem:[%s1 + $0x18] sm:$0xf]
      %v250 = vld [vmem:[%s1 + $0x1c] sm:$0xf]
      %v251 = vld [vmem:[%s1 + $0x20] sm:$0xf]
      %v252 = vld [vmem:[%s1 + $0x24] sm:$0xf]
      %v253 = vld [vmem:[%s1 + $0x28] sm:$0xf]
      %v254 = vld [vmem:[%s1 + $0x2c] sm:$0xf]
      %v255 = vld [vmem:[%s1 + $0x30] sm:$0xf]
      %v256 = vld [vmem:[%s1 + $0x34] sm:$0xf]
      %v257 = vld [vmem:[%s1 + $0x38] sm:$0xf]
      %v258 = vld [vmem:[%s1 + $0x3c] sm:$0xf]
      %v259 = vld [vmem:[%s1 + $0x40] sm:$0xf]
      %v260 = vld [vmem:[%s1 + $0x44] sm:$0xf]
      %v261 = vld [vmem:[%s1 + $0x48] sm:$0xf]
      %v262 = vld [vmem:[%s1 + $0x4c] sm:$0xf]
      %v263 = vld [vmem:[%s1 + $0x50] sm:$0xf]
      %v264 = vld [vmem:[%s1 + $0x54] sm:$0xf]
      %v265 = vld [vmem:[%s1 + $0x58] sm:$0xf]
      %v266 = vld [vmem:[%s1 + $0x5c] sm:$0xf]
      %v267 = vld [vmem:[%s1 + $0x60] sm:$0xf]
      %v268 = vld [vmem:[%s1 + $0x64] sm:$0xf]
      %v269 = vld [vmem:[%s1 + $0x68] sm:$0xf]
      %v270 = vld [vmem:[%s1 + $0x6c] sm:$0xf]
      %v271 = vld [vmem:[%s1 + $0x70] sm:$0xf]
      %v272 = vld [vmem:[%s1 + $0x74] sm:$0xf]
      %v273 = vld [vmem:[%s1 + $0x78] sm:$0xf]
      %v274 = vld [vmem:[%s1 + $0x7c] sm:$0xf]
      %v275 = vld [vmem:[%s1 + $0x80] sm:$0xf]
      %v276 = vld [vmem:[%s1 + $0x84] sm:$0xf]
      %v277 = vld [vmem:[%s1 + $0x88] sm:$0xf]
      %v278 = vld [vmem:[%s1 + $0x8c] sm:$0xf]
      %v279 = vld [vmem:[%s1 + $0x90] sm:$0xf]
      %v280 = vld [vmem:[%s1 + $0x94] sm:$0xf]
      %v281 = vld [vmem:[%s1 + $0x98] sm:$0xf]
      %v282 = vld [vmem:[%s1 + $0x9c] sm:$0xf]
      %v283 = vld [vmem:[%s1 + $0xa0] sm:$0xf]
      %v284 = vld [vmem:[%s1 + $0xa4] sm:$0xf]
      %v285 = vld [vmem:[%s1 + $0xa8] sm:$0xf]
      %v286 = vld [vmem:[%s1 + $0xac] sm:$0xf]
      %v287 = vld [vmem:[%s1 + $0xb0] sm:$0xf]
      %v288 = vld [vmem:[%s1 + $0xb4] sm:$0xf]
      %v289 = vld [vmem:[%s1 + $0xb8] sm:$0xf]
      %v290 = vld [vmem:[%s1 + $0xbc] sm:$0xf]
      %v291 = vld [vmem:[%s2] sm:$0x1]
      %v293 = vlaneseq
      %v294 = vshrl.u32 %v293, 7
      %v295 = vsub.s32 0, %v294
      %v296 = vrot.slane %v291, %v295
      %v314 = vunpack.c.l.b16 %v227
      %v315 = vunpack.c.h.b16 %v227
      %v316 = vunpack.c.l.b16 %v228
      %v317 = vunpack.c.l.b16 %v229
      %v318 = vunpack.c.h.b16 %v229
      %v319 = vunpack.c.l.b16 %v230
      %v320 = vunpack.c.l.b16 %v231
      %v321 = vunpack.c.h.b16 %v231
      %v322 = vunpack.c.l.b16 %v232
      %v323 = vunpack.c.l.b16 %v233
      %v324 = vunpack.c.h.b16 %v233
      %v325 = vunpack.c.l.b16 %v234
      %v326 = vunpack.c.l.b16 %v235
      %v327 = vunpack.c.h.b16 %v235
      %v328 = vunpack.c.l.b16 %v236
      %v329 = vunpack.c.l.b16 %v237
      %v330 = vunpack.c.h.b16 %v237
      %v331 = vunpack.c.l.b16 %v238
      %v332 = vunpack.c.l.b16 %v239
      %v333 = vunpack.c.h.b16 %v239
      %v334 = vunpack.c.l.b16 %v240
      %v335 = vunpack.c.l.b16 %v241
      %v336 = vunpack.c.h.b16 %v241
      %v337 = vunpack.c.l.b16 %v242
      %v338 = vpack.c.b16 %v317, %v314
      %v339 = vpack.c.b16 %v318, %v315
      %v340 = vpack.c.b16 %v319, %v316
      %v341 = vpack.c.b16 %v323, %v320
      %v342 = vpack.c.b16 %v324, %v321
      %v343 = vpack.c.b16 %v325, %v322
      %v344 = vpack.c.b16 %v329, %v326
      %v345 = vpack.c.b16 %v330, %v327
      %v346 = vpack.c.b16 %v331, %v328
      %v347 = vpack.c.b16 %v335, %v332
      %v348 = vpack.c.b16 %v336, %v333
      %v349 = vpack.c.b16 %v337, %v334
      %v410 = vunpack.c.l.b16 %v243
      %v411 = vunpack.c.l.b16 %v244
      %v412 = vunpack.c.l.b16 %v245
      %v413 = vunpack.c.l.b16 %v246
      %v414 = vunpack.c.l.b16 %v247
      %v415 = vunpack.c.l.b16 %v248
      %v416 = vunpack.c.l.b16 %v249
      %v417 = vunpack.c.l.b16 %v250
      %v418 = vunpack.c.l.b16 %v251
      %v419 = vunpack.c.l.b16 %v252
      %v420 = vunpack.c.l.b16 %v253
      %v421 = vunpack.c.l.b16 %v254
      %v422 = vunpack.c.l.b16 %v255
      %v423 = vunpack.c.l.b16 %v256
      %v424 = vunpack.c.l.b16 %v257
      %v425 = vunpack.c.l.b16 %v258
      %v426 = vunpack.c.l.b16 %v259
      %v427 = vunpack.c.l.b16 %v260
      %v428 = vunpack.c.l.b16 %v261
      %v429 = vunpack.c.l.b16 %v262
      %v430 = vunpack.c.l.b16 %v263
      %v431 = vunpack.c.l.b16 %v264
      %v432 = vunpack.c.l.b16 %v265
      %v433 = vunpack.c.l.b16 %v266
      %v434 = vunpack.c.l.b16 %v267
      %v435 = vunpack.c.l.b16 %v268
      %v436 = vunpack.c.l.b16 %v269
      %v437 = vunpack.c.l.b16 %v270
      %v438 = vunpack.c.l.b16 %v271
      %v439 = vunpack.c.l.b16 %v272
      %v440 = vunpack.c.l.b16 %v273
      %v441 = vunpack.c.l.b16 %v274
      %v442 = vunpack.c.l.b16 %v275
      %v443 = vunpack.c.l.b16 %v276
      %v444 = vunpack.c.l.b16 %v277
      %v445 = vunpack.c.l.b16 %v278
      %v446 = vunpack.c.l.b16 %v279
      %v447 = vunpack.c.l.b16 %v280
      %v448 = vunpack.c.l.b16 %v281
      %v449 = vunpack.c.l.b16 %v282
      %v450 = vunpack.c.l.b16 %v283
      %v451 = vunpack.c.l.b16 %v284
      %v452 = vunpack.c.l.b16 %v285
      %v453 = vunpack.c.l.b16 %v286
      %v454 = vunpack.c.l.b16 %v287
      %v455 = vunpack.c.l.b16 %v288
      %v456 = vunpack.c.l.b16 %v289
      %v457 = vunpack.c.l.b16 %v290
      %v458 = vpack.c.b16 %v411, %v410
      %v459 = vpack.c.b16 %v413, %v412
      %v460 = vpack.c.b16 %v415, %v414
      %v461 = vpack.c.b16 %v417, %v416
      %v462 = vpack.c.b16 %v419, %v418
      %v463 = vpack.c.b16 %v421, %v420
      %v464 = vpack.c.b16 %v423, %v422
      %v465 = vpack.c.b16 %v425, %v424
      %v466 = vpack.c.b16 %v427, %v426
      %v467 = vpack.c.b16 %v429, %v428
      %v468 = vpack.c.b16 %v431, %v430
      %v469 = vpack.c.b16 %v433, %v432
      %v470 = vpack.c.b16 %v435, %v434
      %v471 = vpack.c.b16 %v437, %v436
      %v472 = vpack.c.b16 %v439, %v438
      %v473 = vpack.c.b16 %v441, %v440
      %v474 = vpack.c.b16 %v443, %v442
      %v475 = vpack.c.b16 %v445, %v444
      %v476 = vpack.c.b16 %v447, %v446
      %v477 = vpack.c.b16 %v449, %v448
      %v478 = vpack.c.b16 %v451, %v450
      %v479 = vpack.c.b16 %v453, %v452
      %v480 = vpack.c.b16 %v455, %v454
      %v481 = vpack.c.b16 %v457, %v456
      %506 = vmatprep.subr.bf16.mxu0 0
      %507 = vmatpush1.bf16.msra.mxu0 %v458
      %508 = vmatprep.subr.bf16.mxu0 0
      %509 = vmatpush1.bf16.msra.mxu0 %v459
      %510 = vmatprep.subr.bf16.mxu0 0
      %511 = vmatpush1.bf16.msra.mxu0 %v460
      %512 = vmatprep.subr.bf16.mxu0 0
      %513 = vmatpush1.bf16.msra.mxu0 %v461
      %514 = vmatprep.subr.bf16.mxu0 0
      %515 = vmatpush1.bf16.msra.mxu0 %v462
      %516 = vmatprep.subr.bf16.mxu0 0
      %517 = vmatpush1.bf16.msra.mxu0 %v463
      %518 = vmatprep.subr.bf16.mxu0 0
      %519 = vmatpush1.bf16.msra.mxu0 %v464
      %520 = vmatprep.subr.bf16.mxu0 0
      %521 = vmatpush1.bf16.msra.mxu0 %v465
      %522 = vmatprep.subr.bf16.mxu0 0
      %523 = vmatpush1.bf16.msra.mxu0 %v466
      %524 = vmatprep.subr.bf16.mxu0 0
      %525 = vmatpush1.bf16.msra.mxu0 %v467
      %526 = vmatprep.subr.bf16.mxu0 0
      %527 = vmatpush1.bf16.msra.mxu0 %v468
      %528 = vmatprep.subr.bf16.mxu0 0
      %529 = vmatpush1.bf16.msra.mxu0 %v469
      %530 = vmatprep.subr.bf16.mxu0 0
      %531 = vmatpush1.bf16.msra.mxu0 %v470
      %532 = vmatprep.subr.bf16.mxu0 0
      %533 = vmatpush1.bf16.msra.mxu0 %v471
      %534 = vmatprep.subr.bf16.mxu0 0
      %535 = vmatpush1.bf16.msra.mxu0 %v472
      %536 = vmatprep.subr.bf16.mxu0 0
      %537 = vmatpush1.bf16.msra.mxu0 %v473
      %538 = vmatprep.mubr.bf16.mxu0 %v339
      %539 = vmatmul.mubr.bf16.gmra.mrb[0].mxu0 %v338
      %v540 = vpop.f32.mrb[0].mxu0
      %v541 = vadd.f32 %v296, %v540
      %v542 = vpop.f32.mrb[0].mxu0
      %v543 = vpop.f32.mrb[0].mxu0
      %v544 = vadd.f32 %v296, %v543
      %v545 = vpop.f32.mrb[0].mxu0
      %546 = vmatprep.mubr.bf16.mxu0 %v342
      %547 = vmatmul.mubr.bf16.gmra.mrb[0].mxu0 %v341
      %v548 = vpop.f32.mrb[0].mxu0
      %v549 = vadd.f32 %v296, %v548
      %v550 = vpop.f32.mrb[0].mxu0
      %v551 = vpop.f32.mrb[0].mxu0
      %v552 = vadd.f32 %v296, %v551
      %v553 = vpop.f32.mrb[0].mxu0
      %554 = vmatprep.mubr.bf16.mxu0 %v345
      %555 = vmatmul.mubr.bf16.gmra.mrb[0].mxu0 %v344
      %v556 = vpop.f32.mrb[0].mxu0
      %v557 = vadd.f32 %v296, %v556
      %v558 = vpop.f32.mrb[0].mxu0
      %v559 = vpop.f32.mrb[0].mxu0
      %v560 = vadd.f32 %v296, %v559
      %v561 = vpop.f32.mrb[0].mxu0
      %562 = vmatprep.mubr.bf16.mxu0 %v348
      %563 = vmatmul.mubr.bf16.gmra.mrb[0].mxu0 %v347
      %v564 = vpop.f32.mrb[0].mxu0
      %v565 = vadd.f32 %v296, %v564
      %v566 = vpop.f32.mrb[0].mxu0
      %v567 = vpop.f32.mrb[0].mxu0
      %v568 = vadd.f32 %v296, %v567
      %v569 = vpop.f32.mrb[0].mxu0
      %570 = vdwg.mxu0
      %571 = vmatprep.subr.bf16.mxu0 0
      %572 = vmatpush1.bf16.msra.mxu0 %v474
      %573 = vmatprep.subr.bf16.mxu0 0
      %574 = vmatpush1.bf16.msra.mxu0 %v475
      %575 = vmatprep.subr.bf16.mxu0 0
      %576 = vmatpush1.bf16.msra.mxu0 %v476
      %577 = vmatprep.subr.bf16.mxu0 0
      %578 = vmatpush1.bf16.msra.mxu0 %v477
      %579 = vmatprep.subr.bf16.mxu0 0
      %580 = vmatpush1.bf16.msra.mxu0 %v478
      %581 = vmatprep.subr.bf16.mxu0 0
      %582 = vmatpush1.bf16.msra.mxu0 %v479
      %583 = vmatprep.subr.bf16.mxu0 0
      %584 = vmatpush1.bf16.msra.mxu0 %v480
      %585 = vmatprep.subr.bf16.mxu0 0
      %586 = vmatpush1.bf16.msra.mxu0 %v481
      %587 = vmatprep.subr.bf16.mxu0 0
      %588 = vmatpush1.bf16.msra.mxu0 0
      %589 = vmatprep.subr.bf16.mxu0 0
      %590 = vmatpush1.bf16.msra.mxu0 0
      %591 = vmatprep.subr.bf16.mxu0 0
      %592 = vmatpush1.bf16.msra.mxu0 0
      %593 = vmatprep.subr.bf16.mxu0 0
      %594 = vmatpush1.bf16.msra.mxu0 0
      %595 = vmatprep.subr.bf16.mxu0 0
      %596 = vmatpush1.bf16.msra.mxu0 0
      %597 = vmatprep.subr.bf16.mxu0 0
      %598 = vmatpush1.bf16.msra.mxu0 0
      %599 = vmatprep.subr.bf16.mxu0 0
      %600 = vmatpush1.bf16.msra.mxu0 0
      %601 = vmatprep.subr.bf16.mxu0 0
      %602 = vmatpush1.bf16.msra.mxu0 0
      %603 = vmatprep.mubr.bf16.mxu0 0
      %604 = vmatmul.mubr.bf16.gmra.mrb[0].mxu0 %v340
      %v605 = vpop.f32.mrb[0].mxu0
      %v606 = vadd.f32 %v541, %v605
      %v607 = vpop.f32.mrb[0].mxu0
      %v608 = vpop.f32.mrb[0].mxu0
      %v609 = vadd.f32 %v544, %v608
      %v610 = vpop.f32.mrb[0].mxu0
      %611 = vmatprep.mubr.bf16.mxu0 0
      %612 = vmatmul.mubr.bf16.gmra.mrb[0].mxu0 %v343
      %v613 = vpop.f32.mrb[0].mxu0
      %v614 = vadd.f32 %v549, %v613
      %v615 = vpop.f32.mrb[0].mxu0
      %v616 = vpop.f32.mrb[0].mxu0
      %v617 = vadd.f32 %v552, %v616
      %v618 = vpop.f32.mrb[0].mxu0
      %619 = vmatprep.mubr.bf16.mxu0 0
      %620 = vmatmul.mubr.bf16.gmra.mrb[0].mxu0 %v346
      %v621 = vpop.f32.mrb[0].mxu0
      %v622 = vadd.f32 %v557, %v621
      %v623 = vpop.f32.mrb[0].mxu0
      %v624 = vpop.f32.mrb[0].mxu0
      %v625 = vadd.f32 %v560, %v624
      %v626 = vpop.f32.mrb[0].mxu0
      %627 = vmatprep.mubr.bf16.mxu0 0
      %628 = vmatmul.mubr.bf16.gmra.mrb[0].mxu0 %v349
      %v629 = vpop.f32.mrb[0].mxu0
      %v630 = vadd.f32 %v565, %v629
      %v631 = vpop.f32.mrb[0].mxu0
      %v632 = vpop.f32.mrb[0].mxu0
      %v633 = vadd.f32 %v568, %v632
      %v634 = vpop.f32.mrb[0].mxu0
      %635 = vdwg.mxu0
      %v636 = vmax.f32 %v606, 0.0
      %v637 = vmax.f32 %v609, 0.0
      %v638 = vmax.f32 %v614, 0.0
      %v639 = vmax.f32 %v617, 0.0
      %v640 = vmax.f32 %v622, 0.0
      %v641 = vmax.f32 %v625, 0.0
      %v642 = vmax.f32 %v630, 0.0
      %v643 = vmax.f32 %v633, 0.0
      %v644 = vld [vmem:[%s218] sm:$0xff]
      %v645 = vld [vmem:[%s218 + $0x8] sm:$0xff]
      %v646 = vld [vmem:[%s218 + $0x10] sm:$0xff]
      %v647 = vld [vmem:[%s218 + $0x18] sm:$0xff]
      %v648 = vld [vmem:[%s218 + $0x20] sm:$0xff]
      %v649 = vld [vmem:[%s218 + $0x28] sm:$0xff]
      %v650 = vld [vmem:[%s218 + $0x30] sm:$0xff]
      %v651 = vld [vmem:[%s218 + $0x38] sm:$0xff]
      %v652 = vadd.f32 %v636, %v644
      %v653 = vadd.f32 %v637, %v645
      %v654 = vadd.f32 %v638, %v646
      %v655 = vadd.f32 %v639, %v647
      %v656 = vadd.f32 %v640, %v648
      %v657 = vadd.f32 %v641, %v649
      %v658 = vadd.f32 %v642, %v650
      %v659 = vadd.f32 %v643, %v651
      %660 = vst [vmem:[%s224] sm:$0xff] %v652
      %661 = vst [vmem:[%s224 + $0x8] sm:$0xff] %v653
      %662 = vst [vmem:[%s224 + $0x10] sm:$0xff] %v654
      %663 = vst [vmem:[%s224 + $0x18] sm:$0xff] %v655
      %664 = vst [vmem:[%s224 + $0x20] sm:$0xff] %v656
      %665 = vst [vmem:[%s224 + $0x28] sm:$0xff] %v657
      %666 = vst [vmem:[%s224 + $0x30] sm:$0xff] %v658
      %667 = vst [vmem:[%s224 + $0x38] sm:$0xff] %v659
      %s668 = smul.u32 8, %s15
      %p669 = scmp.lt.s32.totalorder %s668, 15
      %s670 = scalar_select %p669, %s668, 15
      %s671 = smul.addr %s670, 8
      %s672 = scalar_lea.vmem %s4, %s671
      // Predicated region
      $region37: #{forward.24} parent=35 // pred_check
        %p673 = pneg %p127
      $region38: #{forward.24} parent=35 // pred_check_branch
        %675 = sbr.rel (%p673) target = $region40
      $region39: #{forward.24} parent=35 // pred_region
        %s676 = smul.u32 8, %s15
      $region40: #{forward.24} parent=35 // pred_fallthru
        _
    $region36: #{forward.24} parent=5 // pred_fallthru
      _
    %p677 = scmp.le.s32.totalorder 2, %s10
    // Predicated region
    $region41: #{forward.24} parent=5 // pred_check
      %p678 = pneg %p677
    $region42: #{forward.24} parent=5 // pred_check_branch
      %680 = sbr.rel (%p678) target = $region44
    $region43: #{forward.24} parent=5 // pred_region
      %s681 = ssub.s32 %s10, 2
      // Predicated region
      $region45: #{forward.24} parent=43 // pred_check
        %p682 = pneg %p133
      $region46: #{forward.24} parent=43 // pred_check_branch
        %684 = sbr.rel (%p682) target = $region48
      $region47: #{forward.24} parent=43 // pred_region
        %s685 = smul.u32 8, %s16
        %p686 = scmp.lt.s32.totalorder %s685, 15
        %s687 = scalar_select %p686, %s685, 15
        %s688 = smul.addr %s687, 8
        %s689 = scalar_lea.vmem %s4, %s688
      $region48: #{forward.24} parent=43 // pred_fallthru
        _
    $region44: #{forward.24} parent=5 // pred_fallthru
      _
  $region6: #{forward.24} parent=0 // loop_footer
    %s14 = sadd.s32 1, %s10
  $region7: #{forward.24} parent=0 // loop_footer_branch
    %9 = sbr.rel target = $region3
  $region8: #{forward.24} parent=0 // loop_exit
    _

// kernel: forward.25
$region0: #{forward.25}
  #allocation0 [shape = 'u32[]', space=smem, size = 0x4, offset = 0x4, fixed_abs, tag = 'smem constant byte address 0x4 - core index']
  #allocation1 [shape = 'u32[144,128]{1,0:T(1,128)}', space=vmem, size = 0x12000, scoped, tag = 'internal scratch']
  %s0 = inlined_call_operand.vmem [shape: f32[4,32,128], index: 0, kind: input, shape index: {}]
  %s1 = inlined_call_operand.vmem [shape: f32[32,128], index: 1, kind: output, shape index: {}]
  %s2 = sld [smem:[#allocation0]]
  $region75: #{forward.25} parent=0
    _
  %s4 = ssub.s32 1, %s2
  %s5 = scalar_select 0, %s4, %s2
  $region1: #{forward.25} parent=0
    #allocation2 [shape = 'u8[65536]{0}', space=vmem, size = 0x10000, scoped, tag = 'input window, operand 0']
    loop: start=0, step=1, limit=4
    $region2: #{forward.25} parent=1 // loop_pre_header
      _
    $region3: #{forward.25} parent=1 // loop_header
      %s7 = sphi 0, %s11
      %p8 = scmp.ge.s32.totalorder %s7, 4
      %s17 = sphi 0, %s19
      %s20 = sphi 0, %s17
      %s21 = sphi 0, %s20
      %s37 = sphi 0, %s21
      %s43 = sphi 0, %s45
      %s46 = sphi 0, %s43
      %s47 = sphi 0, %s46
      %s63 = sphi 0, %s47
    $region4: #{forward.25} parent=1 // loop_header_branch
      %10 = sbr.rel (%p8) target = $region8
    $region5: #{forward.25} parent=1 // loop_body
      %s12 = ssub.s32 %s7, 1
      %s13 = ssub.s32 %s7, 2
      %s14 = sadd.s32 %s7, 1
      %s15 = ssub.s32 %s7, %s14
      %p16 = scmp.eq.s32.totalorder %s15, 0
      %s18 = sadd.s32 %s17, 1
      %s19 = scalar_select %p16, %s17, %s18
      %p22 = pneg %p16
      %p23 = scmp.eq.s32.totalorder %s7, 1
      %p24 = por %p22, %p23
      %p25 = scmp.ne.s32.totalorder %s17, %s20
      %p26 = scmp.eq.s32.totalorder %s7, 0
      %p27 = por %p25, %p26
      %p28 = scmp.ne.s32.totalorder %s17, %s20
      %p29 = scmp.eq.s32.totalorder %s12, 1
      %p30 = por %p28, %p29
      %p31 = scmp.ne.s32.totalorder %s20, %s21
      %p32 = scmp.eq.s32.totalorder %s12, 0
      %p33 = por %p31, %p32
      %p34 = scmp.ne.s32.totalorder %s20, %s21
      %p35 = scmp.eq.s32.totalorder %s13, 1
      %p36 = por %p34, %p35
      %p38 = scmp.ne.s32.totalorder %s21, %s37
      %p39 = scmp.eq.s32.totalorder %s13, 0
      %p40 = por %p38, %p39
      %s41 = ssub.s32 %s7, %s14
      %p42 = scmp.eq.s32.totalorder %s41, 0
      %s44 = sadd.s32 %s43, 1
      %s45 = scalar_select %p42, %s43, %s44
      %p48 = pneg %p42
      %p49 = scmp.eq.s32.totalorder %s7, 1
      %p50 = por %p48, %p49
      %p51 = scmp.ne.s32.totalorder %s43, %s46
      %p52 = scmp.eq.s32.totalorder %s7, 0
      %p53 = por %p51, %p52
      %p54 = scmp.ne.s32.totalorder %s43, %s46
      %p55 = scmp.eq.s32.totalorder %s12, 1
      %p56 = por %p54, %p55
      %p57 = scmp.ne.s32.totalorder %s46, %s47
      %p58 = scmp.eq.s32.totalorder %s12, 0
      %p59 = por %p57, %p58
      %p60 = scmp.ne.s32.totalorder %s46, %s47
      %p61 = scmp.eq.s32.totalorder %s13, 1
      %p62 = por %p60, %p61
      %p64 = scmp.ne.s32.totalorder %s47, %s63
      %p65 = scmp.eq.s32.totalorder %s13, 0
      %p66 = por %p64, %p65
      %p67 = scmp.le.s32.totalorder 1, %s7
      %p68 = scmp.lt.s32.totalorder %s7, 3
      %p69 = pnand %p67, %p68
      %p70 = pneg %p69
      // Predicated region
      $region9: #{forward.25} parent=5 // pred_check
        _
      $region10: #{forward.25} parent=5 // pred_check_branch
        %72 = sbr.rel (%p69) target = $region12
      $region11: #{forward.25} parent=5 // pred_region
        %s73 = ssub.s32 %s7, 1
      $region12: #{forward.25} parent=5 // pred_fallthru
        _
      %p74 = scmp.lt.s32.totalorder %s7, 2
      // Predicated region
      $region13: #{forward.25} parent=5 // pred_check
        %p75 = pneg %p74
      $region14: #{forward.25} parent=5 // pred_check_branch
        %77 = sbr.rel (%p75) target = $region16
      $region15: #{forward.25} parent=5 // pred_region
        // Predicated region
        $region17: #{forward.25} parent=15 // pred_check
          %p78 = pneg %p27
        $region18: #{forward.25} parent=15 // pred_check_branch
          %80 = sbr.rel (%p78) target = $region20
        $region19: #{forward.25} parent=15 // pred_region
          %s81 = sand.u32 %s17, 1
          %s82 = sand.u32 %s17, 1
          %s83 = smul.addr %s82, 64
          %s84 = scalar_lea.vmem [#allocation2], %s83
          %s85 = smul.u32 2, %s7
          %s86 = smul.addr %s85, 8
          %s87 = scalar_lea.vmem %s0, %s86
          // Predicated region
          $region21: #{forward.25} parent=19 // pred_check
            _
          $region22: #{forward.25} parent=19 // pred_check_branch
            %89 = sbr.rel (0) target = $region24
          $region23: #{forward.25} parent=19 // pred_region
            // Predicated region
            $region25: #{forward.25} parent=23 // pred_check
              _
            $region26: #{forward.25} parent=23 // pred_check_branch
              %91 = sbr.rel (0) target = $region28
            $region27: #{forward.25} parent=23 // pred_region
              // Predicated region
              $region40: #{forward.25} parent=27 // pred_check
                _
              $region41: #{forward.25} parent=27 // pred_check_branch
                %120 = sbr.rel (0) target = $region43
              $region42: #{forward.25} parent=27 // pred_region
                loop: start=0, step=1, limit=1
                $region44: #{forward.25} parent=42 // loop_pre_header
                  _
                $region45: #{forward.25} parent=42 // loop_header
                  %s122 = sphi 0, %s126
                  %p123 = scmp.ge.s32.totalorder %s122, 1
                  %s127 = sphi %s87, %s87
                  %s128 = sphi %s84, %s84
                $region46: #{forward.25} parent=42 // loop_header_branch
                  %125 = sbr.rel (%p123) target = $region50
                $region47: #{forward.25} parent=42 // loop_body
                  %v129 = vld [vmem:[%s127] sm:$0xff]
                  %130 = vst [vmem:[%s128] sm:$0xff] %v129
                  %v131 = vld [vmem:[%s127 + $0x8] sm:$0xff]
                  %132 = vst [vmem:[%s128 + $0x8] sm:$0xff] %v131
                  %v133 = vld [vmem:[%s127 + $0x20] sm:$0xff]
                  %134 = vst [vmem:[%s128 + $0x10] sm:$0xff] %v133
                  %v135 = vld [vmem:[%s127 + $0x28] sm:$0xff]
                  %136 = vst [vmem:[%s128 + $0x18] sm:$0xff] %v135
                  %v137 = vld [vmem:[%s127 + $0x40] sm:$0xff]
                  %138 = vst [vmem:[%s128 + $0x20] sm:$0xff] %v137
                  %v139 = vld [vmem:[%s127 + $0x48] sm:$0xff]
                  %140 = vst [vmem:[%s128 + $0x28] sm:$0xff] %v139
                  %v141 = vld [vmem:[%s127 + $0x60] sm:$0xff]
                  %142 = vst [vmem:[%s128 + $0x30] sm:$0xff] %v141
                  %v143 = vld [vmem:[%s127 + $0x68] sm:$0xff]
                  %144 = vst [vmem:[%s128 + $0x38] sm:$0xff] %v143
                $region48: #{forward.25} parent=42 // loop_footer
                  %s126 = sadd.s32 1, %s122
                $region49: #{forward.25} parent=42 // loop_footer_branch
                  %121 = sbr.rel target = $region45
                $region50: #{forward.25} parent=42 // loop_exit
                  _
              $region43: #{forward.25} parent=27 // pred_fallthru
                _
              // Predicated region
              $region51: #{forward.25} parent=27 // pred_check
                _
              $region52: #{forward.25} parent=27 // pred_check_branch
                %146 = sbr.rel target = $region54
              $region53: #{forward.25} parent=27 // pred_region
                _
              $region54: #{forward.25} parent=27 // pred_fallthru
                _
            $region28: #{forward.25} parent=23 // pred_fallthru
              _
            // Predicated region
            $region29: #{forward.25} parent=23 // pred_check
              _
            $region30: #{forward.25} parent=23 // pred_check_branch
              %93 = sbr.rel target = $region32
            $region31: #{forward.25} parent=23 // pred_region
              loop: start=0, step=1, limit=1
              $region33: #{forward.25} parent=31 // loop_pre_header
                _
              $region34: #{forward.25} parent=31 // loop_header
                %s96 = sphi 0, %s100
                %p97 = scmp.ge.s32.totalorder %s96, 1
                %s101 = sphi %s87, %s87
                %s102 = sphi %s84, %s84
              $region35: #{forward.25} parent=31 // loop_header_branch
                %99 = sbr.rel (%p97) target = $region39
              $region36: #{forward.25} parent=31 // loop_body
                %v103 = vld [vmem:[%s101] sm:$0xff]
                %104 = vst [vmem:[%s102] sm:$0xff] %v103
                %v105 = vld [vmem:[%s101 + $0x8] sm:$0xff]
                %106 = vst [vmem:[%s102 + $0x8] sm:$0xff] %v105
                %v107 = vld [vmem:[%s101 + $0x20] sm:$0xff]
                %108 = vst [vmem:[%s102 + $0x10] sm:$0xff] %v107
                %v109 = vld [vmem:[%s101 + $0x28] sm:$0xff]
                %110 = vst [vmem:[%s102 + $0x18] sm:$0xff] %v109
                %v111 = vld [vmem:[%s101 + $0x40] sm:$0xff]
                %112 = vst [vmem:[%s102 + $0x20] sm:$0xff] %v111
                %v113 = vld [vmem:[%s101 + $0x48] sm:$0xff]
                %114 = vst [vmem:[%s102 + $0x28] sm:$0xff] %v113
                %v115 = vld [vmem:[%s101 + $0x60] sm:$0xff]
                %116 = vst [vmem:[%s102 + $0x30] sm:$0xff] %v115
                %v117 = vld [vmem:[%s101 + $0x68] sm:$0xff]
                %118 = vst [vmem:[%s102 + $0x38] sm:$0xff] %v117
              $region37: #{forward.25} parent=31 // loop_footer
                %s100 = sadd.s32 1, %s96
              $region38: #{forward.25} parent=31 // loop_footer_branch
                %95 = sbr.rel target = $region34
              $region39: #{forward.25} parent=31 // loop_exit
                _
            $region32: #{forward.25} parent=23 // pred_fallthru
              _
          $region24: #{forward.25} parent=19 // pred_fallthru
            _
          %147 = vnop
        $region20: #{forward.25} parent=15 // pred_fallthru
          _
      $region16: #{forward.25} parent=5 // pred_fallthru
        _
      %p148 = scmp.le.s32.totalorder 1, %s7
      %p149 = scmp.lt.s32.totalorder %s7, 3
      %p150 = pnand %p148, %p149
      %p151 = pneg %p150
      // Predicated region
      $region55: #{forward.25} parent=5 // pred_check
        _
      $region56: #{forward.25} parent=5 // pred_check_branch
        %153 = sbr.rel (%p150) target = $region58
      $region57: #{forward.25} parent=5 // pred_region
        %s154 = ssub.s32 %s7, 1
        %s155 = sand.u32 %s20, 1
        %s156 = sand.u32 %s20, 1
        %s157 = smul.addr %s156, 64
        %s158 = scalar_lea.vmem [#allocation2], %s157
        // Predicated region
        $region59: #{forward.25} parent=57 // pred_check
          %p159 = pneg %p33
        $region60: #{forward.25} parent=57 // pred_check_branch
          %161 = sbr.rel (%p159) target = $region62
        $region61: #{forward.25} parent=57 // pred_region
          _
        $region62: #{forward.25} parent=57 // pred_fallthru
          _
        %s162 = sand.u32 %s20, 1
        %s163 = sand.u32 %s20, 1
        %s164 = smul.addr %s163, 64
        %s165 = scalar_lea.vmem [#allocation2], %s164
        %p166 = pneg %p33
        %p167 = pneg %p30
        %p168 = pneg %p59
        %p169 = pneg %p56
        %s170 = smul.u32 2, %s12
        %p171 = scmp.lt.s32.totalorder %s170, 3
        %s172 = scalar_select %p171, %s170, 3
        %s173 = smul.addr %s172, 8
        %s174 = scalar_lea.vmem %s1, %s173
        %s175 = smul.u32 2, %s12
        %s176 = smul.u32 2, %s12
        %p177 = scmp.lt.s32.totalorder %s176, 3
        %s178 = scalar_select %p177, %s176, 3
        %s179 = smul.addr %s178, 8
        %s180 = scalar_lea.vmem %s1, %s179
        %s181 = smul.u32 2, %s12
        %v182 = vld [vmem:[%s158] sm:$0xff]
        %v183 = vld [vmem:[%s158 + $0x8] sm:$0xff]
        %s184 = scalar_lea.vmem %s158, 16 [#allocation2]
        %v185 = vld [vmem:[%s184] sm:$0xff]
        %v186 = vld [vmem:[%s184 + $0x8] sm:$0xff]
        %v187 = vmax.f32 %v182, %v185
        %v188 = vmax.f32 %v183, %v186
        %s189 = scalar_lea.vmem %s158, 32 [#allocation2]
        %v190 = vld [vmem:[%s189] sm:$0xff]
        %v191 = vld [vmem:[%s189 + $0x8] sm:$0xff]
        %v192 = vmax.f32 %v187, %v190
        %v193 = vmax.f32 %v188, %v191
        %s194 = scalar_lea.vmem %s158, 48 [#allocation2]
        %v195 = vld [vmem:[%s194] sm:$0xff]
        %v196 = vld [vmem:[%s194 + $0x8] sm:$0xff]
        %v197 = vmax.f32 %v192, %v195
        %v198 = vmax.f32 %v193, %v196
        %199 = vst [vmem:[%s180] sm:$0xff] %v197
        %200 = vst [vmem:[%s180 + $0x8] sm:$0xff] %v198
        %s201 = smul.u32 2, %s12
        %p202 = scmp.lt.s32.totalorder %s201, 3
        %s203 = scalar_select %p202, %s201, 3
        %s204 = smul.addr %s203, 8
        %s205 = scalar_lea.vmem %s1, %s204
        // Predicated region
        $region63: #{forward.25} parent=57 // pred_check
          %p206 = pneg %p56
        $region64: #{forward.25} parent=57 // pred_check_branch
          %208 = sbr.rel (%p206) target = $region66
        $region65: #{forward.25} parent=57 // pred_region
          %s209 = smul.u32 2, %s12
        $region66: #{forward.25} parent=57 // pred_fallthru
          _
      $region58: #{forward.25} parent=5 // pred_fallthru
        _
      %p210 = scmp.le.s32.totalorder 2, %s7
      // Predicated region
      $region67: #{forward.25} parent=5 // pred_check
        %p211 = pneg %p210
      $region68: #{forward.25} parent=5 // pred_check_branch
        %213 = sbr.rel (%p211) target = $region70
      $region69: #{forward.25} parent=5 // pred_region
        %s214 = ssub.s32 %s7, 2
        // Predicated region
        $region71: #{forward.25} parent=69 // pred_check
          %p215 = pneg %p62
        $region72: #{forward.25} parent=69 // pred_check_branch
          %217 = sbr.rel (%p215) target = $region74
        $region73: #{forward.25} parent=69 // pred_region
          %s218 = smul.u32 2, %s13
          %p219 = scmp.lt.s32.totalorder %s218, 3
          %s220 = scalar_select %p219, %s218, 3
          %s221 = smul.addr %s220, 8
          %s222 = scalar_lea.vmem %s1, %s221
        $region74: #{forward.25} parent=69 // pred_fallthru
          _
      $region70: #{forward.25} parent=5 // pred_fallthru
        _
    $region6: #{forward.25} parent=1 // loop_footer
      %s11 = sadd.s32 1, %s7
    $region7: #{forward.25} parent=1 // loop_footer_branch
      %6 = sbr.rel target = $region3
    $region8: #{forward.25} parent=1 // loop_exit
      _

// kernel: forward.27
$region0: #{forward.27}
  #allocation0 [shape = 'u32[]', space=smem, size = 0x4, offset = 0x4, fixed_abs, tag = 'smem constant byte address 0x4 - core index']
  #allocation1 [shape = 'u32[144,128]{1,0:T(1,128)}', space=vmem, size = 0x12000, scoped, tag = 'internal scratch']
  %s0 = inlined_call_operand.vmem [shape: bf16[32,384], index: 0, kind: input, shape index: {}]
  %s1 = inlined_call_operand.vmem [shape: bf16[384,128], index: 1, kind: input, shape index: {}]
  %s2 = inlined_call_operand.vmem [shape: f32[1,128], index: 2, kind: input, shape index: {}]
  %s3 = inlined_call_operand.vmem [shape: f32[32,128], index: 3, kind: output, shape index: {}]
  %s4 = sld [smem:[#allocation0]]
  $region45: #{forward.27} parent=0
    _
  %s6 = ssub.s32 1, %s4
  %s7 = scalar_select 0, %s6, %s4
  loop: start=0, step=1, limit=4
  $region2: #{forward.27} parent=0 // loop_pre_header
    _
  $region3: #{forward.27} parent=0 // loop_header
    %s9 = sphi 0, %s13
    %p10 = scmp.ge.s32.totalorder %s9, 4
    %s19 = sphi 0, %s21
    %s22 = sphi 0, %s19
    %s23 = sphi 0, %s22
    %s39 = sphi 0, %s23
    %s43 = sphi 0, %s43
    %s45 = sphi 0, %s43
    %s46 = sphi 0, %s45
    %s60 = sphi 0, %s46
    %s64 = sphi 0, %s64
    %s66 = sphi 0, %s64
    %s67 = sphi 0, %s66
    %s81 = sphi 0, %s67
    %s87 = sphi 0, %s89
    %s90 = sphi 0, %s87
    %s91 = sphi 0, %s90
    %s107 = sphi 0, %s91
  $region4: #{forward.27} parent=0 // loop_header_branch
    %12 = sbr.rel (%p10) target = $region8
  $region5: #{forward.27} parent=0 // loop_body
    %s14 = ssub.s32 %s9, 1
    %s15 = ssub.s32 %s9, 2
    %s16 = sadd.s32 %s9, 1
    %s17 = ssub.s32 %s9, %s16
    %p18 = scmp.eq.s32.totalorder %s17, 0
    %s20 = sadd.s32 %s19, 1
    %s21 = scalar_select %p18, %s19, %s20
    %p24 = pneg %p18
    %p25 = scmp.eq.s32.totalorder %s9, 1
    %p26 = por %p24, %p25
    %p27 = scmp.ne.s32.totalorder %s19, %s22
    %p28 = scmp.eq.s32.totalorder %s9, 0
    %p29 = por %p27, %p28
    %p30 = scmp.ne.s32.totalorder %s19, %s22
    %p31 = scmp.eq.s32.totalorder %s14, 1
    %p32 = por %p30, %p31
    %p33 = scmp.ne.s32.totalorder %s22, %s23
    %p34 = scmp.eq.s32.totalorder %s14, 0
    %p35 = por %p33, %p34
    %p36 = scmp.ne.s32.totalorder %s22, %s23
    %p37 = scmp.eq.s32.totalorder %s15, 1
    %p38 = por %p36, %p37
    %p40 = scmp.ne.s32.totalorder %s23, %s39
    %p41 = scmp.eq.s32.totalorder %s15, 0
    %p42 = por %p40, %p41
    %s44 = sadd.s32 %s43, 1
    %p47 = scmp.eq.s32.totalorder %s9, 1
    %p48 = scmp.ne.s32.totalorder %s43, %s45
    %p49 = scmp.eq.s32.totalorder %s9, 0
    %p50 = por %p48, %p49
    %p51 = scmp.ne.s32.totalorder %s43, %s45
    %p52 = scmp.eq.s32.totalorder %s14, 1
    %p53 = por %p51, %p52
    %p54 = scmp.ne.s32.totalorder %s45, %s46
    %p55 = scmp.eq.s32.totalorder %s14, 0
    %p56 = por %p54, %p55
    %p57 = scmp.ne.s32.totalorder %s45, %s46
    %p58 = scmp.eq.s32.totalorder %s15, 1
    %p59 = por %p57, %p58
    %p61 = scmp.ne.s32.totalorder %s46, %s60
    %p62 = scmp.eq.s32.totalorder %s15, 0
    %p63 = por %p61, %p62
    %s65 = sadd.s32 %s64, 1
    %p68 = scmp.eq.s32.totalorder %s9, 1
    %p69 = scmp.ne.s32.totalorder %s64, %s66
    %p70 = scmp.eq.s32.totalorder %s9, 0
    %p71 = por %p69, %p70
    %p72 = scmp.ne.s32.totalorder %s64, %s66
    %p73 = scmp.eq.s32.totalorder %s14, 1
    %p74 = por %p72, %p73
    %p75 = scmp.ne.s32.totalorder %s66, %s67
    %p76 = scmp.eq.s32.totalorder %s14, 0
    %p77 = por %p75, %p76
    %p78 = scmp.ne.s32.totalorder %s66, %s67
    %p79 = scmp.eq.s32.totalorder %s15, 1
    %p80 = por %p78, %p79
    %p82 = scmp.ne.s32.totalorder %s67, %s81
    %p83 = scmp.eq.s32.totalorder %s15, 0
    %p84 = por %p82, %p83
    %s85 = ssub.s32 %s9, %s16
    %p86 = scmp.eq.s32.totalorder %s85, 0
    %s88 = sadd.s32 %s87, 1
    %s89 = scalar_select %p86, %s87, %s88
    %p92 = pneg %p86
    %p93 = scmp.eq.s32.totalorder %s9, 1
    %p94 = por %p92, %p93
    %p95 = scmp.ne.s32.totalorder %s87, %s90
    %p96 = scmp.eq.s32.totalorder %s9, 0
    %p97 = por %p95, %p96
    %p98 = scmp.ne.s32.totalorder %s87, %s90
    %p99 = scmp.eq.s32.totalorder %s14, 1
    %p100 = por %p98, %p99
    %p101 = scmp.ne.s32.totalorder %s90, %s91
    %p102 = scmp.eq.s32.totalorder %s14, 0
    %p103 = por %p101, %p102
    %p104 = scmp.ne.s32.totalorder %s90, %s91
    %p105 = scmp.eq.s32.totalorder %s15, 1
    %p106 = por %p104, %p105
    %p108 = scmp.ne.s32.totalorder %s91, %s107
    %p109 = scmp.eq.s32.totalorder %s15, 0
    %p110 = por %p108, %p109
    %p111 = scmp.le.s32.totalorder 1, %s9
    %p112 = scmp.lt.s32.totalorder %s9, 3
    %p113 = pnand %p111, %p112
    %p114 = pneg %p113
    // Predicated region
    $region9: #{forward.27} parent=5 // pred_check
      _
    $region10: #{forward.27} parent=5 // pred_check_branch
      %116 = sbr.rel (%p113) target = $region12
    $region11: #{forward.27} parent=5 // pred_region
      %s117 = ssub.s32 %s9, 1
      // Predicated region
      $region13: #{forward.27} parent=11 // pred_check
        %p118 = pneg %p56
      $region14: #{forward.27} parent=11 // pred_check_branch
        %120 = sbr.rel (%p118) target = $region16
      $region15: #{forward.27} parent=11 // pred_region
        _
      $region16: #{forward.27} parent=11 // pred_fallthru
        _
      // Predicated region
      $region17: #{forward.27} parent=11 // pred_check
        %p121 = pneg %p77
      $region18: #{forward.27} parent=11 // pred_check_branch
        %123 = sbr.rel (%p121) target = $region20
      $region19: #{forward.27} parent=11 // pred_region
        _
      $region20: #{forward.27} parent=11 // pred_fallthru
        _
    $region12: #{forward.27} parent=5 // pred_fallthru
      _
    %p124 = scmp.lt.s32.totalorder %s9, 2
    // Predicated region
    $region21: #{forward.27} parent=5 // pred_check
      %p125 = pneg %p124
    $region22: #{forward.27} parent=5 // pred_check_branch
      %127 = sbr.rel (%p125) target = $region24
    $region23: #{forward.27} parent=5 // pred_region
      // Predicated region
      $region25: #{forward.27} parent=23 // pred_check
        %p128 = pneg %p29
      $region26: #{forward.27} parent=23 // pred_check_branch
        %130 = sbr.rel (%p128) target = $region28
      $region27: #{forward.27} parent=23 // pred_region
        %s131 = smul.u32 2, %s9
        %p132 = scmp.lt.s32.totalorder %s131, 3
        %s133 = scalar_select %p132, %s131, 3
        %s134 = smul.addr %s133, 3
        %s135 = smul.addr %s134, 4
        %s136 = scalar_lea.vmem %s0, %s135
        %s137 = smul.u32 2, %s9
      $region28: #{forward.27} parent=23 // pred_fallthru
        _
    $region24: #{forward.27} parent=5 // pred_fallthru
      _
    %p138 = scmp.le.s32.totalorder 1, %s9
    %p139 = scmp.lt.s32.totalorder %s9, 3
    %p140 = pnand %p138, %p139
    %p141 = pneg %p140
    // Predicated region
    $region29: #{forward.27} parent=5 // pred_check
      _
    $region30: #{forward.27} parent=5 // pred_check_branch
      %143 = sbr.rel (%p140) target = $region32
    $region31: #{forward.27} parent=5 // pred_region
      %s144 = ssub.s32 %s9, 1
      %s145 = smul.u32 2, %s14
      %p146 = scmp.lt.s32.totalorder %s145, 3
      %s147 = scalar_select %p146, %s145, 3
      %s148 = smul.addr %s147, 3
      %s149 = smul.addr %s148, 4
      %s150 = scalar_lea.vmem %s0, %s149
      %p151 = pneg %p35
      %p152 = pneg %p32
      %p153 = pneg %p56
      %p154 = pneg %p53
      %p155 = pneg %p77
      %p156 = pneg %p74
      %p157 = pneg %p103
      %p158 = pneg %p100
      %s159 = smul.u32 2, %s14
      %p160 = scmp.lt.s32.totalorder %s159, 3
      %s161 = scalar_select %p160, %s159, 3
      %s162 = smul.addr %s161, 8
      %s163 = scalar_lea.vmem %s3, %s162
      %s164 = smul.u32 2, %s14
      %p165 = scmp.lt.s32.totalorder %s164, 3
      %s166 = scalar_select %p165, %s164, 3
      %s167 = smul.addr %s166, 3
      %s168 = smul.addr %s167, 4
      %s169 = scalar_lea.vmem %s0, %s168
      %s170 = smul.u32 2, %s14
      %s171 = smul.u32 2, %s14
      %p172 = scmp.lt.s32.totalorder %s171, 3
      %s173 = scalar_select %p172, %s171, 3
      %s174 = smul.addr %s173, 8
      %s175 = scalar_lea.vmem %s3, %s174
      %s176 = smul.u32 2, %s14
      %v178 = vld [vmem:[%s169] sm:$0xff]
      %v179 = vld [vmem:[%s169 + $0x8] sm:$0xf]
      %v180 = vld [vmem:[%s169 + $0xc] sm:$0xff]
      %v181 = vld [vmem:[%s169 + $0x14] sm:$0xf]
      %v182 = vld [vmem:[%s1] sm:$0xf]
      %v183 = vld [vmem:[%s1 + $0x4] sm:$0xf]
      %v184 = vld [vmem:[%s1 + $0x8] sm:$0xf]
      %v185 = vld [vmem:[%s1 + $0xc] sm:$0xf]
      %v186 = vld [vmem:[%s1 + $0x10] sm:$0xf]
      %v187 = vld [vmem:[%s1 + $0x14] sm:$0xf]
      %v188 = vld [vmem:[%s1 + $0x18] sm:$0xf]
      %v189 = vld [vmem:[%s1 + $0x1c] sm:$0xf]
      %v190 = vld [vmem:[%s1 + $0x20] sm:$0xf]
      %v191 = vld [vmem:[%s1 + $0x24] sm:$0xf]
      %v192 = vld [vmem:[%s1 + $0x28] sm:$0xf]
      %v193 = vld [vmem:[%s1 + $0x2c] sm:$0xf]
      %v194 = vld [vmem:[%s1 + $0x30] sm:$0xf]
      %v195 = vld [vmem:[%s1 + $0x34] sm:$0xf]
      %v196 = vld [vmem:[%s1 + $0x38] sm:$0xf]
      %v197 = vld [vmem:[%s1 + $0x3c] sm:$0xf]
      %v198 = vld [vmem:[%s1 + $0x40] sm:$0xf]
      %v199 = vld [vmem:[%s1 + $0x44] sm:$0xf]
      %v200 = vld [vmem:[%s1 + $0x48] sm:$0xf]
      %v201 = vld [vmem:[%s1 + $0x4c] sm:$0xf]
      %v202 = vld [vmem:[%s1 + $0x50] sm:$0xf]
      %v203 = vld [vmem:[%s1 + $0x54] sm:$0xf]
      %v204 = vld [vmem:[%s1 + $0x58] sm:$0xf]
      %v205 = vld [vmem:[%s1 + $0x5c] sm:$0xf]
      %v206 = vld [vmem:[%s1 + $0x60] sm:$0xf]
      %v207 = vld [vmem:[%s1 + $0x64] sm:$0xf]
      %v208 = vld [vmem:[%s1 + $0x68] sm:$0xf]
      %v209 = vld [vmem:[%s1 + $0x6c] sm:$0xf]
      %v210 = vld [vmem:[%s1 + $0x70] sm:$0xf]
      %v211 = vld [vmem:[%s1 + $0x74] sm:$0xf]
      %v212 = vld [vmem:[%s1 + $0x78] sm:$0xf]
      %v213 = vld [vmem:[%s1 + $0x7c] sm:$0xf]
      %v214 = vld [vmem:[%s1 + $0x80] sm:$0xf]
      %v215 = vld [vmem:[%s1 + $0x84] sm:$0xf]
      %v216 = vld [vmem:[%s1 + $0x88] sm:$0xf]
      %v217 = vld [vmem:[%s1 + $0x8c] sm:$0xf]
      %v218 = vld [vmem:[%s1 + $0x90] sm:$0xf]
      %v219 = vld [vmem:[%s1 + $0x94] sm:$0xf]
      %v220 = vld [vmem:[%s1 + $0x98] sm:$0xf]
      %v221 = vld [vmem:[%s1 + $0x9c] sm:$0xf]
      %v222 = vld [vmem:[%s1 + $0xa0] sm:$0xf]
      %v223 = vld [vmem:[%s1 + $0xa4] sm:$0xf]
      %v224 = vld [vmem:[%s1 + $0xa8] sm:$0xf]
      %v225 = vld [vmem:[%s1 + $0xac] sm:$0xf]
      %v226 = vld [vmem:[%s1 + $0xb0] sm:$0xf]
      %v227 = vld [vmem:[%s1 + $0xb4] sm:$0xf]
      %v228 = vld [vmem:[%s1 + $0xb8] sm:$0xf]
      %v229 = vld [vmem:[%s1 + $0xbc] sm:$0xf]
      %v230 = vld [vmem:[%s2] sm:$0x1]
      %v232 = vlaneseq
      %v233 = vshrl.u32 %v232, 7
      %v234 = vsub.s32 0, %v233
      %v235 = vrot.slane %v230, %v234
      %v241 = vunpack.c.l.b16 %v178
      %v242 = vunpack.c.h.b16 %v178
      %v243 = vunpack.c.l.b16 %v179
      %v244 = vunpack.c.l.b16 %v180
      %v245 = vunpack.c.h.b16 %v180
      %v246 = vunpack.c.l.b16 %v181
      %v247 = vpack.c.b16 %v244, %v241
      %v248 = vpack.c.b16 %v245, %v242
      %v249 = vpack.c.b16 %v246, %v243
      %v301 = vunpack.c.l.b16 %v182
      %v302 = vunpack.c.l.b16 %v183
      %v303 = vunpack.c.l.b16 %v184
      %v304 = vunpack.c.l.b16 %v185
      %v305 = vunpack.c.l.b16 %v186
      %v306 = vunpack.c.l.b16 %v187
      %v307 = vunpack.c.l.b16 %v188
      %v308 = vunpack.c.l.b16 %v189
      %v309 = vunpack.c.l.b16 %v190
      %v310 = vunpack.c.l.b16 %v191
      %v311 = vunpack.c.l.b16 %v192
      %v312 = vunpack.c.l.b16 %v193
      %v313 = vunpack.c.l.b16 %v194
      %v314 = vunpack.c.l.b16 %v195
      %v315 = vunpack.c.l.b16 %v196
      %v316 = vunpack.c.l.b16 %v197
      %v317 = vunpack.c.l.b16 %v198
      %v318 = vunpack.c.l.b16 %v199
      %v319 = vunpack.c.l.b16 %v200
      %v320 = vunpack.c.l.b16 %v201
      %v321 = vunpack.c.l.b16 %v202
      %v322 = vunpack.c.l.b16 %v203
      %v323 = vunpack.c.l.b16 %v204
      %v324 = vunpack.c.l.b16 %v205
      %v325 = vunpack.c.l.b16 %v206
      %v326 = vunpack.c.l.b16 %v207
      %v327 = vunpack.c.l.b16 %v208
      %v328 = vunpack.c.l.b16 %v209
      %v329 = vunpack.c.l.b16 %v210
      %v330 = vunpack.c.l.b16 %v211
      %v331 = vunpack.c.l.b16 %v212
      %v332 = vunpack.c.l.b16 %v213
      %v333 = vunpack.c.l.b16 %v214
      %v334 = vunpack.c.l.b16 %v215
      %v335 = vunpack.c.l.b16 %v216
      %v336 = vunpack.c.l.b16 %v217
      %v337 = vunpack.c.l.b16 %v218
      %v338 = vunpack.c.l.b16 %v219
      %v339 = vunpack.c.l.b16 %v220
      %v340 = vunpack.c.l.b16 %v221
      %v341 = vunpack.c.l.b16 %v222
      %v342 = vunpack.c.l.b16 %v223
      %v343 = vunpack.c.l.b16 %v224
      %v344 = vunpack.c.l.b16 %v225
      %v345 = vunpack.c.l.b16 %v226
      %v346 = vunpack.c.l.b16 %v227
      %v347 = vunpack.c.l.b16 %v228
      %v348 = vunpack.c.l.b16 %v229
      %v349 = vpack.c.b16 %v302, %v301
      %v350 = vpack.c.b16 %v304, %v303
      %v351 = vpack.c.b16 %v306, %v305
      %v352 = vpack.c.b16 %v308, %v307
      %v353 = vpack.c.b16 %v310, %v309
      %v354 = vpack.c.b16 %v312, %v311
      %v355 = vpack.c.b16 %v314, %v313
      %v356 = vpack.c.b16 %v316, %v315
      %v357 = vpack.c.b16 %v318, %v317
      %v358 = vpack.c.b16 %v320, %v319
      %v359 = vpack.c.b16 %v322, %v321
      %v360 = vpack.c.b16 %v324, %v323
      %v361 = vpack.c.b16 %v326, %v325
      %v362 = vpack.c.b16 %v328, %v327
      %v363 = vpack.c.b16 %v330, %v329
      %v364 = vpack.c.b16 %v332, %v331
      %v365 = vpack.c.b16 %v334, %v333
      %v366 = vpack.c.b16 %v336, %v335
      %v367 = vpack.c.b16 %v338, %v337
      %v368 = vpack.c.b16 %v340, %v339
      %v369 = vpack.c.b16 %v342, %v341
      %v370 = vpack.c.b16 %v344, %v343
      %v371 = vpack.c.b16 %v346, %v345
      %v372 = vpack.c.b16 %v348, %v347
      %397 = vmatprep.subr.bf16.mxu0 0
      %398 = vmatpush1.bf16.msra.mxu0 %v349
      %399 = vmatprep.subr.bf16.mxu0 0
      %400 = vmatpush1.bf16.msra.mxu0 %v350
      %401 = vmatprep.subr.bf16.mxu0 0
      %402 = vmatpush1.bf16.msra.mxu0 %v351
      %403 = vmatprep.subr.bf16.mxu0 0
      %404 = vmatpush1.bf16.msra.mxu0 %v352
      %405 = vmatprep.subr.bf16.mxu0 0
      %406 = vmatpush1.bf16.msra.mxu0 %v353
      %407 = vmatprep.subr.bf16.mxu0 0
      %408 = vmatpush1.bf16.msra.mxu0 %v354
      %409 = vmatprep.subr.bf16.mxu0 0
      %410 = vmatpush1.bf16.msra.mxu0 %v355
      %411 = vmatprep.subr.bf16.mxu0 0
      %412 = vmatpush1.bf16.msra.mxu0 %v356
      %413 = vmatprep.subr.bf16.mxu0 0
      %414 = vmatpush1.bf16.msra.mxu0 %v357
      %415 = vmatprep.subr.bf16.mxu0 0
      %416 = vmatpush1.bf16.msra.mxu0 %v358
      %417 = vmatprep.subr.bf16.mxu0 0
      %418 = vmatpush1.bf16.msra.mxu0 %v359
      %419 = vmatprep.subr.bf16.mxu0 0
      %420 = vmatpush1.bf16.msra.mxu0 %v360
      %421 = vmatprep.subr.bf16.mxu0 0
      %422 = vmatpush1.bf16.msra.mxu0 %v361
      %423 = vmatprep.subr.bf16.mxu0 0
      %424 = vmatpush1.bf16.msra.mxu0 %v362
      %425 = vmatprep.subr.bf16.mxu0 0
      %426 = vmatpush1.bf16.msra.mxu0 %v363
      %427 = vmatprep.subr.bf16.mxu0 0
      %428 = vmatpush1.bf16.msra.mxu0 %v364
      %429 = vmatprep.mubr.bf16.mxu0 %v248
      %430 = vmatmul.mubr.bf16.gmra.mrb[0].mxu0 %v247
      %v431 = vpop.f32.mrb[0].mxu0
      %v432 = vadd.f32 %v235, %v431
      %v433 = vpop.f32.mrb[0].mxu0
      %v434 = vpop.f32.mrb[0].mxu0
      %v435 = vadd.f32 %v235, %v434
      %v436 = vpop.f32.mrb[0].mxu0
      %437 = vdwg.mxu0
      %438 = vmatprep.subr.bf16.mxu0 0
      %439 = vmatpush1.bf16.msra.mxu0 %v365
      %440 = vmatprep.subr.bf16.mxu0 0
      %441 = vmatpush1.bf16.msra.mxu0 %v366
      %442 = vmatprep.subr.bf16.mxu0 0
      %443 = vmatpush1.bf16.msra.mxu0 %v367
      %444 = vmatprep.subr.bf16.mxu0 0
      %445 = vmatpush1.bf16.msra.mxu0 %v368
      %446 = vmatprep.subr.bf16.mxu0 0
      %447 = vmatpush1.bf16.msra.mxu0 %v369
      %448 = vmatprep.subr.bf16.mxu0 0
      %449 = vmatpush1.bf16.msra.mxu0 %v370
      %450 = vmatprep.subr.bf16.mxu0 0
      %451 = vmatpush1.bf16.msra.mxu0 %v371
      %452 = vmatprep.subr.bf16.mxu0 0
      %453 = vmatpush1.bf16.msra.mxu0 %v372
      %454 = vmatprep.subr.bf16.mxu0 0
      %455 = vmatpush1.bf16.msra.mxu0 0
      %456 = vmatprep.subr.bf16.mxu0 0
      %457 = vmatpush1.bf16.msra.mxu0 0
      %458 = vmatprep.subr.bf16.mxu0 0
      %459 = vmatpush1.bf16.msra.mxu0 0
      %460 = vmatprep.subr.bf16.mxu0 0
      %461 = vmatpush1.bf16.msra.mxu0 0
      %462 = vmatprep.subr.bf16.mxu0 0
      %463 = vmatpush1.bf16.msra.mxu0 0
      %464 = vmatprep.subr.bf16.mxu0 0
      %465 = vmatpush1.bf16.msra.mxu0 0
      %466 = vmatprep.subr.bf16.mxu0 0
      %467 = vmatpush1.bf16.msra.mxu0 0
      %468 = vmatprep.subr.bf16.mxu0 0
      %469 = vmatpush1.bf16.msra.mxu0 0
      %470 = vmatprep.mubr.bf16.mxu0 0
      %471 = vmatmul.mubr.bf16.gmra.mrb[0].mxu0 %v249
      %v472 = vpop.f32.mrb[0].mxu0
      %v473 = vadd.f32 %v432, %v472
      %v474 = vpop.f32.mrb[0].mxu0
      %v475 = vpop.f32.mrb[0].mxu0
      %v476 = vadd.f32 %v435, %v475
      %v477 = vpop.f32.mrb[0].mxu0
      %478 = vdwg.mxu0
      %v479 = vmax.f32 %v473, 0.0
      %v480 = vmax.f32 %v476, 0.0
      %481 = vst [vmem:[%s175] sm:$0xff] %v479
      %482 = vst [vmem:[%s175 + $0x8] sm:$0xff] %v480
      %s483 = smul.u32 2, %s14
      %p484 = scmp.lt.s32.totalorder %s483, 3
      %s485 = scalar_select %p484, %s483, 3
      %s486 = smul.addr %s485, 8
      %s487 = scalar_lea.vmem %s3, %s486
      // Predicated region
      $region33: #{forward.27} parent=31 // pred_check
        %p488 = pneg %p100
      $region34: #{forward.27} parent=31 // pred_check_branch
        %490 = sbr.rel (%p488) target = $region36
      $region35: #{forward.27} parent=31 // pred_region
        %s491 = smul.u32 2, %s14
      $region36: #{forward.27} parent=31 // pred_fallthru
        _
    $region32: #{forward.27} parent=5 // pred_fallthru
      _
    %p492 = scmp.le.s32.totalorder 2, %s9
    // Predicated region
    $region37: #{forward.27} parent=5 // pred_check
      %p493 = pneg %p492
    $region38: #{forward.27} parent=5 // pred_check_branch
      %495 = sbr.rel (%p493) target = $region40
    $region39: #{forward.27} parent=5 // pred_region
      %s496 = ssub.s32 %s9, 2
      // Predicated region
      $region41: #{forward.27} parent=39 // pred_check
        %p497 = pneg %p106
      $region42: #{forward.27} parent=39 // pred_check_branch
        %499 = sbr.rel (%p497) target = $region44
      $region43: #{forward.27} parent=39 // pred_region
        %s500 = smul.u32 2, %s15
        %p501 = scmp.lt.s32.totalorder %s500, 3
        %s502 = scalar_select %p501, %s500, 3
        %s503 = smul.addr %s502, 8
        %s504 = scalar_lea.vmem %s3, %s503
      $region44: #{forward.27} parent=39 // pred_fallthru
        _
    $region40: #{forward.27} parent=5 // pred_fallthru
      _
  $region6: #{forward.27} parent=0 // loop_footer
    %s13 = sadd.s32 1, %s9
  $region7: #{forward.27} parent=0 // loop_footer_branch
    %8 = sbr.rel target = $region3
  $region8: #{forward.27} parent=0 // loop_exit
    _

// kernel: forward.26
$region0: #{forward.26}
  #allocation0 [shape = 'u32[]', space=smem, size = 0x4, offset = 0x4, fixed_abs, tag = 'smem constant byte address 0x4 - core index']
  #allocation1 [shape = 'u32[144,128]{1,0:T(1,128)}', space=vmem, size = 0x12000, scoped, tag = 'internal scratch']
  %s0 = inlined_call_operand.vmem [shape: bf16[32,128], index: 0, kind: input, shape index: {}]
  %s1 = inlined_call_operand.vmem [shape: bf16[128,128], index: 1, kind: input, shape index: {}]
  %s2 = inlined_call_operand.vmem [shape: f32[1,128], index: 2, kind: input, shape index: {}]
  %s3 = inlined_call_operand.vmem [shape: f32[32,128], index: 3, kind: output, shape index: {}]
  %s4 = sld [smem:[#allocation0]]
  $region45: #{forward.26} parent=0
    _
  %s6 = ssub.s32 1, %s4
  %s7 = scalar_select 0, %s6, %s4
  loop: start=0, step=1, limit=4
  $region2: #{forward.26} parent=0 // loop_pre_header
    _
  $region3: #{forward.26} parent=0 // loop_header
    %s9 = sphi 0, %s13
    %p10 = scmp.ge.s32.totalorder %s9, 4
    %s19 = sphi 0, %s21
    %s22 = sphi 0, %s19
    %s23 = sphi 0, %s22
    %s39 = sphi 0, %s23
    %s43 = sphi 0, %s43
    %s45 = sphi 0, %s43
    %s46 = sphi 0, %s45
    %s60 = sphi 0, %s46
    %s64 = sphi 0, %s64
    %s66 = sphi 0, %s64
    %s67 = sphi 0, %s66
    %s81 = sphi 0, %s67
    %s87 = sphi 0, %s89
    %s90 = sphi 0, %s87
    %s91 = sphi 0, %s90
    %s107 = sphi 0, %s91
  $region4: #{forward.26} parent=0 // loop_header_branch
    %12 = sbr.rel (%p10) target = $region8
  $region5: #{forward.26} parent=0 // loop_body
    %s14 = ssub.s32 %s9, 1
    %s15 = ssub.s32 %s9, 2
    %s16 = sadd.s32 %s9, 1
    %s17 = ssub.s32 %s9, %s16
    %p18 = scmp.eq.s32.totalorder %s17, 0
    %s20 = sadd.s32 %s19, 1
    %s21 = scalar_select %p18, %s19, %s20
    %p24 = pneg %p18
    %p25 = scmp.eq.s32.totalorder %s9, 1
    %p26 = por %p24, %p25
    %p27 = scmp.ne.s32.totalorder %s19, %s22
    %p28 = scmp.eq.s32.totalorder %s9, 0
    %p29 = por %p27, %p28
    %p30 = scmp.ne.s32.totalorder %s19, %s22
    %p31 = scmp.eq.s32.totalorder %s14, 1
    %p32 = por %p30, %p31
    %p33 = scmp.ne.s32.totalorder %s22, %s23
    %p34 = scmp.eq.s32.totalorder %s14, 0
    %p35 = por %p33, %p34
    %p36 = scmp.ne.s32.totalorder %s22, %s23
    %p37 = scmp.eq.s32.totalorder %s15, 1
    %p38 = por %p36, %p37
    %p40 = scmp.ne.s32.totalorder %s23, %s39
    %p41 = scmp.eq.s32.totalorder %s15, 0
    %p42 = por %p40, %p41
    %s44 = sadd.s32 %s43, 1
    %p47 = scmp.eq.s32.totalorder %s9, 1
    %p48 = scmp.ne.s32.totalorder %s43, %s45
    %p49 = scmp.eq.s32.totalorder %s9, 0
    %p50 = por %p48, %p49
    %p51 = scmp.ne.s32.totalorder %s43, %s45
    %p52 = scmp.eq.s32.totalorder %s14, 1
    %p53 = por %p51, %p52
    %p54 = scmp.ne.s32.totalorder %s45, %s46
    %p55 = scmp.eq.s32.totalorder %s14, 0
    %p56 = por %p54, %p55
    %p57 = scmp.ne.s32.totalorder %s45, %s46
    %p58 = scmp.eq.s32.totalorder %s15, 1
    %p59 = por %p57, %p58
    %p61 = scmp.ne.s32.totalorder %s46, %s60
    %p62 = scmp.eq.s32.totalorder %s15, 0
    %p63 = por %p61, %p62
    %s65 = sadd.s32 %s64, 1
    %p68 = scmp.eq.s32.totalorder %s9, 1
    %p69 = scmp.ne.s32.totalorder %s64, %s66
    %p70 = scmp.eq.s32.totalorder %s9, 0
    %p71 = por %p69, %p70
    %p72 = scmp.ne.s32.totalorder %s64, %s66
    %p73 = scmp.eq.s32.totalorder %s14, 1
    %p74 = por %p72, %p73
    %p75 = scmp.ne.s32.totalorder %s66, %s67
    %p76 = scmp.eq.s32.totalorder %s14, 0
    %p77 = por %p75, %p76
    %p78 = scmp.ne.s32.totalorder %s66, %s67
    %p79 = scmp.eq.s32.totalorder %s15, 1
    %p80 = por %p78, %p79
    %p82 = scmp.ne.s32.totalorder %s67, %s81
    %p83 = scmp.eq.s32.totalorder %s15, 0
    %p84 = por %p82, %p83
    %s85 = ssub.s32 %s9, %s16
    %p86 = scmp.eq.s32.totalorder %s85, 0
    %s88 = sadd.s32 %s87, 1
    %s89 = scalar_select %p86, %s87, %s88
    %p92 = pneg %p86
    %p93 = scmp.eq.s32.totalorder %s9, 1
    %p94 = por %p92, %p93
    %p95 = scmp.ne.s32.totalorder %s87, %s90
    %p96 = scmp.eq.s32.totalorder %s9, 0
    %p97 = por %p95, %p96
    %p98 = scmp.ne.s32.totalorder %s87, %s90
    %p99 = scmp.eq.s32.totalorder %s14, 1
    %p100 = por %p98, %p99
    %p101 = scmp.ne.s32.totalorder %s90, %s91
    %p102 = scmp.eq.s32.totalorder %s14, 0
    %p103 = por %p101, %p102
    %p104 = scmp.ne.s32.totalorder %s90, %s91
    %p105 = scmp.eq.s32.totalorder %s15, 1
    %p106 = por %p104, %p105
    %p108 = scmp.ne.s32.totalorder %s91, %s107
    %p109 = scmp.eq.s32.totalorder %s15, 0
    %p110 = por %p108, %p109
    %p111 = scmp.le.s32.totalorder 1, %s9
    %p112 = scmp.lt.s32.totalorder %s9, 3
    %p113 = pnand %p111, %p112
    %p114 = pneg %p113
    // Predicated region
    $region9: #{forward.26} parent=5 // pred_check
      _
    $region10: #{forward.26} parent=5 // pred_check_branch
      %116 = sbr.rel (%p113) target = $region12
    $region11: #{forward.26} parent=5 // pred_region
      %s117 = ssub.s32 %s9, 1
      // Predicated region
      $region13: #{forward.26} parent=11 // pred_check
        %p118 = pneg %p56
      $region14: #{forward.26} parent=11 // pred_check_branch
        %120 = sbr.rel (%p118) target = $region16
      $region15: #{forward.26} parent=11 // pred_region
        _
      $region16: #{forward.26} parent=11 // pred_fallthru
        _
      // Predicated region
      $region17: #{forward.26} parent=11 // pred_check
        %p121 = pneg %p77
      $region18: #{forward.26} parent=11 // pred_check_branch
        %123 = sbr.rel (%p121) target = $region20
      $region19: #{forward.26} parent=11 // pred_region
        _
      $region20: #{forward.26} parent=11 // pred_fallthru
        _
    $region12: #{forward.26} parent=5 // pred_fallthru
      _
    %p124 = scmp.lt.s32.totalorder %s9, 2
    // Predicated region
    $region21: #{forward.26} parent=5 // pred_check
      %p125 = pneg %p124
    $region22: #{forward.26} parent=5 // pred_check_branch
      %127 = sbr.rel (%p125) target = $region24
    $region23: #{forward.26} parent=5 // pred_region
      // Predicated region
      $region25: #{forward.26} parent=23 // pred_check
        %p128 = pneg %p29
      $region26: #{forward.26} parent=23 // pred_check_branch
        %130 = sbr.rel (%p128) target = $region28
      $region27: #{forward.26} parent=23 // pred_region
        %s131 = smul.u32 2, %s9
        %p132 = scmp.lt.s32.totalorder %s131, 3
        %s133 = scalar_select %p132, %s131, 3
        %s134 = smul.addr %s133, 4
        %s135 = scalar_lea.vmem %s0, %s134
        %s136 = smul.u32 2, %s9
      $region28: #{forward.26} parent=23 // pred_fallthru
        _
    $region24: #{forward.26} parent=5 // pred_fallthru
      _
    %p137 = scmp.le.s32.totalorder 1, %s9
    %p138 = scmp.lt.s32.totalorder %s9, 3
    %p139 = pnand %p137, %p138
    %p140 = pneg %p139
    // Predicated region
    $region29: #{forward.26} parent=5 // pred_check
      _
    $region30: #{forward.26} parent=5 // pred_check_branch
      %142 = sbr.rel (%p139) target = $region32
    $region31: #{forward.26} parent=5 // pred_region
      %s143 = ssub.s32 %s9, 1
      %s144 = smul.u32 2, %s14
      %p145 = scmp.lt.s32.totalorder %s144, 3
      %s146 = scalar_select %p145, %s144, 3
      %s147 = smul.addr %s146, 4
      %s148 = scalar_lea.vmem %s0, %s147
      %p149 = pneg %p35
      %p150 = pneg %p32
      %p151 = pneg %p56
      %p152 = pneg %p53
      %p153 = pneg %p77
      %p154 = pneg %p74
      %p155 = pneg %p103
      %p156 = pneg %p100
      %s157 = smul.u32 2, %s14
      %p158 = scmp.lt.s32.totalorder %s157, 3
      %s159 = scalar_select %p158, %s157, 3
      %s160 = smul.addr %s159, 8
      %s161 = scalar_lea.vmem %s3, %s160
      %s162 = smul.u32 2, %s14
      %p163 = scmp.lt.s32.totalorder %s162, 3
      %s164 = scalar_select %p163, %s162, 3
      %s165 = smul.addr %s164, 4
      %s166 = scalar_lea.vmem %s0, %s165
      %s167 = smul.u32 2, %s14
      %s168 = smul.u32 2, %s14
      %p169 = scmp.lt.s32.totalorder %s168, 3
      %s170 = scalar_select %p169, %s168, 3
      %s171 = smul.addr %s170, 8
      %s172 = scalar_lea.vmem %s3, %s171
      %s173 = smul.u32 2, %s14
      %v175 = vld [vmem:[%s166] sm:$0xf]
      %v176 = vld [vmem:[%s166 + $0x4] sm:$0xf]
      %v177 = vld [vmem:[%s1] sm:$0xf]
      %v178 = vld [vmem:[%s1 + $0x4] sm:$0xf]
      %v179 = vld [vmem:[%s1 + $0x8] sm:$0xf]
      %v180 = vld [vmem:[%s1 + $0xc] sm:$0xf]
      %v181 = vld [vmem:[%s1 + $0x10] sm:$0xf]
      %v182 = vld [vmem:[%s1 + $0x14] sm:$0xf]
      %v183 = vld [vmem:[%s1 + $0x18] sm:$0xf]
      %v184 = vld [vmem:[%s1 + $0x1c] sm:$0xf]
      %v185 = vld [vmem:[%s1 + $0x20] sm:$0xf]
      %v186 = vld [vmem:[%s1 + $0x24] sm:$0xf]
      %v187 = vld [vmem:[%s1 + $0x28] sm:$0xf]
      %v188 = vld [vmem:[%s1 + $0x2c] sm:$0xf]
      %v189 = vld [vmem:[%s1 + $0x30] sm:$0xf]
      %v190 = vld [vmem:[%s1 + $0x34] sm:$0xf]
      %v191 = vld [vmem:[%s1 + $0x38] sm:$0xf]
      %v192 = vld [vmem:[%s1 + $0x3c] sm:$0xf]
      %v193 = vld [vmem:[%s2] sm:$0x1]
      %v195 = vlaneseq
      %v196 = vshrl.u32 %v195, 7
      %v197 = vsub.s32 0, %v196
      %v198 = vrot.slane %v193, %v197
      %v202 = vunpack.c.l.b16 %v175
      %v203 = vunpack.c.l.b16 %v176
      %v204 = vpack.c.b16 %v203, %v202
      %v222 = vunpack.c.l.b16 %v177
      %v223 = vunpack.c.l.b16 %v178
      %v224 = vunpack.c.l.b16 %v179
      %v225 = vunpack.c.l.b16 %v180
      %v226 = vunpack.c.l.b16 %v181
      %v227 = vunpack.c.l.b16 %v182
      %v228 = vunpack.c.l.b16 %v183
      %v229 = vunpack.c.l.b16 %v184
      %v230 = vunpack.c.l.b16 %v185
      %v231 = vunpack.c.l.b16 %v186
      %v232 = vunpack.c.l.b16 %v187
      %v233 = vunpack.c.l.b16 %v188
      %v234 = vunpack.c.l.b16 %v189
      %v235 = vunpack.c.l.b16 %v190
      %v236 = vunpack.c.l.b16 %v191
      %v237 = vunpack.c.l.b16 %v192
      %v238 = vpack.c.b16 %v223, %v222
      %v239 = vpack.c.b16 %v225, %v224
      %v240 = vpack.c.b16 %v227, %v226
      %v241 = vpack.c.b16 %v229, %v228
      %v242 = vpack.c.b16 %v231, %v230
      %v243 = vpack.c.b16 %v233, %v232
      %v244 = vpack.c.b16 %v235, %v234
      %v245 = vpack.c.b16 %v237, %v236
      %254 = vmatprep.subr.bf16.mxu0 0
      %255 = vmatpush1.bf16.msra.mxu0 %v238
      %256 = vmatprep.subr.bf16.mxu0 0
      %257 = vmatpush1.bf16.msra.mxu0 %v239
      %258 = vmatprep.subr.bf16.mxu0 0
      %259 = vmatpush1.bf16.msra.mxu0 %v240
      %260 = vmatprep.subr.bf16.mxu0 0
      %261 = vmatpush1.bf16.msra.mxu0 %v241
      %262 = vmatprep.subr.bf16.mxu0 0
      %263 = vmatpush1.bf16.msra.mxu0 %v242
      %264 = vmatprep.subr.bf16.mxu0 0
      %265 = vmatpush1.bf16.msra.mxu0 %v243
      %266 = vmatprep.subr.bf16.mxu0 0
      %267 = vmatpush1.bf16.msra.mxu0 %v244
      %268 = vmatprep.subr.bf16.mxu0 0
      %269 = vmatpush1.bf16.msra.mxu0 %v245
      %270 = vmatprep.subr.bf16.mxu0 0
      %271 = vmatpush1.bf16.msra.mxu0 0
      %272 = vmatprep.subr.bf16.mxu0 0
      %273 = vmatpush1.bf16.msra.mxu0 0
      %274 = vmatprep.subr.bf16.mxu0 0
      %275 = vmatpush1.bf16.msra.mxu0 0
      %276 = vmatprep.subr.bf16.mxu0 0
      %277 = vmatpush1.bf16.msra.mxu0 0
      %278 = vmatprep.subr.bf16.mxu0 0
      %279 = vmatpush1.bf16.msra.mxu0 0
      %280 = vmatprep.subr.bf16.mxu0 0
      %281 = vmatpush1.bf16.msra.mxu0 0
      %282 = vmatprep.subr.bf16.mxu0 0
      %283 = vmatpush1.bf16.msra.mxu0 0
      %284 = vmatprep.subr.bf16.mxu0 0
      %285 = vmatpush1.bf16.msra.mxu0 0
      %286 = vmatprep.mubr.bf16.mxu0 0
      %287 = vmatmul.mubr.bf16.gmra.mrb[0].mxu0 %v204
      %v288 = vpop.f32.mrb[0].mxu0
      %v289 = vadd.f32 %v198, %v288
      %v290 = vpop.f32.mrb[0].mxu0
      %v291 = vpop.f32.mrb[0].mxu0
      %v292 = vadd.f32 %v198, %v291
      %v293 = vpop.f32.mrb[0].mxu0
      %294 = vdwg.mxu0
      %295 = vst [vmem:[%s172] sm:$0xff] %v289
      %296 = vst [vmem:[%s172 + $0x8] sm:$0xff] %v292
      %s297 = smul.u32 2, %s14
      %p298 = scmp.lt.s32.totalorder %s297, 3
      %s299 = scalar_select %p298, %s297, 3
      %s300 = smul.addr %s299, 8
      %s301 = scalar_lea.vmem %s3, %s300
      // Predicated region
      $region33: #{forward.26} parent=31 // pred_check
        %p302 = pneg %p100
      $region34: #{forward.26} parent=31 // pred_check_branch
        %304 = sbr.rel (%p302) target = $region36
      $region35: #{forward.26} parent=31 // pred_region
        %s305 = smul.u32 2, %s14
      $region36: #{forward.26} parent=31 // pred_fallthru
        _
    $region32: #{forward.26} parent=5 // pred_fallthru
      _
    %p306 = scmp.le.s32.totalorder 2, %s9
    // Predicated region
    $region37: #{forward.26} parent=5 // pred_check
      %p307 = pneg %p306
    $region38: #{forward.26} parent=5 // pred_check_branch
      %309 = sbr.rel (%p307) target = $region40
    $region39: #{forward.26} parent=5 // pred_region
      %s310 = ssub.s32 %s9, 2
      // Predicated region
      $region41: #{forward.26} parent=39 // pred_check
        %p311 = pneg %p106
      $region42: #{forward.26} parent=39 // pred_check_branch
        %313 = sbr.rel (%p311) target = $region44
      $region43: #{forward.26} parent=39 // pred_region
        %s314 = smul.u32 2, %s15
        %p315 = scmp.lt.s32.totalorder %s314, 3
        %s316 = scalar_select %p315, %s314, 3
        %s317 = smul.addr %s316, 8
        %s318 = scalar_lea.vmem %s3, %s317
      $region44: #{forward.26} parent=39 // pred_fallthru
        _
    $region40: #{forward.26} parent=5 // pred_fallthru
      _
  $region6: #{forward.26} parent=0 // loop_footer
    %s13 = sadd.s32 1, %s9
  $region7: #{forward.26} parent=0 // loop_footer_branch
    %8 = sbr.rel target = $region3
  $region8: #{forward.26} parent=0 // loop_exit
    _

// kernel: forward.28
$region0: #{forward.28}
  #allocation0 [shape = 'u32[]', space=smem, size = 0x4, offset = 0x4, fixed_abs, tag = 'smem constant byte address 0x4 - core index']
  #allocation1 [shape = 'u32[144,128]{1,0:T(1,128)}', space=vmem, size = 0x12000, scoped, tag = 'internal scratch']
  %s0 = inlined_call_operand.vmem [shape: bf16[32,512], index: 0, kind: input, shape index: {}]
  %s1 = inlined_call_operand.vmem [shape: bf16[512,128], index: 1, kind: input, shape index: {}]
  %s2 = inlined_call_operand.vmem [shape: f32[1,128], index: 2, kind: input, shape index: {}]
  %s3 = inlined_call_operand.vmem [shape: f32[32,128], index: 3, kind: input, shape index: {}]
  %s4 = inlined_call_operand.vmem [shape: f32[32,128], index: 4, kind: output, shape index: {}]
  %s5 = sld [smem:[#allocation0]]
  $region49: #{forward.28} parent=0
    _
  %s7 = ssub.s32 1, %s5
  %s8 = scalar_select 0, %s7, %s5
  loop: start=0, step=1, limit=4
  $region2: #{forward.28} parent=0 // loop_pre_header
    _
  $region3: #{forward.28} parent=0 // loop_header
    %s10 = sphi 0, %s14
    %p11 = scmp.ge.s32.totalorder %s10, 4
    %s20 = sphi 0, %s22
    %s23 = sphi 0, %s20
    %s24 = sphi 0, %s23
    %s40 = sphi 0, %s24
    %s44 = sphi 0, %s44
    %s46 = sphi 0, %s44
    %s47 = sphi 0, %s46
    %s61 = sphi 0, %s47
    %s65 = sphi 0, %s65
    %s67 = sphi 0, %s65
    %s68 = sphi 0, %s67
    %s82 = sphi 0, %s68
    %s88 = sphi 0, %s90
    %s91 = sphi 0, %s88
    %s92 = sphi 0, %s91
    %s108 = sphi 0, %s92
    %s114 = sphi 0, %s116
    %s117 = sphi 0, %s114
    %s118 = sphi 0, %s117
    %s134 = sphi 0, %s118
  $region4: #{forward.28} parent=0 // loop_header_branch
    %13 = sbr.rel (%p11) target = $region8
  $region5: #{forward.28} parent=0 // loop_body
    %s15 = ssub.s32 %s10, 1
    %s16 = ssub.s32 %s10, 2
    %s17 = sadd.s32 %s10, 1
    %s18 = ssub.s32 %s10, %s17
    %p19 = scmp.eq.s32.totalorder %s18, 0
    %s21 = sadd.s32 %s20, 1
    %s22 = scalar_select %p19, %s20, %s21
    %p25 = pneg %p19
    %p26 = scmp.eq.s32.totalorder %s10, 1
    %p27 = por %p25, %p26
    %p28 = scmp.ne.s32.totalorder %s20, %s23
    %p29 = scmp.eq.s32.totalorder %s10, 0
    %p30 = por %p28, %p29
    %p31 = scmp.ne.s32.totalorder %s20, %s23
    %p32 = scmp.eq.s32.totalorder %s15, 1
    %p33 = por %p31, %p32
    %p34 = scmp.ne.s32.totalorder %s23, %s24
    %p35 = scmp.eq.s32.totalorder %s15, 0
    %p36 = por %p34, %p35
    %p37 = scmp.ne.s32.totalorder %s23, %s24
    %p38 = scmp.eq.s32.totalorder %s16, 1
    %p39 = por %p37, %p38
    %p41 = scmp.ne.s32.totalorder %s24, %s40
    %p42 = scmp.eq.s32.totalorder %s16, 0
    %p43 = por %p41, %p42
    %s45 = sadd.s32 %s44, 1
    %p48 = scmp.eq.s32.totalorder %s10, 1
    %p49 = scmp.ne.s32.totalorder %s44, %s46
    %p50 = scmp.eq.s32.totalorder %s10, 0
    %p51 = por %p49, %p50
    %p52 = scmp.ne.s32.totalorder %s44, %s46
    %p53 = scmp.eq.s32.totalorder %s15, 1
    %p54 = por %p52, %p53
    %p55 = scmp.ne.s32.totalorder %s46, %s47
    %p56 = scmp.eq.s32.totalorder %s15, 0
    %p57 = por %p55, %p56
    %p58 = scmp.ne.s32.totalorder %s46, %s47
    %p59 = scmp.eq.s32.totalorder %s16, 1
    %p60 = por %p58, %p59
    %p62 = scmp.ne.s32.totalorder %s47, %s61
    %p63 = scmp.eq.s32.totalorder %s16, 0
    %p64 = por %p62, %p63
    %s66 = sadd.s32 %s65, 1
    %p69 = scmp.eq.s32.totalorder %s10, 1
    %p70 = scmp.ne.s32.totalorder %s65, %s67
    %p71 = scmp.eq.s32.totalorder %s10, 0
    %p72 = por %p70, %p71
    %p73 = scmp.ne.s32.totalorder %s65, %s67
    %p74 = scmp.eq.s32.totalorder %s15, 1
    %p75 = por %p73, %p74
    %p76 = scmp.ne.s32.totalorder %s67, %s68
    %p77 = scmp.eq.s32.totalorder %s15, 0
    %p78 = por %p76, %p77
    %p79 = scmp.ne.s32.totalorder %s67, %s68
    %p80 = scmp.eq.s32.totalorder %s16, 1
    %p81 = por %p79, %p80
    %p83 = scmp.ne.s32.totalorder %s68, %s82
    %p84 = scmp.eq.s32.totalorder %s16, 0
    %p85 = por %p83, %p84
    %s86 = ssub.s32 %s10, %s17
    %p87 = scmp.eq.s32.totalorder %s86, 0
    %s89 = sadd.s32 %s88, 1
    %s90 = scalar_select %p87, %s88, %s89
    %p93 = pneg %p87
    %p94 = scmp.eq.s32.totalorder %s10, 1
    %p95 = por %p93, %p94
    %p96 = scmp.ne.s32.totalorder %s88, %s91
    %p97 = scmp.eq.s32.totalorder %s10, 0
    %p98 = por %p96, %p97
    %p99 = scmp.ne.s32.totalorder %s88, %s91
    %p100 = scmp.eq.s32.totalorder %s15, 1
    %p101 = por %p99, %p100
    %p102 = scmp.ne.s32.totalorder %s91, %s92
    %p103 = scmp.eq.s32.totalorder %s15, 0
    %p104 = por %p102, %p103
    %p105 = scmp.ne.s32.totalorder %s91, %s92
    %p106 = scmp.eq.s32.totalorder %s16, 1
    %p107 = por %p105, %p106
    %p109 = scmp.ne.s32.totalorder %s92, %s108
    %p110 = scmp.eq.s32.totalorder %s16, 0
    %p111 = por %p109, %p110
    %s112 = ssub.s32 %s10, %s17
    %p113 = scmp.eq.s32.totalorder %s112, 0
    %s115 = sadd.s32 %s114, 1
    %s116 = scalar_select %p113, %s114, %s115
    %p119 = pneg %p113
    %p120 = scmp.eq.s32.totalorder %s10, 1
    %p121 = por %p119, %p120
    %p122 = scmp.ne.s32.totalorder %s114, %s117
    %p123 = scmp.eq.s32.totalorder %s10, 0
    %p124 = por %p122, %p123
    %p125 = scmp.ne.s32.totalorder %s114, %s117
    %p126 = scmp.eq.s32.totalorder %s15, 1
    %p127 = por %p125, %p126
    %p128 = scmp.ne.s32.totalorder %s117, %s118
    %p129 = scmp.eq.s32.totalorder %s15, 0
    %p130 = por %p128, %p129
    %p131 = scmp.ne.s32.totalorder %s117, %s118
    %p132 = scmp.eq.s32.totalorder %s16, 1
    %p133 = por %p131, %p132
    %p135 = scmp.ne.s32.totalorder %s118, %s134
    %p136 = scmp.eq.s32.totalorder %s16, 0
    %p137 = por %p135, %p136
    %p138 = scmp.le.s32.totalorder 1, %s10
    %p139 = scmp.lt.s32.totalorder %s10, 3
    %p140 = pnand %p138, %p139
    %p141 = pneg %p140
    // Predicated region
    $region9: #{forward.28} parent=5 // pred_check
      _
    $region10: #{forward.28} parent=5 // pred_check_branch
      %143 = sbr.rel (%p140) target = $region12
    $region11: #{forward.28} parent=5 // pred_region
      %s144 = ssub.s32 %s10, 1
      // Predicated region
      $region13: #{forward.28} parent=11 // pred_check
        %p145 = pneg %p57
      $region14: #{forward.28} parent=11 // pred_check_branch
        %147 = sbr.rel (%p145) target = $region16
      $region15: #{forward.28} parent=11 // pred_region
        _
      $region16: #{forward.28} parent=11 // pred_fallthru
        _
      // Predicated region
      $region17: #{forward.28} parent=11 // pred_check
        %p148 = pneg %p78
      $region18: #{forward.28} parent=11 // pred_check_branch
        %150 = sbr.rel (%p148) target = $region20
      $region19: #{forward.28} parent=11 // pred_region
        _
      $region20: #{forward.28} parent=11 // pred_fallthru
        _
    $region12: #{forward.28} parent=5 // pred_fallthru
      _
    %p151 = scmp.lt.s32.totalorder %s10, 2
    // Predicated region
    $region21: #{forward.28} parent=5 // pred_check
      %p152 = pneg %p151
    $region22: #{forward.28} parent=5 // pred_check_branch
      %154 = sbr.rel (%p152) target = $region24
    $region23: #{forward.28} parent=5 // pred_region
      // Predicated region
      $region25: #{forward.28} parent=23 // pred_check
        %p155 = pneg %p30
      $region26: #{forward.28} parent=23 // pred_check_branch
        %157 = sbr.rel (%p155) target = $region28
      $region27: #{forward.28} parent=23 // pred_region
        %s158 = smul.u32 2, %s10
        %p159 = scmp.lt.s32.totalorder %s158, 3
        %s160 = scalar_select %p159, %s158, 3
        %s161 = smul.addr %s160, 4
        %s162 = smul.addr %s161, 4
        %s163 = scalar_lea.vmem %s0, %s162
        %s164 = smul.u32 2, %s10
      $region28: #{forward.28} parent=23 // pred_fallthru
        _
      // Predicated region
      $region29: #{forward.28} parent=23 // pred_check
        %p165 = pneg %p98
      $region30: #{forward.28} parent=23 // pred_check_branch
        %167 = sbr.rel (%p165) target = $region32
      $region31: #{forward.28} parent=23 // pred_region
        %s168 = smul.u32 2, %s10
        %p169 = scmp.lt.s32.totalorder %s168, 3
        %s170 = scalar_select %p169, %s168, 3
        %s171 = smul.addr %s170, 8
        %s172 = scalar_lea.vmem %s3, %s171
        %s173 = smul.u32 2, %s10
      $region32: #{forward.28} parent=23 // pred_fallthru
        _
    $region24: #{forward.28} parent=5 // pred_fallthru
      _
    %p174 = scmp.le.s32.totalorder 1, %s10
    %p175 = scmp.lt.s32.totalorder %s10, 3
    %p176 = pnand %p174, %p175
    %p177 = pneg %p176
    // Predicated region
    $region33: #{forward.28} parent=5 // pred_check
      _
    $region34: #{forward.28} parent=5 // pred_check_branch
      %179 = sbr.rel (%p176) target = $region36
    $region35: #{forward.28} parent=5 // pred_region
      %s180 = ssub.s32 %s10, 1
      %s181 = smul.u32 2, %s15
      %p182 = scmp.lt.s32.totalorder %s181, 3
      %s183 = scalar_select %p182, %s181, 3
      %s184 = smul.addr %s183, 4
      %s185 = smul.addr %s184, 4
      %s186 = scalar_lea.vmem %s0, %s185
      %p187 = pneg %p36
      %p188 = pneg %p33
      %p189 = pneg %p57
      %p190 = pneg %p54
      %p191 = pneg %p78
      %p192 = pneg %p75
      %s193 = smul.u32 2, %s15
      %p194 = scmp.lt.s32.totalorder %s193, 3
      %s195 = scalar_select %p194, %s193, 3
      %s196 = smul.addr %s195, 8
      %s197 = scalar_lea.vmem %s3, %s196
      %p198 = pneg %p104
      %p199 = pneg %p101
      %p200 = pneg %p130
      %p201 = pneg %p127
      %s202 = smul.u32 2, %s15
      %p203 = scmp.lt.s32.totalorder %s202, 3
      %s204 = scalar_select %p203, %s202, 3
      %s205 = smul.addr %s204, 8
      %s206 = scalar_lea.vmem %s4, %s205
      %s207 = smul.u32 2, %s15
      %p208 = scmp.lt.s32.totalorder %s207, 3
      %s209 = scalar_select %p208, %s207, 3
      %s210 = smul.addr %s209, 4
      %s211 = smul.addr %s210, 4
      %s212 = scalar_lea.vmem %s0, %s211
      %s213 = smul.u32 2, %s15
      %s214 = smul.u32 2, %s15
      %p215 = scmp.lt.s32.totalorder %s214, 3
      %s216 = scalar_select %p215, %s214, 3
      %s217 = smul.addr %s216, 8
      %s218 = scalar_lea.vmem %s3, %s217
      %s219 = smul.u32 2, %s15
      %s220 = smul.u32 2, %s15
      %p221 = scmp.lt.s32.totalorder %s220, 3
      %s222 = scalar_select %p221, %s220, 3
      %s223 = smul.addr %s222, 8
      %s224 = scalar_lea.vmem %s4, %s223
      %s225 = smul.u32 2, %s15
      %v227 = vld [vmem:[%s212] sm:$0xff]
      %v228 = vld [vmem:[%s212 + $0x8] sm:$0xff]
      %v229 = vld [vmem:[%s212 + $0x10] sm:$0xff]
      %v230 = vld [vmem:[%s212 + $0x18] sm:$0xff]
      %v231 = vld [vmem:[%s1] sm:$0xf]
      %v232 = vld [vmem:[%s1 + $0x4] sm:$0xf]
      %v233 = vld [vmem:[%s1 + $0x8] sm:$0xf]
      %v234 = vld [vmem:[%s1 + $0xc] sm:$0xf]
      %v235 = vld [vmem:[%s1 + $0x10] sm:$0xf]
      %v236 = vld [vmem:[%s1 + $0x14] sm:$0xf]
      %v237 = vld [vmem:[%s1 + $0x18] sm:$0xf]
      %v238 = vld [vmem:[%s1 + $0x1c] sm:$0xf]
      %v239 = vld [vmem:[%s1 + $0x20] sm:$0xf]
      %v240 = vld [vmem:[%s1 + $0x24] sm:$0xf]
      %v241 = vld [vmem:[%s1 + $0x28] sm:$0xf]
      %v242 = vld [vmem:[%s1 + $0x2c] sm:$0xf]
      %v243 = vld [vmem:[%s1 + $0x30] sm:$0xf]
      %v244 = vld [vmem:[%s1 + $0x34] sm:$0xf]
      %v245 = vld [vmem:[%s1 + $0x38] sm:$0xf]
      %v246 = vld [vmem:[%s1 + $0x3c] sm:$0xf]
      %v247 = vld [vmem:[%s1 + $0x40] sm:$0xf]
      %v248 = vld [vmem:[%s1 + $0x44] sm:$0xf]
      %v249 = vld [vmem:[%s1 + $0x48] sm:$0xf]
      %v250 = vld [vmem:[%s1 + $0x4c] sm:$0xf]
      %v251 = vld [vmem:[%s1 + $0x50] sm:$0xf]
      %v252 = vld [vmem:[%s1 + $0x54] sm:$0xf]
      %v253 = vld [vmem:[%s1 + $0x58] sm:$0xf]
      %v254 = vld [vmem:[%s1 + $0x5c] sm:$0xf]
      %v255 = vld [vmem:[%s1 + $0x60] sm:$0xf]
      %v256 = vld [vmem:[%s1 + $0x64] sm:$0xf]
      %v257 = vld [vmem:[%s1 + $0x68] sm:$0xf]
      %v258 = vld [vmem:[%s1 + $0x6c] sm:$0xf]
      %v259 = vld [vmem:[%s1 + $0x70] sm:$0xf]
      %v260 = vld [vmem:[%s1 + $0x74] sm:$0xf]
      %v261 = vld [vmem:[%s1 + $0x78] sm:$0xf]
      %v262 = vld [vmem:[%s1 + $0x7c] sm:$0xf]
      %v263 = vld [vmem:[%s1 + $0x80] sm:$0xf]
      %v264 = vld [vmem:[%s1 + $0x84] sm:$0xf]
      %v265 = vld [vmem:[%s1 + $0x88] sm:$0xf]
      %v266 = vld [vmem:[%s1 + $0x8c] sm:$0xf]
      %v267 = vld [vmem:[%s1 + $0x90] sm:$0xf]
      %v268 = vld [vmem:[%s1 + $0x94] sm:$0xf]
      %v269 = vld [vmem:[%s1 + $0x98] sm:$0xf]
      %v270 = vld [vmem:[%s1 + $0x9c] sm:$0xf]
      %v271 = vld [vmem:[%s1 + $0xa0] sm:$0xf]
      %v272 = vld [vmem:[%s1 + $0xa4] sm:$0xf]
      %v273 = vld [vmem:[%s1 + $0xa8] sm:$0xf]
      %v274 = vld [vmem:[%s1 + $0xac] sm:$0xf]
      %v275 = vld [vmem:[%s1 + $0xb0] sm:$0xf]
      %v276 = vld [vmem:[%s1 + $0xb4] sm:$0xf]
      %v277 = vld [vmem:[%s1 + $0xb8] sm:$0xf]
      %v278 = vld [vmem:[%s1 + $0xbc] sm:$0xf]
      %v279 = vld [vmem:[%s1 + $0xc0] sm:$0xf]
      %v280 = vld [vmem:[%s1 + $0xc4] sm:$0xf]
      %v281 = vld [vmem:[%s1 + $0xc8] sm:$0xf]
      %v282 = vld [vmem:[%s1 + $0xcc] sm:$0xf]
      %v283 = vld [vmem:[%s1 + $0xd0] sm:$0xf]
      %v284 = vld [vmem:[%s1 + $0xd4] sm:$0xf]
      %v285 = vld [vmem:[%s1 + $0xd8] sm:$0xf]
      %v286 = vld [vmem:[%s1 + $0xdc] sm:$0xf]
      %v287 = vld [vmem:[%s1 + $0xe0] sm:$0xf]
      %v288 = vld [vmem:[%s1 + $0xe4] sm:$0xf]
      %v289 = vld [vmem:[%s1 + $0xe8] sm:$0xf]
      %v290 = vld [vmem:[%s1 + $0xec] sm:$0xf]
      %v291 = vld [vmem:[%s1 + $0xf0] sm:$0xf]
      %v292 = vld [vmem:[%s1 + $0xf4] sm:$0xf]
      %v293 = vld [vmem:[%s1 + $0xf8] sm:$0xf]
      %v294 = vld [vmem:[%s1 + $0xfc] sm:$0xf]
      %v295 = vld [vmem:[%s2] sm:$0x1]
      %v297 = vlaneseq
      %v298 = vshrl.u32 %v297, 7
      %v299 = vsub.s32 0, %v298
      %v300 = vrot.slane %v295, %v299
      %v306 = vunpack.c.l.b16 %v227
      %v307 = vunpack.c.h.b16 %v227
      %v308 = vunpack.c.l.b16 %v228
      %v309 = vunpack.c.h.b16 %v228
      %v310 = vunpack.c.l.b16 %v229
      %v311 = vunpack.c.h.b16 %v229
      %v312 = vunpack.c.l.b16 %v230
      %v313 = vunpack.c.h.b16 %v230
      %v314 = vpack.c.b16 %v310, %v306
      %v315 = vpack.c.b16 %v311, %v307
      %v316 = vpack.c.b16 %v312, %v308
      %v317 = vpack.c.b16 %v313, %v309
      %v386 = vunpack.c.l.b16 %v231
      %v387 = vunpack.c.l.b16 %v232
      %v388 = vunpack.c.l.b16 %v233
      %v389 = vunpack.c.l.b16 %v234
      %v390 = vunpack.c.l.b16 %v235
      %v391 = vunpack.c.l.b16 %v236
      %v392 = vunpack.c.l.b16 %v237
      %v393 = vunpack.c.l.b16 %v238
      %v394 = vunpack.c.l.b16 %v239
      %v395 = vunpack.c.l.b16 %v240
      %v396 = vunpack.c.l.b16 %v241
      %v397 = vunpack.c.l.b16 %v242
      %v398 = vunpack.c.l.b16 %v243
      %v399 = vunpack.c.l.b16 %v244
      %v400 = vunpack.c.l.b16 %v245
      %v401 = vunpack.c.l.b16 %v246
      %v402 = vunpack.c.l.b16 %v247
      %v403 = vunpack.c.l.b16 %v248
      %v404 = vunpack.c.l.b16 %v249
      %v405 = vunpack.c.l.b16 %v250
      %v406 = vunpack.c.l.b16 %v251
      %v407 = vunpack.c.l.b16 %v252
      %v408 = vunpack.c.l.b16 %v253
      %v409 = vunpack.c.l.b16 %v254
      %v410 = vunpack.c.l.b16 %v255
      %v411 = vunpack.c.l.b16 %v256
      %v412 = vunpack.c.l.b16 %v257
      %v413 = vunpack.c.l.b16 %v258
      %v414 = vunpack.c.l.b16 %v259
      %v415 = vunpack.c.l.b16 %v260
      %v416 = vunpack.c.l.b16 %v261
      %v417 = vunpack.c.l.b16 %v262
      %v418 = vunpack.c.l.b16 %v263
      %v419 = vunpack.c.l.b16 %v264
      %v420 = vunpack.c.l.b16 %v265
      %v421 = vunpack.c.l.b16 %v266
      %v422 = vunpack.c.l.b16 %v267
      %v423 = vunpack.c.l.b16 %v268
      %v424 = vunpack.c.l.b16 %v269
      %v425 = vunpack.c.l.b16 %v270
      %v426 = vunpack.c.l.b16 %v271
      %v427 = vunpack.c.l.b16 %v272
      %v428 = vunpack.c.l.b16 %v273
      %v429 = vunpack.c.l.b16 %v274
      %v430 = vunpack.c.l.b16 %v275
      %v431 = vunpack.c.l.b16 %v276
      %v432 = vunpack.c.l.b16 %v277
      %v433 = vunpack.c.l.b16 %v278
      %v434 = vunpack.c.l.b16 %v279
      %v435 = vunpack.c.l.b16 %v280
      %v436 = vunpack.c.l.b16 %v281
      %v437 = vunpack.c.l.b16 %v282
      %v438 = vunpack.c.l.b16 %v283
      %v439 = vunpack.c.l.b16 %v284
      %v440 = vunpack.c.l.b16 %v285
      %v441 = vunpack.c.l.b16 %v286
      %v442 = vunpack.c.l.b16 %v287
      %v443 = vunpack.c.l.b16 %v288
      %v444 = vunpack.c.l.b16 %v289
      %v445 = vunpack.c.l.b16 %v290
      %v446 = vunpack.c.l.b16 %v291
      %v447 = vunpack.c.l.b16 %v292
      %v448 = vunpack.c.l.b16 %v293
      %v449 = vunpack.c.l.b16 %v294
      %v450 = vpack.c.b16 %v387, %v386
      %v451 = vpack.c.b16 %v389, %v388
      %v452 = vpack.c.b16 %v391, %v390
      %v453 = vpack.c.b16 %v393, %v392
      %v454 = vpack.c.b16 %v395, %v394
      %v455 = vpack.c.b16 %v397, %v396
      %v456 = vpack.c.b16 %v399, %v398
      %v457 = vpack.c.b16 %v401, %v400
      %v458 = vpack.c.b16 %v403, %v402
      %v459 = vpack.c.b16 %v405, %v404
      %v460 = vpack.c.b16 %v407, %v406
      %v461 = vpack.c.b16 %v409, %v408
      %v462 = vpack.c.b16 %v411, %v410
      %v463 = vpack.c.b16 %v413, %v412
      %v464 = vpack.c.b16 %v415, %v414
      %v465 = vpack.c.b16 %v417, %v416
      %v466 = vpack.c.b16 %v419, %v418
      %v467 = vpack.c.b16 %v421, %v420
      %v468 = vpack.c.b16 %v423, %v422
      %v469 = vpack.c.b16 %v425, %v424
      %v470 = vpack.c.b16 %v427, %v426
      %v471 = vpack.c.b16 %v429, %v428
      %v472 = vpack.c.b16 %v431, %v430
      %v473 = vpack.c.b16 %v433, %v432
      %v474 = vpack.c.b16 %v435, %v434
      %v475 = vpack.c.b16 %v437, %v436
      %v476 = vpack.c.b16 %v439, %v438
      %v477 = vpack.c.b16 %v441, %v440
      %v478 = vpack.c.b16 %v443, %v442
      %v479 = vpack.c.b16 %v445, %v444
      %v480 = vpack.c.b16 %v447, %v446
      %v481 = vpack.c.b16 %v449, %v448
      %514 = vmatprep.subr.bf16.mxu0 0
      %515 = vmatpush1.bf16.msra.mxu0 %v450
      %516 = vmatprep.subr.bf16.mxu0 0
      %517 = vmatpush1.bf16.msra.mxu0 %v451
      %518 = vmatprep.subr.bf16.mxu0 0
      %519 = vmatpush1.bf16.msra.mxu0 %v452
      %520 = vmatprep.subr.bf16.mxu0 0
      %521 = vmatpush1.bf16.msra.mxu0 %v453
      %522 = vmatprep.subr.bf16.mxu0 0
      %523 = vmatpush1.bf16.msra.mxu0 %v454
      %524 = vmatprep.subr.bf16.mxu0 0
      %525 = vmatpush1.bf16.msra.mxu0 %v455
      %526 = vmatprep.subr.bf16.mxu0 0
      %527 = vmatpush1.bf16.msra.mxu0 %v456
      %528 = vmatprep.subr.bf16.mxu0 0
      %529 = vmatpush1.bf16.msra.mxu0 %v457
      %530 = vmatprep.subr.bf16.mxu0 0
      %531 = vmatpush1.bf16.msra.mxu0 %v458
      %532 = vmatprep.subr.bf16.mxu0 0
      %533 = vmatpush1.bf16.msra.mxu0 %v459
      %534 = vmatprep.subr.bf16.mxu0 0
      %535 = vmatpush1.bf16.msra.mxu0 %v460
      %536 = vmatprep.subr.bf16.mxu0 0
      %537 = vmatpush1.bf16.msra.mxu0 %v461
      %538 = vmatprep.subr.bf16.mxu0 0
      %539 = vmatpush1.bf16.msra.mxu0 %v462
      %540 = vmatprep.subr.bf16.mxu0 0
      %541 = vmatpush1.bf16.msra.mxu0 %v463
      %542 = vmatprep.subr.bf16.mxu0 0
      %543 = vmatpush1.bf16.msra.mxu0 %v464
      %544 = vmatprep.subr.bf16.mxu0 0
      %545 = vmatpush1.bf16.msra.mxu0 %v465
      %546 = vmatprep.mubr.bf16.mxu0 %v315
      %547 = vmatmul.mubr.bf16.gmra.mrb[0].mxu0 %v314
      %v548 = vpop.f32.mrb[0].mxu0
      %v549 = vadd.f32 %v300, %v548
      %v550 = vpop.f32.mrb[0].mxu0
      %v551 = vpop.f32.mrb[0].mxu0
      %v552 = vadd.f32 %v300, %v551
      %v553 = vpop.f32.mrb[0].mxu0
      %554 = vdwg.mxu0
      %555 = vmatprep.subr.bf16.mxu0 0
      %556 = vmatpush1.bf16.msra.mxu0 %v466
      %557 = vmatprep.subr.bf16.mxu0 0
      %558 = vmatpush1.bf16.msra.mxu0 %v467
      %559 = vmatprep.subr.bf16.mxu0 0
      %560 = vmatpush1.bf16.msra.mxu0 %v468
      %561 = vmatprep.subr.bf16.mxu0 0
      %562 = vmatpush1.bf16.msra.mxu0 %v469
      %563 = vmatprep.subr.bf16.mxu0 0
      %564 = vmatpush1.bf16.msra.mxu0 %v470
      %565 = vmatprep.subr.bf16.mxu0 0
      %566 = vmatpush1.bf16.msra.mxu0 %v471
      %567 = vmatprep.subr.bf16.mxu0 0
      %568 = vmatpush1.bf16.msra.mxu0 %v472
      %569 = vmatprep.subr.bf16.mxu0 0
      %570 = vmatpush1.bf16.msra.mxu0 %v473
      %571 = vmatprep.subr.bf16.mxu0 0
      %572 = vmatpush1.bf16.msra.mxu0 %v474
      %573 = vmatprep.subr.bf16.mxu0 0
      %574 = vmatpush1.bf16.msra.mxu0 %v475
      %575 = vmatprep.subr.bf16.mxu0 0
      %576 = vmatpush1.bf16.msra.mxu0 %v476
      %577 = vmatprep.subr.bf16.mxu0 0
      %578 = vmatpush1.bf16.msra.mxu0 %v477
      %579 = vmatprep.subr.bf16.mxu0 0
      %580 = vmatpush1.bf16.msra.mxu0 %v478
      %581 = vmatprep.subr.bf16.mxu0 0
      %582 = vmatpush1.bf16.msra.mxu0 %v479
      %583 = vmatprep.subr.bf16.mxu0 0
      %584 = vmatpush1.bf16.msra.mxu0 %v480
      %585 = vmatprep.subr.bf16.mxu0 0
      %586 = vmatpush1.bf16.msra.mxu0 %v481
      %587 = vmatprep.mubr.bf16.mxu0 %v317
      %588 = vmatmul.mubr.bf16.gmra.mrb[0].mxu0 %v316
      %v589 = vpop.f32.mrb[0].mxu0
      %v590 = vadd.f32 %v549, %v589
      %v591 = vpop.f32.mrb[0].mxu0
      %v592 = vpop.f32.mrb[0].mxu0
      %v593 = vadd.f32 %v552, %v592
      %v594 = vpop.f32.mrb[0].mxu0
      %595 = vdwg.mxu0
      %v596 = vmax.f32 %v590, 0.0
      %v597 = vmax.f32 %v593, 0.0
      %v598 = vld [vmem:[%s218] sm:$0xff]
      %v599 = vld [vmem:[%s218 + $0x8] sm:$0xff]
      %v600 = vadd.f32 %v596, %v598
      %v601 = vadd.f32 %v597, %v599
      %602 = vst [vmem:[%s224] sm:$0xff] %v600
      %603 = vst [vmem:[%s224 + $0x8] sm:$0xff] %v601
      %s604 = smul.u32 2, %s15
      %p605 = scmp.lt.s32.totalorder %s604, 3
      %s606 = scalar_select %p605, %s604, 3
      %s607 = smul.addr %s606, 8
      %s608 = scalar_lea.vmem %s4, %s607
      // Predicated region
      $region37: #{forward.28} parent=35 // pred_check
        %p609 = pneg %p127
      $region38: #{forward.28} parent=35 // pred_check_branch
        %611 = sbr.rel (%p609) target = $region40
      $region39: #{forward.28} parent=35 // pred_region
        %s612 = smul.u32 2, %s15
      $region40: #{forward.28} parent=35 // pred_fallthru
        _
    $region36: #{forward.28} parent=5 // pred_fallthru
      _
    %p613 = scmp.le.s32.totalorder 2, %s10
    // Predicated region
    $region41: #{forward.28} parent=5 // pred_check
      %p614 = pneg %p613
    $region42: #{forward.28} parent=5 // pred_check_branch
      %616 = sbr.rel (%p614) target = $region44
    $region43: #{forward.28} parent=5 // pred_region
      %s617 = ssub.s32 %s10, 2
      // Predicated region
      $region45: #{forward.28} parent=43 // pred_check
        %p618 = pneg %p133
      $region46: #{forward.28} parent=43 // pred_check_branch
        %620 = sbr.rel (%p618) target = $region48
      $region47: #{forward.28} parent=43 // pred_region
        %s621 = smul.u32 2, %s16
        %p622 = scmp.lt.s32.totalorder %s621, 3
        %s623 = scalar_select %p622, %s621, 3
        %s624 = smul.addr %s623, 8
        %s625 = scalar_lea.vmem %s4, %s624
      $region48: #{forward.28} parent=43 // pred_fallthru
        _
    $region44: #{forward.28} parent=5 // pred_fallthru
      _
  $region6: #{forward.28} parent=0 // loop_footer
    %s14 = sadd.s32 1, %s10
  $region7: #{forward.28} parent=0 // loop_footer_branch
    %9 = sbr.rel target = $region3
  $region8: #{forward.28} parent=0 // loop_exit
    _

// kernel: forward.29
$region0: #{forward.29}
  #allocation0 [shape = 'u32[]', space=smem, size = 0x4, offset = 0x4, fixed_abs, tag = 'smem constant byte address 0x4 - core index']
  #allocation1 [shape = 'u32[144,128]{1,0:T(1,128)}', space=vmem, size = 0x12000, scoped, tag = 'internal scratch']
  %s0 = inlined_call_operand.vmem [shape: f32[4,8,128], index: 0, kind: input, shape index: {}]
  %s1 = inlined_call_operand.vmem [shape: f32[8,128], index: 1, kind: output, shape index: {}]
  %s2 = sld [smem:[#allocation0]]
  $region14: #{forward.29} parent=0
    _
  %s4 = ssub.s32 1, %s2
  %s5 = scalar_select 0, %s4, %s2
  // Predicated region
  $region2: #{forward.29} parent=0 // pred_check
    _
  $region3: #{forward.29} parent=0 // pred_check_branch
    %7 = sbr.rel (0) target = $region5
  $region4: #{forward.29} parent=0 // pred_region
    _
  $region5: #{forward.29} parent=0 // pred_fallthru
    _
  %v8 = vld [vmem:[%s0] sm:$0xff]
  %s9 = scalar_lea.vmem %s0, 8
  %v10 = vld [vmem:[%s9] sm:$0xff]
  %v11 = vmax.f32 %v8, %v10
  %s12 = scalar_lea.vmem %s0, 16
  %v13 = vld [vmem:[%s12] sm:$0xff]
  %v14 = vmax.f32 %v11, %v13
  %s15 = scalar_lea.vmem %s0, 24
  %v16 = vld [vmem:[%s15] sm:$0xff]
  %v17 = vmax.f32 %v14, %v16
  %18 = vst [vmem:[%s1] sm:$0xff] %v17
  // Predicated region
  $region6: #{forward.29} parent=0 // pred_check
    _
  $region7: #{forward.29} parent=0 // pred_check_branch
    %20 = sbr.rel (0) target = $region9
  $region8: #{forward.29} parent=0 // pred_region
    _
  $region9: #{forward.29} parent=0 // pred_fallthru
    _
  // Predicated region
  $region10: #{forward.29} parent=0 // pred_check
    _
  $region11: #{forward.29} parent=0 // pred_check_branch
    %22 = sbr.rel (0) target = $region13
  $region12: #{forward.29} parent=0 // pred_region
    _
  $region13: #{forward.29} parent=0 // pred_fallthru
    _

// kernel: forward.31
$region0: #{forward.31}
  #allocation0 [shape = 'u32[]', space=smem, size = 0x4, offset = 0x4, fixed_abs, tag = 'smem constant byte address 0x4 - core index']
  #allocation1 [shape = 'u32[144,128]{1,0:T(1,128)}', space=vmem, size = 0x12000, scoped, tag = 'internal scratch']
  %s0 = inlined_call_operand.vmem [shape: bf16[8,512], index: 0, kind: input, shape index: {}]
  %s1 = inlined_call_operand.vmem [shape: bf16[512,128], index: 1, kind: input, shape index: {}]
  %s2 = inlined_call_operand.vmem [shape: f32[1,128], index: 2, kind: input, shape index: {}]
  %s3 = inlined_call_operand.vmem [shape: f32[8,128], index: 3, kind: output, shape index: {}]
  %s4 = sld [smem:[#allocation0]]
  $region22: #{forward.31} parent=0
    _
  %s6 = ssub.s32 1, %s4
  %s7 = scalar_select 0, %s6, %s4
  // Predicated region
  $region2: #{forward.31} parent=0 // pred_check
    _
  $region3: #{forward.31} parent=0 // pred_check_branch
    %9 = sbr.rel (0) target = $region5
  $region4: #{forward.31} parent=0 // pred_region
    _
  $region5: #{forward.31} parent=0 // pred_fallthru
    _
  // Predicated region
  $region6: #{forward.31} parent=0 // pred_check
    _
  $region7: #{forward.31} parent=0 // pred_check_branch
    %11 = sbr.rel (0) target = $region9
  $region8: #{forward.31} parent=0 // pred_region
    _
  $region9: #{forward.31} parent=0 // pred_fallthru
    _
  // Predicated region
  $region10: #{forward.31} parent=0 // pred_check
    _
  $region11: #{forward.31} parent=0 // pred_check_branch
    %13 = sbr.rel (0) target = $region13
  $region12: #{forward.31} parent=0 // pred_region
    _
  $region13: #{forward.31} parent=0 // pred_fallthru
    _
  %v15 = vld [vmem:[%s0] sm:$0xff]
  %v16 = vld [vmem:[%s0 + $0x8] sm:$0xff]
  %v17 = vld [vmem:[%s1] sm:$0xf]
  %v18 = vld [vmem:[%s1 + $0x4] sm:$0xf]
  %v19 = vld [vmem:[%s1 + $0x8] sm:$0xf]
  %v20 = vld [vmem:[%s1 + $0xc] sm:$0xf]
  %v21 = vld [vmem:[%s1 + $0x10] sm:$0xf]
  %v22 = vld [vmem:[%s1 + $0x14] sm:$0xf]
  %v23 = vld [vmem:[%s1 + $0x18] sm:$0xf]
  %v24 = vld [vmem:[%s1 + $0x1c] sm:$0xf]
  %v25 = vld [vmem:[%s1 + $0x20] sm:$0xf]
  %v26 = vld [vmem:[%s1 + $0x24] sm:$0xf]
  %v27 = vld [vmem:[%s1 + $0x28] sm:$0xf]
  %v28 = vld [vmem:[%s1 + $0x2c] sm:$0xf]
  %v29 = vld [vmem:[%s1 + $0x30] sm:$0xf]
  %v30 = vld [vmem:[%s1 + $0x34] sm:$0xf]
  %v31 = vld [vmem:[%s1 + $0x38] sm:$0xf]
  %v32 = vld [vmem:[%s1 + $0x3c] sm:$0xf]
  %v33 = vld [vmem:[%s1 + $0x40] sm:$0xf]
  %v34 = vld [vmem:[%s1 + $0x44] sm:$0xf]
  %v35 = vld [vmem:[%s1 + $0x48] sm:$0xf]
  %v36 = vld [vmem:[%s1 + $0x4c] sm:$0xf]
  %v37 = vld [vmem:[%s1 + $0x50] sm:$0xf]
  %v38 = vld [vmem:[%s1 + $0x54] sm:$0xf]
  %v39 = vld [vmem:[%s1 + $0x58] sm:$0xf]
  %v40 = vld [vmem:[%s1 + $0x5c] sm:$0xf]
  %v41 = vld [vmem:[%s1 + $0x60] sm:$0xf]
  %v42 = vld [vmem:[%s1 + $0x64] sm:$0xf]
  %v43 = vld [vmem:[%s1 + $0x68] sm:$0xf]
  %v44 = vld [vmem:[%s1 + $0x6c] sm:$0xf]
  %v45 = vld [vmem:[%s1 + $0x70] sm:$0xf]
  %v46 = vld [vmem:[%s1 + $0x74] sm:$0xf]
  %v47 = vld [vmem:[%s1 + $0x78] sm:$0xf]
  %v48 = vld [vmem:[%s1 + $0x7c] sm:$0xf]
  %v49 = vld [vmem:[%s1 + $0x80] sm:$0xf]
  %v50 = vld [vmem:[%s1 + $0x84] sm:$0xf]
  %v51 = vld [vmem:[%s1 + $0x88] sm:$0xf]
  %v52 = vld [vmem:[%s1 + $0x8c] sm:$0xf]
  %v53 = vld [vmem:[%s1 + $0x90] sm:$0xf]
  %v54 = vld [vmem:[%s1 + $0x94] sm:$0xf]
  %v55 = vld [vmem:[%s1 + $0x98] sm:$0xf]
  %v56 = vld [vmem:[%s1 + $0x9c] sm:$0xf]
  %v57 = vld [vmem:[%s1 + $0xa0] sm:$0xf]
  %v58 = vld [vmem:[%s1 + $0xa4] sm:$0xf]
  %v59 = vld [vmem:[%s1 + $0xa8] sm:$0xf]
  %v60 = vld [vmem:[%s1 + $0xac] sm:$0xf]
  %v61 = vld [vmem:[%s1 + $0xb0] sm:$0xf]
  %v62 = vld [vmem:[%s1 + $0xb4] sm:$0xf]
  %v63 = vld [vmem:[%s1 + $0xb8] sm:$0xf]
  %v64 = vld [vmem:[%s1 + $0xbc] sm:$0xf]
  %v65 = vld [vmem:[%s1 + $0xc0] sm:$0xf]
  %v66 = vld [vmem:[%s1 + $0xc4] sm:$0xf]
  %v67 = vld [vmem:[%s1 + $0xc8] sm:$0xf]
  %v68 = vld [vmem:[%s1 + $0xcc] sm:$0xf]
  %v69 = vld [vmem:[%s1 + $0xd0] sm:$0xf]
  %v70 = vld [vmem:[%s1 + $0xd4] sm:$0xf]
  %v71 = vld [vmem:[%s1 + $0xd8] sm:$0xf]
  %v72 = vld [vmem:[%s1 + $0xdc] sm:$0xf]
  %v73 = vld [vmem:[%s1 + $0xe0] sm:$0xf]
  %v74 = vld [vmem:[%s1 + $0xe4] sm:$0xf]
  %v75 = vld [vmem:[%s1 + $0xe8] sm:$0xf]
  %v76 = vld [vmem:[%s1 + $0xec] sm:$0xf]
  %v77 = vld [vmem:[%s1 + $0xf0] sm:$0xf]
  %v78 = vld [vmem:[%s1 + $0xf4] sm:$0xf]
  %v79 = vld [vmem:[%s1 + $0xf8] sm:$0xf]
  %v80 = vld [vmem:[%s1 + $0xfc] sm:$0xf]
  %v81 = vld [vmem:[%s2] sm:$0x1]
  %v83 = vlaneseq
  %v84 = vshrl.u32 %v83, 7
  %v85 = vsub.s32 0, %v84
  %v86 = vrot.slane %v81, %v85
  %v90 = vunpack.c.l.b16 %v15
  %v91 = vunpack.c.h.b16 %v15
  %v92 = vunpack.c.l.b16 %v16
  %v93 = vunpack.c.h.b16 %v16
  %v94 = vpack.c.b16 %v90, %v90
  %v95 = vpack.c.b16 %v91, %v91
  %v96 = vpack.c.b16 %v92, %v92
  %v97 = vpack.c.b16 %v93, %v93
  %v166 = vunpack.c.l.b16 %v17
  %v167 = vunpack.c.l.b16 %v18
  %v168 = vunpack.c.l.b16 %v19
  %v169 = vunpack.c.l.b16 %v20
  %v170 = vunpack.c.l.b16 %v21
  %v171 = vunpack.c.l.b16 %v22
  %v172 = vunpack.c.l.b16 %v23
  %v173 = vunpack.c.l.b16 %v24
  %v174 = vunpack.c.l.b16 %v25
  %v175 = vunpack.c.l.b16 %v26
  %v176 = vunpack.c.l.b16 %v27
  %v177 = vunpack.c.l.b16 %v28
  %v178 = vunpack.c.l.b16 %v29
  %v179 = vunpack.c.l.b16 %v30
  %v180 = vunpack.c.l.b16 %v31
  %v181 = vunpack.c.l.b16 %v32
  %v182 = vunpack.c.l.b16 %v33
  %v183 = vunpack.c.l.b16 %v34
  %v184 = vunpack.c.l.b16 %v35
  %v185 = vunpack.c.l.b16 %v36
  %v186 = vunpack.c.l.b16 %v37
  %v187 = vunpack.c.l.b16 %v38
  %v188 = vunpack.c.l.b16 %v39
  %v189 = vunpack.c.l.b16 %v40
  %v190 = vunpack.c.l.b16 %v41
  %v191 = vunpack.c.l.b16 %v42
  %v192 = vunpack.c.l.b16 %v43
  %v193 = vunpack.c.l.b16 %v44
  %v194 = vunpack.c.l.b16 %v45
  %v195 = vunpack.c.l.b16 %v46
  %v196 = vunpack.c.l.b16 %v47
  %v197 = vunpack.c.l.b16 %v48
  %v198 = vunpack.c.l.b16 %v49
  %v199 = vunpack.c.l.b16 %v50
  %v200 = vunpack.c.l.b16 %v51
  %v201 = vunpack.c.l.b16 %v52
  %v202 = vunpack.c.l.b16 %v53
  %v203 = vunpack.c.l.b16 %v54
  %v204 = vunpack.c.l.b16 %v55
  %v205 = vunpack.c.l.b16 %v56
  %v206 = vunpack.c.l.b16 %v57
  %v207 = vunpack.c.l.b16 %v58
  %v208 = vunpack.c.l.b16 %v59
  %v209 = vunpack.c.l.b16 %v60
  %v210 = vunpack.c.l.b16 %v61
  %v211 = vunpack.c.l.b16 %v62
  %v212 = vunpack.c.l.b16 %v63
  %v213 = vunpack.c.l.b16 %v64
  %v214 = vunpack.c.l.b16 %v65
  %v215 = vunpack.c.l.b16 %v66
  %v216 = vunpack.c.l.b16 %v67
  %v217 = vunpack.c.l.b16 %v68
  %v218 = vunpack.c.l.b16 %v69
  %v219 = vunpack.c.l.b16 %v70
  %v220 = vunpack.c.l.b16 %v71
  %v221 = vunpack.c.l.b16 %v72
  %v222 = vunpack.c.l.b16 %v73
  %v223 = vunpack.c.l.b16 %v74
  %v224 = vunpack.c.l.b16 %v75
  %v225 = vunpack.c.l.b16 %v76
  %v226 = vunpack.c.l.b16 %v77
  %v227 = vunpack.c.l.b16 %v78
  %v228 = vunpack.c.l.b16 %v79
  %v229 = vunpack.c.l.b16 %v80
  %v230 = vpack.c.b16 %v167, %v166
  %v231 = vpack.c.b16 %v169, %v168
  %v232 = vpack.c.b16 %v171, %v170
  %v233 = vpack.c.b16 %v173, %v172
  %v234 = vpack.c.b16 %v175, %v174
  %v235 = vpack.c.b16 %v177, %v176
  %v236 = vpack.c.b16 %v179, %v178
  %v237 = vpack.c.b16 %v181, %v180
  %v238 = vpack.c.b16 %v183, %v182
  %v239 = vpack.c.b16 %v185, %v184
  %v240 = vpack.c.b16 %v187, %v186
  %v241 = vpack.c.b16 %v189, %v188
  %v242 = vpack.c.b16 %v191, %v190
  %v243 = vpack.c.b16 %v193, %v192
  %v244 = vpack.c.b16 %v195, %v194
  %v245 = vpack.c.b16 %v197, %v196
  %v246 = vpack.c.b16 %v199, %v198
  %v247 = vpack.c.b16 %v201, %v200
  %v248 = vpack.c.b16 %v203, %v202
  %v249 = vpack.c.b16 %v205, %v204
  %v250 = vpack.c.b16 %v207, %v206
  %v251 = vpack.c.b16 %v209, %v208
  %v252 = vpack.c.b16 %v211, %v210
  %v253 = vpack.c.b16 %v213, %v212
  %v254 = vpack.c.b16 %v215, %v214
  %v255 = vpack.c.b16 %v217, %v216
  %v256 = vpack.c.b16 %v219, %v218
  %v257 = vpack.c.b16 %v221, %v220
  %v258 = vpack.c.b16 %v223, %v222
  %v259 = vpack.c.b16 %v225, %v224
  %v260 = vpack.c.b16 %v227, %v226
  %v261 = vpack.c.b16 %v229, %v228
  %294 = vmatprep.subr.bf16.mxu0 0
  %295 = vmatpush1.bf16.msra.mxu0 %v230
  %296 = vmatprep.subr.bf16.mxu0 0
  %297 = vmatpush1.bf16.msra.mxu0 %v231
  %298 = vmatprep.subr.bf16.mxu0 0
  %299 = vmatpush1.bf16.msra.mxu0 %v232
  %300 = vmatprep.subr.bf16.mxu0 0
  %301 = vmatpush1.bf16.msra.mxu0 %v233
  %302 = vmatprep.subr.bf16.mxu0 0
  %303 = vmatpush1.bf16.msra.mxu0 %v234
  %304 = vmatprep.subr.bf16.mxu0 0
  %305 = vmatpush1.bf16.msra.mxu0 %v235
  %306 = vmatprep.subr.bf16.mxu0 0
  %307 = vmatpush1.bf16.msra.mxu0 %v236
  %308 = vmatprep.subr.bf16.mxu0 0
  %309 = vmatpush1.bf16.msra.mxu0 %v237
  %310 = vmatprep.subr.bf16.mxu0 0
  %311 = vmatpush1.bf16.msra.mxu0 %v238
  %312 = vmatprep.subr.bf16.mxu0 0
  %313 = vmatpush1.bf16.msra.mxu0 %v239
  %314 = vmatprep.subr.bf16.mxu0 0
  %315 = vmatpush1.bf16.msra.mxu0 %v240
  %316 = vmatprep.subr.bf16.mxu0 0
  %317 = vmatpush1.bf16.msra.mxu0 %v241
  %318 = vmatprep.subr.bf16.mxu0 0
  %319 = vmatpush1.bf16.msra.mxu0 %v242
  %320 = vmatprep.subr.bf16.mxu0 0
  %321 = vmatpush1.bf16.msra.mxu0 %v243
  %322 = vmatprep.subr.bf16.mxu0 0
  %323 = vmatpush1.bf16.msra.mxu0 %v244
  %324 = vmatprep.subr.bf16.mxu0 0
  %325 = vmatpush1.bf16.msra.mxu0 %v245
  %326 = vmatprep.mubr.bf16.mxu0 %v95
  %327 = vmatmul.mubr.bf16.gmra.mrb[0].mxu0 %v94
  %v328 = vpop.f32.mrb[0].mxu0
  %v329 = vadd.f32 %v86, %v328
  %v330 = vpop.f32.mrb[0].mxu0
  %v331 = vpop.f32.mrb[0].mxu0
  %v332 = vpop.f32.mrb[0].mxu0
  %333 = vdwg.mxu0
  %334 = vmatprep.subr.bf16.mxu0 0
  %335 = vmatpush1.bf16.msra.mxu0 %v246
  %336 = vmatprep.subr.bf16.mxu0 0
  %337 = vmatpush1.bf16.msra.mxu0 %v247
  %338 = vmatprep.subr.bf16.mxu0 0
  %339 = vmatpush1.bf16.msra.mxu0 %v248
  %340 = vmatprep.subr.bf16.mxu0 0
  %341 = vmatpush1.bf16.msra.mxu0 %v249
  %342 = vmatprep.subr.bf16.mxu0 0
  %343 = vmatpush1.bf16.msra.mxu0 %v250
  %344 = vmatprep.subr.bf16.mxu0 0
  %345 = vmatpush1.bf16.msra.mxu0 %v251
  %346 = vmatprep.subr.bf16.mxu0 0
  %347 = vmatpush1.bf16.msra.mxu0 %v252
  %348 = vmatprep.subr.bf16.mxu0 0
  %349 = vmatpush1.bf16.msra.mxu0 %v253
  %350 = vmatprep.subr.bf16.mxu0 0
  %351 = vmatpush1.bf16.msra.mxu0 %v254
  %352 = vmatprep.subr.bf16.mxu0 0
  %353 = vmatpush1.bf16.msra.mxu0 %v255
  %354 = vmatprep.subr.bf16.mxu0 0
  %355 = vmatpush1.bf16.msra.mxu0 %v256
  %356 = vmatprep.subr.bf16.mxu0 0
  %357 = vmatpush1.bf16.msra.mxu0 %v257
  %358 = vmatprep.subr.bf16.mxu0 0
  %359 = vmatpush1.bf16.msra.mxu0 %v258
  %360 = vmatprep.subr.bf16.mxu0 0
  %361 = vmatpush1.bf16.msra.mxu0 %v259
  %362 = vmatprep.subr.bf16.mxu0 0
  %363 = vmatpush1.bf16.msra.mxu0 %v260
  %364 = vmatprep.subr.bf16.mxu0 0
  %365 = vmatpush1.bf16.msra.mxu0 %v261
  %366 = vmatprep.mubr.bf16.mxu0 %v97
  %367 = vmatmul.mubr.bf16.gmra.mrb[0].mxu0 %v96
  %v368 = vpop.f32.mrb[0].mxu0
  %v369 = vadd.f32 %v329, %v368
  %v370 = vpop.f32.mrb[0].mxu0
  %v371 = vpop.f32.mrb[0].mxu0
  %v372 = vpop.f32.mrb[0].mxu0
  %373 = vdwg.mxu0
  %v374 = vmax.f32 %v369, 0.0
  %375 = vst [vmem:[%s3] sm:$0xff] %v374
  // Predicated region
  $region14: #{forward.31} parent=0 // pred_check
    _
  $region15: #{forward.31} parent=0 // pred_check_branch
    %377 = sbr.rel (0) target = $region17
  $region16: #{forward.31} parent=0 // pred_region
    _
  $region17: #{forward.31} parent=0 // pred_fallthru
    _
  // Predicated region
  $region18: #{forward.31} parent=0 // pred_check
    _
  $region19: #{forward.31} parent=0 // pred_check_branch
    %379 = sbr.rel (0) target = $region21
  $region20: #{forward.31} parent=0 // pred_region
    _
  $region21: #{forward.31} parent=0 // pred_fallthru
    _

// kernel: forward.30
$region0: #{forward.30}
  #allocation0 [shape = 'u32[]', space=smem, size = 0x4, offset = 0x4, fixed_abs, tag = 'smem constant byte address 0x4 - core index']
  #allocation1 [shape = 'u32[144,128]{1,0:T(1,128)}', space=vmem, size = 0x12000, scoped, tag = 'internal scratch']
  %s0 = inlined_call_operand.vmem [shape: bf16[8,128], index: 0, kind: input, shape index: {}]
  %s1 = inlined_call_operand.vmem [shape: bf16[128,128], index: 1, kind: input, shape index: {}]
  %s2 = inlined_call_operand.vmem [shape: f32[1,128], index: 2, kind: input, shape index: {}]
  %s3 = inlined_call_operand.vmem [shape: f32[8,128], index: 3, kind: output, shape index: {}]
  %s4 = sld [smem:[#allocation0]]
  $region22: #{forward.30} parent=0
    _
  %s6 = ssub.s32 1, %s4
  %s7 = scalar_select 0, %s6, %s4
  // Predicated region
  $region2: #{forward.30} parent=0 // pred_check
    _
  $region3: #{forward.30} parent=0 // pred_check_branch
    %9 = sbr.rel (0) target = $region5
  $region4: #{forward.30} parent=0 // pred_region
    _
  $region5: #{forward.30} parent=0 // pred_fallthru
    _
  // Predicated region
  $region6: #{forward.30} parent=0 // pred_check
    _
  $region7: #{forward.30} parent=0 // pred_check_branch
    %11 = sbr.rel (0) target = $region9
  $region8: #{forward.30} parent=0 // pred_region
    _
  $region9: #{forward.30} parent=0 // pred_fallthru
    _
  // Predicated region
  $region10: #{forward.30} parent=0 // pred_check
    _
  $region11: #{forward.30} parent=0 // pred_check_branch
    %13 = sbr.rel (0) target = $region13
  $region12: #{forward.30} parent=0 // pred_region
    _
  $region13: #{forward.30} parent=0 // pred_fallthru
    _
  %v15 = vld [vmem:[%s0] sm:$0xf]
  %v16 = vld [vmem:[%s1] sm:$0xf]
  %v17 = vld [vmem:[%s1 + $0x4] sm:$0xf]
  %v18 = vld [vmem:[%s1 + $0x8] sm:$0xf]
  %v19 = vld [vmem:[%s1 + $0xc] sm:$0xf]
  %v20 = vld [vmem:[%s1 + $0x10] sm:$0xf]
  %v21 = vld [vmem:[%s1 + $0x14] sm:$0xf]
  %v22 = vld [vmem:[%s1 + $0x18] sm:$0xf]
  %v23 = vld [vmem:[%s1 + $0x1c] sm:$0xf]
  %v24 = vld [vmem:[%s1 + $0x20] sm:$0xf]
  %v25 = vld [vmem:[%s1 + $0x24] sm:$0xf]
  %v26 = vld [vmem:[%s1 + $0x28] sm:$0xf]
  %v27 = vld [vmem:[%s1 + $0x2c] sm:$0xf]
  %v28 = vld [vmem:[%s1 + $0x30] sm:$0xf]
  %v29 = vld [vmem:[%s1 + $0x34] sm:$0xf]
  %v30 = vld [vmem:[%s1 + $0x38] sm:$0xf]
  %v31 = vld [vmem:[%s1 + $0x3c] sm:$0xf]
  %v32 = vld [vmem:[%s2] sm:$0x1]
  %v34 = vlaneseq
  %v35 = vshrl.u32 %v34, 7
  %v36 = vsub.s32 0, %v35
  %v37 = vrot.slane %v32, %v36
  %v55 = vunpack.c.l.b16 %v16
  %v56 = vunpack.c.l.b16 %v17
  %v57 = vunpack.c.l.b16 %v18
  %v58 = vunpack.c.l.b16 %v19
  %v59 = vunpack.c.l.b16 %v20
  %v60 = vunpack.c.l.b16 %v21
  %v61 = vunpack.c.l.b16 %v22
  %v62 = vunpack.c.l.b16 %v23
  %v63 = vunpack.c.l.b16 %v24
  %v64 = vunpack.c.l.b16 %v25
  %v65 = vunpack.c.l.b16 %v26
  %v66 = vunpack.c.l.b16 %v27
  %v67 = vunpack.c.l.b16 %v28
  %v68 = vunpack.c.l.b16 %v29
  %v69 = vunpack.c.l.b16 %v30
  %v70 = vunpack.c.l.b16 %v31
  %v71 = vpack.c.b16 %v56, %v55
  %v72 = vpack.c.b16 %v58, %v57
  %v73 = vpack.c.b16 %v60, %v59
  %v74 = vpack.c.b16 %v62, %v61
  %v75 = vpack.c.b16 %v64, %v63
  %v76 = vpack.c.b16 %v66, %v65
  %v77 = vpack.c.b16 %v68, %v67
  %v78 = vpack.c.b16 %v70, %v69
  %87 = vmatprep.subr.bf16.mxu0 0
  %88 = vmatpush1.bf16.msra.mxu0 %v71
  %89 = vmatprep.subr.bf16.mxu0 0
  %90 = vmatpush1.bf16.msra.mxu0 %v72
  %91 = vmatprep.subr.bf16.mxu0 0
  %92 = vmatpush1.bf16.msra.mxu0 %v73
  %93 = vmatprep.subr.bf16.mxu0 0
  %94 = vmatpush1.bf16.msra.mxu0 %v74
  %95 = vmatprep.subr.bf16.mxu0 0
  %96 = vmatpush1.bf16.msra.mxu0 %v75
  %97 = vmatprep.subr.bf16.mxu0 0
  %98 = vmatpush1.bf16.msra.mxu0 %v76
  %99 = vmatprep.subr.bf16.mxu0 0
  %100 = vmatpush1.bf16.msra.mxu0 %v77
  %101 = vmatprep.subr.bf16.mxu0 0
  %102 = vmatpush1.bf16.msra.mxu0 %v78
  %103 = vmatprep.subr.bf16.mxu0 0
  %104 = vmatpush1.bf16.msra.mxu0 0
  %105 = vmatprep.subr.bf16.mxu0 0
  %106 = vmatpush1.bf16.msra.mxu0 0
  %107 = vmatprep.subr.bf16.mxu0 0
  %108 = vmatpush1.bf16.msra.mxu0 0
  %109 = vmatprep.subr.bf16.mxu0 0
  %110 = vmatpush1.bf16.msra.mxu0 0
  %111 = vmatprep.subr.bf16.mxu0 0
  %112 = vmatpush1.bf16.msra.mxu0 0
  %113 = vmatprep.subr.bf16.mxu0 0
  %114 = vmatpush1.bf16.msra.mxu0 0
  %115 = vmatprep.subr.bf16.mxu0 0
  %116 = vmatpush1.bf16.msra.mxu0 0
  %117 = vmatprep.subr.bf16.mxu0 0
  %118 = vmatpush1.bf16.msra.mxu0 0
  %119 = vmatprep.mubr.bf16.mxu0 0
  %120 = vmatmul.mubr.bf16.gmra.mrb[0].mxu0 %v15
  %v121 = vpop.f32.mrb[0].mxu0
  %v122 = vadd.f32 %v37, %v121
  %v123 = vpop.f32.mrb[0].mxu0
  %v124 = vpop.f32.mrb[0].mxu0
  %v125 = vpop.f32.mrb[0].mxu0
  %126 = vdwg.mxu0
  %127 = vst [vmem:[%s3] sm:$0xff] %v122
  // Predicated region
  $region14: #{forward.30} parent=0 // pred_check
    _
  $region15: #{forward.30} parent=0 // pred_check_branch
    %129 = sbr.rel (0) target = $region17
  $region16: #{forward.30} parent=0 // pred_region
    _
  $region17: #{forward.30} parent=0 // pred_fallthru
    _
  // Predicated region
  $region18: #{forward.30} parent=0 // pred_check
    _
  $region19: #{forward.30} parent=0 // pred_check_branch
    %131 = sbr.rel (0) target = $region21
  $region20: #{forward.30} parent=0 // pred_region
    _
  $region21: #{forward.30} parent=0 // pred_fallthru
    _

// kernel: forward.32
$region0: #{forward.32}
  #allocation0 [shape = 'u32[]', space=smem, size = 0x4, offset = 0x4, fixed_abs, tag = 'smem constant byte address 0x4 - core index']
  #allocation1 [shape = 'u32[144,128]{1,0:T(1,128)}', space=vmem, size = 0x12000, scoped, tag = 'internal scratch']
  %s0 = inlined_call_operand.vmem [shape: bf16[8,640], index: 0, kind: input, shape index: {}]
  %s1 = inlined_call_operand.vmem [shape: bf16[640,128], index: 1, kind: input, shape index: {}]
  %s2 = inlined_call_operand.vmem [shape: f32[1,128], index: 2, kind: input, shape index: {}]
  %s3 = inlined_call_operand.vmem [shape: f32[8,128], index: 3, kind: input, shape index: {}]
  %s4 = inlined_call_operand.vmem [shape: f32[8,128], index: 4, kind: output, shape index: {}]
  %s5 = sld [smem:[#allocation0]]
  $region26: #{forward.32} parent=0
    _
  %s7 = ssub.s32 1, %s5
  %s8 = scalar_select 0, %s7, %s5
  // Predicated region
  $region2: #{forward.32} parent=0 // pred_check
    _
  $region3: #{forward.32} parent=0 // pred_check_branch
    %10 = sbr.rel (0) target = $region5
  $region4: #{forward.32} parent=0 // pred_region
    _
  $region5: #{forward.32} parent=0 // pred_fallthru
    _
  // Predicated region
  $region6: #{forward.32} parent=0 // pred_check
    _
  $region7: #{forward.32} parent=0 // pred_check_branch
    %12 = sbr.rel (0) target = $region9
  $region8: #{forward.32} parent=0 // pred_region
    _
  $region9: #{forward.32} parent=0 // pred_fallthru
    _
  // Predicated region
  $region10: #{forward.32} parent=0 // pred_check
    _
  $region11: #{forward.32} parent=0 // pred_check_branch
    %14 = sbr.rel (0) target = $region13
  $region12: #{forward.32} parent=0 // pred_region
    _
  $region13: #{forward.32} parent=0 // pred_fallthru
    _
  // Predicated region
  $region14: #{forward.32} parent=0 // pred_check
    _
  $region15: #{forward.32} parent=0 // pred_check_branch
    %16 = sbr.rel (0) target = $region17
  $region16: #{forward.32} parent=0 // pred_region
    _
  $region17: #{forward.32} parent=0 // pred_fallthru
    _
  %v18 = vld [vmem:[%s0] sm:$0xff]
  %v19 = vld [vmem:[%s0 + $0x8] sm:$0xff]
  %v20 = vld [vmem:[%s0 + $0x10] sm:$0xf]
  %v21 = vld [vmem:[%s1] sm:$0xf]
  %v22 = vld [vmem:[%s1 + $0x4] sm:$0xf]
  %v23 = vld [vmem:[%s1 + $0x8] sm:$0xf]
  %v24 = vld [vmem:[%s1 + $0xc] sm:$0xf]
  %v25 = vld [vmem:[%s1 + $0x10] sm:$0xf]
  %v26 = vld [vmem:[%s1 + $0x14] sm:$0xf]
  %v27 = vld [vmem:[%s1 + $0x18] sm:$0xf]
  %v28 = vld [vmem:[%s1 + $0x1c] sm:$0xf]
  %v29 = vld [vmem:[%s1 + $0x20] sm:$0xf]
  %v30 = vld [vmem:[%s1 + $0x24] sm:$0xf]
  %v31 = vld [vmem:[%s1 + $0x28] sm:$0xf]
  %v32 = vld [vmem:[%s1 + $0x2c] sm:$0xf]
  %v33 = vld [vmem:[%s1 + $0x30] sm:$0xf]
  %v34 = vld [vmem:[%s1 + $0x34] sm:$0xf]
  %v35 = vld [vmem:[%s1 + $0x38] sm:$0xf]
  %v36 = vld [vmem:[%s1 + $0x3c] sm:$0xf]
  %v37 = vld [vmem:[%s1 + $0x40] sm:$0xf]
  %v38 = vld [vmem:[%s1 + $0x44] sm:$0xf]
  %v39 = vld [vmem:[%s1 + $0x48] sm:$0xf]
  %v40 = vld [vmem:[%s1 + $0x4c] sm:$0xf]
  %v41 = vld [vmem:[%s1 + $0x50] sm:$0xf]
  %v42 = vld [vmem:[%s1 + $0x54] sm:$0xf]
  %v43 = vld [vmem:[%s1 + $0x58] sm:$0xf]
  %v44 = vld [vmem:[%s1 + $0x5c] sm:$0xf]
  %v45 = vld [vmem:[%s1 + $0x60] sm:$0xf]
  %v46 = vld [vmem:[%s1 + $0x64] sm:$0xf]
  %v47 = vld [vmem:[%s1 + $0x68] sm:$0xf]
  %v48 = vld [vmem:[%s1 + $0x6c] sm:$0xf]
  %v49 = vld [vmem:[%s1 + $0x70] sm:$0xf]
  %v50 = vld [vmem:[%s1 + $0x74] sm:$0xf]
  %v51 = vld [vmem:[%s1 + $0x78] sm:$0xf]
  %v52 = vld [vmem:[%s1 + $0x7c] sm:$0xf]
  %v53 = vld [vmem:[%s1 + $0x80] sm:$0xf]
  %v54 = vld [vmem:[%s1 + $0x84] sm:$0xf]
  %v55 = vld [vmem:[%s1 + $0x88] sm:$0xf]
  %v56 = vld [vmem:[%s1 + $0x8c] sm:$0xf]
  %v57 = vld [vmem:[%s1 + $0x90] sm:$0xf]
  %v58 = vld [vmem:[%s1 + $0x94] sm:$0xf]
  %v59 = vld [vmem:[%s1 + $0x98] sm:$0xf]
  %v60 = vld [vmem:[%s1 + $0x9c] sm:$0xf]
  %v61 = vld [vmem:[%s1 + $0xa0] sm:$0xf]
  %v62 = vld [vmem:[%s1 + $0xa4] sm:$0xf]
  %v63 = vld [vmem:[%s1 + $0xa8] sm:$0xf]
  %v64 = vld [vmem:[%s1 + $0xac] sm:$0xf]
  %v65 = vld [vmem:[%s1 + $0xb0] sm:$0xf]
  %v66 = vld [vmem:[%s1 + $0xb4] sm:$0xf]
  %v67 = vld [vmem:[%s1 + $0xb8] sm:$0xf]
  %v68 = vld [vmem:[%s1 + $0xbc] sm:$0xf]
  %v69 = vld [vmem:[%s1 + $0xc0] sm:$0xf]
  %v70 = vld [vmem:[%s1 + $0xc4] sm:$0xf]
  %v71 = vld [vmem:[%s1 + $0xc8] sm:$0xf]
  %v72 = vld [vmem:[%s1 + $0xcc] sm:$0xf]
  %v73 = vld [vmem:[%s1 + $0xd0] sm:$0xf]
  %v74 = vld [vmem:[%s1 + $0xd4] sm:$0xf]
  %v75 = vld [vmem:[%s1 + $0xd8] sm:$0xf]
  %v76 = vld [vmem:[%s1 + $0xdc] sm:$0xf]
  %v77 = vld [vmem:[%s1 + $0xe0] sm:$0xf]
  %v78 = vld [vmem:[%s1 + $0xe4] sm:$0xf]
  %v79 = vld [vmem:[%s1 + $0xe8] sm:$0xf]
  %v80 = vld [vmem:[%s1 + $0xec] sm:$0xf]
  %v81 = vld [vmem:[%s1 + $0xf0] sm:$0xf]
  %v82 = vld [vmem:[%s1 + $0xf4] sm:$0xf]
  %v83 = vld [vmem:[%s1 + $0xf8] sm:$0xf]
  %v84 = vld [vmem:[%s1 + $0xfc] sm:$0xf]
  %v85 = vld [vmem:[%s1 + $0x100] sm:$0xf]
  %v86 = vld [vmem:[%s1 + $0x104] sm:$0xf]
  %v87 = vld [vmem:[%s1 + $0x108] sm:$0xf]
  %v88 = vld [vmem:[%s1 + $0x10c] sm:$0xf]
  %v89 = vld [vmem:[%s1 + $0x110] sm:$0xf]
  %v90 = vld [vmem:[%s1 + $0x114] sm:$0xf]
  %v91 = vld [vmem:[%s1 + $0x118] sm:$0xf]
  %v92 = vld [vmem:[%s1 + $0x11c] sm:$0xf]
  %v93 = vld [vmem:[%s1 + $0x120] sm:$0xf]
  %v94 = vld [vmem:[%s1 + $0x124] sm:$0xf]
  %v95 = vld [vmem:[%s1 + $0x128] sm:$0xf]
  %v96 = vld [vmem:[%s1 + $0x12c] sm:$0xf]
  %v97 = vld [vmem:[%s1 + $0x130] sm:$0xf]
  %v98 = vld [vmem:[%s1 + $0x134] sm:$0xf]
  %v99 = vld [vmem:[%s1 + $0x138] sm:$0xf]
  %v100 = vld [vmem:[%s1 + $0x13c] sm:$0xf]
  %v101 = vld [vmem:[%s2] sm:$0x1]
  %v103 = vlaneseq
  %v104 = vshrl.u32 %v103, 7
  %v105 = vsub.s32 0, %v104
  %v106 = vrot.slane %v101, %v105
  %v111 = vunpack.c.l.b16 %v18
  %v112 = vunpack.c.h.b16 %v18
  %v113 = vunpack.c.l.b16 %v19
  %v114 = vunpack.c.h.b16 %v19
  %v115 = vunpack.c.l.b16 %v20
  %v116 = vpack.c.b16 %v111, %v111
  %v117 = vpack.c.b16 %v112, %v112
  %v118 = vpack.c.b16 %v113, %v113
  %v119 = vpack.c.b16 %v114, %v114
  %v120 = vpack.c.b16 %v115, %v115
  %v206 = vunpack.c.l.b16 %v21
  %v207 = vunpack.c.l.b16 %v22
  %v208 = vunpack.c.l.b16 %v23
  %v209 = vunpack.c.l.b16 %v24
  %v210 = vunpack.c.l.b16 %v25
  %v211 = vunpack.c.l.b16 %v26
  %v212 = vunpack.c.l.b16 %v27
  %v213 = vunpack.c.l.b16 %v28
  %v214 = vunpack.c.l.b16 %v29
  %v215 = vunpack.c.l.b16 %v30
  %v216 = vunpack.c.l.b16 %v31
  %v217 = vunpack.c.l.b16 %v32
  %v218 = vunpack.c.l.b16 %v33
  %v219 = vunpack.c.l.b16 %v34
  %v220 = vunpack.c.l.b16 %v35
  %v221 = vunpack.c.l.b16 %v36
  %v222 = vunpack.c.l.b16 %v37
  %v223 = vunpack.c.l.b16 %v38
  %v224 = vunpack.c.l.b16 %v39
  %v225 = vunpack.c.l.b16 %v40
  %v226 = vunpack.c.l.b16 %v41
  %v227 = vunpack.c.l.b16 %v42
  %v228 = vunpack.c.l.b16 %v43
  %v229 = vunpack.c.l.b16 %v44
  %v230 = vunpack.c.l.b16 %v45
  %v231 = vunpack.c.l.b16 %v46
  %v232 = vunpack.c.l.b16 %v47
  %v233 = vunpack.c.l.b16 %v48
  %v234 = vunpack.c.l.b16 %v49
  %v235 = vunpack.c.l.b16 %v50
  %v236 = vunpack.c.l.b16 %v51
  %v237 = vunpack.c.l.b16 %v52
  %v238 = vunpack.c.l.b16 %v53
  %v239 = vunpack.c.l.b16 %v54
  %v240 = vunpack.c.l.b16 %v55
  %v241 = vunpack.c.l.b16 %v56
  %v242 = vunpack.c.l.b16 %v57
  %v243 = vunpack.c.l.b16 %v58
  %v244 = vunpack.c.l.b16 %v59
  %v245 = vunpack.c.l.b16 %v60
  %v246 = vunpack.c.l.b16 %v61
  %v247 = vunpack.c.l.b16 %v62
  %v248 = vunpack.c.l.b16 %v63
  %v249 = vunpack.c.l.b16 %v64
  %v250 = vunpack.c.l.b16 %v65
  %v251 = vunpack.c.l.b16 %v66
  %v252 = vunpack.c.l.b16 %v67
  %v253 = vunpack.c.l.b16 %v68
  %v254 = vunpack.c.l.b16 %v69
  %v255 = vunpack.c.l.b16 %v70
  %v256 = vunpack.c.l.b16 %v71
  %v257 = vunpack.c.l.b16 %v72
  %v258 = vunpack.c.l.b16 %v73
  %v259 = vunpack.c.l.b16 %v74
  %v260 = vunpack.c.l.b16 %v75
  %v261 = vunpack.c.l.b16 %v76
  %v262 = vunpack.c.l.b16 %v77
  %v263 = vunpack.c.l.b16 %v78
  %v264 = vunpack.c.l.b16 %v79
  %v265 = vunpack.c.l.b16 %v80
  %v266 = vunpack.c.l.b16 %v81
  %v267 = vunpack.c.l.b16 %v82
  %v268 = vunpack.c.l.b16 %v83
  %v269 = vunpack.c.l.b16 %v84
  %v270 = vunpack.c.l.b16 %v85
  %v271 = vunpack.c.l.b16 %v86
  %v272 = vunpack.c.l.b16 %v87
  %v273 = vunpack.c.l.b16 %v88
  %v274 = vunpack.c.l.b16 %v89
  %v275 = vunpack.c.l.b16 %v90
  %v276 = vunpack.c.l.b16 %v91
  %v277 = vunpack.c.l.b16 %v92
  %v278 = vunpack.c.l.b16 %v93
  %v279 = vunpack.c.l.b16 %v94
  %v280 = vunpack.c.l.b16 %v95
  %v281 = vunpack.c.l.b16 %v96
  %v282 = vunpack.c.l.b16 %v97
  %v283 = vunpack.c.l.b16 %v98
  %v284 = vunpack.c.l.b16 %v99
  %v285 = vunpack.c.l.b16 %v100
  %v286 = vpack.c.b16 %v207, %v206
  %v287 = vpack.c.b16 %v209, %v208
  %v288 = vpack.c.b16 %v211, %v210
  %v289 = vpack.c.b16 %v213, %v212
  %v290 = vpack.c.b16 %v215, %v214
  %v291 = vpack.c.b16 %v217, %v216
  %v292 = vpack.c.b16 %v219, %v218
  %v293 = vpack.c.b16 %v221, %v220
  %v294 = vpack.c.b16 %v223, %v222
  %v295 = vpack.c.b16 %v225, %v224
  %v296 = vpack.c.b16 %v227, %v226
  %v297 = vpack.c.b16 %v229, %v228
  %v298 = vpack.c.b16 %v231, %v230
  %v299 = vpack.c.b16 %v233, %v232
  %v300 = vpack.c.b16 %v235, %v234
  %v301 = vpack.c.b16 %v237, %v236
  %v302 = vpack.c.b16 %v239, %v238
  %v303 = vpack.c.b16 %v241, %v240
  %v304 = vpack.c.b16 %v243, %v242
  %v305 = vpack.c.b16 %v245, %v244
  %v306 = vpack.c.b16 %v247, %v246
  %v307 = vpack.c.b16 %v249, %v248
  %v308 = vpack.c.b16 %v251, %v250
  %v309 = vpack.c.b16 %v253, %v252
  %v310 = vpack.c.b16 %v255, %v254
  %v311 = vpack.c.b16 %v257, %v256
  %v312 = vpack.c.b16 %v259, %v258
  %v313 = vpack.c.b16 %v261, %v260
  %v314 = vpack.c.b16 %v263, %v262
  %v315 = vpack.c.b16 %v265, %v264
  %v316 = vpack.c.b16 %v267, %v266
  %v317 = vpack.c.b16 %v269, %v268
  %v318 = vpack.c.b16 %v271, %v270
  %v319 = vpack.c.b16 %v273, %v272
  %v320 = vpack.c.b16 %v275, %v274
  %v321 = vpack.c.b16 %v277, %v276
  %v322 = vpack.c.b16 %v279, %v278
  %v323 = vpack.c.b16 %v281, %v280
  %v324 = vpack.c.b16 %v283, %v282
  %v325 = vpack.c.b16 %v285, %v284
  %366 = vmatprep.subr.bf16.mxu0 0
  %367 = vmatpush1.bf16.msra.mxu0 %v286
  %368 = vmatprep.subr.bf16.mxu0 0
  %369 = vmatpush1.bf16.msra.mxu0 %v287
  %370 = vmatprep.subr.bf16.mxu0 0
  %371 = vmatpush1.bf16.msra.mxu0 %v288
  %372 = vmatprep.subr.bf16.mxu0 0
  %373 = vmatpush1.bf16.msra.mxu0 %v289
  %374 = vmatprep.subr.bf16.mxu0 0
  %375 = vmatpush1.bf16.msra.mxu0 %v290
  %376 = vmatprep.subr.bf16.mxu0 0
  %377 = vmatpush1.bf16.msra.mxu0 %v291
  %378 = vmatprep.subr.bf16.mxu0 0
  %379 = vmatpush1.bf16.msra.mxu0 %v292
  %380 = vmatprep.subr.bf16.mxu0 0
  %381 = vmatpush1.bf16.msra.mxu0 %v293
  %382 = vmatprep.subr.bf16.mxu0 0
  %383 = vmatpush1.bf16.msra.mxu0 %v294
  %384 = vmatprep.subr.bf16.mxu0 0
  %385 = vmatpush1.bf16.msra.mxu0 %v295
  %386 = vmatprep.subr.bf16.mxu0 0
  %387 = vmatpush1.bf16.msra.mxu0 %v296
  %388 = vmatprep.subr.bf16.mxu0 0
  %389 = vmatpush1.bf16.msra.mxu0 %v297
  %390 = vmatprep.subr.bf16.mxu0 0
  %391 = vmatpush1.bf16.msra.mxu0 %v298
  %392 = vmatprep.subr.bf16.mxu0 0
  %393 = vmatpush1.bf16.msra.mxu0 %v299
  %394 = vmatprep.subr.bf16.mxu0 0
  %395 = vmatpush1.bf16.msra.mxu0 %v300
  %396 = vmatprep.subr.bf16.mxu0 0
  %397 = vmatpush1.bf16.msra.mxu0 %v301
  %398 = vmatprep.mubr.bf16.mxu0 %v117
  %399 = vmatmul.mubr.bf16.gmra.mrb[0].mxu0 %v116
  %v400 = vpop.f32.mrb[0].mxu0
  %v401 = vadd.f32 %v106, %v400
  %v402 = vpop.f32.mrb[0].mxu0
  %v403 = vpop.f32.mrb[0].mxu0
  %v404 = vpop.f32.mrb[0].mxu0
  %405 = vdwg.mxu0
  %406 = vmatprep.subr.bf16.mxu0 0
  %407 = vmatpush1.bf16.msra.mxu0 %v302
  %408 = vmatprep.subr.bf16.mxu0 0
  %409 = vmatpush1.bf16.msra.mxu0 %v303
  %410 = vmatprep.subr.bf16.mxu0 0
  %411 = vmatpush1.bf16.msra.mxu0 %v304
  %412 = vmatprep.subr.bf16.mxu0 0
  %413 = vmatpush1.bf16.msra.mxu0 %v305
  %414 = vmatprep.subr.bf16.mxu0 0
  %415 = vmatpush1.bf16.msra.mxu0 %v306
  %416 = vmatprep.subr.bf16.mxu0 0
  %417 = vmatpush1.bf16.msra.mxu0 %v307
  %418 = vmatprep.subr.bf16.mxu0 0
  %419 = vmatpush1.bf16.msra.mxu0 %v308
  %420 = vmatprep.subr.bf16.mxu0 0
  %421 = vmatpush1.bf16.msra.mxu0 %v309
  %422 = vmatprep.subr.bf16.mxu0 0
  %423 = vmatpush1.bf16.msra.mxu0 %v310
  %424 = vmatprep.subr.bf16.mxu0 0
  %425 = vmatpush1.bf16.msra.mxu0 %v311
  %426 = vmatprep.subr.bf16.mxu0 0
  %427 = vmatpush1.bf16.msra.mxu0 %v312
  %428 = vmatprep.subr.bf16.mxu0 0
  %429 = vmatpush1.bf16.msra.mxu0 %v313
  %430 = vmatprep.subr.bf16.mxu0 0
  %431 = vmatpush1.bf16.msra.mxu0 %v314
  %432 = vmatprep.subr.bf16.mxu0 0
  %433 = vmatpush1.bf16.msra.mxu0 %v315
  %434 = vmatprep.subr.bf16.mxu0 0
  %435 = vmatpush1.bf16.msra.mxu0 %v316
  %436 = vmatprep.subr.bf16.mxu0 0
  %437 = vmatpush1.bf16.msra.mxu0 %v317
  %438 = vmatprep.mubr.bf16.mxu0 %v119
  %439 = vmatmul.mubr.bf16.gmra.mrb[0].mxu0 %v118
  %v440 = vpop.f32.mrb[0].mxu0
  %v441 = vadd.f32 %v401, %v440
  %v442 = vpop.f32.mrb[0].mxu0
  %v443 = vpop.f32.mrb[0].mxu0
  %v444 = vpop.f32.mrb[0].mxu0
  %445 = vdwg.mxu0
  %446 = vmatprep.subr.bf16.mxu0 0
  %447 = vmatpush1.bf16.msra.mxu0 %v318
  %448 = vmatprep.subr.bf16.mxu0 0
  %449 = vmatpush1.bf16.msra.mxu0 %v319
  %450 = vmatprep.subr.bf16.mxu0 0
  %451 = vmatpush1.bf16.msra.mxu0 %v320
  %452 = vmatprep.subr.bf16.mxu0 0
  %453 = vmatpush1.bf16.msra.mxu0 %v321
  %454 = vmatprep.subr.bf16.mxu0 0
  %455 = vmatpush1.bf16.msra.mxu0 %v322
  %456 = vmatprep.subr.bf16.mxu0 0
  %457 = vmatpush1.bf16.msra.mxu0 %v323
  %458 = vmatprep.subr.bf16.mxu0 0
  %459 = vmatpush1.bf16.msra.mxu0 %v324
  %460 = vmatprep.subr.bf16.mxu0 0
  %461 = vmatpush1.bf16.msra.mxu0 %v325
  %462 = vmatprep.subr.bf16.mxu0 0
  %463 = vmatpush1.bf16.msra.mxu0 0
  %464 = vmatprep.subr.bf16.mxu0 0
  %465 = vmatpush1.bf16.msra.mxu0 0
  %466 = vmatprep.subr.bf16.mxu0 0
  %467 = vmatpush1.bf16.msra.mxu0 0
  %468 = vmatprep.subr.bf16.mxu0 0
  %469 = vmatpush1.bf16.msra.mxu0 0
  %470 = vmatprep.subr.bf16.mxu0 0
  %471 = vmatpush1.bf16.msra.mxu0 0
  %472 = vmatprep.subr.bf16.mxu0 0
  %473 = vmatpush1.bf16.msra.mxu0 0
  %474 = vmatprep.subr.bf16.mxu0 0
  %475 = vmatpush1.bf16.msra.mxu0 0
  %476 = vmatprep.subr.bf16.mxu0 0
  %477 = vmatpush1.bf16.msra.mxu0 0
  %478 = vmatprep.mubr.bf16.mxu0 0
  %479 = vmatmul.mubr.bf16.gmra.mrb[0].mxu0 %v120
  %v480 = vpop.f32.mrb[0].mxu0
  %v481 = vadd.f32 %v441, %v480
  %v482 = vpop.f32.mrb[0].mxu0
  %v483 = vpop.f32.mrb[0].mxu0
  %v484 = vpop.f32.mrb[0].mxu0
  %485 = vdwg.mxu0
  %v486 = vmax.f32 %v481, 0.0
  %v487 = vld [vmem:[%s3] sm:$0xff]
  %v488 = vadd.f32 %v486, %v487
  %489 = vst [vmem:[%s4] sm:$0xff] %v488
  // Predicated region
  $region18: #{forward.32} parent=0 // pred_check
    _
  $region19: #{forward.32} parent=0 // pred_check_branch
    %491 = sbr.rel (0) target = $region21
  $region20: #{forward.32} parent=0 // pred_region
    _
  $region21: #{forward.32} parent=0 // pred_fallthru
    _
  // Predicated region
  $region22: #{forward.32} parent=0 // pred_check
    _
  $region23: #{forward.32} parent=0 // pred_check_branch
    %493 = sbr.rel (0) target = $region25
  $region24: #{forward.32} parent=0 // pred_region
    _
  $region25: #{forward.32} parent=0 // pred_fallthru
    _

// kernel: forward.33
$region0: #{forward.33}
  #allocation0 [shape = 'u32[]', space=smem, size = 0x4, offset = 0x4, fixed_abs, tag = 'smem constant byte address 0x4 - core index']
  #allocation1 [shape = 'u32[144,128]{1,0:T(1,128)}', space=vmem, size = 0x12000, scoped, tag = 'internal scratch']
  %s0 = inlined_call_operand.vmem [shape: f32[4,8,128], index: 0, kind: input, shape index: {}]
  %s1 = inlined_call_operand.vmem [shape: f32[8,128], index: 1, kind: output, shape index: {}]
  %s2 = sld [smem:[#allocation0]]
  $region14: #{forward.33} parent=0
    _
  %s4 = ssub.s32 1, %s2
  %s5 = scalar_select 0, %s4, %s2
  // Predicated region
  $region2: #{forward.33} parent=0 // pred_check
    _
  $region3: #{forward.33} parent=0 // pred_check_branch
    %7 = sbr.rel (0) target = $region5
  $region4: #{forward.33} parent=0 // pred_region
    _
  $region5: #{forward.33} parent=0 // pred_fallthru
    _
  %v8 = vld [vmem:[%s0] sm:$0xff]
  %s9 = scalar_lea.vmem %s0, 8
  %v10 = vld [vmem:[%s9] sm:$0xff]
  %v11 = vadd.f32 %v8, %v10
  %s12 = scalar_lea.vmem %s0, 16
  %v13 = vld [vmem:[%s12] sm:$0xff]
  %v14 = vadd.f32 %v11, %v13
  %s15 = scalar_lea.vmem %s0, 24
  %v16 = vld [vmem:[%s15] sm:$0xff]
  %v17 = vadd.f32 %v14, %v16
  %v18 = vmul.f32 %v17, 0.25
  %19 = vst [vmem:[%s1] sm:$0xff] %v18
  // Predicated region
  $region6: #{forward.33} parent=0 // pred_check
    _
  $region7: #{forward.33} parent=0 // pred_check_branch
    %21 = sbr.rel (0) target = $region9
  $region8: #{forward.33} parent=0 // pred_region
    _
  $region9: #{forward.33} parent=0 // pred_fallthru
    _
  // Predicated region
  $region10: #{forward.33} parent=0 // pred_check
    _
  $region11: #{forward.33} parent=0 // pred_check_branch
    %23 = sbr.rel (0) target = $region13
  $region12: #{forward.33} parent=0 // pred_region
    _
  $region13: #{forward.33} parent=0 // pred_fallthru
    _

</llo_original>
